<compile_context>
chip_gen: v7x
topology: tpu7x:2x2x1
jax: 0.10.0
libtpu: 0.0.40
codegen_flags: <defaults>
</compile_context>

<pallas_src>
import jax
import jax.numpy as jnp
from jax.experimental import pallas as pl
from jax.experimental.pallas import tpu as pltpu

# ----------------------------------------------------------------------------
# Layer sizes (match the PyTorch module exactly) and lane-dense padded sizes
# ----------------------------------------------------------------------------
DIMS = [2400, 1000, 648, 328, 168, 41]        # logical in -> hidden... -> out
PAD_DIMS = [2400, 1024, 768, 384, 256, 128]   # outputs padded to multiples of 128
OUT_DIM = DIMS[-1]
N_LAYERS = len(DIMS) - 1


def _round_up(n, m):
    return n + ((-n) % m)


# ----------------------------------------------------------------------------
# Pallas kernel: the whole 5-layer MLP for one batch tile
# ----------------------------------------------------------------------------
def mlp_kernel(x_ref,
               w1_ref, s1_ref, b1_ref,
               w2_ref, s2_ref, b2_ref,
               w3_ref, s3_ref, b3_ref,
               w4_ref, s4_ref, b4_ref,
               w5_ref, s5_ref, b5_ref,
               out_ref):
    h = x_ref[...]                                       # bf16 (TB, 2400)
    layers = ((w1_ref, s1_ref, b1_ref), (w2_ref, s2_ref, b2_ref),
              (w3_ref, s3_ref, b3_ref), (w4_ref, s4_ref, b4_ref),
              (w5_ref, s5_ref, b5_ref))
    for li, (w_ref, s_ref, b_ref) in enumerate(layers):
        # int8 weights are a storage format only: dequant-to-bf16 in VMEM (exact for
        # |q| <= 127), MXU matmul with f32 accumulation, per-column scale + bias in f32.
        w_bf16 = w_ref[...].astype(jnp.bfloat16)
        acc = jnp.dot(h, w_bf16, preferred_element_type=jnp.float32)
        acc = acc * s_ref[...] + b_ref[...]
        if li < N_LAYERS - 1:
            h = jnp.maximum(acc, 0.0).astype(jnp.bfloat16)
        else:
            out_ref[...] = acc.astype(out_ref.dtype)


# ----------------------------------------------------------------------------
# Parameter handling
# ----------------------------------------------------------------------------
def init_params(key):
    """PyTorch nn.Linear default init: U(-k, k), k = 1/sqrt(fan_in). Stored as (in, out)."""
    params = []
    for i in range(N_LAYERS):
        fan_in, fan_out = DIMS[i], DIMS[i + 1]
        key, kw, kb = jax.random.split(key, 3)
        bound = 1.0 / jnp.sqrt(fan_in)
        w = jax.random.uniform(kw, (fan_in, fan_out), jnp.float32, -bound, bound)
        b = jax.random.uniform(kb, (fan_out,), jnp.float32, -bound, bound)
        params.append((w, b))
    return params


def quantize_params(params):
    """Zero-pad to PAD_DIMS, quantize weights to int8 with per-output-channel f32
    scales (symmetric, 127 levels).  Biases stay f32 with shape (1, out_p)."""
    quantized = []
    for i, (w, b) in enumerate(params):
        in_p, out_p = PAD_DIMS[i], PAD_DIMS[i + 1]
        fin, fout = w.shape
        w_p = jnp.zeros((in_p, out_p), jnp.float32).at[:fin, :fout].set(w)
        b_p = jnp.zeros((1, out_p), jnp.float32).at[0, :fout].set(b)
        absmax = jnp.max(jnp.abs(w_p), axis=0, keepdims=True)           # (1, out_p)
        scale = jnp.maximum(absmax, 1e-8) / 127.0
        w_q = jnp.clip(jnp.round(w_p / scale), -127.0, 127.0).astype(jnp.int8)
        quantized.append((w_q, scale, b_p))
    return quantized


# ----------------------------------------------------------------------------
# Wrapper
# ----------------------------------------------------------------------------
def mlp_forward(x, qparams):
    """x: any shape that flattens to (-1, 2400).  Returns (B, 41) float32 logits."""
    x = jnp.reshape(x, (-1, DIMS[0])).astype(jnp.bfloat16)   # torch .view + dtype cast
    batch = x.shape[0]

    # Batch tile: multiple of 16 rows (bf16 sublane packing).  Large batches use a
    # 256-row tile to fill the 256-wide MXU on v6e/v7x and amortize grid-step overhead.
    b16 = _round_up(batch, 16)
    tb = 256 if b16 >= 256 else b16
    b_pad = _round_up(b16, tb)
    if b_pad != batch:
        x = jnp.pad(x, ((0, b_pad - batch), (0, 0)))
    grid = (b_pad // tb,)

    # Only shard batch tiles across TensorCores when per-TC compute clearly exceeds
    # the weight stream; otherwise megacore would double the weight HBM bytes (v7x).
    dim_sem = ("parallel",) if b_pad >= 2048 else ("arbitrary",)

    # Constant-index weight/scale/bias blocks: single-buffered (double-buffering a
    # block that never changes just duplicates VMEM residency).
    resident = pl.Buffered(1)

    flat_params = []
    in_specs = [pl.BlockSpec((tb, PAD_DIMS[0]), lambda i: (i, 0))]   # x tiled over batch
    for (w_q, s, b) in qparams:
        flat_params.extend((w_q, s, b))
        in_specs.append(pl.BlockSpec(w_q.shape, lambda i: (0, 0), pipeline_mode=resident))
        in_specs.append(pl.BlockSpec(s.shape, lambda i: (0, 0), pipeline_mode=resident))
        in_specs.append(pl.BlockSpec(b.shape, lambda i: (0, 0), pipeline_mode=resident))
    out_spec = pl.BlockSpec((tb, PAD_DIMS[-1]), lambda i: (i, 0))

    # Advisory cost estimate: HBM-byte dominated at small batch.
    flops = 2 * b_pad * sum(PAD_DIMS[k] * PAD_DIMS[k + 1] for k in range(N_LAYERS))
    weight_bytes = sum(int(w.size) * 1 + int(s.size) * 4 + int(b.size) * 4
                       for w, s, b in qparams)
    bytes_accessed = weight_bytes + int(x.size) * 2 + b_pad * PAD_DIMS[-1] * 4

    out = pl.pallas_call(
        mlp_kernel,
        grid=grid,
        out_shape=jax.ShapeDtypeStruct((b_pad, PAD_DIMS[-1]), jnp.float32),
        in_specs=in_specs,
        out_specs=out_spec,
        compiler_params=pltpu.CompilerParams(
            dimension_semantics=dim_sem,
            vmem_limit_bytes=40 << 20,           # safe on v7x's 64 MiB physical VMEM
        ),
        cost_estimate=pl.CostEstimate(
            flops=flops, transcendentals=0, bytes_accessed=bytes_accessed),
    )(x, *flat_params)

    # Drop batch padding and the zero-padded logit columns.
    return out[:batch, :OUT_DIM]


# ----------------------------------------------------------------------------
# Main
# ----------------------------------------------------------------------------
if __name__ == "__main__":
    key = jax.random.PRNGKey(0)
    key, kx = jax.random.split(key)

    # Small batch; feature dims are fixed by the module (input views to (-1, 200*12)).
    batch = 4
    x = jax.random.normal(kx, (batch, 200, 12), dtype=jnp.float32)

    params = init_params(key)
    qparams = quantize_params(params)

    logits = mlp_forward(x, qparams)
    logits = jax.block_until_ready(logits)
    assert logits.shape == (batch, OUT_DIM), logits.shape

    # Reference in plain JAX with the exact same int8-weight / bf16-activation /
    # f32-accumulation math as the kernel.
    ref = jnp.reshape(x, (-1, DIMS[0])).astype(jnp.bfloat16)
    for i, (w_q, s, b) in enumerate(qparams):
        acc = jnp.dot(ref, w_q.astype(jnp.bfloat16),
                      preferred_element_type=jnp.float32) * s + b
        if i < N_LAYERS - 1:
            ref = jnp.maximum(acc, 0.0).astype(jnp.bfloat16)
        else:
            ref = acc
    ref = ref[:, :OUT_DIM]

    assert jnp.allclose(logits, ref, atol=2e-2, rtol=2e-2), "mismatch vs reference"

    print("KERNEL_OK")
</pallas_src>

<mosaic_0001>
module attributes {stable_mosaic.version = 11 : i64} {
  func.func @mlp_kernel(%arg0: i32, %arg1: memref<16x2400xbf16, #tpu.memory_space<vmem>>, %arg2: memref<2400x1024xi8, #tpu.memory_space<vmem>>, %arg3: memref<1x1024xf32, #tpu.memory_space<vmem>>, %arg4: memref<1x1024xf32, #tpu.memory_space<vmem>>, %arg5: memref<1024x768xi8, #tpu.memory_space<vmem>>, %arg6: memref<1x768xf32, #tpu.memory_space<vmem>>, %arg7: memref<1x768xf32, #tpu.memory_space<vmem>>, %arg8: memref<768x384xi8, #tpu.memory_space<vmem>>, %arg9: memref<1x384xf32, #tpu.memory_space<vmem>>, %arg10: memref<1x384xf32, #tpu.memory_space<vmem>>, %arg11: memref<384x256xi8, #tpu.memory_space<vmem>>, %arg12: memref<1x256xf32, #tpu.memory_space<vmem>>, %arg13: memref<1x256xf32, #tpu.memory_space<vmem>>, %arg14: memref<256x128xi8, #tpu.memory_space<vmem>>, %arg15: memref<1x128xf32, #tpu.memory_space<vmem>>, %arg16: memref<1x128xf32, #tpu.memory_space<vmem>>, %arg17: memref<16x128xf32, #tpu.memory_space<vmem>>) attributes {dimension_semantics = [#tpu.dimension_semantics<arbitrary>], iteration_bounds = array<i64: 1>, scalar_prefetch = 0 : i64, scratch_operands = 0 : i64, tpu.core_type = #tpu.core_type<tc>, window_params = [{transform_indices = @transform_0, window_bounds = array<i64: 16, 2400>}, {pipeline_mode = #tpu.pipeline_mode<synchronous>, transform_indices = @transform_1, window_bounds = array<i64: 2400, 1024>}, {pipeline_mode = #tpu.pipeline_mode<synchronous>, transform_indices = @transform_2, window_bounds = array<i64: 1, 1024>}, {pipeline_mode = #tpu.pipeline_mode<synchronous>, transform_indices = @transform_3, window_bounds = array<i64: 1, 1024>}, {pipeline_mode = #tpu.pipeline_mode<synchronous>, transform_indices = @transform_4, window_bounds = array<i64: 1024, 768>}, {pipeline_mode = #tpu.pipeline_mode<synchronous>, transform_indices = @transform_5, window_bounds = array<i64: 1, 768>}, {pipeline_mode = #tpu.pipeline_mode<synchronous>, transform_indices = @transform_6, window_bounds = array<i64: 1, 768>}, {pipeline_mode = #tpu.pipeline_mode<synchronous>, transform_indices = @transform_7, window_bounds = array<i64: 768, 384>}, {pipeline_mode = #tpu.pipeline_mode<synchronous>, transform_indices = @transform_8, window_bounds = array<i64: 1, 384>}, {pipeline_mode = #tpu.pipeline_mode<synchronous>, transform_indices = @transform_9, window_bounds = array<i64: 1, 384>}, {pipeline_mode = #tpu.pipeline_mode<synchronous>, transform_indices = @transform_10, window_bounds = array<i64: 384, 256>}, {pipeline_mode = #tpu.pipeline_mode<synchronous>, transform_indices = @transform_11, window_bounds = array<i64: 1, 256>}, {pipeline_mode = #tpu.pipeline_mode<synchronous>, transform_indices = @transform_12, window_bounds = array<i64: 1, 256>}, {pipeline_mode = #tpu.pipeline_mode<synchronous>, transform_indices = @transform_13, window_bounds = array<i64: 256, 128>}, {pipeline_mode = #tpu.pipeline_mode<synchronous>, transform_indices = @transform_14, window_bounds = array<i64: 1, 128>}, {pipeline_mode = #tpu.pipeline_mode<synchronous>, transform_indices = @transform_15, window_bounds = array<i64: 1, 128>}, {transform_indices = @transform_16, window_bounds = array<i64: 16, 128>}]} {
    %c0 = arith.constant 0 : index
    %c0_0 = arith.constant 0 : index
    %0 = vector.load %arg1[%c0, %c0_0] : memref<16x2400xbf16, #tpu.memory_space<vmem>>, vector<16x2400xbf16>
    %c0_1 = arith.constant 0 : index
    %c0_2 = arith.constant 0 : index
    %1 = vector.load %arg2[%c0_1, %c0_2] : memref<2400x1024xi8, #tpu.memory_space<vmem>>, vector<2400x1024xi8>
    %2 = arith.sitofp %1 : vector<2400x1024xi8> to vector<2400x1024xbf16>
    %cst = arith.constant dense<0.000000e+00> : vector<16x1024xf32>
    %3 = tpu.matmul %0, %2, %cst {dimension_numbers = #tpu.dot_dimension_numbers<[1], [0], [0], [1], [0, 0, 1, 1], [], []>} : vector<16x2400xbf16>, vector<2400x1024xbf16>, vector<16x1024xf32> -> vector<16x1024xf32>
    %c0_3 = arith.constant 0 : index
    %c0_4 = arith.constant 0 : index
    %4 = vector.load %arg3[%c0_3, %c0_4] : memref<1x1024xf32, #tpu.memory_space<vmem>>, vector<1x1024xf32>
    %5 = vector.broadcast %4 : vector<1x1024xf32> to vector<16x1024xf32>
    %6 = arith.mulf %3, %5 : vector<16x1024xf32>
    %c0_5 = arith.constant 0 : index
    %c0_6 = arith.constant 0 : index
    %7 = vector.load %arg4[%c0_5, %c0_6] : memref<1x1024xf32, #tpu.memory_space<vmem>>, vector<1x1024xf32>
    %8 = vector.broadcast %7 : vector<1x1024xf32> to vector<16x1024xf32>
    %9 = arith.addf %6, %8 : vector<16x1024xf32>
    %cst_7 = arith.constant 0.000000e+00 : f32
    %10 = vector.broadcast %cst_7 : f32 to vector<16x1024xf32>
    %11 = arith.maximumf %9, %10 : vector<16x1024xf32>
    %12 = arith.truncf %11 : vector<16x1024xf32> to vector<16x1024xbf16>
    %c0_8 = arith.constant 0 : index
    %c0_9 = arith.constant 0 : index
    %13 = vector.load %arg5[%c0_8, %c0_9] : memref<1024x768xi8, #tpu.memory_space<vmem>>, vector<1024x768xi8>
    %14 = arith.sitofp %13 : vector<1024x768xi8> to vector<1024x768xbf16>
    %cst_10 = arith.constant dense<0.000000e+00> : vector<16x768xf32>
    %15 = tpu.matmul %12, %14, %cst_10 {dimension_numbers = #tpu.dot_dimension_numbers<[1], [0], [0], [1], [0, 0, 1, 1], [], []>} : vector<16x1024xbf16>, vector<1024x768xbf16>, vector<16x768xf32> -> vector<16x768xf32>
    %c0_11 = arith.constant 0 : index
    %c0_12 = arith.constant 0 : index
    %16 = vector.load %arg6[%c0_11, %c0_12] : memref<1x768xf32, #tpu.memory_space<vmem>>, vector<1x768xf32>
    %17 = vector.broadcast %16 : vector<1x768xf32> to vector<16x768xf32>
    %18 = arith.mulf %15, %17 : vector<16x768xf32>
    %c0_13 = arith.constant 0 : index
    %c0_14 = arith.constant 0 : index
    %19 = vector.load %arg7[%c0_13, %c0_14] : memref<1x768xf32, #tpu.memory_space<vmem>>, vector<1x768xf32>
    %20 = vector.broadcast %19 : vector<1x768xf32> to vector<16x768xf32>
    %21 = arith.addf %18, %20 : vector<16x768xf32>
    %cst_15 = arith.constant 0.000000e+00 : f32
    %22 = vector.broadcast %cst_15 : f32 to vector<16x768xf32>
    %23 = arith.maximumf %21, %22 : vector<16x768xf32>
    %24 = arith.truncf %23 : vector<16x768xf32> to vector<16x768xbf16>
    %c0_16 = arith.constant 0 : index
    %c0_17 = arith.constant 0 : index
    %25 = vector.load %arg8[%c0_16, %c0_17] : memref<768x384xi8, #tpu.memory_space<vmem>>, vector<768x384xi8>
    %26 = arith.sitofp %25 : vector<768x384xi8> to vector<768x384xbf16>
    %cst_18 = arith.constant dense<0.000000e+00> : vector<16x384xf32>
    %27 = tpu.matmul %24, %26, %cst_18 {dimension_numbers = #tpu.dot_dimension_numbers<[1], [0], [0], [1], [0, 0, 1, 1], [], []>} : vector<16x768xbf16>, vector<768x384xbf16>, vector<16x384xf32> -> vector<16x384xf32>
    %c0_19 = arith.constant 0 : index
    %c0_20 = arith.constant 0 : index
    %28 = vector.load %arg9[%c0_19, %c0_20] : memref<1x384xf32, #tpu.memory_space<vmem>>, vector<1x384xf32>
    %29 = vector.broadcast %28 : vector<1x384xf32> to vector<16x384xf32>
    %30 = arith.mulf %27, %29 : vector<16x384xf32>
    %c0_21 = arith.constant 0 : index
    %c0_22 = arith.constant 0 : index
    %31 = vector.load %arg10[%c0_21, %c0_22] : memref<1x384xf32, #tpu.memory_space<vmem>>, vector<1x384xf32>
    %32 = vector.broadcast %31 : vector<1x384xf32> to vector<16x384xf32>
    %33 = arith.addf %30, %32 : vector<16x384xf32>
    %cst_23 = arith.constant 0.000000e+00 : f32
    %34 = vector.broadcast %cst_23 : f32 to vector<16x384xf32>
    %35 = arith.maximumf %33, %34 : vector<16x384xf32>
    %36 = arith.truncf %35 : vector<16x384xf32> to vector<16x384xbf16>
    %c0_24 = arith.constant 0 : index
    %c0_25 = arith.constant 0 : index
    %37 = vector.load %arg11[%c0_24, %c0_25] : memref<384x256xi8, #tpu.memory_space<vmem>>, vector<384x256xi8>
    %38 = arith.sitofp %37 : vector<384x256xi8> to vector<384x256xbf16>
    %cst_26 = arith.constant dense<0.000000e+00> : vector<16x256xf32>
    %39 = tpu.matmul %36, %38, %cst_26 {dimension_numbers = #tpu.dot_dimension_numbers<[1], [0], [0], [1], [0, 0, 1, 1], [], []>} : vector<16x384xbf16>, vector<384x256xbf16>, vector<16x256xf32> -> vector<16x256xf32>
    %c0_27 = arith.constant 0 : index
    %c0_28 = arith.constant 0 : index
    %40 = vector.load %arg12[%c0_27, %c0_28] : memref<1x256xf32, #tpu.memory_space<vmem>>, vector<1x256xf32>
    %41 = vector.broadcast %40 : vector<1x256xf32> to vector<16x256xf32>
    %42 = arith.mulf %39, %41 : vector<16x256xf32>
    %c0_29 = arith.constant 0 : index
    %c0_30 = arith.constant 0 : index
    %43 = vector.load %arg13[%c0_29, %c0_30] : memref<1x256xf32, #tpu.memory_space<vmem>>, vector<1x256xf32>
    %44 = vector.broadcast %43 : vector<1x256xf32> to vector<16x256xf32>
    %45 = arith.addf %42, %44 : vector<16x256xf32>
    %cst_31 = arith.constant 0.000000e+00 : f32
    %46 = vector.broadcast %cst_31 : f32 to vector<16x256xf32>
    %47 = arith.maximumf %45, %46 : vector<16x256xf32>
    %48 = arith.truncf %47 : vector<16x256xf32> to vector<16x256xbf16>
    %c0_32 = arith.constant 0 : index
    %c0_33 = arith.constant 0 : index
    %49 = vector.load %arg14[%c0_32, %c0_33] : memref<256x128xi8, #tpu.memory_space<vmem>>, vector<256x128xi8>
    %50 = arith.sitofp %49 : vector<256x128xi8> to vector<256x128xbf16>
    %cst_34 = arith.constant dense<0.000000e+00> : vector<16x128xf32>
    %51 = tpu.matmul %48, %50, %cst_34 {dimension_numbers = #tpu.dot_dimension_numbers<[1], [0], [0], [1], [0, 0, 1, 1], [], []>} : vector<16x256xbf16>, vector<256x128xbf16>, vector<16x128xf32> -> vector<16x128xf32>
    %c0_35 = arith.constant 0 : index
    %c0_36 = arith.constant 0 : index
    %52 = vector.load %arg15[%c0_35, %c0_36] : memref<1x128xf32, #tpu.memory_space<vmem>>, vector<1x128xf32>
    %53 = vector.broadcast %52 : vector<1x128xf32> to vector<16x128xf32>
    %54 = arith.mulf %51, %53 : vector<16x128xf32>
    %c0_37 = arith.constant 0 : index
    %c0_38 = arith.constant 0 : index
    %55 = vector.load %arg16[%c0_37, %c0_38] : memref<1x128xf32, #tpu.memory_space<vmem>>, vector<1x128xf32>
    %56 = vector.broadcast %55 : vector<1x128xf32> to vector<16x128xf32>
    %57 = arith.addf %54, %56 : vector<16x128xf32>
    %c0_39 = arith.constant 0 : index
    %c0_40 = arith.constant 0 : index
    %58 = vector.load %arg17[%c0_39, %c0_40] : memref<16x128xf32, #tpu.memory_space<vmem>>, vector<16x128xf32>
    tpu.vector_store %arg17[%c0_39, %c0_40], %57 {strides = array<i32>} : memref<16x128xf32, #tpu.memory_space<vmem>>, vector<16x128xf32>,
    return
  }
  func.func @transform_0(%arg0: i32) -> (i32, i32) {
    %c0_i32 = arith.constant 0 : i32
    %c0_i32_0 = arith.constant 0 : i32
    return %arg0, %c0_i32 : i32, i32
  }
  func.func @transform_1(%arg0: i32) -> (i32, i32) {
    %c0_i32 = arith.constant 0 : i32
    %c0_i32_0 = arith.constant 0 : i32
    %c0_i32_1 = arith.constant 0 : i32
    return %c0_i32, %c0_i32_0 : i32, i32
  }
  func.func @transform_2(%arg0: i32) -> (i32, i32) {
    %c0_i32 = arith.constant 0 : i32
    %c0_i32_0 = arith.constant 0 : i32
    %c0_i32_1 = arith.constant 0 : i32
    return %c0_i32, %c0_i32_0 : i32, i32
  }
  func.func @transform_3(%arg0: i32) -> (i32, i32) {
    %c0_i32 = arith.constant 0 : i32
    %c0_i32_0 = arith.constant 0 : i32
    %c0_i32_1 = arith.constant 0 : i32
    return %c0_i32, %c0_i32_0 : i32, i32
  }
  func.func @transform_4(%arg0: i32) -> (i32, i32) {
    %c0_i32 = arith.constant 0 : i32
    %c0_i32_0 = arith.constant 0 : i32
    %c0_i32_1 = arith.constant 0 : i32
    return %c0_i32, %c0_i32_0 : i32, i32
  }
  func.func @transform_5(%arg0: i32) -> (i32, i32) {
    %c0_i32 = arith.constant 0 : i32
    %c0_i32_0 = arith.constant 0 : i32
    %c0_i32_1 = arith.constant 0 : i32
    return %c0_i32, %c0_i32_0 : i32, i32
  }
  func.func @transform_6(%arg0: i32) -> (i32, i32) {
    %c0_i32 = arith.constant 0 : i32
    %c0_i32_0 = arith.constant 0 : i32
    %c0_i32_1 = arith.constant 0 : i32
    return %c0_i32, %c0_i32_0 : i32, i32
  }
  func.func @transform_7(%arg0: i32) -> (i32, i32) {
    %c0_i32 = arith.constant 0 : i32
    %c0_i32_0 = arith.constant 0 : i32
    %c0_i32_1 = arith.constant 0 : i32
    return %c0_i32, %c0_i32_0 : i32, i32
  }
  func.func @transform_8(%arg0: i32) -> (i32, i32) {
    %c0_i32 = arith.constant 0 : i32
    %c0_i32_0 = arith.constant 0 : i32
    %c0_i32_1 = arith.constant 0 : i32
    return %c0_i32, %c0_i32_0 : i32, i32
  }
  func.func @transform_9(%arg0: i32) -> (i32, i32) {
    %c0_i32 = arith.constant 0 : i32
    %c0_i32_0 = arith.constant 0 : i32
    %c0_i32_1 = arith.constant 0 : i32
    return %c0_i32, %c0_i32_0 : i32, i32
  }
  func.func @transform_10(%arg0: i32) -> (i32, i32) {
    %c0_i32 = arith.constant 0 : i32
    %c0_i32_0 = arith.constant 0 : i32
    %c0_i32_1 = arith.constant 0 : i32
    return %c0_i32, %c0_i32_0 : i32, i32
  }
  func.func @transform_11(%arg0: i32) -> (i32, i32) {
    %c0_i32 = arith.constant 0 : i32
    %c0_i32_0 = arith.constant 0 : i32
    %c0_i32_1 = arith.constant 0 : i32
    return %c0_i32, %c0_i32_0 : i32, i32
  }
  func.func @transform_12(%arg0: i32) -> (i32, i32) {
    %c0_i32 = arith.constant 0 : i32
    %c0_i32_0 = arith.constant 0 : i32
    %c0_i32_1 = arith.constant 0 : i32
    return %c0_i32, %c0_i32_0 : i32, i32
  }
  func.func @transform_13(%arg0: i32) -> (i32, i32) {
    %c0_i32 = arith.constant 0 : i32
    %c0_i32_0 = arith.constant 0 : i32
    %c0_i32_1 = arith.constant 0 : i32
    return %c0_i32, %c0_i32_0 : i32, i32
  }
  func.func @transform_14(%arg0: i32) -> (i32, i32) {
    %c0_i32 = arith.constant 0 : i32
    %c0_i32_0 = arith.constant 0 : i32
    %c0_i32_1 = arith.constant 0 : i32
    return %c0_i32, %c0_i32_0 : i32, i32
  }
  func.func @transform_15(%arg0: i32) -> (i32, i32) {
    %c0_i32 = arith.constant 0 : i32
    %c0_i32_0 = arith.constant 0 : i32
    %c0_i32_1 = arith.constant 0 : i32
    return %c0_i32, %c0_i32_0 : i32, i32
  }
  func.func @transform_16(%arg0: i32) -> (i32, i32) {
    %c0_i32 = arith.constant 0 : i32
    %c0_i32_0 = arith.constant 0 : i32
    return %arg0, %c0_i32 : i32, i32
  }
}

</mosaic_0001>

<llo_original>
// kernel: tpu_custom_call.1
$region0: #{tpu_custom_call.1}
  #allocation0 [shape = 'u32[]', space=smem, size = 0x4, offset = 0x4, fixed_abs, tag = 'smem constant byte address 0x4 - core index']
  #allocation1 [shape = 'u32[144,128]{1,0:T(1,128)}', space=vmem, size = 0x12000, scoped, tag = 'internal scratch']
  %s0 = inlined_call_operand.hbm [shape: bf16[16,2400], index: 0, kind: input, shape index: {}]
  %s1 = inlined_call_operand.hbm [shape: s8[2400,1024], index: 1, kind: input, shape index: {}]
  %s2 = inlined_call_operand.hbm [shape: f32[1,1024], index: 2, kind: input, shape index: {}]
  %s3 = inlined_call_operand.hbm [shape: f32[1,1024], index: 3, kind: input, shape index: {}]
  %s4 = inlined_call_operand.hbm [shape: s8[1024,768], index: 4, kind: input, shape index: {}]
  %s5 = inlined_call_operand.hbm [shape: f32[1,768], index: 5, kind: input, shape index: {}]
  %s6 = inlined_call_operand.hbm [shape: f32[1,768], index: 6, kind: input, shape index: {}]
  %s7 = inlined_call_operand.hbm [shape: s8[768,384], index: 7, kind: input, shape index: {}]
  %s8 = inlined_call_operand.hbm [shape: f32[1,384], index: 8, kind: input, shape index: {}]
  %s9 = inlined_call_operand.hbm [shape: f32[1,384], index: 9, kind: input, shape index: {}]
  %s10 = inlined_call_operand.hbm [shape: s8[384,256], index: 10, kind: input, shape index: {}]
  %s11 = inlined_call_operand.hbm [shape: f32[1,256], index: 11, kind: input, shape index: {}]
  %s12 = inlined_call_operand.hbm [shape: f32[1,256], index: 12, kind: input, shape index: {}]
  %s13 = inlined_call_operand.hbm [shape: s8[256,128], index: 13, kind: input, shape index: {}]
  %s14 = inlined_call_operand.hbm [shape: f32[1,128], index: 14, kind: input, shape index: {}]
  %s15 = inlined_call_operand.hbm [shape: f32[1,128], index: 15, kind: input, shape index: {}]
  %s16 = inlined_call_operand.hbm [shape: f32[16,128], index: 16, kind: output, shape index: {}]
  %s17 = sld [smem:[#allocation0]]
  $region138: #{tpu_custom_call.1} parent=0
    _
  %s19 = ssub.s32 1, %s17
  %s20 = scalar_select 0, %s19, %s17
  $region1: #{tpu_custom_call.1} parent=0
    #allocation2 [shape = 'u8[77824]{0}', space=vmem, size = 0x13000, scoped, tag = 'input window, operand 0, single buffered']
    #allocation3 [shape = 's32[1]{0}', space=sflag, size = 0x4, scoped, tag = 'scoped memory for tpu_custom_call.1']
    #allocation4 [shape = 's32[1]{0}', space=sflag, size = 0x4, scoped, tag = 'scoped memory for tpu_custom_call.1']
    #allocation5 [shape = 'u8[2457600]{0}', space=vmem, size = 0x258000, scoped, tag = 'input window, operand 1, single buffered']
    #allocation6 [shape = 's32[1]{0}', space=sflag, size = 0x4, scoped, tag = 'scoped memory for tpu_custom_call.1']
    #allocation7 [shape = 'u8[4096]{0}', space=vmem, size = 0x1000, scoped, tag = 'input window, operand 2, single buffered']
    #allocation8 [shape = 'u8[4096]{0}', space=vmem, size = 0x1000, scoped, tag = 'input window, operand 3, single buffered']
    #allocation9 [shape = 's32[1]{0}', space=sflag, size = 0x4, scoped, tag = 'scoped memory for tpu_custom_call.1']
    #allocation10 [shape = 'u8[786432]{0}', space=vmem, size = 0xc0000, scoped, tag = 'input window, operand 4, single buffered']
    #allocation11 [shape = 'u8[3072]{0}', space=vmem, size = 0xc00, scoped, tag = 'input window, operand 5, single buffered']
    #allocation12 [shape = 's32[1]{0}', space=sflag, size = 0x4, scoped, tag = 'scoped memory for tpu_custom_call.1']
    #allocation13 [shape = 'u8[3072]{0}', space=vmem, size = 0xc00, scoped, tag = 'input window, operand 6, single buffered']
    #allocation14 [shape = 'u8[294912]{0}', space=vmem, size = 0x48000, scoped, tag = 'input window, operand 7, single buffered']
    #allocation15 [shape = 's32[1]{0}', space=sflag, size = 0x4, scoped, tag = 'scoped memory for tpu_custom_call.1']
    #allocation16 [shape = 'u8[1536]{0}', space=vmem, size = 0x800, scoped, tag = 'input window, operand 8, single buffered']
    #allocation17 [shape = 'u8[1536]{0}', space=vmem, size = 0x800, scoped, tag = 'input window, operand 9, single buffered']
    #allocation18 [shape = 's32[1]{0}', space=sflag, size = 0x4, scoped, tag = 'scoped memory for tpu_custom_call.1']
    #allocation19 [shape = 'u8[98304]{0}', space=vmem, size = 0x18000, scoped, tag = 'input window, operand 10, single buffered']
    #allocation20 [shape = 'u8[1024]{0}', space=vmem, size = 0x400, scoped, tag = 'input window, operand 11, single buffered']
    #allocation21 [shape = 's32[1]{0}', space=sflag, size = 0x4, scoped, tag = 'scoped memory for tpu_custom_call.1']
    #allocation22 [shape = 'u8[1024]{0}', space=vmem, size = 0x400, scoped, tag = 'input window, operand 12, single buffered']
    #allocation23 [shape = 'u8[32768]{0}', space=vmem, size = 0x8000, scoped, tag = 'input window, operand 13, single buffered']
    #allocation24 [shape = 's32[1]{0}', space=sflag, size = 0x4, scoped, tag = 'scoped memory for tpu_custom_call.1']
    #allocation25 [shape = 'u8[512]{0}', space=vmem, size = 0x400, scoped, tag = 'input window, operand 14, single buffered']
    #allocation26 [shape = 'u8[512]{0}', space=vmem, size = 0x400, scoped, tag = 'input window, operand 15, single buffered']
    #allocation27 [shape = 's32[1]{0}', space=sflag, size = 0x4, scoped, tag = 'scoped memory for tpu_custom_call.1']
    #allocation28 [shape = 'u8[8192]{0}', space=vmem, size = 0x2000, scoped, tag = 'output window, operand 0, single buffered']
    %21 = vsyncpa [#allocation3], 0
    %22 = vsyncpa [#allocation6], 0
    %23 = vsyncpa [#allocation9], 0
    %24 = vsyncpa [#allocation12], 0
    %25 = vsyncpa [#allocation15], 0
    %26 = vsyncpa [#allocation18], 0
    %27 = vsyncpa [#allocation21], 0
    %28 = vsyncpa [#allocation24], 0
    %29 = vsyncpa [#allocation27], 0
    %30 = vsyncpa [#allocation4], 0
    // Predicated region
    $region2: #{tpu_custom_call.1} parent=1 // pred_check
      _
    $region3: #{tpu_custom_call.1} parent=1 // pred_check_branch
      %32 = sbr.rel (0) target = $region5
    $region4: #{tpu_custom_call.1} parent=1 // pred_region
      %s34 = ssub.s32 2432, 2432
      %35 = vsyncadd [#allocation3], %s34
      %s36 = sshll.u32 [#allocation2], 4
      %s37 = int_to_ptr.vmem [resolvable:$true] %s36
      %42 = dma.hbm_to_vmem [thread:$0]  %s0, 2432, %s37, [#allocation3], 1216, 1216, 76
    $region5: #{tpu_custom_call.1} parent=1 // pred_fallthru
      _
    // Predicated region
    $region6: #{tpu_custom_call.1} parent=1 // pred_check
      _
    $region7: #{tpu_custom_call.1} parent=1 // pred_check_branch
      %44 = sbr.rel (0) target = $region9
    $region8: #{tpu_custom_call.1} parent=1 // pred_region
      %s46 = ssub.s32 76800, 76800
      %47 = vsyncadd [#allocation6], %s46
      %s48 = sshll.u32 [#allocation5], 4
      %s49 = int_to_ptr.vmem [resolvable:$true] %s48
      %54 = dma.hbm_to_vmem [thread:$0]  %s1, 76800, %s49, [#allocation6], 1024, 1024, 64
    $region9: #{tpu_custom_call.1} parent=1 // pred_fallthru
      _
    // Predicated region
    $region10: #{tpu_custom_call.1} parent=1 // pred_check
      _
    $region11: #{tpu_custom_call.1} parent=1 // pred_check_branch
      %56 = sbr.rel (0) target = $region13
    $region12: #{tpu_custom_call.1} parent=1 // pred_region
      %s58 = ssub.s32 128, 128
      %59 = vsyncadd [#allocation6], %s58
      %s61 = sshll.u32 [#allocation7], 4
      %s62 = int_to_ptr.vmem [resolvable:$true] %s61
      %64 = dma.hbm_to_vmem [thread:$0]  %s2, 128, %s62, [#allocation6]
    $region13: #{tpu_custom_call.1} parent=1 // pred_fallthru
      _
    // Predicated region
    $region14: #{tpu_custom_call.1} parent=1 // pred_check
      _
    $region15: #{tpu_custom_call.1} parent=1 // pred_check_branch
      %66 = sbr.rel (0) target = $region17
    $region16: #{tpu_custom_call.1} parent=1 // pred_region
      %s68 = ssub.s32 128, 128
      %69 = vsyncadd [#allocation9], %s68
      %s71 = sshll.u32 [#allocation8], 4
      %s72 = int_to_ptr.vmem [resolvable:$true] %s71
      %74 = dma.hbm_to_vmem [thread:$0]  %s3, 128, %s72, [#allocation9]
    $region17: #{tpu_custom_call.1} parent=1 // pred_fallthru
      _
    // Predicated region
    $region18: #{tpu_custom_call.1} parent=1 // pred_check
      _
    $region19: #{tpu_custom_call.1} parent=1 // pred_check_branch
      %76 = sbr.rel (0) target = $region21
    $region20: #{tpu_custom_call.1} parent=1 // pred_region
      %s78 = ssub.s32 24576, 24576
      %79 = vsyncadd [#allocation9], %s78
      %s80 = sshll.u32 [#allocation10], 4
      %s81 = int_to_ptr.vmem [resolvable:$true] %s80
      %86 = dma.hbm_to_vmem [thread:$0]  %s4, 24576, %s81, [#allocation9], 768, 768, 48
    $region21: #{tpu_custom_call.1} parent=1 // pred_fallthru
      _
    // Predicated region
    $region22: #{tpu_custom_call.1} parent=1 // pred_check
      _
    $region23: #{tpu_custom_call.1} parent=1 // pred_check_branch
      %88 = sbr.rel (0) target = $region25
    $region24: #{tpu_custom_call.1} parent=1 // pred_region
      %s90 = ssub.s32 96, 96
      %91 = vsyncadd [#allocation12], %s90
      %s93 = sshll.u32 [#allocation11], 4
      %s94 = int_to_ptr.vmem [resolvable:$true] %s93
      %96 = dma.hbm_to_vmem [thread:$0]  %s5, 96, %s94, [#allocation12]
    $region25: #{tpu_custom_call.1} parent=1 // pred_fallthru
      _
    // Predicated region
    $region26: #{tpu_custom_call.1} parent=1 // pred_check
      _
    $region27: #{tpu_custom_call.1} parent=1 // pred_check_branch
      %98 = sbr.rel (0) target = $region29
    $region28: #{tpu_custom_call.1} parent=1 // pred_region
      %s100 = ssub.s32 96, 96
      %101 = vsyncadd [#allocation12], %s100
      %s103 = sshll.u32 [#allocation13], 4
      %s104 = int_to_ptr.vmem [resolvable:$true] %s103
      %106 = dma.hbm_to_vmem [thread:$0]  %s6, 96, %s104, [#allocation12]
    $region29: #{tpu_custom_call.1} parent=1 // pred_fallthru
      _
    // Predicated region
    $region30: #{tpu_custom_call.1} parent=1 // pred_check
      _
    $region31: #{tpu_custom_call.1} parent=1 // pred_check_branch
      %108 = sbr.rel (0) target = $region33
    $region32: #{tpu_custom_call.1} parent=1 // pred_region
      %s110 = ssub.s32 9216, 9216
      %111 = vsyncadd [#allocation15], %s110
      %s112 = sshll.u32 [#allocation14], 4
      %s113 = int_to_ptr.vmem [resolvable:$true] %s112
      %118 = dma.hbm_to_vmem [thread:$0]  %s7, 9216, %s113, [#allocation15], 384, 384, 24
    $region33: #{tpu_custom_call.1} parent=1 // pred_fallthru
      _
    // Predicated region
    $region34: #{tpu_custom_call.1} parent=1 // pred_check
      _
    $region35: #{tpu_custom_call.1} parent=1 // pred_check_branch
      %120 = sbr.rel (0) target = $region37
    $region36: #{tpu_custom_call.1} parent=1 // pred_region
      %s122 = ssub.s32 48, 48
      %123 = vsyncadd [#allocation15], %s122
      %s125 = sshll.u32 [#allocation16], 4
      %s126 = int_to_ptr.vmem [resolvable:$true] %s125
      %128 = dma.hbm_to_vmem [thread:$0]  %s8, 48, %s126, [#allocation15]
    $region37: #{tpu_custom_call.1} parent=1 // pred_fallthru
      _
    // Predicated region
    $region38: #{tpu_custom_call.1} parent=1 // pred_check
      _
    $region39: #{tpu_custom_call.1} parent=1 // pred_check_branch
      %130 = sbr.rel (0) target = $region41
    $region40: #{tpu_custom_call.1} parent=1 // pred_region
      %s132 = ssub.s32 48, 48
      %133 = vsyncadd [#allocation18], %s132
      %s135 = sshll.u32 [#allocation17], 4
      %s136 = int_to_ptr.vmem [resolvable:$true] %s135
      %138 = dma.hbm_to_vmem [thread:$0]  %s9, 48, %s136, [#allocation18]
    $region41: #{tpu_custom_call.1} parent=1 // pred_fallthru
      _
    // Predicated region
    $region42: #{tpu_custom_call.1} parent=1 // pred_check
      _
    $region43: #{tpu_custom_call.1} parent=1 // pred_check_branch
      %140 = sbr.rel (0) target = $region45
    $region44: #{tpu_custom_call.1} parent=1 // pred_region
      %s142 = ssub.s32 3072, 3072
      %143 = vsyncadd [#allocation18], %s142
      %s144 = sshll.u32 [#allocation19], 4
      %s145 = int_to_ptr.vmem [resolvable:$true] %s144
      %150 = dma.hbm_to_vmem [thread:$0]  %s10, 3072, %s145, [#allocation18], 256, 256, 16
    $region45: #{tpu_custom_call.1} parent=1 // pred_fallthru
      _
    // Predicated region
    $region46: #{tpu_custom_call.1} parent=1 // pred_check
      _
    $region47: #{tpu_custom_call.1} parent=1 // pred_check_branch
      %152 = sbr.rel (0) target = $region49
    $region48: #{tpu_custom_call.1} parent=1 // pred_region
      %s154 = ssub.s32 32, 32
      %155 = vsyncadd [#allocation21], %s154
      %s157 = sshll.u32 [#allocation20], 4
      %s158 = int_to_ptr.vmem [resolvable:$true] %s157
      %160 = dma.hbm_to_vmem [thread:$0]  %s11, 32, %s158, [#allocation21]
    $region49: #{tpu_custom_call.1} parent=1 // pred_fallthru
      _
    // Predicated region
    $region50: #{tpu_custom_call.1} parent=1 // pred_check
      _
    $region51: #{tpu_custom_call.1} parent=1 // pred_check_branch
      %162 = sbr.rel (0) target = $region53
    $region52: #{tpu_custom_call.1} parent=1 // pred_region
      %s164 = ssub.s32 32, 32
      %165 = vsyncadd [#allocation21], %s164
      %s167 = sshll.u32 [#allocation22], 4
      %s168 = int_to_ptr.vmem [resolvable:$true] %s167
      %170 = dma.hbm_to_vmem [thread:$0]  %s12, 32, %s168, [#allocation21]
    $region53: #{tpu_custom_call.1} parent=1 // pred_fallthru
      _
    // Predicated region
    $region54: #{tpu_custom_call.1} parent=1 // pred_check
      _
    $region55: #{tpu_custom_call.1} parent=1 // pred_check_branch
      %172 = sbr.rel (0) target = $region57
    $region56: #{tpu_custom_call.1} parent=1 // pred_region
      %s174 = ssub.s32 1024, 1024
      %175 = vsyncadd [#allocation24], %s174
      %s176 = sshll.u32 [#allocation23], 4
      %s177 = int_to_ptr.vmem [resolvable:$true] %s176
      %182 = dma.hbm_to_vmem [thread:$0]  %s13, 1024, %s177, [#allocation24], 128, 128, 8
    $region57: #{tpu_custom_call.1} parent=1 // pred_fallthru
      _
    // Predicated region
    $region58: #{tpu_custom_call.1} parent=1 // pred_check
      _
    $region59: #{tpu_custom_call.1} parent=1 // pred_check_branch
      %184 = sbr.rel (0) target = $region61
    $region60: #{tpu_custom_call.1} parent=1 // pred_region
      %s186 = ssub.s32 16, 16
      %187 = vsyncadd [#allocation24], %s186
      %s189 = sshll.u32 [#allocation25], 4
      %s190 = int_to_ptr.vmem [resolvable:$true] %s189
      %192 = dma.hbm_to_vmem [thread:$0]  %s14, 16, %s190, [#allocation24]
    $region61: #{tpu_custom_call.1} parent=1 // pred_fallthru
      _
    // Predicated region
    $region62: #{tpu_custom_call.1} parent=1 // pred_check
      _
    $region63: #{tpu_custom_call.1} parent=1 // pred_check_branch
      %194 = sbr.rel (0) target = $region65
    $region64: #{tpu_custom_call.1} parent=1 // pred_region
      %s196 = ssub.s32 16, 16
      %197 = vsyncadd [#allocation27], %s196
      %s199 = sshll.u32 [#allocation26], 4
      %s200 = int_to_ptr.vmem [resolvable:$true] %s199
      %202 = dma.hbm_to_vmem [thread:$0]  %s15, 16, %s200, [#allocation27]
    $region65: #{tpu_custom_call.1} parent=1 // pred_fallthru
      _
    // Predicated region
    $region66: #{tpu_custom_call.1} parent=1 // pred_check
      _
    $region67: #{tpu_custom_call.1} parent=1 // pred_check_branch
      %204 = sbr.rel (0) target = $region69
    $region68: #{tpu_custom_call.1} parent=1 // pred_region
      %205 = dma.done [#allocation3], 2432
    $region69: #{tpu_custom_call.1} parent=1 // pred_fallthru
      _
    // Predicated region
    $region70: #{tpu_custom_call.1} parent=1 // pred_check
      _
    $region71: #{tpu_custom_call.1} parent=1 // pred_check_branch
      %207 = sbr.rel (0) target = $region73
    $region72: #{tpu_custom_call.1} parent=1 // pred_region
      %208 = dma.done [#allocation6], 76800
    $region73: #{tpu_custom_call.1} parent=1 // pred_fallthru
      _
    // Predicated region
    $region74: #{tpu_custom_call.1} parent=1 // pred_check
      _
    $region75: #{tpu_custom_call.1} parent=1 // pred_check_branch
      %210 = sbr.rel (0) target = $region77
    $region76: #{tpu_custom_call.1} parent=1 // pred_region
      %211 = dma.done [#allocation6], 128
    $region77: #{tpu_custom_call.1} parent=1 // pred_fallthru
      _
    // Predicated region
    $region78: #{tpu_custom_call.1} parent=1 // pred_check
      _
    $region79: #{tpu_custom_call.1} parent=1 // pred_check_branch
      %213 = sbr.rel (0) target = $region81
    $region80: #{tpu_custom_call.1} parent=1 // pred_region
      %214 = dma.done [#allocation9], 128
    $region81: #{tpu_custom_call.1} parent=1 // pred_fallthru
      _
    // Predicated region
    $region82: #{tpu_custom_call.1} parent=1 // pred_check
      _
    $region83: #{tpu_custom_call.1} parent=1 // pred_check_branch
      %216 = sbr.rel (0) target = $region85
    $region84: #{tpu_custom_call.1} parent=1 // pred_region
      %217 = dma.done [#allocation9], 24576
    $region85: #{tpu_custom_call.1} parent=1 // pred_fallthru
      _
    // Predicated region
    $region86: #{tpu_custom_call.1} parent=1 // pred_check
      _
    $region87: #{tpu_custom_call.1} parent=1 // pred_check_branch
      %219 = sbr.rel (0) target = $region89
    $region88: #{tpu_custom_call.1} parent=1 // pred_region
      %220 = dma.done [#allocation12], 96
    $region89: #{tpu_custom_call.1} parent=1 // pred_fallthru
      _
    // Predicated region
    $region90: #{tpu_custom_call.1} parent=1 // pred_check
      _
    $region91: #{tpu_custom_call.1} parent=1 // pred_check_branch
      %222 = sbr.rel (0) target = $region93
    $region92: #{tpu_custom_call.1} parent=1 // pred_region
      %223 = dma.done [#allocation12], 96
    $region93: #{tpu_custom_call.1} parent=1 // pred_fallthru
      _
    // Predicated region
    $region94: #{tpu_custom_call.1} parent=1 // pred_check
      _
    $region95: #{tpu_custom_call.1} parent=1 // pred_check_branch
      %225 = sbr.rel (0) target = $region97
    $region96: #{tpu_custom_call.1} parent=1 // pred_region
      %226 = dma.done [#allocation15], 9216
    $region97: #{tpu_custom_call.1} parent=1 // pred_fallthru
      _
    // Predicated region
    $region98: #{tpu_custom_call.1} parent=1 // pred_check
      _
    $region99: #{tpu_custom_call.1} parent=1 // pred_check_branch
      %228 = sbr.rel (0) target = $region101
    $region100: #{tpu_custom_call.1} parent=1 // pred_region
      %229 = dma.done [#allocation15], 48
    $region101: #{tpu_custom_call.1} parent=1 // pred_fallthru
      _
    // Predicated region
    $region102: #{tpu_custom_call.1} parent=1 // pred_check
      _
    $region103: #{tpu_custom_call.1} parent=1 // pred_check_branch
      %231 = sbr.rel (0) target = $region105
    $region104: #{tpu_custom_call.1} parent=1 // pred_region
      %232 = dma.done [#allocation18], 48
    $region105: #{tpu_custom_call.1} parent=1 // pred_fallthru
      _
    // Predicated region
    $region106: #{tpu_custom_call.1} parent=1 // pred_check
      _
    $region107: #{tpu_custom_call.1} parent=1 // pred_check_branch
      %234 = sbr.rel (0) target = $region109
    $region108: #{tpu_custom_call.1} parent=1 // pred_region
      %235 = dma.done [#allocation18], 3072
    $region109: #{tpu_custom_call.1} parent=1 // pred_fallthru
      _
    // Predicated region
    $region110: #{tpu_custom_call.1} parent=1 // pred_check
      _
    $region111: #{tpu_custom_call.1} parent=1 // pred_check_branch
      %237 = sbr.rel (0) target = $region113
    $region112: #{tpu_custom_call.1} parent=1 // pred_region
      %238 = dma.done [#allocation21], 32
    $region113: #{tpu_custom_call.1} parent=1 // pred_fallthru
      _
    // Predicated region
    $region114: #{tpu_custom_call.1} parent=1 // pred_check
      _
    $region115: #{tpu_custom_call.1} parent=1 // pred_check_branch
      %240 = sbr.rel (0) target = $region117
    $region116: #{tpu_custom_call.1} parent=1 // pred_region
      %241 = dma.done [#allocation21], 32
    $region117: #{tpu_custom_call.1} parent=1 // pred_fallthru
      _
    // Predicated region
    $region118: #{tpu_custom_call.1} parent=1 // pred_check
      _
    $region119: #{tpu_custom_call.1} parent=1 // pred_check_branch
      %243 = sbr.rel (0) target = $region121
    $region120: #{tpu_custom_call.1} parent=1 // pred_region
      %244 = dma.done [#allocation24], 1024
    $region121: #{tpu_custom_call.1} parent=1 // pred_fallthru
      _
    // Predicated region
    $region122: #{tpu_custom_call.1} parent=1 // pred_check
      _
    $region123: #{tpu_custom_call.1} parent=1 // pred_check_branch
      %246 = sbr.rel (0) target = $region125
    $region124: #{tpu_custom_call.1} parent=1 // pred_region
      %247 = dma.done [#allocation24], 16
    $region125: #{tpu_custom_call.1} parent=1 // pred_fallthru
      _
    // Predicated region
    $region126: #{tpu_custom_call.1} parent=1 // pred_check
      _
    $region127: #{tpu_custom_call.1} parent=1 // pred_check_branch
      %249 = sbr.rel (0) target = $region129
    $region128: #{tpu_custom_call.1} parent=1 // pred_region
      %250 = dma.done [#allocation27], 16
    $region129: #{tpu_custom_call.1} parent=1 // pred_fallthru
      _
    %v252 = vld [vmem:[#allocation2] sm:$0xff]
    %v253 = vld [vmem:[#allocation2 + $0x8] sm:$0xff]
    %v254 = vld [vmem:[#allocation2 + $0x10] sm:$0xff]
    %v255 = vld [vmem:[#allocation2 + $0x18] sm:$0xff]
    %v256 = vld [vmem:[#allocation2 + $0x20] sm:$0xff]
    %v257 = vld [vmem:[#allocation2 + $0x28] sm:$0xff]
    %v258 = vld [vmem:[#allocation2 + $0x30] sm:$0xff]
    %v259 = vld [vmem:[#allocation2 + $0x38] sm:$0xff]
    %v260 = vld [vmem:[#allocation2 + $0x40] sm:$0xff]
    %v261 = vld [vmem:[#allocation2 + $0x48] sm:$0xf]
    %v262 = vld [vmem:[#allocation2 + $0x4c] sm:$0xff]
    %v263 = vld [vmem:[#allocation2 + $0x54] sm:$0xff]
    %v264 = vld [vmem:[#allocation2 + $0x5c] sm:$0xff]
    %v265 = vld [vmem:[#allocation2 + $0x64] sm:$0xff]
    %v266 = vld [vmem:[#allocation2 + $0x6c] sm:$0xff]
    %v267 = vld [vmem:[#allocation2 + $0x74] sm:$0xff]
    %v268 = vld [vmem:[#allocation2 + $0x7c] sm:$0xff]
    %v269 = vld [vmem:[#allocation2 + $0x84] sm:$0xff]
    %v270 = vld [vmem:[#allocation2 + $0x8c] sm:$0xff]
    %v271 = vld [vmem:[#allocation2 + $0x94] sm:$0xf]
    %v272 = vld [vmem:[#allocation5] sm:$0xff]
    %v273 = vld [vmem:[#allocation5 + $0x8] sm:$0xff]
    %v274 = vld [vmem:[#allocation5 + $0x10] sm:$0xff]
    %v275 = vld [vmem:[#allocation5 + $0x18] sm:$0xff]
    %v276 = vld [vmem:[#allocation5 + $0x20] sm:$0xff]
    %v277 = vld [vmem:[#allocation5 + $0x28] sm:$0xff]
    %v278 = vld [vmem:[#allocation5 + $0x30] sm:$0xff]
    %v279 = vld [vmem:[#allocation5 + $0x38] sm:$0xff]
    %v280 = vld [vmem:[#allocation5 + $0x40] sm:$0xff]
    %v281 = vld [vmem:[#allocation5 + $0x48] sm:$0xff]
    %v282 = vld [vmem:[#allocation5 + $0x50] sm:$0xff]
    %v283 = vld [vmem:[#allocation5 + $0x58] sm:$0xff]
    %v284 = vld [vmem:[#allocation5 + $0x60] sm:$0xff]
    %v285 = vld [vmem:[#allocation5 + $0x68] sm:$0xff]
    %v286 = vld [vmem:[#allocation5 + $0x70] sm:$0xff]
    %v287 = vld [vmem:[#allocation5 + $0x78] sm:$0xff]
    %v288 = vld [vmem:[#allocation5 + $0x80] sm:$0xff]
    %v289 = vld [vmem:[#allocation5 + $0x88] sm:$0xff]
    %v290 = vld [vmem:[#allocation5 + $0x90] sm:$0xff]
    %v291 = vld [vmem:[#allocation5 + $0x98] sm:$0xff]
    %v292 = vld [vmem:[#allocation5 + $0xa0] sm:$0xff]
    %v293 = vld [vmem:[#allocation5 + $0xa8] sm:$0xff]
    %v294 = vld [vmem:[#allocation5 + $0xb0] sm:$0xff]
    %v295 = vld [vmem:[#allocation5 + $0xb8] sm:$0xff]
    %v296 = vld [vmem:[#allocation5 + $0xc0] sm:$0xff]
    %v297 = vld [vmem:[#allocation5 + $0xc8] sm:$0xff]
    %v298 = vld [vmem:[#allocation5 + $0xd0] sm:$0xff]
    %v299 = vld [vmem:[#allocation5 + $0xd8] sm:$0xff]
    %v300 = vld [vmem:[#allocation5 + $0xe0] sm:$0xff]
    %v301 = vld [vmem:[#allocation5 + $0xe8] sm:$0xff]
    %v302 = vld [vmem:[#allocation5 + $0xf0] sm:$0xff]
    %v303 = vld [vmem:[#allocation5 + $0xf8] sm:$0xff]
    %v304 = vld [vmem:[#allocation5 + $0x100] sm:$0xff]
    %v305 = vld [vmem:[#allocation5 + $0x108] sm:$0xff]
    %v306 = vld [vmem:[#allocation5 + $0x110] sm:$0xff]
    %v307 = vld [vmem:[#allocation5 + $0x118] sm:$0xff]
    %v308 = vld [vmem:[#allocation5 + $0x120] sm:$0xff]
    %v309 = vld [vmem:[#allocation5 + $0x128] sm:$0xff]
    %v310 = vld [vmem:[#allocation5 + $0x130] sm:$0xff]
    %v311 = vld [vmem:[#allocation5 + $0x138] sm:$0xff]
    %v312 = vld [vmem:[#allocation5 + $0x140] sm:$0xff]
    %v313 = vld [vmem:[#allocation5 + $0x148] sm:$0xff]
    %v314 = vld [vmem:[#allocation5 + $0x150] sm:$0xff]
    %v315 = vld [vmem:[#allocation5 + $0x158] sm:$0xff]
    %v316 = vld [vmem:[#allocation5 + $0x160] sm:$0xff]
    %v317 = vld [vmem:[#allocation5 + $0x168] sm:$0xff]
    %v318 = vld [vmem:[#allocation5 + $0x170] sm:$0xff]
    %v319 = vld [vmem:[#allocation5 + $0x178] sm:$0xff]
    %v320 = vld [vmem:[#allocation5 + $0x180] sm:$0xff]
    %v321 = vld [vmem:[#allocation5 + $0x188] sm:$0xff]
    %v322 = vld [vmem:[#allocation5 + $0x190] sm:$0xff]
    %v323 = vld [vmem:[#allocation5 + $0x198] sm:$0xff]
    %v324 = vld [vmem:[#allocation5 + $0x1a0] sm:$0xff]
    %v325 = vld [vmem:[#allocation5 + $0x1a8] sm:$0xff]
    %v326 = vld [vmem:[#allocation5 + $0x1b0] sm:$0xff]
    %v327 = vld [vmem:[#allocation5 + $0x1b8] sm:$0xff]
    %v328 = vld [vmem:[#allocation5 + $0x1c0] sm:$0xff]
    %v329 = vld [vmem:[#allocation5 + $0x1c8] sm:$0xff]
    %v330 = vld [vmem:[#allocation5 + $0x1d0] sm:$0xff]
    %v331 = vld [vmem:[#allocation5 + $0x1d8] sm:$0xff]
    %v332 = vld [vmem:[#allocation5 + $0x1e0] sm:$0xff]
    %v333 = vld [vmem:[#allocation5 + $0x1e8] sm:$0xff]
    %v334 = vld [vmem:[#allocation5 + $0x1f0] sm:$0xff]
    %v335 = vld [vmem:[#allocation5 + $0x1f8] sm:$0xff]
    %v336 = vld [vmem:[#allocation5 + $0x200] sm:$0xff]
    %v337 = vld [vmem:[#allocation5 + $0x208] sm:$0xff]
    %v338 = vld [vmem:[#allocation5 + $0x210] sm:$0xff]
    %v339 = vld [vmem:[#allocation5 + $0x218] sm:$0xff]
    %v340 = vld [vmem:[#allocation5 + $0x220] sm:$0xff]
    %v341 = vld [vmem:[#allocation5 + $0x228] sm:$0xff]
    %v342 = vld [vmem:[#allocation5 + $0x230] sm:$0xff]
    %v343 = vld [vmem:[#allocation5 + $0x238] sm:$0xff]
    %v344 = vld [vmem:[#allocation5 + $0x240] sm:$0xff]
    %v345 = vld [vmem:[#allocation5 + $0x248] sm:$0xff]
    %v346 = vld [vmem:[#allocation5 + $0x250] sm:$0xff]
    %v347 = vld [vmem:[#allocation5 + $0x258] sm:$0xff]
    %v348 = vld [vmem:[#allocation5 + $0x260] sm:$0xff]
    %v349 = vld [vmem:[#allocation5 + $0x268] sm:$0xff]
    %v350 = vld [vmem:[#allocation5 + $0x270] sm:$0xff]
    %v351 = vld [vmem:[#allocation5 + $0x278] sm:$0xff]
    %v352 = vld [vmem:[#allocation5 + $0x280] sm:$0xff]
    %v353 = vld [vmem:[#allocation5 + $0x288] sm:$0xff]
    %v354 = vld [vmem:[#allocation5 + $0x290] sm:$0xff]
    %v355 = vld [vmem:[#allocation5 + $0x298] sm:$0xff]
    %v356 = vld [vmem:[#allocation5 + $0x2a0] sm:$0xff]
    %v357 = vld [vmem:[#allocation5 + $0x2a8] sm:$0xff]
    %v358 = vld [vmem:[#allocation5 + $0x2b0] sm:$0xff]
    %v359 = vld [vmem:[#allocation5 + $0x2b8] sm:$0xff]
    %v360 = vld [vmem:[#allocation5 + $0x2c0] sm:$0xff]
    %v361 = vld [vmem:[#allocation5 + $0x2c8] sm:$0xff]
    %v362 = vld [vmem:[#allocation5 + $0x2d0] sm:$0xff]
    %v363 = vld [vmem:[#allocation5 + $0x2d8] sm:$0xff]
    %v364 = vld [vmem:[#allocation5 + $0x2e0] sm:$0xff]
    %v365 = vld [vmem:[#allocation5 + $0x2e8] sm:$0xff]
    %v366 = vld [vmem:[#allocation5 + $0x2f0] sm:$0xff]
    %v367 = vld [vmem:[#allocation5 + $0x2f8] sm:$0xff]
    %v368 = vld [vmem:[#allocation5 + $0x300] sm:$0xff]
    %v369 = vld [vmem:[#allocation5 + $0x308] sm:$0xff]
    %v370 = vld [vmem:[#allocation5 + $0x310] sm:$0xff]
    %v371 = vld [vmem:[#allocation5 + $0x318] sm:$0xff]
    %v372 = vld [vmem:[#allocation5 + $0x320] sm:$0xff]
    %v373 = vld [vmem:[#allocation5 + $0x328] sm:$0xff]
    %v374 = vld [vmem:[#allocation5 + $0x330] sm:$0xff]
    %v375 = vld [vmem:[#allocation5 + $0x338] sm:$0xff]
    %v376 = vld [vmem:[#allocation5 + $0x340] sm:$0xff]
    %v377 = vld [vmem:[#allocation5 + $0x348] sm:$0xff]
    %v378 = vld [vmem:[#allocation5 + $0x350] sm:$0xff]
    %v379 = vld [vmem:[#allocation5 + $0x358] sm:$0xff]
    %v380 = vld [vmem:[#allocation5 + $0x360] sm:$0xff]
    %v381 = vld [vmem:[#allocation5 + $0x368] sm:$0xff]
    %v382 = vld [vmem:[#allocation5 + $0x370] sm:$0xff]
    %v383 = vld [vmem:[#allocation5 + $0x378] sm:$0xff]
    %v384 = vld [vmem:[#allocation5 + $0x380] sm:$0xff]
    %v385 = vld [vmem:[#allocation5 + $0x388] sm:$0xff]
    %v386 = vld [vmem:[#allocation5 + $0x390] sm:$0xff]
    %v387 = vld [vmem:[#allocation5 + $0x398] sm:$0xff]
    %v388 = vld [vmem:[#allocation5 + $0x3a0] sm:$0xff]
    %v389 = vld [vmem:[#allocation5 + $0x3a8] sm:$0xff]
    %v390 = vld [vmem:[#allocation5 + $0x3b0] sm:$0xff]
    %v391 = vld [vmem:[#allocation5 + $0x3b8] sm:$0xff]
    %v392 = vld [vmem:[#allocation5 + $0x3c0] sm:$0xff]
    %v393 = vld [vmem:[#allocation5 + $0x3c8] sm:$0xff]
    %v394 = vld [vmem:[#allocation5 + $0x3d0] sm:$0xff]
    %v395 = vld [vmem:[#allocation5 + $0x3d8] sm:$0xff]
    %v396 = vld [vmem:[#allocation5 + $0x3e0] sm:$0xff]
    %v397 = vld [vmem:[#allocation5 + $0x3e8] sm:$0xff]
    %v398 = vld [vmem:[#allocation5 + $0x3f0] sm:$0xff]
    %v399 = vld [vmem:[#allocation5 + $0x3f8] sm:$0xff]
    %v400 = vld [vmem:[#allocation5 + $0x400] sm:$0xff]
    %v401 = vld [vmem:[#allocation5 + $0x408] sm:$0xff]
    %v402 = vld [vmem:[#allocation5 + $0x410] sm:$0xff]
    %v403 = vld [vmem:[#allocation5 + $0x418] sm:$0xff]
    %v404 = vld [vmem:[#allocation5 + $0x420] sm:$0xff]
    %v405 = vld [vmem:[#allocation5 + $0x428] sm:$0xff]
    %v406 = vld [vmem:[#allocation5 + $0x430] sm:$0xff]
    %v407 = vld [vmem:[#allocation5 + $0x438] sm:$0xff]
    %v408 = vld [vmem:[#allocation5 + $0x440] sm:$0xff]
    %v409 = vld [vmem:[#allocation5 + $0x448] sm:$0xff]
    %v410 = vld [vmem:[#allocation5 + $0x450] sm:$0xff]
    %v411 = vld [vmem:[#allocation5 + $0x458] sm:$0xff]
    %v412 = vld [vmem:[#allocation5 + $0x460] sm:$0xff]
    %v413 = vld [vmem:[#allocation5 + $0x468] sm:$0xff]
    %v414 = vld [vmem:[#allocation5 + $0x470] sm:$0xff]
    %v415 = vld [vmem:[#allocation5 + $0x478] sm:$0xff]
    %v416 = vld [vmem:[#allocation5 + $0x480] sm:$0xff]
    %v417 = vld [vmem:[#allocation5 + $0x488] sm:$0xff]
    %v418 = vld [vmem:[#allocation5 + $0x490] sm:$0xff]
    %v419 = vld [vmem:[#allocation5 + $0x498] sm:$0xff]
    %v420 = vld [vmem:[#allocation5 + $0x4a0] sm:$0xff]
    %v421 = vld [vmem:[#allocation5 + $0x4a8] sm:$0xff]
    %v422 = vld [vmem:[#allocation5 + $0x4b0] sm:$0xff]
    %v423 = vld [vmem:[#allocation5 + $0x4b8] sm:$0xff]
    %v424 = vld [vmem:[#allocation5 + $0x4c0] sm:$0xff]
    %v425 = vld [vmem:[#allocation5 + $0x4c8] sm:$0xff]
    %v426 = vld [vmem:[#allocation5 + $0x4d0] sm:$0xff]
    %v427 = vld [vmem:[#allocation5 + $0x4d8] sm:$0xff]
    %v428 = vld [vmem:[#allocation5 + $0x4e0] sm:$0xff]
    %v429 = vld [vmem:[#allocation5 + $0x4e8] sm:$0xff]
    %v430 = vld [vmem:[#allocation5 + $0x4f0] sm:$0xff]
    %v431 = vld [vmem:[#allocation5 + $0x4f8] sm:$0xff]
    %v432 = vld [vmem:[#allocation5 + $0x500] sm:$0xff]
    %v433 = vld [vmem:[#allocation5 + $0x508] sm:$0xff]
    %v434 = vld [vmem:[#allocation5 + $0x510] sm:$0xff]
    %v435 = vld [vmem:[#allocation5 + $0x518] sm:$0xff]
    %v436 = vld [vmem:[#allocation5 + $0x520] sm:$0xff]
    %v437 = vld [vmem:[#allocation5 + $0x528] sm:$0xff]
    %v438 = vld [vmem:[#allocation5 + $0x530] sm:$0xff]
    %v439 = vld [vmem:[#allocation5 + $0x538] sm:$0xff]
    %v440 = vld [vmem:[#allocation5 + $0x540] sm:$0xff]
    %v441 = vld [vmem:[#allocation5 + $0x548] sm:$0xff]
    %v442 = vld [vmem:[#allocation5 + $0x550] sm:$0xff]
    %v443 = vld [vmem:[#allocation5 + $0x558] sm:$0xff]
    %v444 = vld [vmem:[#allocation5 + $0x560] sm:$0xff]
    %v445 = vld [vmem:[#allocation5 + $0x568] sm:$0xff]
    %v446 = vld [vmem:[#allocation5 + $0x570] sm:$0xff]
    %v447 = vld [vmem:[#allocation5 + $0x578] sm:$0xff]
    %v448 = vld [vmem:[#allocation5 + $0x580] sm:$0xff]
    %v449 = vld [vmem:[#allocation5 + $0x588] sm:$0xff]
    %v450 = vld [vmem:[#allocation5 + $0x590] sm:$0xff]
    %v451 = vld [vmem:[#allocation5 + $0x598] sm:$0xff]
    %v452 = vld [vmem:[#allocation5 + $0x5a0] sm:$0xff]
    %v453 = vld [vmem:[#allocation5 + $0x5a8] sm:$0xff]
    %v454 = vld [vmem:[#allocation5 + $0x5b0] sm:$0xff]
    %v455 = vld [vmem:[#allocation5 + $0x5b8] sm:$0xff]
    %v456 = vld [vmem:[#allocation5 + $0x5c0] sm:$0xff]
    %v457 = vld [vmem:[#allocation5 + $0x5c8] sm:$0xff]
    %v458 = vld [vmem:[#allocation5 + $0x5d0] sm:$0xff]
    %v459 = vld [vmem:[#allocation5 + $0x5d8] sm:$0xff]
    %v460 = vld [vmem:[#allocation5 + $0x5e0] sm:$0xff]
    %v461 = vld [vmem:[#allocation5 + $0x5e8] sm:$0xff]
    %v462 = vld [vmem:[#allocation5 + $0x5f0] sm:$0xff]
    %v463 = vld [vmem:[#allocation5 + $0x5f8] sm:$0xff]
    %v464 = vld [vmem:[#allocation5 + $0x600] sm:$0xff]
    %v465 = vld [vmem:[#allocation5 + $0x608] sm:$0xff]
    %v466 = vld [vmem:[#allocation5 + $0x610] sm:$0xff]
    %v467 = vld [vmem:[#allocation5 + $0x618] sm:$0xff]
    %v468 = vld [vmem:[#allocation5 + $0x620] sm:$0xff]
    %v469 = vld [vmem:[#allocation5 + $0x628] sm:$0xff]
    %v470 = vld [vmem:[#allocation5 + $0x630] sm:$0xff]
    %v471 = vld [vmem:[#allocation5 + $0x638] sm:$0xff]
    %v472 = vld [vmem:[#allocation5 + $0x640] sm:$0xff]
    %v473 = vld [vmem:[#allocation5 + $0x648] sm:$0xff]
    %v474 = vld [vmem:[#allocation5 + $0x650] sm:$0xff]
    %v475 = vld [vmem:[#allocation5 + $0x658] sm:$0xff]
    %v476 = vld [vmem:[#allocation5 + $0x660] sm:$0xff]
    %v477 = vld [vmem:[#allocation5 + $0x668] sm:$0xff]
    %v478 = vld [vmem:[#allocation5 + $0x670] sm:$0xff]
    %v479 = vld [vmem:[#allocation5 + $0x678] sm:$0xff]
    %v480 = vld [vmem:[#allocation5 + $0x680] sm:$0xff]
    %v481 = vld [vmem:[#allocation5 + $0x688] sm:$0xff]
    %v482 = vld [vmem:[#allocation5 + $0x690] sm:$0xff]
    %v483 = vld [vmem:[#allocation5 + $0x698] sm:$0xff]
    %v484 = vld [vmem:[#allocation5 + $0x6a0] sm:$0xff]
    %v485 = vld [vmem:[#allocation5 + $0x6a8] sm:$0xff]
    %v486 = vld [vmem:[#allocation5 + $0x6b0] sm:$0xff]
    %v487 = vld [vmem:[#allocation5 + $0x6b8] sm:$0xff]
    %v488 = vld [vmem:[#allocation5 + $0x6c0] sm:$0xff]
    %v489 = vld [vmem:[#allocation5 + $0x6c8] sm:$0xff]
    %v490 = vld [vmem:[#allocation5 + $0x6d0] sm:$0xff]
    %v491 = vld [vmem:[#allocation5 + $0x6d8] sm:$0xff]
    %v492 = vld [vmem:[#allocation5 + $0x6e0] sm:$0xff]
    %v493 = vld [vmem:[#allocation5 + $0x6e8] sm:$0xff]
    %v494 = vld [vmem:[#allocation5 + $0x6f0] sm:$0xff]
    %v495 = vld [vmem:[#allocation5 + $0x6f8] sm:$0xff]
    %v496 = vld [vmem:[#allocation5 + $0x700] sm:$0xff]
    %v497 = vld [vmem:[#allocation5 + $0x708] sm:$0xff]
    %v498 = vld [vmem:[#allocation5 + $0x710] sm:$0xff]
    %v499 = vld [vmem:[#allocation5 + $0x718] sm:$0xff]
    %v500 = vld [vmem:[#allocation5 + $0x720] sm:$0xff]
    %v501 = vld [vmem:[#allocation5 + $0x728] sm:$0xff]
    %v502 = vld [vmem:[#allocation5 + $0x730] sm:$0xff]
    %v503 = vld [vmem:[#allocation5 + $0x738] sm:$0xff]
    %v504 = vld [vmem:[#allocation5 + $0x740] sm:$0xff]
    %v505 = vld [vmem:[#allocation5 + $0x748] sm:$0xff]
    %v506 = vld [vmem:[#allocation5 + $0x750] sm:$0xff]
    %v507 = vld [vmem:[#allocation5 + $0x758] sm:$0xff]
    %v508 = vld [vmem:[#allocation5 + $0x760] sm:$0xff]
    %v509 = vld [vmem:[#allocation5 + $0x768] sm:$0xff]
    %v510 = vld [vmem:[#allocation5 + $0x770] sm:$0xff]
    %v511 = vld [vmem:[#allocation5 + $0x778] sm:$0xff]
    %v512 = vld [vmem:[#allocation5 + $0x780] sm:$0xff]
    %v513 = vld [vmem:[#allocation5 + $0x788] sm:$0xff]
    %v514 = vld [vmem:[#allocation5 + $0x790] sm:$0xff]
    %v515 = vld [vmem:[#allocation5 + $0x798] sm:$0xff]
    %v516 = vld [vmem:[#allocation5 + $0x7a0] sm:$0xff]
    %v517 = vld [vmem:[#allocation5 + $0x7a8] sm:$0xff]
    %v518 = vld [vmem:[#allocation5 + $0x7b0] sm:$0xff]
    %v519 = vld [vmem:[#allocation5 + $0x7b8] sm:$0xff]
    %v520 = vld [vmem:[#allocation5 + $0x7c0] sm:$0xff]
    %v521 = vld [vmem:[#allocation5 + $0x7c8] sm:$0xff]
    %v522 = vld [vmem:[#allocation5 + $0x7d0] sm:$0xff]
    %v523 = vld [vmem:[#allocation5 + $0x7d8] sm:$0xff]
    %v524 = vld [vmem:[#allocation5 + $0x7e0] sm:$0xff]
    %v525 = vld [vmem:[#allocation5 + $0x7e8] sm:$0xff]
    %v526 = vld [vmem:[#allocation5 + $0x7f0] sm:$0xff]
    %v527 = vld [vmem:[#allocation5 + $0x7f8] sm:$0xff]
    %v528 = vld [vmem:[#allocation5 + $0x800] sm:$0xff]
    %v529 = vld [vmem:[#allocation5 + $0x808] sm:$0xff]
    %v530 = vld [vmem:[#allocation5 + $0x810] sm:$0xff]
    %v531 = vld [vmem:[#allocation5 + $0x818] sm:$0xff]
    %v532 = vld [vmem:[#allocation5 + $0x820] sm:$0xff]
    %v533 = vld [vmem:[#allocation5 + $0x828] sm:$0xff]
    %v534 = vld [vmem:[#allocation5 + $0x830] sm:$0xff]
    %v535 = vld [vmem:[#allocation5 + $0x838] sm:$0xff]
    %v536 = vld [vmem:[#allocation5 + $0x840] sm:$0xff]
    %v537 = vld [vmem:[#allocation5 + $0x848] sm:$0xff]
    %v538 = vld [vmem:[#allocation5 + $0x850] sm:$0xff]
    %v539 = vld [vmem:[#allocation5 + $0x858] sm:$0xff]
    %v540 = vld [vmem:[#allocation5 + $0x860] sm:$0xff]
    %v541 = vld [vmem:[#allocation5 + $0x868] sm:$0xff]
    %v542 = vld [vmem:[#allocation5 + $0x870] sm:$0xff]
    %v543 = vld [vmem:[#allocation5 + $0x878] sm:$0xff]
    %v544 = vld [vmem:[#allocation5 + $0x880] sm:$0xff]
    %v545 = vld [vmem:[#allocation5 + $0x888] sm:$0xff]
    %v546 = vld [vmem:[#allocation5 + $0x890] sm:$0xff]
    %v547 = vld [vmem:[#allocation5 + $0x898] sm:$0xff]
    %v548 = vld [vmem:[#allocation5 + $0x8a0] sm:$0xff]
    %v549 = vld [vmem:[#allocation5 + $0x8a8] sm:$0xff]
    %v550 = vld [vmem:[#allocation5 + $0x8b0] sm:$0xff]
    %v551 = vld [vmem:[#allocation5 + $0x8b8] sm:$0xff]
    %v552 = vld [vmem:[#allocation5 + $0x8c0] sm:$0xff]
    %v553 = vld [vmem:[#allocation5 + $0x8c8] sm:$0xff]
    %v554 = vld [vmem:[#allocation5 + $0x8d0] sm:$0xff]
    %v555 = vld [vmem:[#allocation5 + $0x8d8] sm:$0xff]
    %v556 = vld [vmem:[#allocation5 + $0x8e0] sm:$0xff]
    %v557 = vld [vmem:[#allocation5 + $0x8e8] sm:$0xff]
    %v558 = vld [vmem:[#allocation5 + $0x8f0] sm:$0xff]
    %v559 = vld [vmem:[#allocation5 + $0x8f8] sm:$0xff]
    %v560 = vld [vmem:[#allocation5 + $0x900] sm:$0xff]
    %v561 = vld [vmem:[#allocation5 + $0x908] sm:$0xff]
    %v562 = vld [vmem:[#allocation5 + $0x910] sm:$0xff]
    %v563 = vld [vmem:[#allocation5 + $0x918] sm:$0xff]
    %v564 = vld [vmem:[#allocation5 + $0x920] sm:$0xff]
    %v565 = vld [vmem:[#allocation5 + $0x928] sm:$0xff]
    %v566 = vld [vmem:[#allocation5 + $0x930] sm:$0xff]
    %v567 = vld [vmem:[#allocation5 + $0x938] sm:$0xff]
    %v568 = vld [vmem:[#allocation5 + $0x940] sm:$0xff]
    %v569 = vld [vmem:[#allocation5 + $0x948] sm:$0xff]
    %v570 = vld [vmem:[#allocation5 + $0x950] sm:$0xff]
    %v571 = vld [vmem:[#allocation5 + $0x958] sm:$0xff]
    %v572 = vld [vmem:[#allocation5 + $0x960] sm:$0xff]
    %v573 = vld [vmem:[#allocation5 + $0x968] sm:$0xff]
    %v574 = vld [vmem:[#allocation5 + $0x970] sm:$0xff]
    %v575 = vld [vmem:[#allocation5 + $0x978] sm:$0xff]
    %v576 = vld [vmem:[#allocation5 + $0x980] sm:$0xff]
    %v577 = vld [vmem:[#allocation5 + $0x988] sm:$0xff]
    %v578 = vld [vmem:[#allocation5 + $0x990] sm:$0xff]
    %v579 = vld [vmem:[#allocation5 + $0x998] sm:$0xff]
    %v580 = vld [vmem:[#allocation5 + $0x9a0] sm:$0xff]
    %v581 = vld [vmem:[#allocation5 + $0x9a8] sm:$0xff]
    %v582 = vld [vmem:[#allocation5 + $0x9b0] sm:$0xff]
    %v583 = vld [vmem:[#allocation5 + $0x9b8] sm:$0xff]
    %v584 = vld [vmem:[#allocation5 + $0x9c0] sm:$0xff]
    %v585 = vld [vmem:[#allocation5 + $0x9c8] sm:$0xff]
    %v586 = vld [vmem:[#allocation5 + $0x9d0] sm:$0xff]
    %v587 = vld [vmem:[#allocation5 + $0x9d8] sm:$0xff]
    %v588 = vld [vmem:[#allocation5 + $0x9e0] sm:$0xff]
    %v589 = vld [vmem:[#allocation5 + $0x9e8] sm:$0xff]
    %v590 = vld [vmem:[#allocation5 + $0x9f0] sm:$0xff]
    %v591 = vld [vmem:[#allocation5 + $0x9f8] sm:$0xff]
    %v592 = vld [vmem:[#allocation5 + $0xa00] sm:$0xff]
    %v593 = vld [vmem:[#allocation5 + $0xa08] sm:$0xff]
    %v594 = vld [vmem:[#allocation5 + $0xa10] sm:$0xff]
    %v595 = vld [vmem:[#allocation5 + $0xa18] sm:$0xff]
    %v596 = vld [vmem:[#allocation5 + $0xa20] sm:$0xff]
    %v597 = vld [vmem:[#allocation5 + $0xa28] sm:$0xff]
    %v598 = vld [vmem:[#allocation5 + $0xa30] sm:$0xff]
    %v599 = vld [vmem:[#allocation5 + $0xa38] sm:$0xff]
    %v600 = vld [vmem:[#allocation5 + $0xa40] sm:$0xff]
    %v601 = vld [vmem:[#allocation5 + $0xa48] sm:$0xff]
    %v602 = vld [vmem:[#allocation5 + $0xa50] sm:$0xff]
    %v603 = vld [vmem:[#allocation5 + $0xa58] sm:$0xff]
    %v604 = vld [vmem:[#allocation5 + $0xa60] sm:$0xff]
    %v605 = vld [vmem:[#allocation5 + $0xa68] sm:$0xff]
    %v606 = vld [vmem:[#allocation5 + $0xa70] sm:$0xff]
    %v607 = vld [vmem:[#allocation5 + $0xa78] sm:$0xff]
    %v608 = vld [vmem:[#allocation5 + $0xa80] sm:$0xff]
    %v609 = vld [vmem:[#allocation5 + $0xa88] sm:$0xff]
    %v610 = vld [vmem:[#allocation5 + $0xa90] sm:$0xff]
    %v611 = vld [vmem:[#allocation5 + $0xa98] sm:$0xff]
    %v612 = vld [vmem:[#allocation5 + $0xaa0] sm:$0xff]
    %v613 = vld [vmem:[#allocation5 + $0xaa8] sm:$0xff]
    %v614 = vld [vmem:[#allocation5 + $0xab0] sm:$0xff]
    %v615 = vld [vmem:[#allocation5 + $0xab8] sm:$0xff]
    %v616 = vld [vmem:[#allocation5 + $0xac0] sm:$0xff]
    %v617 = vld [vmem:[#allocation5 + $0xac8] sm:$0xff]
    %v618 = vld [vmem:[#allocation5 + $0xad0] sm:$0xff]
    %v619 = vld [vmem:[#allocation5 + $0xad8] sm:$0xff]
    %v620 = vld [vmem:[#allocation5 + $0xae0] sm:$0xff]
    %v621 = vld [vmem:[#allocation5 + $0xae8] sm:$0xff]
    %v622 = vld [vmem:[#allocation5 + $0xaf0] sm:$0xff]
    %v623 = vld [vmem:[#allocation5 + $0xaf8] sm:$0xff]
    %v624 = vld [vmem:[#allocation5 + $0xb00] sm:$0xff]
    %v625 = vld [vmem:[#allocation5 + $0xb08] sm:$0xff]
    %v626 = vld [vmem:[#allocation5 + $0xb10] sm:$0xff]
    %v627 = vld [vmem:[#allocation5 + $0xb18] sm:$0xff]
    %v628 = vld [vmem:[#allocation5 + $0xb20] sm:$0xff]
    %v629 = vld [vmem:[#allocation5 + $0xb28] sm:$0xff]
    %v630 = vld [vmem:[#allocation5 + $0xb30] sm:$0xff]
    %v631 = vld [vmem:[#allocation5 + $0xb38] sm:$0xff]
    %v632 = vld [vmem:[#allocation5 + $0xb40] sm:$0xff]
    %v633 = vld [vmem:[#allocation5 + $0xb48] sm:$0xff]
    %v634 = vld [vmem:[#allocation5 + $0xb50] sm:$0xff]
    %v635 = vld [vmem:[#allocation5 + $0xb58] sm:$0xff]
    %v636 = vld [vmem:[#allocation5 + $0xb60] sm:$0xff]
    %v637 = vld [vmem:[#allocation5 + $0xb68] sm:$0xff]
    %v638 = vld [vmem:[#allocation5 + $0xb70] sm:$0xff]
    %v639 = vld [vmem:[#allocation5 + $0xb78] sm:$0xff]
    %v640 = vld [vmem:[#allocation5 + $0xb80] sm:$0xff]
    %v641 = vld [vmem:[#allocation5 + $0xb88] sm:$0xff]
    %v642 = vld [vmem:[#allocation5 + $0xb90] sm:$0xff]
    %v643 = vld [vmem:[#allocation5 + $0xb98] sm:$0xff]
    %v644 = vld [vmem:[#allocation5 + $0xba0] sm:$0xff]
    %v645 = vld [vmem:[#allocation5 + $0xba8] sm:$0xff]
    %v646 = vld [vmem:[#allocation5 + $0xbb0] sm:$0xff]
    %v647 = vld [vmem:[#allocation5 + $0xbb8] sm:$0xff]
    %v648 = vld [vmem:[#allocation5 + $0xbc0] sm:$0xff]
    %v649 = vld [vmem:[#allocation5 + $0xbc8] sm:$0xff]
    %v650 = vld [vmem:[#allocation5 + $0xbd0] sm:$0xff]
    %v651 = vld [vmem:[#allocation5 + $0xbd8] sm:$0xff]
    %v652 = vld [vmem:[#allocation5 + $0xbe0] sm:$0xff]
    %v653 = vld [vmem:[#allocation5 + $0xbe8] sm:$0xff]
    %v654 = vld [vmem:[#allocation5 + $0xbf0] sm:$0xff]
    %v655 = vld [vmem:[#allocation5 + $0xbf8] sm:$0xff]
    %v656 = vld [vmem:[#allocation5 + $0xc00] sm:$0xff]
    %v657 = vld [vmem:[#allocation5 + $0xc08] sm:$0xff]
    %v658 = vld [vmem:[#allocation5 + $0xc10] sm:$0xff]
    %v659 = vld [vmem:[#allocation5 + $0xc18] sm:$0xff]
    %v660 = vld [vmem:[#allocation5 + $0xc20] sm:$0xff]
    %v661 = vld [vmem:[#allocation5 + $0xc28] sm:$0xff]
    %v662 = vld [vmem:[#allocation5 + $0xc30] sm:$0xff]
    %v663 = vld [vmem:[#allocation5 + $0xc38] sm:$0xff]
    %v664 = vld [vmem:[#allocation5 + $0xc40] sm:$0xff]
    %v665 = vld [vmem:[#allocation5 + $0xc48] sm:$0xff]
    %v666 = vld [vmem:[#allocation5 + $0xc50] sm:$0xff]
    %v667 = vld [vmem:[#allocation5 + $0xc58] sm:$0xff]
    %v668 = vld [vmem:[#allocation5 + $0xc60] sm:$0xff]
    %v669 = vld [vmem:[#allocation5 + $0xc68] sm:$0xff]
    %v670 = vld [vmem:[#allocation5 + $0xc70] sm:$0xff]
    %v671 = vld [vmem:[#allocation5 + $0xc78] sm:$0xff]
    %v672 = vld [vmem:[#allocation5 + $0xc80] sm:$0xff]
    %v673 = vld [vmem:[#allocation5 + $0xc88] sm:$0xff]
    %v674 = vld [vmem:[#allocation5 + $0xc90] sm:$0xff]
    %v675 = vld [vmem:[#allocation5 + $0xc98] sm:$0xff]
    %v676 = vld [vmem:[#allocation5 + $0xca0] sm:$0xff]
    %v677 = vld [vmem:[#allocation5 + $0xca8] sm:$0xff]
    %v678 = vld [vmem:[#allocation5 + $0xcb0] sm:$0xff]
    %v679 = vld [vmem:[#allocation5 + $0xcb8] sm:$0xff]
    %v680 = vld [vmem:[#allocation5 + $0xcc0] sm:$0xff]
    %v681 = vld [vmem:[#allocation5 + $0xcc8] sm:$0xff]
    %v682 = vld [vmem:[#allocation5 + $0xcd0] sm:$0xff]
    %v683 = vld [vmem:[#allocation5 + $0xcd8] sm:$0xff]
    %v684 = vld [vmem:[#allocation5 + $0xce0] sm:$0xff]
    %v685 = vld [vmem:[#allocation5 + $0xce8] sm:$0xff]
    %v686 = vld [vmem:[#allocation5 + $0xcf0] sm:$0xff]
    %v687 = vld [vmem:[#allocation5 + $0xcf8] sm:$0xff]
    %v688 = vld [vmem:[#allocation5 + $0xd00] sm:$0xff]
    %v689 = vld [vmem:[#allocation5 + $0xd08] sm:$0xff]
    %v690 = vld [vmem:[#allocation5 + $0xd10] sm:$0xff]
    %v691 = vld [vmem:[#allocation5 + $0xd18] sm:$0xff]
    %v692 = vld [vmem:[#allocation5 + $0xd20] sm:$0xff]
    %v693 = vld [vmem:[#allocation5 + $0xd28] sm:$0xff]
    %v694 = vld [vmem:[#allocation5 + $0xd30] sm:$0xff]
    %v695 = vld [vmem:[#allocation5 + $0xd38] sm:$0xff]
    %v696 = vld [vmem:[#allocation5 + $0xd40] sm:$0xff]
    %v697 = vld [vmem:[#allocation5 + $0xd48] sm:$0xff]
    %v698 = vld [vmem:[#allocation5 + $0xd50] sm:$0xff]
    %v699 = vld [vmem:[#allocation5 + $0xd58] sm:$0xff]
    %v700 = vld [vmem:[#allocation5 + $0xd60] sm:$0xff]
    %v701 = vld [vmem:[#allocation5 + $0xd68] sm:$0xff]
    %v702 = vld [vmem:[#allocation5 + $0xd70] sm:$0xff]
    %v703 = vld [vmem:[#allocation5 + $0xd78] sm:$0xff]
    %v704 = vld [vmem:[#allocation5 + $0xd80] sm:$0xff]
    %v705 = vld [vmem:[#allocation5 + $0xd88] sm:$0xff]
    %v706 = vld [vmem:[#allocation5 + $0xd90] sm:$0xff]
    %v707 = vld [vmem:[#allocation5 + $0xd98] sm:$0xff]
    %v708 = vld [vmem:[#allocation5 + $0xda0] sm:$0xff]
    %v709 = vld [vmem:[#allocation5 + $0xda8] sm:$0xff]
    %v710 = vld [vmem:[#allocation5 + $0xdb0] sm:$0xff]
    %v711 = vld [vmem:[#allocation5 + $0xdb8] sm:$0xff]
    %v712 = vld [vmem:[#allocation5 + $0xdc0] sm:$0xff]
    %v713 = vld [vmem:[#allocation5 + $0xdc8] sm:$0xff]
    %v714 = vld [vmem:[#allocation5 + $0xdd0] sm:$0xff]
    %v715 = vld [vmem:[#allocation5 + $0xdd8] sm:$0xff]
    %v716 = vld [vmem:[#allocation5 + $0xde0] sm:$0xff]
    %v717 = vld [vmem:[#allocation5 + $0xde8] sm:$0xff]
    %v718 = vld [vmem:[#allocation5 + $0xdf0] sm:$0xff]
    %v719 = vld [vmem:[#allocation5 + $0xdf8] sm:$0xff]
    %v720 = vld [vmem:[#allocation5 + $0xe00] sm:$0xff]
    %v721 = vld [vmem:[#allocation5 + $0xe08] sm:$0xff]
    %v722 = vld [vmem:[#allocation5 + $0xe10] sm:$0xff]
    %v723 = vld [vmem:[#allocation5 + $0xe18] sm:$0xff]
    %v724 = vld [vmem:[#allocation5 + $0xe20] sm:$0xff]
    %v725 = vld [vmem:[#allocation5 + $0xe28] sm:$0xff]
    %v726 = vld [vmem:[#allocation5 + $0xe30] sm:$0xff]
    %v727 = vld [vmem:[#allocation5 + $0xe38] sm:$0xff]
    %v728 = vld [vmem:[#allocation5 + $0xe40] sm:$0xff]
    %v729 = vld [vmem:[#allocation5 + $0xe48] sm:$0xff]
    %v730 = vld [vmem:[#allocation5 + $0xe50] sm:$0xff]
    %v731 = vld [vmem:[#allocation5 + $0xe58] sm:$0xff]
    %v732 = vld [vmem:[#allocation5 + $0xe60] sm:$0xff]
    %v733 = vld [vmem:[#allocation5 + $0xe68] sm:$0xff]
    %v734 = vld [vmem:[#allocation5 + $0xe70] sm:$0xff]
    %v735 = vld [vmem:[#allocation5 + $0xe78] sm:$0xff]
    %v736 = vld [vmem:[#allocation5 + $0xe80] sm:$0xff]
    %v737 = vld [vmem:[#allocation5 + $0xe88] sm:$0xff]
    %v738 = vld [vmem:[#allocation5 + $0xe90] sm:$0xff]
    %v739 = vld [vmem:[#allocation5 + $0xe98] sm:$0xff]
    %v740 = vld [vmem:[#allocation5 + $0xea0] sm:$0xff]
    %v741 = vld [vmem:[#allocation5 + $0xea8] sm:$0xff]
    %v742 = vld [vmem:[#allocation5 + $0xeb0] sm:$0xff]
    %v743 = vld [vmem:[#allocation5 + $0xeb8] sm:$0xff]
    %v744 = vld [vmem:[#allocation5 + $0xec0] sm:$0xff]
    %v745 = vld [vmem:[#allocation5 + $0xec8] sm:$0xff]
    %v746 = vld [vmem:[#allocation5 + $0xed0] sm:$0xff]
    %v747 = vld [vmem:[#allocation5 + $0xed8] sm:$0xff]
    %v748 = vld [vmem:[#allocation5 + $0xee0] sm:$0xff]
    %v749 = vld [vmem:[#allocation5 + $0xee8] sm:$0xff]
    %v750 = vld [vmem:[#allocation5 + $0xef0] sm:$0xff]
    %v751 = vld [vmem:[#allocation5 + $0xef8] sm:$0xff]
    %v752 = vld [vmem:[#allocation5 + $0xf00] sm:$0xff]
    %v753 = vld [vmem:[#allocation5 + $0xf08] sm:$0xff]
    %v754 = vld [vmem:[#allocation5 + $0xf10] sm:$0xff]
    %v755 = vld [vmem:[#allocation5 + $0xf18] sm:$0xff]
    %v756 = vld [vmem:[#allocation5 + $0xf20] sm:$0xff]
    %v757 = vld [vmem:[#allocation5 + $0xf28] sm:$0xff]
    %v758 = vld [vmem:[#allocation5 + $0xf30] sm:$0xff]
    %v759 = vld [vmem:[#allocation5 + $0xf38] sm:$0xff]
    %v760 = vld [vmem:[#allocation5 + $0xf40] sm:$0xff]
    %v761 = vld [vmem:[#allocation5 + $0xf48] sm:$0xff]
    %v762 = vld [vmem:[#allocation5 + $0xf50] sm:$0xff]
    %v763 = vld [vmem:[#allocation5 + $0xf58] sm:$0xff]
    %v764 = vld [vmem:[#allocation5 + $0xf60] sm:$0xff]
    %v765 = vld [vmem:[#allocation5 + $0xf68] sm:$0xff]
    %v766 = vld [vmem:[#allocation5 + $0xf70] sm:$0xff]
    %v767 = vld [vmem:[#allocation5 + $0xf78] sm:$0xff]
    %v768 = vld [vmem:[#allocation5 + $0xf80] sm:$0xff]
    %v769 = vld [vmem:[#allocation5 + $0xf88] sm:$0xff]
    %v770 = vld [vmem:[#allocation5 + $0xf90] sm:$0xff]
    %v771 = vld [vmem:[#allocation5 + $0xf98] sm:$0xff]
    %v772 = vld [vmem:[#allocation5 + $0xfa0] sm:$0xff]
    %v773 = vld [vmem:[#allocation5 + $0xfa8] sm:$0xff]
    %v774 = vld [vmem:[#allocation5 + $0xfb0] sm:$0xff]
    %v775 = vld [vmem:[#allocation5 + $0xfb8] sm:$0xff]
    %v776 = vld [vmem:[#allocation5 + $0xfc0] sm:$0xff]
    %v777 = vld [vmem:[#allocation5 + $0xfc8] sm:$0xff]
    %v778 = vld [vmem:[#allocation5 + $0xfd0] sm:$0xff]
    %v779 = vld [vmem:[#allocation5 + $0xfd8] sm:$0xff]
    %v780 = vld [vmem:[#allocation5 + $0xfe0] sm:$0xff]
    %v781 = vld [vmem:[#allocation5 + $0xfe8] sm:$0xff]
    %v782 = vld [vmem:[#allocation5 + $0xff0] sm:$0xff]
    %v783 = vld [vmem:[#allocation5 + $0xff8] sm:$0xff]
    %v784 = vld [vmem:[#allocation5 + $0x1000] sm:$0xff]
    %v785 = vld [vmem:[#allocation5 + $0x1008] sm:$0xff]
    %v786 = vld [vmem:[#allocation5 + $0x1010] sm:$0xff]
    %v787 = vld [vmem:[#allocation5 + $0x1018] sm:$0xff]
    %v788 = vld [vmem:[#allocation5 + $0x1020] sm:$0xff]
    %v789 = vld [vmem:[#allocation5 + $0x1028] sm:$0xff]
    %v790 = vld [vmem:[#allocation5 + $0x1030] sm:$0xff]
    %v791 = vld [vmem:[#allocation5 + $0x1038] sm:$0xff]
    %v792 = vld [vmem:[#allocation5 + $0x1040] sm:$0xff]
    %v793 = vld [vmem:[#allocation5 + $0x1048] sm:$0xff]
    %v794 = vld [vmem:[#allocation5 + $0x1050] sm:$0xff]
    %v795 = vld [vmem:[#allocation5 + $0x1058] sm:$0xff]
    %v796 = vld [vmem:[#allocation5 + $0x1060] sm:$0xff]
    %v797 = vld [vmem:[#allocation5 + $0x1068] sm:$0xff]
    %v798 = vld [vmem:[#allocation5 + $0x1070] sm:$0xff]
    %v799 = vld [vmem:[#allocation5 + $0x1078] sm:$0xff]
    %v800 = vld [vmem:[#allocation5 + $0x1080] sm:$0xff]
    %v801 = vld [vmem:[#allocation5 + $0x1088] sm:$0xff]
    %v802 = vld [vmem:[#allocation5 + $0x1090] sm:$0xff]
    %v803 = vld [vmem:[#allocation5 + $0x1098] sm:$0xff]
    %v804 = vld [vmem:[#allocation5 + $0x10a0] sm:$0xff]
    %v805 = vld [vmem:[#allocation5 + $0x10a8] sm:$0xff]
    %v806 = vld [vmem:[#allocation5 + $0x10b0] sm:$0xff]
    %v807 = vld [vmem:[#allocation5 + $0x10b8] sm:$0xff]
    %v808 = vld [vmem:[#allocation5 + $0x10c0] sm:$0xff]
    %v809 = vld [vmem:[#allocation5 + $0x10c8] sm:$0xff]
    %v810 = vld [vmem:[#allocation5 + $0x10d0] sm:$0xff]
    %v811 = vld [vmem:[#allocation5 + $0x10d8] sm:$0xff]
    %v812 = vld [vmem:[#allocation5 + $0x10e0] sm:$0xff]
    %v813 = vld [vmem:[#allocation5 + $0x10e8] sm:$0xff]
    %v814 = vld [vmem:[#allocation5 + $0x10f0] sm:$0xff]
    %v815 = vld [vmem:[#allocation5 + $0x10f8] sm:$0xff]
    %v816 = vld [vmem:[#allocation5 + $0x1100] sm:$0xff]
    %v817 = vld [vmem:[#allocation5 + $0x1108] sm:$0xff]
    %v818 = vld [vmem:[#allocation5 + $0x1110] sm:$0xff]
    %v819 = vld [vmem:[#allocation5 + $0x1118] sm:$0xff]
    %v820 = vld [vmem:[#allocation5 + $0x1120] sm:$0xff]
    %v821 = vld [vmem:[#allocation5 + $0x1128] sm:$0xff]
    %v822 = vld [vmem:[#allocation5 + $0x1130] sm:$0xff]
    %v823 = vld [vmem:[#allocation5 + $0x1138] sm:$0xff]
    %v824 = vld [vmem:[#allocation5 + $0x1140] sm:$0xff]
    %v825 = vld [vmem:[#allocation5 + $0x1148] sm:$0xff]
    %v826 = vld [vmem:[#allocation5 + $0x1150] sm:$0xff]
    %v827 = vld [vmem:[#allocation5 + $0x1158] sm:$0xff]
    %v828 = vld [vmem:[#allocation5 + $0x1160] sm:$0xff]
    %v829 = vld [vmem:[#allocation5 + $0x1168] sm:$0xff]
    %v830 = vld [vmem:[#allocation5 + $0x1170] sm:$0xff]
    %v831 = vld [vmem:[#allocation5 + $0x1178] sm:$0xff]
    %v832 = vld [vmem:[#allocation5 + $0x1180] sm:$0xff]
    %v833 = vld [vmem:[#allocation5 + $0x1188] sm:$0xff]
    %v834 = vld [vmem:[#allocation5 + $0x1190] sm:$0xff]
    %v835 = vld [vmem:[#allocation5 + $0x1198] sm:$0xff]
    %v836 = vld [vmem:[#allocation5 + $0x11a0] sm:$0xff]
    %v837 = vld [vmem:[#allocation5 + $0x11a8] sm:$0xff]
    %v838 = vld [vmem:[#allocation5 + $0x11b0] sm:$0xff]
    %v839 = vld [vmem:[#allocation5 + $0x11b8] sm:$0xff]
    %v840 = vld [vmem:[#allocation5 + $0x11c0] sm:$0xff]
    %v841 = vld [vmem:[#allocation5 + $0x11c8] sm:$0xff]
    %v842 = vld [vmem:[#allocation5 + $0x11d0] sm:$0xff]
    %v843 = vld [vmem:[#allocation5 + $0x11d8] sm:$0xff]
    %v844 = vld [vmem:[#allocation5 + $0x11e0] sm:$0xff]
    %v845 = vld [vmem:[#allocation5 + $0x11e8] sm:$0xff]
    %v846 = vld [vmem:[#allocation5 + $0x11f0] sm:$0xff]
    %v847 = vld [vmem:[#allocation5 + $0x11f8] sm:$0xff]
    %v848 = vld [vmem:[#allocation5 + $0x1200] sm:$0xff]
    %v849 = vld [vmem:[#allocation5 + $0x1208] sm:$0xff]
    %v850 = vld [vmem:[#allocation5 + $0x1210] sm:$0xff]
    %v851 = vld [vmem:[#allocation5 + $0x1218] sm:$0xff]
    %v852 = vld [vmem:[#allocation5 + $0x1220] sm:$0xff]
    %v853 = vld [vmem:[#allocation5 + $0x1228] sm:$0xff]
    %v854 = vld [vmem:[#allocation5 + $0x1230] sm:$0xff]
    %v855 = vld [vmem:[#allocation5 + $0x1238] sm:$0xff]
    %v856 = vld [vmem:[#allocation5 + $0x1240] sm:$0xff]
    %v857 = vld [vmem:[#allocation5 + $0x1248] sm:$0xff]
    %v858 = vld [vmem:[#allocation5 + $0x1250] sm:$0xff]
    %v859 = vld [vmem:[#allocation5 + $0x1258] sm:$0xff]
    %v860 = vld [vmem:[#allocation5 + $0x1260] sm:$0xff]
    %v861 = vld [vmem:[#allocation5 + $0x1268] sm:$0xff]
    %v862 = vld [vmem:[#allocation5 + $0x1270] sm:$0xff]
    %v863 = vld [vmem:[#allocation5 + $0x1278] sm:$0xff]
    %v864 = vld [vmem:[#allocation5 + $0x1280] sm:$0xff]
    %v865 = vld [vmem:[#allocation5 + $0x1288] sm:$0xff]
    %v866 = vld [vmem:[#allocation5 + $0x1290] sm:$0xff]
    %v867 = vld [vmem:[#allocation5 + $0x1298] sm:$0xff]
    %v868 = vld [vmem:[#allocation5 + $0x12a0] sm:$0xff]
    %v869 = vld [vmem:[#allocation5 + $0x12a8] sm:$0xff]
    %v870 = vld [vmem:[#allocation5 + $0x12b0] sm:$0xff]
    %v871 = vld [vmem:[#allocation5 + $0x12b8] sm:$0xff]
    %v872 = vunpack.c.l.s8.bf16 %v272
    %v873 = vunpack.c.l.s8.bf16 %v273
    %v874 = vunpack.c.l.s8.bf16 %v274
    %v875 = vunpack.c.l.s8.bf16 %v275
    %v876 = vunpack.c.l.s8.bf16 %v276
    %v877 = vunpack.c.l.s8.bf16 %v277
    %v878 = vunpack.c.l.s8.bf16 %v278
    %v879 = vunpack.c.l.s8.bf16 %v279
    %v880 = vunpack.c.h.s8.bf16 %v272
    %v881 = vunpack.c.h.s8.bf16 %v273
    %v882 = vunpack.c.h.s8.bf16 %v274
    %v883 = vunpack.c.h.s8.bf16 %v275
    %v884 = vunpack.c.h.s8.bf16 %v276
    %v885 = vunpack.c.h.s8.bf16 %v277
    %v886 = vunpack.c.h.s8.bf16 %v278
    %v887 = vunpack.c.h.s8.bf16 %v279
    %v888 = vunpack.c.l.s8.bf16 %v280
    %v889 = vunpack.c.l.s8.bf16 %v281
    %v890 = vunpack.c.l.s8.bf16 %v282
    %v891 = vunpack.c.l.s8.bf16 %v283
    %v892 = vunpack.c.l.s8.bf16 %v284
    %v893 = vunpack.c.l.s8.bf16 %v285
    %v894 = vunpack.c.l.s8.bf16 %v286
    %v895 = vunpack.c.l.s8.bf16 %v287
    %v896 = vunpack.c.h.s8.bf16 %v280
    %v897 = vunpack.c.h.s8.bf16 %v281
    %v898 = vunpack.c.h.s8.bf16 %v282
    %v899 = vunpack.c.h.s8.bf16 %v283
    %v900 = vunpack.c.h.s8.bf16 %v284
    %v901 = vunpack.c.h.s8.bf16 %v285
    %v902 = vunpack.c.h.s8.bf16 %v286
    %v903 = vunpack.c.h.s8.bf16 %v287
    %v904 = vunpack.c.l.s8.bf16 %v288
    %v905 = vunpack.c.l.s8.bf16 %v289
    %v906 = vunpack.c.l.s8.bf16 %v290
    %v907 = vunpack.c.l.s8.bf16 %v291
    %v908 = vunpack.c.l.s8.bf16 %v292
    %v909 = vunpack.c.l.s8.bf16 %v293
    %v910 = vunpack.c.l.s8.bf16 %v294
    %v911 = vunpack.c.l.s8.bf16 %v295
    %v912 = vunpack.c.h.s8.bf16 %v288
    %v913 = vunpack.c.h.s8.bf16 %v289
    %v914 = vunpack.c.h.s8.bf16 %v290
    %v915 = vunpack.c.h.s8.bf16 %v291
    %v916 = vunpack.c.h.s8.bf16 %v292
    %v917 = vunpack.c.h.s8.bf16 %v293
    %v918 = vunpack.c.h.s8.bf16 %v294
    %v919 = vunpack.c.h.s8.bf16 %v295
    %v920 = vunpack.c.l.s8.bf16 %v296
    %v921 = vunpack.c.l.s8.bf16 %v297
    %v922 = vunpack.c.l.s8.bf16 %v298
    %v923 = vunpack.c.l.s8.bf16 %v299
    %v924 = vunpack.c.l.s8.bf16 %v300
    %v925 = vunpack.c.l.s8.bf16 %v301
    %v926 = vunpack.c.l.s8.bf16 %v302
    %v927 = vunpack.c.l.s8.bf16 %v303
    %v928 = vunpack.c.h.s8.bf16 %v296
    %v929 = vunpack.c.h.s8.bf16 %v297
    %v930 = vunpack.c.h.s8.bf16 %v298
    %v931 = vunpack.c.h.s8.bf16 %v299
    %v932 = vunpack.c.h.s8.bf16 %v300
    %v933 = vunpack.c.h.s8.bf16 %v301
    %v934 = vunpack.c.h.s8.bf16 %v302
    %v935 = vunpack.c.h.s8.bf16 %v303
    %v936 = vunpack.c.l.s8.bf16 %v304
    %v937 = vunpack.c.l.s8.bf16 %v305
    %v938 = vunpack.c.l.s8.bf16 %v306
    %v939 = vunpack.c.l.s8.bf16 %v307
    %v940 = vunpack.c.l.s8.bf16 %v308
    %v941 = vunpack.c.l.s8.bf16 %v309
    %v942 = vunpack.c.l.s8.bf16 %v310
    %v943 = vunpack.c.l.s8.bf16 %v311
    %v944 = vunpack.c.h.s8.bf16 %v304
    %v945 = vunpack.c.h.s8.bf16 %v305
    %v946 = vunpack.c.h.s8.bf16 %v306
    %v947 = vunpack.c.h.s8.bf16 %v307
    %v948 = vunpack.c.h.s8.bf16 %v308
    %v949 = vunpack.c.h.s8.bf16 %v309
    %v950 = vunpack.c.h.s8.bf16 %v310
    %v951 = vunpack.c.h.s8.bf16 %v311
    %v952 = vunpack.c.l.s8.bf16 %v312
    %v953 = vunpack.c.l.s8.bf16 %v313
    %v954 = vunpack.c.l.s8.bf16 %v314
    %v955 = vunpack.c.l.s8.bf16 %v315
    %v956 = vunpack.c.l.s8.bf16 %v316
    %v957 = vunpack.c.l.s8.bf16 %v317
    %v958 = vunpack.c.l.s8.bf16 %v318
    %v959 = vunpack.c.l.s8.bf16 %v319
    %v960 = vunpack.c.h.s8.bf16 %v312
    %v961 = vunpack.c.h.s8.bf16 %v313
    %v962 = vunpack.c.h.s8.bf16 %v314
    %v963 = vunpack.c.h.s8.bf16 %v315
    %v964 = vunpack.c.h.s8.bf16 %v316
    %v965 = vunpack.c.h.s8.bf16 %v317
    %v966 = vunpack.c.h.s8.bf16 %v318
    %v967 = vunpack.c.h.s8.bf16 %v319
    %v968 = vunpack.c.l.s8.bf16 %v320
    %v969 = vunpack.c.l.s8.bf16 %v321
    %v970 = vunpack.c.l.s8.bf16 %v322
    %v971 = vunpack.c.l.s8.bf16 %v323
    %v972 = vunpack.c.l.s8.bf16 %v324
    %v973 = vunpack.c.l.s8.bf16 %v325
    %v974 = vunpack.c.l.s8.bf16 %v326
    %v975 = vunpack.c.l.s8.bf16 %v327
    %v976 = vunpack.c.h.s8.bf16 %v320
    %v977 = vunpack.c.h.s8.bf16 %v321
    %v978 = vunpack.c.h.s8.bf16 %v322
    %v979 = vunpack.c.h.s8.bf16 %v323
    %v980 = vunpack.c.h.s8.bf16 %v324
    %v981 = vunpack.c.h.s8.bf16 %v325
    %v982 = vunpack.c.h.s8.bf16 %v326
    %v983 = vunpack.c.h.s8.bf16 %v327
    %v984 = vunpack.c.l.s8.bf16 %v328
    %v985 = vunpack.c.l.s8.bf16 %v329
    %v986 = vunpack.c.l.s8.bf16 %v330
    %v987 = vunpack.c.l.s8.bf16 %v331
    %v988 = vunpack.c.l.s8.bf16 %v332
    %v989 = vunpack.c.l.s8.bf16 %v333
    %v990 = vunpack.c.l.s8.bf16 %v334
    %v991 = vunpack.c.l.s8.bf16 %v335
    %v992 = vunpack.c.h.s8.bf16 %v328
    %v993 = vunpack.c.h.s8.bf16 %v329
    %v994 = vunpack.c.h.s8.bf16 %v330
    %v995 = vunpack.c.h.s8.bf16 %v331
    %v996 = vunpack.c.h.s8.bf16 %v332
    %v997 = vunpack.c.h.s8.bf16 %v333
    %v998 = vunpack.c.h.s8.bf16 %v334
    %v999 = vunpack.c.h.s8.bf16 %v335
    %v1000 = vunpack.c.l.s8.bf16 %v336
    %v1001 = vunpack.c.l.s8.bf16 %v337
    %v1002 = vunpack.c.l.s8.bf16 %v338
    %v1003 = vunpack.c.l.s8.bf16 %v339
    %v1004 = vunpack.c.l.s8.bf16 %v340
    %v1005 = vunpack.c.l.s8.bf16 %v341
    %v1006 = vunpack.c.l.s8.bf16 %v342
    %v1007 = vunpack.c.l.s8.bf16 %v343
    %v1008 = vunpack.c.h.s8.bf16 %v336
    %v1009 = vunpack.c.h.s8.bf16 %v337
    %v1010 = vunpack.c.h.s8.bf16 %v338
    %v1011 = vunpack.c.h.s8.bf16 %v339
    %v1012 = vunpack.c.h.s8.bf16 %v340
    %v1013 = vunpack.c.h.s8.bf16 %v341
    %v1014 = vunpack.c.h.s8.bf16 %v342
    %v1015 = vunpack.c.h.s8.bf16 %v343
    %v1016 = vunpack.c.l.s8.bf16 %v344
    %v1017 = vunpack.c.l.s8.bf16 %v345
    %v1018 = vunpack.c.l.s8.bf16 %v346
    %v1019 = vunpack.c.l.s8.bf16 %v347
    %v1020 = vunpack.c.l.s8.bf16 %v348
    %v1021 = vunpack.c.l.s8.bf16 %v349
    %v1022 = vunpack.c.l.s8.bf16 %v350
    %v1023 = vunpack.c.l.s8.bf16 %v351
    %v1024 = vunpack.c.h.s8.bf16 %v344
    %v1025 = vunpack.c.h.s8.bf16 %v345
    %v1026 = vunpack.c.h.s8.bf16 %v346
    %v1027 = vunpack.c.h.s8.bf16 %v347
    %v1028 = vunpack.c.h.s8.bf16 %v348
    %v1029 = vunpack.c.h.s8.bf16 %v349
    %v1030 = vunpack.c.h.s8.bf16 %v350
    %v1031 = vunpack.c.h.s8.bf16 %v351
    %v1032 = vunpack.c.l.s8.bf16 %v352
    %v1033 = vunpack.c.l.s8.bf16 %v353
    %v1034 = vunpack.c.l.s8.bf16 %v354
    %v1035 = vunpack.c.l.s8.bf16 %v355
    %v1036 = vunpack.c.l.s8.bf16 %v356
    %v1037 = vunpack.c.l.s8.bf16 %v357
    %v1038 = vunpack.c.l.s8.bf16 %v358
    %v1039 = vunpack.c.l.s8.bf16 %v359
    %v1040 = vunpack.c.h.s8.bf16 %v352
    %v1041 = vunpack.c.h.s8.bf16 %v353
    %v1042 = vunpack.c.h.s8.bf16 %v354
    %v1043 = vunpack.c.h.s8.bf16 %v355
    %v1044 = vunpack.c.h.s8.bf16 %v356
    %v1045 = vunpack.c.h.s8.bf16 %v357
    %v1046 = vunpack.c.h.s8.bf16 %v358
    %v1047 = vunpack.c.h.s8.bf16 %v359
    %v1048 = vunpack.c.l.s8.bf16 %v360
    %v1049 = vunpack.c.l.s8.bf16 %v361
    %v1050 = vunpack.c.l.s8.bf16 %v362
    %v1051 = vunpack.c.l.s8.bf16 %v363
    %v1052 = vunpack.c.l.s8.bf16 %v364
    %v1053 = vunpack.c.l.s8.bf16 %v365
    %v1054 = vunpack.c.l.s8.bf16 %v366
    %v1055 = vunpack.c.l.s8.bf16 %v367
    %v1056 = vunpack.c.h.s8.bf16 %v360
    %v1057 = vunpack.c.h.s8.bf16 %v361
    %v1058 = vunpack.c.h.s8.bf16 %v362
    %v1059 = vunpack.c.h.s8.bf16 %v363
    %v1060 = vunpack.c.h.s8.bf16 %v364
    %v1061 = vunpack.c.h.s8.bf16 %v365
    %v1062 = vunpack.c.h.s8.bf16 %v366
    %v1063 = vunpack.c.h.s8.bf16 %v367
    %v1064 = vunpack.c.l.s8.bf16 %v368
    %v1065 = vunpack.c.l.s8.bf16 %v369
    %v1066 = vunpack.c.l.s8.bf16 %v370
    %v1067 = vunpack.c.l.s8.bf16 %v371
    %v1068 = vunpack.c.l.s8.bf16 %v372
    %v1069 = vunpack.c.l.s8.bf16 %v373
    %v1070 = vunpack.c.l.s8.bf16 %v374
    %v1071 = vunpack.c.l.s8.bf16 %v375
    %v1072 = vunpack.c.h.s8.bf16 %v368
    %v1073 = vunpack.c.h.s8.bf16 %v369
    %v1074 = vunpack.c.h.s8.bf16 %v370
    %v1075 = vunpack.c.h.s8.bf16 %v371
    %v1076 = vunpack.c.h.s8.bf16 %v372
    %v1077 = vunpack.c.h.s8.bf16 %v373
    %v1078 = vunpack.c.h.s8.bf16 %v374
    %v1079 = vunpack.c.h.s8.bf16 %v375
    %v1080 = vunpack.c.l.s8.bf16 %v376
    %v1081 = vunpack.c.l.s8.bf16 %v377
    %v1082 = vunpack.c.l.s8.bf16 %v378
    %v1083 = vunpack.c.l.s8.bf16 %v379
    %v1084 = vunpack.c.l.s8.bf16 %v380
    %v1085 = vunpack.c.l.s8.bf16 %v381
    %v1086 = vunpack.c.l.s8.bf16 %v382
    %v1087 = vunpack.c.l.s8.bf16 %v383
    %v1088 = vunpack.c.h.s8.bf16 %v376
    %v1089 = vunpack.c.h.s8.bf16 %v377
    %v1090 = vunpack.c.h.s8.bf16 %v378
    %v1091 = vunpack.c.h.s8.bf16 %v379
    %v1092 = vunpack.c.h.s8.bf16 %v380
    %v1093 = vunpack.c.h.s8.bf16 %v381
    %v1094 = vunpack.c.h.s8.bf16 %v382
    %v1095 = vunpack.c.h.s8.bf16 %v383
    %v1096 = vunpack.c.l.s8.bf16 %v384
    %v1097 = vunpack.c.l.s8.bf16 %v385
    %v1098 = vunpack.c.l.s8.bf16 %v386
    %v1099 = vunpack.c.l.s8.bf16 %v387
    %v1100 = vunpack.c.l.s8.bf16 %v388
    %v1101 = vunpack.c.l.s8.bf16 %v389
    %v1102 = vunpack.c.l.s8.bf16 %v390
    %v1103 = vunpack.c.l.s8.bf16 %v391
    %v1104 = vunpack.c.h.s8.bf16 %v384
    %v1105 = vunpack.c.h.s8.bf16 %v385
    %v1106 = vunpack.c.h.s8.bf16 %v386
    %v1107 = vunpack.c.h.s8.bf16 %v387
    %v1108 = vunpack.c.h.s8.bf16 %v388
    %v1109 = vunpack.c.h.s8.bf16 %v389
    %v1110 = vunpack.c.h.s8.bf16 %v390
    %v1111 = vunpack.c.h.s8.bf16 %v391
    %v1112 = vunpack.c.l.s8.bf16 %v392
    %v1113 = vunpack.c.l.s8.bf16 %v393
    %v1114 = vunpack.c.l.s8.bf16 %v394
    %v1115 = vunpack.c.l.s8.bf16 %v395
    %v1116 = vunpack.c.l.s8.bf16 %v396
    %v1117 = vunpack.c.l.s8.bf16 %v397
    %v1118 = vunpack.c.l.s8.bf16 %v398
    %v1119 = vunpack.c.l.s8.bf16 %v399
    %v1120 = vunpack.c.h.s8.bf16 %v392
    %v1121 = vunpack.c.h.s8.bf16 %v393
    %v1122 = vunpack.c.h.s8.bf16 %v394
    %v1123 = vunpack.c.h.s8.bf16 %v395
    %v1124 = vunpack.c.h.s8.bf16 %v396
    %v1125 = vunpack.c.h.s8.bf16 %v397
    %v1126 = vunpack.c.h.s8.bf16 %v398
    %v1127 = vunpack.c.h.s8.bf16 %v399
    %v1128 = vunpack.c.l.s8.bf16 %v400
    %v1129 = vunpack.c.l.s8.bf16 %v401
    %v1130 = vunpack.c.l.s8.bf16 %v402
    %v1131 = vunpack.c.l.s8.bf16 %v403
    %v1132 = vunpack.c.l.s8.bf16 %v404
    %v1133 = vunpack.c.l.s8.bf16 %v405
    %v1134 = vunpack.c.l.s8.bf16 %v406
    %v1135 = vunpack.c.l.s8.bf16 %v407
    %v1136 = vunpack.c.h.s8.bf16 %v400
    %v1137 = vunpack.c.h.s8.bf16 %v401
    %v1138 = vunpack.c.h.s8.bf16 %v402
    %v1139 = vunpack.c.h.s8.bf16 %v403
    %v1140 = vunpack.c.h.s8.bf16 %v404
    %v1141 = vunpack.c.h.s8.bf16 %v405
    %v1142 = vunpack.c.h.s8.bf16 %v406
    %v1143 = vunpack.c.h.s8.bf16 %v407
    %v1144 = vunpack.c.l.s8.bf16 %v408
    %v1145 = vunpack.c.l.s8.bf16 %v409
    %v1146 = vunpack.c.l.s8.bf16 %v410
    %v1147 = vunpack.c.l.s8.bf16 %v411
    %v1148 = vunpack.c.l.s8.bf16 %v412
    %v1149 = vunpack.c.l.s8.bf16 %v413
    %v1150 = vunpack.c.l.s8.bf16 %v414
    %v1151 = vunpack.c.l.s8.bf16 %v415
    %v1152 = vunpack.c.h.s8.bf16 %v408
    %v1153 = vunpack.c.h.s8.bf16 %v409
    %v1154 = vunpack.c.h.s8.bf16 %v410
    %v1155 = vunpack.c.h.s8.bf16 %v411
    %v1156 = vunpack.c.h.s8.bf16 %v412
    %v1157 = vunpack.c.h.s8.bf16 %v413
    %v1158 = vunpack.c.h.s8.bf16 %v414
    %v1159 = vunpack.c.h.s8.bf16 %v415
    %v1160 = vunpack.c.l.s8.bf16 %v416
    %v1161 = vunpack.c.l.s8.bf16 %v417
    %v1162 = vunpack.c.l.s8.bf16 %v418
    %v1163 = vunpack.c.l.s8.bf16 %v419
    %v1164 = vunpack.c.l.s8.bf16 %v420
    %v1165 = vunpack.c.l.s8.bf16 %v421
    %v1166 = vunpack.c.l.s8.bf16 %v422
    %v1167 = vunpack.c.l.s8.bf16 %v423
    %v1168 = vunpack.c.h.s8.bf16 %v416
    %v1169 = vunpack.c.h.s8.bf16 %v417
    %v1170 = vunpack.c.h.s8.bf16 %v418
    %v1171 = vunpack.c.h.s8.bf16 %v419
    %v1172 = vunpack.c.h.s8.bf16 %v420
    %v1173 = vunpack.c.h.s8.bf16 %v421
    %v1174 = vunpack.c.h.s8.bf16 %v422
    %v1175 = vunpack.c.h.s8.bf16 %v423
    %v1176 = vunpack.c.l.s8.bf16 %v424
    %v1177 = vunpack.c.l.s8.bf16 %v425
    %v1178 = vunpack.c.l.s8.bf16 %v426
    %v1179 = vunpack.c.l.s8.bf16 %v427
    %v1180 = vunpack.c.l.s8.bf16 %v428
    %v1181 = vunpack.c.l.s8.bf16 %v429
    %v1182 = vunpack.c.l.s8.bf16 %v430
    %v1183 = vunpack.c.l.s8.bf16 %v431
    %v1184 = vunpack.c.h.s8.bf16 %v424
    %v1185 = vunpack.c.h.s8.bf16 %v425
    %v1186 = vunpack.c.h.s8.bf16 %v426
    %v1187 = vunpack.c.h.s8.bf16 %v427
    %v1188 = vunpack.c.h.s8.bf16 %v428
    %v1189 = vunpack.c.h.s8.bf16 %v429
    %v1190 = vunpack.c.h.s8.bf16 %v430
    %v1191 = vunpack.c.h.s8.bf16 %v431
    %v1192 = vunpack.c.l.s8.bf16 %v432
    %v1193 = vunpack.c.l.s8.bf16 %v433
    %v1194 = vunpack.c.l.s8.bf16 %v434
    %v1195 = vunpack.c.l.s8.bf16 %v435
    %v1196 = vunpack.c.l.s8.bf16 %v436
    %v1197 = vunpack.c.l.s8.bf16 %v437
    %v1198 = vunpack.c.l.s8.bf16 %v438
    %v1199 = vunpack.c.l.s8.bf16 %v439
    %v1200 = vunpack.c.h.s8.bf16 %v432
    %v1201 = vunpack.c.h.s8.bf16 %v433
    %v1202 = vunpack.c.h.s8.bf16 %v434
    %v1203 = vunpack.c.h.s8.bf16 %v435
    %v1204 = vunpack.c.h.s8.bf16 %v436
    %v1205 = vunpack.c.h.s8.bf16 %v437
    %v1206 = vunpack.c.h.s8.bf16 %v438
    %v1207 = vunpack.c.h.s8.bf16 %v439
    %v1208 = vunpack.c.l.s8.bf16 %v440
    %v1209 = vunpack.c.l.s8.bf16 %v441
    %v1210 = vunpack.c.l.s8.bf16 %v442
    %v1211 = vunpack.c.l.s8.bf16 %v443
    %v1212 = vunpack.c.l.s8.bf16 %v444
    %v1213 = vunpack.c.l.s8.bf16 %v445
    %v1214 = vunpack.c.l.s8.bf16 %v446
    %v1215 = vunpack.c.l.s8.bf16 %v447
    %v1216 = vunpack.c.h.s8.bf16 %v440
    %v1217 = vunpack.c.h.s8.bf16 %v441
    %v1218 = vunpack.c.h.s8.bf16 %v442
    %v1219 = vunpack.c.h.s8.bf16 %v443
    %v1220 = vunpack.c.h.s8.bf16 %v444
    %v1221 = vunpack.c.h.s8.bf16 %v445
    %v1222 = vunpack.c.h.s8.bf16 %v446
    %v1223 = vunpack.c.h.s8.bf16 %v447
    %v1224 = vunpack.c.l.s8.bf16 %v448
    %v1225 = vunpack.c.l.s8.bf16 %v449
    %v1226 = vunpack.c.l.s8.bf16 %v450
    %v1227 = vunpack.c.l.s8.bf16 %v451
    %v1228 = vunpack.c.l.s8.bf16 %v452
    %v1229 = vunpack.c.l.s8.bf16 %v453
    %v1230 = vunpack.c.l.s8.bf16 %v454
    %v1231 = vunpack.c.l.s8.bf16 %v455
    %v1232 = vunpack.c.h.s8.bf16 %v448
    %v1233 = vunpack.c.h.s8.bf16 %v449
    %v1234 = vunpack.c.h.s8.bf16 %v450
    %v1235 = vunpack.c.h.s8.bf16 %v451
    %v1236 = vunpack.c.h.s8.bf16 %v452
    %v1237 = vunpack.c.h.s8.bf16 %v453
    %v1238 = vunpack.c.h.s8.bf16 %v454
    %v1239 = vunpack.c.h.s8.bf16 %v455
    %v1240 = vunpack.c.l.s8.bf16 %v456
    %v1241 = vunpack.c.l.s8.bf16 %v457
    %v1242 = vunpack.c.l.s8.bf16 %v458
    %v1243 = vunpack.c.l.s8.bf16 %v459
    %v1244 = vunpack.c.l.s8.bf16 %v460
    %v1245 = vunpack.c.l.s8.bf16 %v461
    %v1246 = vunpack.c.l.s8.bf16 %v462
    %v1247 = vunpack.c.l.s8.bf16 %v463
    %v1248 = vunpack.c.h.s8.bf16 %v456
    %v1249 = vunpack.c.h.s8.bf16 %v457
    %v1250 = vunpack.c.h.s8.bf16 %v458
    %v1251 = vunpack.c.h.s8.bf16 %v459
    %v1252 = vunpack.c.h.s8.bf16 %v460
    %v1253 = vunpack.c.h.s8.bf16 %v461
    %v1254 = vunpack.c.h.s8.bf16 %v462
    %v1255 = vunpack.c.h.s8.bf16 %v463
    %v1256 = vunpack.c.l.s8.bf16 %v464
    %v1257 = vunpack.c.l.s8.bf16 %v465
    %v1258 = vunpack.c.l.s8.bf16 %v466
    %v1259 = vunpack.c.l.s8.bf16 %v467
    %v1260 = vunpack.c.l.s8.bf16 %v468
    %v1261 = vunpack.c.l.s8.bf16 %v469
    %v1262 = vunpack.c.l.s8.bf16 %v470
    %v1263 = vunpack.c.l.s8.bf16 %v471
    %v1264 = vunpack.c.h.s8.bf16 %v464
    %v1265 = vunpack.c.h.s8.bf16 %v465
    %v1266 = vunpack.c.h.s8.bf16 %v466
    %v1267 = vunpack.c.h.s8.bf16 %v467
    %v1268 = vunpack.c.h.s8.bf16 %v468
    %v1269 = vunpack.c.h.s8.bf16 %v469
    %v1270 = vunpack.c.h.s8.bf16 %v470
    %v1271 = vunpack.c.h.s8.bf16 %v471
    %v1272 = vunpack.c.l.s8.bf16 %v472
    %v1273 = vunpack.c.l.s8.bf16 %v473
    %v1274 = vunpack.c.l.s8.bf16 %v474
    %v1275 = vunpack.c.l.s8.bf16 %v475
    %v1276 = vunpack.c.l.s8.bf16 %v476
    %v1277 = vunpack.c.l.s8.bf16 %v477
    %v1278 = vunpack.c.l.s8.bf16 %v478
    %v1279 = vunpack.c.l.s8.bf16 %v479
    %v1280 = vunpack.c.h.s8.bf16 %v472
    %v1281 = vunpack.c.h.s8.bf16 %v473
    %v1282 = vunpack.c.h.s8.bf16 %v474
    %v1283 = vunpack.c.h.s8.bf16 %v475
    %v1284 = vunpack.c.h.s8.bf16 %v476
    %v1285 = vunpack.c.h.s8.bf16 %v477
    %v1286 = vunpack.c.h.s8.bf16 %v478
    %v1287 = vunpack.c.h.s8.bf16 %v479
    %v1288 = vunpack.c.l.s8.bf16 %v480
    %v1289 = vunpack.c.l.s8.bf16 %v481
    %v1290 = vunpack.c.l.s8.bf16 %v482
    %v1291 = vunpack.c.l.s8.bf16 %v483
    %v1292 = vunpack.c.l.s8.bf16 %v484
    %v1293 = vunpack.c.l.s8.bf16 %v485
    %v1294 = vunpack.c.l.s8.bf16 %v486
    %v1295 = vunpack.c.l.s8.bf16 %v487
    %v1296 = vunpack.c.h.s8.bf16 %v480
    %v1297 = vunpack.c.h.s8.bf16 %v481
    %v1298 = vunpack.c.h.s8.bf16 %v482
    %v1299 = vunpack.c.h.s8.bf16 %v483
    %v1300 = vunpack.c.h.s8.bf16 %v484
    %v1301 = vunpack.c.h.s8.bf16 %v485
    %v1302 = vunpack.c.h.s8.bf16 %v486
    %v1303 = vunpack.c.h.s8.bf16 %v487
    %v1304 = vunpack.c.l.s8.bf16 %v488
    %v1305 = vunpack.c.l.s8.bf16 %v489
    %v1306 = vunpack.c.l.s8.bf16 %v490
    %v1307 = vunpack.c.l.s8.bf16 %v491
    %v1308 = vunpack.c.l.s8.bf16 %v492
    %v1309 = vunpack.c.l.s8.bf16 %v493
    %v1310 = vunpack.c.l.s8.bf16 %v494
    %v1311 = vunpack.c.l.s8.bf16 %v495
    %v1312 = vunpack.c.h.s8.bf16 %v488
    %v1313 = vunpack.c.h.s8.bf16 %v489
    %v1314 = vunpack.c.h.s8.bf16 %v490
    %v1315 = vunpack.c.h.s8.bf16 %v491
    %v1316 = vunpack.c.h.s8.bf16 %v492
    %v1317 = vunpack.c.h.s8.bf16 %v493
    %v1318 = vunpack.c.h.s8.bf16 %v494
    %v1319 = vunpack.c.h.s8.bf16 %v495
    %v1320 = vunpack.c.l.s8.bf16 %v496
    %v1321 = vunpack.c.l.s8.bf16 %v497
    %v1322 = vunpack.c.l.s8.bf16 %v498
    %v1323 = vunpack.c.l.s8.bf16 %v499
    %v1324 = vunpack.c.l.s8.bf16 %v500
    %v1325 = vunpack.c.l.s8.bf16 %v501
    %v1326 = vunpack.c.l.s8.bf16 %v502
    %v1327 = vunpack.c.l.s8.bf16 %v503
    %v1328 = vunpack.c.h.s8.bf16 %v496
    %v1329 = vunpack.c.h.s8.bf16 %v497
    %v1330 = vunpack.c.h.s8.bf16 %v498
    %v1331 = vunpack.c.h.s8.bf16 %v499
    %v1332 = vunpack.c.h.s8.bf16 %v500
    %v1333 = vunpack.c.h.s8.bf16 %v501
    %v1334 = vunpack.c.h.s8.bf16 %v502
    %v1335 = vunpack.c.h.s8.bf16 %v503
    %v1336 = vunpack.c.l.s8.bf16 %v504
    %v1337 = vunpack.c.l.s8.bf16 %v505
    %v1338 = vunpack.c.l.s8.bf16 %v506
    %v1339 = vunpack.c.l.s8.bf16 %v507
    %v1340 = vunpack.c.l.s8.bf16 %v508
    %v1341 = vunpack.c.l.s8.bf16 %v509
    %v1342 = vunpack.c.l.s8.bf16 %v510
    %v1343 = vunpack.c.l.s8.bf16 %v511
    %v1344 = vunpack.c.h.s8.bf16 %v504
    %v1345 = vunpack.c.h.s8.bf16 %v505
    %v1346 = vunpack.c.h.s8.bf16 %v506
    %v1347 = vunpack.c.h.s8.bf16 %v507
    %v1348 = vunpack.c.h.s8.bf16 %v508
    %v1349 = vunpack.c.h.s8.bf16 %v509
    %v1350 = vunpack.c.h.s8.bf16 %v510
    %v1351 = vunpack.c.h.s8.bf16 %v511
    %v1352 = vunpack.c.l.s8.bf16 %v512
    %v1353 = vunpack.c.l.s8.bf16 %v513
    %v1354 = vunpack.c.l.s8.bf16 %v514
    %v1355 = vunpack.c.l.s8.bf16 %v515
    %v1356 = vunpack.c.l.s8.bf16 %v516
    %v1357 = vunpack.c.l.s8.bf16 %v517
    %v1358 = vunpack.c.l.s8.bf16 %v518
    %v1359 = vunpack.c.l.s8.bf16 %v519
    %v1360 = vunpack.c.h.s8.bf16 %v512
    %v1361 = vunpack.c.h.s8.bf16 %v513
    %v1362 = vunpack.c.h.s8.bf16 %v514
    %v1363 = vunpack.c.h.s8.bf16 %v515
    %v1364 = vunpack.c.h.s8.bf16 %v516
    %v1365 = vunpack.c.h.s8.bf16 %v517
    %v1366 = vunpack.c.h.s8.bf16 %v518
    %v1367 = vunpack.c.h.s8.bf16 %v519
    %v1368 = vunpack.c.l.s8.bf16 %v520
    %v1369 = vunpack.c.l.s8.bf16 %v521
    %v1370 = vunpack.c.l.s8.bf16 %v522
    %v1371 = vunpack.c.l.s8.bf16 %v523
    %v1372 = vunpack.c.l.s8.bf16 %v524
    %v1373 = vunpack.c.l.s8.bf16 %v525
    %v1374 = vunpack.c.l.s8.bf16 %v526
    %v1375 = vunpack.c.l.s8.bf16 %v527
    %v1376 = vunpack.c.h.s8.bf16 %v520
    %v1377 = vunpack.c.h.s8.bf16 %v521
    %v1378 = vunpack.c.h.s8.bf16 %v522
    %v1379 = vunpack.c.h.s8.bf16 %v523
    %v1380 = vunpack.c.h.s8.bf16 %v524
    %v1381 = vunpack.c.h.s8.bf16 %v525
    %v1382 = vunpack.c.h.s8.bf16 %v526
    %v1383 = vunpack.c.h.s8.bf16 %v527
    %v1384 = vunpack.c.l.s8.bf16 %v528
    %v1385 = vunpack.c.l.s8.bf16 %v529
    %v1386 = vunpack.c.l.s8.bf16 %v530
    %v1387 = vunpack.c.l.s8.bf16 %v531
    %v1388 = vunpack.c.l.s8.bf16 %v532
    %v1389 = vunpack.c.l.s8.bf16 %v533
    %v1390 = vunpack.c.l.s8.bf16 %v534
    %v1391 = vunpack.c.l.s8.bf16 %v535
    %v1392 = vunpack.c.h.s8.bf16 %v528
    %v1393 = vunpack.c.h.s8.bf16 %v529
    %v1394 = vunpack.c.h.s8.bf16 %v530
    %v1395 = vunpack.c.h.s8.bf16 %v531
    %v1396 = vunpack.c.h.s8.bf16 %v532
    %v1397 = vunpack.c.h.s8.bf16 %v533
    %v1398 = vunpack.c.h.s8.bf16 %v534
    %v1399 = vunpack.c.h.s8.bf16 %v535
    %v1400 = vunpack.c.l.s8.bf16 %v536
    %v1401 = vunpack.c.l.s8.bf16 %v537
    %v1402 = vunpack.c.l.s8.bf16 %v538
    %v1403 = vunpack.c.l.s8.bf16 %v539
    %v1404 = vunpack.c.l.s8.bf16 %v540
    %v1405 = vunpack.c.l.s8.bf16 %v541
    %v1406 = vunpack.c.l.s8.bf16 %v542
    %v1407 = vunpack.c.l.s8.bf16 %v543
    %v1408 = vunpack.c.h.s8.bf16 %v536
    %v1409 = vunpack.c.h.s8.bf16 %v537
    %v1410 = vunpack.c.h.s8.bf16 %v538
    %v1411 = vunpack.c.h.s8.bf16 %v539
    %v1412 = vunpack.c.h.s8.bf16 %v540
    %v1413 = vunpack.c.h.s8.bf16 %v541
    %v1414 = vunpack.c.h.s8.bf16 %v542
    %v1415 = vunpack.c.h.s8.bf16 %v543
    %v1416 = vunpack.c.l.s8.bf16 %v544
    %v1417 = vunpack.c.l.s8.bf16 %v545
    %v1418 = vunpack.c.l.s8.bf16 %v546
    %v1419 = vunpack.c.l.s8.bf16 %v547
    %v1420 = vunpack.c.l.s8.bf16 %v548
    %v1421 = vunpack.c.l.s8.bf16 %v549
    %v1422 = vunpack.c.l.s8.bf16 %v550
    %v1423 = vunpack.c.l.s8.bf16 %v551
    %v1424 = vunpack.c.h.s8.bf16 %v544
    %v1425 = vunpack.c.h.s8.bf16 %v545
    %v1426 = vunpack.c.h.s8.bf16 %v546
    %v1427 = vunpack.c.h.s8.bf16 %v547
    %v1428 = vunpack.c.h.s8.bf16 %v548
    %v1429 = vunpack.c.h.s8.bf16 %v549
    %v1430 = vunpack.c.h.s8.bf16 %v550
    %v1431 = vunpack.c.h.s8.bf16 %v551
    %v1432 = vunpack.c.l.s8.bf16 %v552
    %v1433 = vunpack.c.l.s8.bf16 %v553
    %v1434 = vunpack.c.l.s8.bf16 %v554
    %v1435 = vunpack.c.l.s8.bf16 %v555
    %v1436 = vunpack.c.l.s8.bf16 %v556
    %v1437 = vunpack.c.l.s8.bf16 %v557
    %v1438 = vunpack.c.l.s8.bf16 %v558
    %v1439 = vunpack.c.l.s8.bf16 %v559
    %v1440 = vunpack.c.h.s8.bf16 %v552
    %v1441 = vunpack.c.h.s8.bf16 %v553
    %v1442 = vunpack.c.h.s8.bf16 %v554
    %v1443 = vunpack.c.h.s8.bf16 %v555
    %v1444 = vunpack.c.h.s8.bf16 %v556
    %v1445 = vunpack.c.h.s8.bf16 %v557
    %v1446 = vunpack.c.h.s8.bf16 %v558
    %v1447 = vunpack.c.h.s8.bf16 %v559
    %v1448 = vunpack.c.l.s8.bf16 %v560
    %v1449 = vunpack.c.l.s8.bf16 %v561
    %v1450 = vunpack.c.l.s8.bf16 %v562
    %v1451 = vunpack.c.l.s8.bf16 %v563
    %v1452 = vunpack.c.l.s8.bf16 %v564
    %v1453 = vunpack.c.l.s8.bf16 %v565
    %v1454 = vunpack.c.l.s8.bf16 %v566
    %v1455 = vunpack.c.l.s8.bf16 %v567
    %v1456 = vunpack.c.h.s8.bf16 %v560
    %v1457 = vunpack.c.h.s8.bf16 %v561
    %v1458 = vunpack.c.h.s8.bf16 %v562
    %v1459 = vunpack.c.h.s8.bf16 %v563
    %v1460 = vunpack.c.h.s8.bf16 %v564
    %v1461 = vunpack.c.h.s8.bf16 %v565
    %v1462 = vunpack.c.h.s8.bf16 %v566
    %v1463 = vunpack.c.h.s8.bf16 %v567
    %v1464 = vunpack.c.l.s8.bf16 %v568
    %v1465 = vunpack.c.l.s8.bf16 %v569
    %v1466 = vunpack.c.l.s8.bf16 %v570
    %v1467 = vunpack.c.l.s8.bf16 %v571
    %v1468 = vunpack.c.l.s8.bf16 %v572
    %v1469 = vunpack.c.l.s8.bf16 %v573
    %v1470 = vunpack.c.l.s8.bf16 %v574
    %v1471 = vunpack.c.l.s8.bf16 %v575
    %v1472 = vunpack.c.h.s8.bf16 %v568
    %v1473 = vunpack.c.h.s8.bf16 %v569
    %v1474 = vunpack.c.h.s8.bf16 %v570
    %v1475 = vunpack.c.h.s8.bf16 %v571
    %v1476 = vunpack.c.h.s8.bf16 %v572
    %v1477 = vunpack.c.h.s8.bf16 %v573
    %v1478 = vunpack.c.h.s8.bf16 %v574
    %v1479 = vunpack.c.h.s8.bf16 %v575
    %v1480 = vunpack.c.l.s8.bf16 %v576
    %v1481 = vunpack.c.l.s8.bf16 %v577
    %v1482 = vunpack.c.l.s8.bf16 %v578
    %v1483 = vunpack.c.l.s8.bf16 %v579
    %v1484 = vunpack.c.l.s8.bf16 %v580
    %v1485 = vunpack.c.l.s8.bf16 %v581
    %v1486 = vunpack.c.l.s8.bf16 %v582
    %v1487 = vunpack.c.l.s8.bf16 %v583
    %v1488 = vunpack.c.h.s8.bf16 %v576
    %v1489 = vunpack.c.h.s8.bf16 %v577
    %v1490 = vunpack.c.h.s8.bf16 %v578
    %v1491 = vunpack.c.h.s8.bf16 %v579
    %v1492 = vunpack.c.h.s8.bf16 %v580
    %v1493 = vunpack.c.h.s8.bf16 %v581
    %v1494 = vunpack.c.h.s8.bf16 %v582
    %v1495 = vunpack.c.h.s8.bf16 %v583
    %v1496 = vunpack.c.l.s8.bf16 %v584
    %v1497 = vunpack.c.l.s8.bf16 %v585
    %v1498 = vunpack.c.l.s8.bf16 %v586
    %v1499 = vunpack.c.l.s8.bf16 %v587
    %v1500 = vunpack.c.l.s8.bf16 %v588
    %v1501 = vunpack.c.l.s8.bf16 %v589
    %v1502 = vunpack.c.l.s8.bf16 %v590
    %v1503 = vunpack.c.l.s8.bf16 %v591
    %v1504 = vunpack.c.h.s8.bf16 %v584
    %v1505 = vunpack.c.h.s8.bf16 %v585
    %v1506 = vunpack.c.h.s8.bf16 %v586
    %v1507 = vunpack.c.h.s8.bf16 %v587
    %v1508 = vunpack.c.h.s8.bf16 %v588
    %v1509 = vunpack.c.h.s8.bf16 %v589
    %v1510 = vunpack.c.h.s8.bf16 %v590
    %v1511 = vunpack.c.h.s8.bf16 %v591
    %v1512 = vunpack.c.l.s8.bf16 %v592
    %v1513 = vunpack.c.l.s8.bf16 %v593
    %v1514 = vunpack.c.l.s8.bf16 %v594
    %v1515 = vunpack.c.l.s8.bf16 %v595
    %v1516 = vunpack.c.l.s8.bf16 %v596
    %v1517 = vunpack.c.l.s8.bf16 %v597
    %v1518 = vunpack.c.l.s8.bf16 %v598
    %v1519 = vunpack.c.l.s8.bf16 %v599
    %v1520 = vunpack.c.h.s8.bf16 %v592
    %v1521 = vunpack.c.h.s8.bf16 %v593
    %v1522 = vunpack.c.h.s8.bf16 %v594
    %v1523 = vunpack.c.h.s8.bf16 %v595
    %v1524 = vunpack.c.h.s8.bf16 %v596
    %v1525 = vunpack.c.h.s8.bf16 %v597
    %v1526 = vunpack.c.h.s8.bf16 %v598
    %v1527 = vunpack.c.h.s8.bf16 %v599
    %v1528 = vunpack.c.l.s8.bf16 %v600
    %v1529 = vunpack.c.l.s8.bf16 %v601
    %v1530 = vunpack.c.l.s8.bf16 %v602
    %v1531 = vunpack.c.l.s8.bf16 %v603
    %v1532 = vunpack.c.l.s8.bf16 %v604
    %v1533 = vunpack.c.l.s8.bf16 %v605
    %v1534 = vunpack.c.l.s8.bf16 %v606
    %v1535 = vunpack.c.l.s8.bf16 %v607
    %v1536 = vunpack.c.h.s8.bf16 %v600
    %v1537 = vunpack.c.h.s8.bf16 %v601
    %v1538 = vunpack.c.h.s8.bf16 %v602
    %v1539 = vunpack.c.h.s8.bf16 %v603
    %v1540 = vunpack.c.h.s8.bf16 %v604
    %v1541 = vunpack.c.h.s8.bf16 %v605
    %v1542 = vunpack.c.h.s8.bf16 %v606
    %v1543 = vunpack.c.h.s8.bf16 %v607
    %v1544 = vunpack.c.l.s8.bf16 %v608
    %v1545 = vunpack.c.l.s8.bf16 %v609
    %v1546 = vunpack.c.l.s8.bf16 %v610
    %v1547 = vunpack.c.l.s8.bf16 %v611
    %v1548 = vunpack.c.l.s8.bf16 %v612
    %v1549 = vunpack.c.l.s8.bf16 %v613
    %v1550 = vunpack.c.l.s8.bf16 %v614
    %v1551 = vunpack.c.l.s8.bf16 %v615
    %v1552 = vunpack.c.h.s8.bf16 %v608
    %v1553 = vunpack.c.h.s8.bf16 %v609
    %v1554 = vunpack.c.h.s8.bf16 %v610
    %v1555 = vunpack.c.h.s8.bf16 %v611
    %v1556 = vunpack.c.h.s8.bf16 %v612
    %v1557 = vunpack.c.h.s8.bf16 %v613
    %v1558 = vunpack.c.h.s8.bf16 %v614
    %v1559 = vunpack.c.h.s8.bf16 %v615
    %v1560 = vunpack.c.l.s8.bf16 %v616
    %v1561 = vunpack.c.l.s8.bf16 %v617
    %v1562 = vunpack.c.l.s8.bf16 %v618
    %v1563 = vunpack.c.l.s8.bf16 %v619
    %v1564 = vunpack.c.l.s8.bf16 %v620
    %v1565 = vunpack.c.l.s8.bf16 %v621
    %v1566 = vunpack.c.l.s8.bf16 %v622
    %v1567 = vunpack.c.l.s8.bf16 %v623
    %v1568 = vunpack.c.h.s8.bf16 %v616
    %v1569 = vunpack.c.h.s8.bf16 %v617
    %v1570 = vunpack.c.h.s8.bf16 %v618
    %v1571 = vunpack.c.h.s8.bf16 %v619
    %v1572 = vunpack.c.h.s8.bf16 %v620
    %v1573 = vunpack.c.h.s8.bf16 %v621
    %v1574 = vunpack.c.h.s8.bf16 %v622
    %v1575 = vunpack.c.h.s8.bf16 %v623
    %v1576 = vunpack.c.l.s8.bf16 %v624
    %v1577 = vunpack.c.l.s8.bf16 %v625
    %v1578 = vunpack.c.l.s8.bf16 %v626
    %v1579 = vunpack.c.l.s8.bf16 %v627
    %v1580 = vunpack.c.l.s8.bf16 %v628
    %v1581 = vunpack.c.l.s8.bf16 %v629
    %v1582 = vunpack.c.l.s8.bf16 %v630
    %v1583 = vunpack.c.l.s8.bf16 %v631
    %v1584 = vunpack.c.h.s8.bf16 %v624
    %v1585 = vunpack.c.h.s8.bf16 %v625
    %v1586 = vunpack.c.h.s8.bf16 %v626
    %v1587 = vunpack.c.h.s8.bf16 %v627
    %v1588 = vunpack.c.h.s8.bf16 %v628
    %v1589 = vunpack.c.h.s8.bf16 %v629
    %v1590 = vunpack.c.h.s8.bf16 %v630
    %v1591 = vunpack.c.h.s8.bf16 %v631
    %v1592 = vunpack.c.l.s8.bf16 %v632
    %v1593 = vunpack.c.l.s8.bf16 %v633
    %v1594 = vunpack.c.l.s8.bf16 %v634
    %v1595 = vunpack.c.l.s8.bf16 %v635
    %v1596 = vunpack.c.l.s8.bf16 %v636
    %v1597 = vunpack.c.l.s8.bf16 %v637
    %v1598 = vunpack.c.l.s8.bf16 %v638
    %v1599 = vunpack.c.l.s8.bf16 %v639
    %v1600 = vunpack.c.h.s8.bf16 %v632
    %v1601 = vunpack.c.h.s8.bf16 %v633
    %v1602 = vunpack.c.h.s8.bf16 %v634
    %v1603 = vunpack.c.h.s8.bf16 %v635
    %v1604 = vunpack.c.h.s8.bf16 %v636
    %v1605 = vunpack.c.h.s8.bf16 %v637
    %v1606 = vunpack.c.h.s8.bf16 %v638
    %v1607 = vunpack.c.h.s8.bf16 %v639
    %v1608 = vunpack.c.l.s8.bf16 %v640
    %v1609 = vunpack.c.l.s8.bf16 %v641
    %v1610 = vunpack.c.l.s8.bf16 %v642
    %v1611 = vunpack.c.l.s8.bf16 %v643
    %v1612 = vunpack.c.l.s8.bf16 %v644
    %v1613 = vunpack.c.l.s8.bf16 %v645
    %v1614 = vunpack.c.l.s8.bf16 %v646
    %v1615 = vunpack.c.l.s8.bf16 %v647
    %v1616 = vunpack.c.h.s8.bf16 %v640
    %v1617 = vunpack.c.h.s8.bf16 %v641
    %v1618 = vunpack.c.h.s8.bf16 %v642
    %v1619 = vunpack.c.h.s8.bf16 %v643
    %v1620 = vunpack.c.h.s8.bf16 %v644
    %v1621 = vunpack.c.h.s8.bf16 %v645
    %v1622 = vunpack.c.h.s8.bf16 %v646
    %v1623 = vunpack.c.h.s8.bf16 %v647
    %v1624 = vunpack.c.l.s8.bf16 %v648
    %v1625 = vunpack.c.l.s8.bf16 %v649
    %v1626 = vunpack.c.l.s8.bf16 %v650
    %v1627 = vunpack.c.l.s8.bf16 %v651
    %v1628 = vunpack.c.l.s8.bf16 %v652
    %v1629 = vunpack.c.l.s8.bf16 %v653
    %v1630 = vunpack.c.l.s8.bf16 %v654
    %v1631 = vunpack.c.l.s8.bf16 %v655
    %v1632 = vunpack.c.h.s8.bf16 %v648
    %v1633 = vunpack.c.h.s8.bf16 %v649
    %v1634 = vunpack.c.h.s8.bf16 %v650
    %v1635 = vunpack.c.h.s8.bf16 %v651
    %v1636 = vunpack.c.h.s8.bf16 %v652
    %v1637 = vunpack.c.h.s8.bf16 %v653
    %v1638 = vunpack.c.h.s8.bf16 %v654
    %v1639 = vunpack.c.h.s8.bf16 %v655
    %v1640 = vunpack.c.l.s8.bf16 %v656
    %v1641 = vunpack.c.l.s8.bf16 %v657
    %v1642 = vunpack.c.l.s8.bf16 %v658
    %v1643 = vunpack.c.l.s8.bf16 %v659
    %v1644 = vunpack.c.l.s8.bf16 %v660
    %v1645 = vunpack.c.l.s8.bf16 %v661
    %v1646 = vunpack.c.l.s8.bf16 %v662
    %v1647 = vunpack.c.l.s8.bf16 %v663
    %v1648 = vunpack.c.h.s8.bf16 %v656
    %v1649 = vunpack.c.h.s8.bf16 %v657
    %v1650 = vunpack.c.h.s8.bf16 %v658
    %v1651 = vunpack.c.h.s8.bf16 %v659
    %v1652 = vunpack.c.h.s8.bf16 %v660
    %v1653 = vunpack.c.h.s8.bf16 %v661
    %v1654 = vunpack.c.h.s8.bf16 %v662
    %v1655 = vunpack.c.h.s8.bf16 %v663
    %v1656 = vunpack.c.l.s8.bf16 %v664
    %v1657 = vunpack.c.l.s8.bf16 %v665
    %v1658 = vunpack.c.l.s8.bf16 %v666
    %v1659 = vunpack.c.l.s8.bf16 %v667
    %v1660 = vunpack.c.l.s8.bf16 %v668
    %v1661 = vunpack.c.l.s8.bf16 %v669
    %v1662 = vunpack.c.l.s8.bf16 %v670
    %v1663 = vunpack.c.l.s8.bf16 %v671
    %v1664 = vunpack.c.h.s8.bf16 %v664
    %v1665 = vunpack.c.h.s8.bf16 %v665
    %v1666 = vunpack.c.h.s8.bf16 %v666
    %v1667 = vunpack.c.h.s8.bf16 %v667
    %v1668 = vunpack.c.h.s8.bf16 %v668
    %v1669 = vunpack.c.h.s8.bf16 %v669
    %v1670 = vunpack.c.h.s8.bf16 %v670
    %v1671 = vunpack.c.h.s8.bf16 %v671
    %v1672 = vunpack.c.l.s8.bf16 %v672
    %v1673 = vunpack.c.l.s8.bf16 %v673
    %v1674 = vunpack.c.l.s8.bf16 %v674
    %v1675 = vunpack.c.l.s8.bf16 %v675
    %v1676 = vunpack.c.l.s8.bf16 %v676
    %v1677 = vunpack.c.l.s8.bf16 %v677
    %v1678 = vunpack.c.l.s8.bf16 %v678
    %v1679 = vunpack.c.l.s8.bf16 %v679
    %v1680 = vunpack.c.h.s8.bf16 %v672
    %v1681 = vunpack.c.h.s8.bf16 %v673
    %v1682 = vunpack.c.h.s8.bf16 %v674
    %v1683 = vunpack.c.h.s8.bf16 %v675
    %v1684 = vunpack.c.h.s8.bf16 %v676
    %v1685 = vunpack.c.h.s8.bf16 %v677
    %v1686 = vunpack.c.h.s8.bf16 %v678
    %v1687 = vunpack.c.h.s8.bf16 %v679
    %v1688 = vunpack.c.l.s8.bf16 %v680
    %v1689 = vunpack.c.l.s8.bf16 %v681
    %v1690 = vunpack.c.l.s8.bf16 %v682
    %v1691 = vunpack.c.l.s8.bf16 %v683
    %v1692 = vunpack.c.l.s8.bf16 %v684
    %v1693 = vunpack.c.l.s8.bf16 %v685
    %v1694 = vunpack.c.l.s8.bf16 %v686
    %v1695 = vunpack.c.l.s8.bf16 %v687
    %v1696 = vunpack.c.h.s8.bf16 %v680
    %v1697 = vunpack.c.h.s8.bf16 %v681
    %v1698 = vunpack.c.h.s8.bf16 %v682
    %v1699 = vunpack.c.h.s8.bf16 %v683
    %v1700 = vunpack.c.h.s8.bf16 %v684
    %v1701 = vunpack.c.h.s8.bf16 %v685
    %v1702 = vunpack.c.h.s8.bf16 %v686
    %v1703 = vunpack.c.h.s8.bf16 %v687
    %v1704 = vunpack.c.l.s8.bf16 %v688
    %v1705 = vunpack.c.l.s8.bf16 %v689
    %v1706 = vunpack.c.l.s8.bf16 %v690
    %v1707 = vunpack.c.l.s8.bf16 %v691
    %v1708 = vunpack.c.l.s8.bf16 %v692
    %v1709 = vunpack.c.l.s8.bf16 %v693
    %v1710 = vunpack.c.l.s8.bf16 %v694
    %v1711 = vunpack.c.l.s8.bf16 %v695
    %v1712 = vunpack.c.h.s8.bf16 %v688
    %v1713 = vunpack.c.h.s8.bf16 %v689
    %v1714 = vunpack.c.h.s8.bf16 %v690
    %v1715 = vunpack.c.h.s8.bf16 %v691
    %v1716 = vunpack.c.h.s8.bf16 %v692
    %v1717 = vunpack.c.h.s8.bf16 %v693
    %v1718 = vunpack.c.h.s8.bf16 %v694
    %v1719 = vunpack.c.h.s8.bf16 %v695
    %v1720 = vunpack.c.l.s8.bf16 %v696
    %v1721 = vunpack.c.l.s8.bf16 %v697
    %v1722 = vunpack.c.l.s8.bf16 %v698
    %v1723 = vunpack.c.l.s8.bf16 %v699
    %v1724 = vunpack.c.l.s8.bf16 %v700
    %v1725 = vunpack.c.l.s8.bf16 %v701
    %v1726 = vunpack.c.l.s8.bf16 %v702
    %v1727 = vunpack.c.l.s8.bf16 %v703
    %v1728 = vunpack.c.h.s8.bf16 %v696
    %v1729 = vunpack.c.h.s8.bf16 %v697
    %v1730 = vunpack.c.h.s8.bf16 %v698
    %v1731 = vunpack.c.h.s8.bf16 %v699
    %v1732 = vunpack.c.h.s8.bf16 %v700
    %v1733 = vunpack.c.h.s8.bf16 %v701
    %v1734 = vunpack.c.h.s8.bf16 %v702
    %v1735 = vunpack.c.h.s8.bf16 %v703
    %v1736 = vunpack.c.l.s8.bf16 %v704
    %v1737 = vunpack.c.l.s8.bf16 %v705
    %v1738 = vunpack.c.l.s8.bf16 %v706
    %v1739 = vunpack.c.l.s8.bf16 %v707
    %v1740 = vunpack.c.l.s8.bf16 %v708
    %v1741 = vunpack.c.l.s8.bf16 %v709
    %v1742 = vunpack.c.l.s8.bf16 %v710
    %v1743 = vunpack.c.l.s8.bf16 %v711
    %v1744 = vunpack.c.h.s8.bf16 %v704
    %v1745 = vunpack.c.h.s8.bf16 %v705
    %v1746 = vunpack.c.h.s8.bf16 %v706
    %v1747 = vunpack.c.h.s8.bf16 %v707
    %v1748 = vunpack.c.h.s8.bf16 %v708
    %v1749 = vunpack.c.h.s8.bf16 %v709
    %v1750 = vunpack.c.h.s8.bf16 %v710
    %v1751 = vunpack.c.h.s8.bf16 %v711
    %v1752 = vunpack.c.l.s8.bf16 %v712
    %v1753 = vunpack.c.l.s8.bf16 %v713
    %v1754 = vunpack.c.l.s8.bf16 %v714
    %v1755 = vunpack.c.l.s8.bf16 %v715
    %v1756 = vunpack.c.l.s8.bf16 %v716
    %v1757 = vunpack.c.l.s8.bf16 %v717
    %v1758 = vunpack.c.l.s8.bf16 %v718
    %v1759 = vunpack.c.l.s8.bf16 %v719
    %v1760 = vunpack.c.h.s8.bf16 %v712
    %v1761 = vunpack.c.h.s8.bf16 %v713
    %v1762 = vunpack.c.h.s8.bf16 %v714
    %v1763 = vunpack.c.h.s8.bf16 %v715
    %v1764 = vunpack.c.h.s8.bf16 %v716
    %v1765 = vunpack.c.h.s8.bf16 %v717
    %v1766 = vunpack.c.h.s8.bf16 %v718
    %v1767 = vunpack.c.h.s8.bf16 %v719
    %v1768 = vunpack.c.l.s8.bf16 %v720
    %v1769 = vunpack.c.l.s8.bf16 %v721
    %v1770 = vunpack.c.l.s8.bf16 %v722
    %v1771 = vunpack.c.l.s8.bf16 %v723
    %v1772 = vunpack.c.l.s8.bf16 %v724
    %v1773 = vunpack.c.l.s8.bf16 %v725
    %v1774 = vunpack.c.l.s8.bf16 %v726
    %v1775 = vunpack.c.l.s8.bf16 %v727
    %v1776 = vunpack.c.h.s8.bf16 %v720
    %v1777 = vunpack.c.h.s8.bf16 %v721
    %v1778 = vunpack.c.h.s8.bf16 %v722
    %v1779 = vunpack.c.h.s8.bf16 %v723
    %v1780 = vunpack.c.h.s8.bf16 %v724
    %v1781 = vunpack.c.h.s8.bf16 %v725
    %v1782 = vunpack.c.h.s8.bf16 %v726
    %v1783 = vunpack.c.h.s8.bf16 %v727
    %v1784 = vunpack.c.l.s8.bf16 %v728
    %v1785 = vunpack.c.l.s8.bf16 %v729
    %v1786 = vunpack.c.l.s8.bf16 %v730
    %v1787 = vunpack.c.l.s8.bf16 %v731
    %v1788 = vunpack.c.l.s8.bf16 %v732
    %v1789 = vunpack.c.l.s8.bf16 %v733
    %v1790 = vunpack.c.l.s8.bf16 %v734
    %v1791 = vunpack.c.l.s8.bf16 %v735
    %v1792 = vunpack.c.h.s8.bf16 %v728
    %v1793 = vunpack.c.h.s8.bf16 %v729
    %v1794 = vunpack.c.h.s8.bf16 %v730
    %v1795 = vunpack.c.h.s8.bf16 %v731
    %v1796 = vunpack.c.h.s8.bf16 %v732
    %v1797 = vunpack.c.h.s8.bf16 %v733
    %v1798 = vunpack.c.h.s8.bf16 %v734
    %v1799 = vunpack.c.h.s8.bf16 %v735
    %v1800 = vunpack.c.l.s8.bf16 %v736
    %v1801 = vunpack.c.l.s8.bf16 %v737
    %v1802 = vunpack.c.l.s8.bf16 %v738
    %v1803 = vunpack.c.l.s8.bf16 %v739
    %v1804 = vunpack.c.l.s8.bf16 %v740
    %v1805 = vunpack.c.l.s8.bf16 %v741
    %v1806 = vunpack.c.l.s8.bf16 %v742
    %v1807 = vunpack.c.l.s8.bf16 %v743
    %v1808 = vunpack.c.h.s8.bf16 %v736
    %v1809 = vunpack.c.h.s8.bf16 %v737
    %v1810 = vunpack.c.h.s8.bf16 %v738
    %v1811 = vunpack.c.h.s8.bf16 %v739
    %v1812 = vunpack.c.h.s8.bf16 %v740
    %v1813 = vunpack.c.h.s8.bf16 %v741
    %v1814 = vunpack.c.h.s8.bf16 %v742
    %v1815 = vunpack.c.h.s8.bf16 %v743
    %v1816 = vunpack.c.l.s8.bf16 %v744
    %v1817 = vunpack.c.l.s8.bf16 %v745
    %v1818 = vunpack.c.l.s8.bf16 %v746
    %v1819 = vunpack.c.l.s8.bf16 %v747
    %v1820 = vunpack.c.l.s8.bf16 %v748
    %v1821 = vunpack.c.l.s8.bf16 %v749
    %v1822 = vunpack.c.l.s8.bf16 %v750
    %v1823 = vunpack.c.l.s8.bf16 %v751
    %v1824 = vunpack.c.h.s8.bf16 %v744
    %v1825 = vunpack.c.h.s8.bf16 %v745
    %v1826 = vunpack.c.h.s8.bf16 %v746
    %v1827 = vunpack.c.h.s8.bf16 %v747
    %v1828 = vunpack.c.h.s8.bf16 %v748
    %v1829 = vunpack.c.h.s8.bf16 %v749
    %v1830 = vunpack.c.h.s8.bf16 %v750
    %v1831 = vunpack.c.h.s8.bf16 %v751
    %v1832 = vunpack.c.l.s8.bf16 %v752
    %v1833 = vunpack.c.l.s8.bf16 %v753
    %v1834 = vunpack.c.l.s8.bf16 %v754
    %v1835 = vunpack.c.l.s8.bf16 %v755
    %v1836 = vunpack.c.l.s8.bf16 %v756
    %v1837 = vunpack.c.l.s8.bf16 %v757
    %v1838 = vunpack.c.l.s8.bf16 %v758
    %v1839 = vunpack.c.l.s8.bf16 %v759
    %v1840 = vunpack.c.h.s8.bf16 %v752
    %v1841 = vunpack.c.h.s8.bf16 %v753
    %v1842 = vunpack.c.h.s8.bf16 %v754
    %v1843 = vunpack.c.h.s8.bf16 %v755
    %v1844 = vunpack.c.h.s8.bf16 %v756
    %v1845 = vunpack.c.h.s8.bf16 %v757
    %v1846 = vunpack.c.h.s8.bf16 %v758
    %v1847 = vunpack.c.h.s8.bf16 %v759
    %v1848 = vunpack.c.l.s8.bf16 %v760
    %v1849 = vunpack.c.l.s8.bf16 %v761
    %v1850 = vunpack.c.l.s8.bf16 %v762
    %v1851 = vunpack.c.l.s8.bf16 %v763
    %v1852 = vunpack.c.l.s8.bf16 %v764
    %v1853 = vunpack.c.l.s8.bf16 %v765
    %v1854 = vunpack.c.l.s8.bf16 %v766
    %v1855 = vunpack.c.l.s8.bf16 %v767
    %v1856 = vunpack.c.h.s8.bf16 %v760
    %v1857 = vunpack.c.h.s8.bf16 %v761
    %v1858 = vunpack.c.h.s8.bf16 %v762
    %v1859 = vunpack.c.h.s8.bf16 %v763
    %v1860 = vunpack.c.h.s8.bf16 %v764
    %v1861 = vunpack.c.h.s8.bf16 %v765
    %v1862 = vunpack.c.h.s8.bf16 %v766
    %v1863 = vunpack.c.h.s8.bf16 %v767
    %v1864 = vunpack.c.l.s8.bf16 %v768
    %v1865 = vunpack.c.l.s8.bf16 %v769
    %v1866 = vunpack.c.l.s8.bf16 %v770
    %v1867 = vunpack.c.l.s8.bf16 %v771
    %v1868 = vunpack.c.l.s8.bf16 %v772
    %v1869 = vunpack.c.l.s8.bf16 %v773
    %v1870 = vunpack.c.l.s8.bf16 %v774
    %v1871 = vunpack.c.l.s8.bf16 %v775
    %v1872 = vunpack.c.h.s8.bf16 %v768
    %v1873 = vunpack.c.h.s8.bf16 %v769
    %v1874 = vunpack.c.h.s8.bf16 %v770
    %v1875 = vunpack.c.h.s8.bf16 %v771
    %v1876 = vunpack.c.h.s8.bf16 %v772
    %v1877 = vunpack.c.h.s8.bf16 %v773
    %v1878 = vunpack.c.h.s8.bf16 %v774
    %v1879 = vunpack.c.h.s8.bf16 %v775
    %v1880 = vunpack.c.l.s8.bf16 %v776
    %v1881 = vunpack.c.l.s8.bf16 %v777
    %v1882 = vunpack.c.l.s8.bf16 %v778
    %v1883 = vunpack.c.l.s8.bf16 %v779
    %v1884 = vunpack.c.l.s8.bf16 %v780
    %v1885 = vunpack.c.l.s8.bf16 %v781
    %v1886 = vunpack.c.l.s8.bf16 %v782
    %v1887 = vunpack.c.l.s8.bf16 %v783
    %v1888 = vunpack.c.h.s8.bf16 %v776
    %v1889 = vunpack.c.h.s8.bf16 %v777
    %v1890 = vunpack.c.h.s8.bf16 %v778
    %v1891 = vunpack.c.h.s8.bf16 %v779
    %v1892 = vunpack.c.h.s8.bf16 %v780
    %v1893 = vunpack.c.h.s8.bf16 %v781
    %v1894 = vunpack.c.h.s8.bf16 %v782
    %v1895 = vunpack.c.h.s8.bf16 %v783
    %v1896 = vunpack.c.l.s8.bf16 %v784
    %v1897 = vunpack.c.l.s8.bf16 %v785
    %v1898 = vunpack.c.l.s8.bf16 %v786
    %v1899 = vunpack.c.l.s8.bf16 %v787
    %v1900 = vunpack.c.l.s8.bf16 %v788
    %v1901 = vunpack.c.l.s8.bf16 %v789
    %v1902 = vunpack.c.l.s8.bf16 %v790
    %v1903 = vunpack.c.l.s8.bf16 %v791
    %v1904 = vunpack.c.h.s8.bf16 %v784
    %v1905 = vunpack.c.h.s8.bf16 %v785
    %v1906 = vunpack.c.h.s8.bf16 %v786
    %v1907 = vunpack.c.h.s8.bf16 %v787
    %v1908 = vunpack.c.h.s8.bf16 %v788
    %v1909 = vunpack.c.h.s8.bf16 %v789
    %v1910 = vunpack.c.h.s8.bf16 %v790
    %v1911 = vunpack.c.h.s8.bf16 %v791
    %v1912 = vunpack.c.l.s8.bf16 %v792
    %v1913 = vunpack.c.l.s8.bf16 %v793
    %v1914 = vunpack.c.l.s8.bf16 %v794
    %v1915 = vunpack.c.l.s8.bf16 %v795
    %v1916 = vunpack.c.l.s8.bf16 %v796
    %v1917 = vunpack.c.l.s8.bf16 %v797
    %v1918 = vunpack.c.l.s8.bf16 %v798
    %v1919 = vunpack.c.l.s8.bf16 %v799
    %v1920 = vunpack.c.h.s8.bf16 %v792
    %v1921 = vunpack.c.h.s8.bf16 %v793
    %v1922 = vunpack.c.h.s8.bf16 %v794
    %v1923 = vunpack.c.h.s8.bf16 %v795
    %v1924 = vunpack.c.h.s8.bf16 %v796
    %v1925 = vunpack.c.h.s8.bf16 %v797
    %v1926 = vunpack.c.h.s8.bf16 %v798
    %v1927 = vunpack.c.h.s8.bf16 %v799
    %v1928 = vunpack.c.l.s8.bf16 %v800
    %v1929 = vunpack.c.l.s8.bf16 %v801
    %v1930 = vunpack.c.l.s8.bf16 %v802
    %v1931 = vunpack.c.l.s8.bf16 %v803
    %v1932 = vunpack.c.l.s8.bf16 %v804
    %v1933 = vunpack.c.l.s8.bf16 %v805
    %v1934 = vunpack.c.l.s8.bf16 %v806
    %v1935 = vunpack.c.l.s8.bf16 %v807
    %v1936 = vunpack.c.h.s8.bf16 %v800
    %v1937 = vunpack.c.h.s8.bf16 %v801
    %v1938 = vunpack.c.h.s8.bf16 %v802
    %v1939 = vunpack.c.h.s8.bf16 %v803
    %v1940 = vunpack.c.h.s8.bf16 %v804
    %v1941 = vunpack.c.h.s8.bf16 %v805
    %v1942 = vunpack.c.h.s8.bf16 %v806
    %v1943 = vunpack.c.h.s8.bf16 %v807
    %v1944 = vunpack.c.l.s8.bf16 %v808
    %v1945 = vunpack.c.l.s8.bf16 %v809
    %v1946 = vunpack.c.l.s8.bf16 %v810
    %v1947 = vunpack.c.l.s8.bf16 %v811
    %v1948 = vunpack.c.l.s8.bf16 %v812
    %v1949 = vunpack.c.l.s8.bf16 %v813
    %v1950 = vunpack.c.l.s8.bf16 %v814
    %v1951 = vunpack.c.l.s8.bf16 %v815
    %v1952 = vunpack.c.h.s8.bf16 %v808
    %v1953 = vunpack.c.h.s8.bf16 %v809
    %v1954 = vunpack.c.h.s8.bf16 %v810
    %v1955 = vunpack.c.h.s8.bf16 %v811
    %v1956 = vunpack.c.h.s8.bf16 %v812
    %v1957 = vunpack.c.h.s8.bf16 %v813
    %v1958 = vunpack.c.h.s8.bf16 %v814
    %v1959 = vunpack.c.h.s8.bf16 %v815
    %v1960 = vunpack.c.l.s8.bf16 %v816
    %v1961 = vunpack.c.l.s8.bf16 %v817
    %v1962 = vunpack.c.l.s8.bf16 %v818
    %v1963 = vunpack.c.l.s8.bf16 %v819
    %v1964 = vunpack.c.l.s8.bf16 %v820
    %v1965 = vunpack.c.l.s8.bf16 %v821
    %v1966 = vunpack.c.l.s8.bf16 %v822
    %v1967 = vunpack.c.l.s8.bf16 %v823
    %v1968 = vunpack.c.h.s8.bf16 %v816
    %v1969 = vunpack.c.h.s8.bf16 %v817
    %v1970 = vunpack.c.h.s8.bf16 %v818
    %v1971 = vunpack.c.h.s8.bf16 %v819
    %v1972 = vunpack.c.h.s8.bf16 %v820
    %v1973 = vunpack.c.h.s8.bf16 %v821
    %v1974 = vunpack.c.h.s8.bf16 %v822
    %v1975 = vunpack.c.h.s8.bf16 %v823
    %v1976 = vunpack.c.l.s8.bf16 %v824
    %v1977 = vunpack.c.l.s8.bf16 %v825
    %v1978 = vunpack.c.l.s8.bf16 %v826
    %v1979 = vunpack.c.l.s8.bf16 %v827
    %v1980 = vunpack.c.l.s8.bf16 %v828
    %v1981 = vunpack.c.l.s8.bf16 %v829
    %v1982 = vunpack.c.l.s8.bf16 %v830
    %v1983 = vunpack.c.l.s8.bf16 %v831
    %v1984 = vunpack.c.h.s8.bf16 %v824
    %v1985 = vunpack.c.h.s8.bf16 %v825
    %v1986 = vunpack.c.h.s8.bf16 %v826
    %v1987 = vunpack.c.h.s8.bf16 %v827
    %v1988 = vunpack.c.h.s8.bf16 %v828
    %v1989 = vunpack.c.h.s8.bf16 %v829
    %v1990 = vunpack.c.h.s8.bf16 %v830
    %v1991 = vunpack.c.h.s8.bf16 %v831
    %v1992 = vunpack.c.l.s8.bf16 %v832
    %v1993 = vunpack.c.l.s8.bf16 %v833
    %v1994 = vunpack.c.l.s8.bf16 %v834
    %v1995 = vunpack.c.l.s8.bf16 %v835
    %v1996 = vunpack.c.l.s8.bf16 %v836
    %v1997 = vunpack.c.l.s8.bf16 %v837
    %v1998 = vunpack.c.l.s8.bf16 %v838
    %v1999 = vunpack.c.l.s8.bf16 %v839
    %v2000 = vunpack.c.h.s8.bf16 %v832
    %v2001 = vunpack.c.h.s8.bf16 %v833
    %v2002 = vunpack.c.h.s8.bf16 %v834
    %v2003 = vunpack.c.h.s8.bf16 %v835
    %v2004 = vunpack.c.h.s8.bf16 %v836
    %v2005 = vunpack.c.h.s8.bf16 %v837
    %v2006 = vunpack.c.h.s8.bf16 %v838
    %v2007 = vunpack.c.h.s8.bf16 %v839
    %v2008 = vunpack.c.l.s8.bf16 %v840
    %v2009 = vunpack.c.l.s8.bf16 %v841
    %v2010 = vunpack.c.l.s8.bf16 %v842
    %v2011 = vunpack.c.l.s8.bf16 %v843
    %v2012 = vunpack.c.l.s8.bf16 %v844
    %v2013 = vunpack.c.l.s8.bf16 %v845
    %v2014 = vunpack.c.l.s8.bf16 %v846
    %v2015 = vunpack.c.l.s8.bf16 %v847
    %v2016 = vunpack.c.h.s8.bf16 %v840
    %v2017 = vunpack.c.h.s8.bf16 %v841
    %v2018 = vunpack.c.h.s8.bf16 %v842
    %v2019 = vunpack.c.h.s8.bf16 %v843
    %v2020 = vunpack.c.h.s8.bf16 %v844
    %v2021 = vunpack.c.h.s8.bf16 %v845
    %v2022 = vunpack.c.h.s8.bf16 %v846
    %v2023 = vunpack.c.h.s8.bf16 %v847
    %v2024 = vunpack.c.l.s8.bf16 %v848
    %v2025 = vunpack.c.l.s8.bf16 %v849
    %v2026 = vunpack.c.l.s8.bf16 %v850
    %v2027 = vunpack.c.l.s8.bf16 %v851
    %v2028 = vunpack.c.l.s8.bf16 %v852
    %v2029 = vunpack.c.l.s8.bf16 %v853
    %v2030 = vunpack.c.l.s8.bf16 %v854
    %v2031 = vunpack.c.l.s8.bf16 %v855
    %v2032 = vunpack.c.h.s8.bf16 %v848
    %v2033 = vunpack.c.h.s8.bf16 %v849
    %v2034 = vunpack.c.h.s8.bf16 %v850
    %v2035 = vunpack.c.h.s8.bf16 %v851
    %v2036 = vunpack.c.h.s8.bf16 %v852
    %v2037 = vunpack.c.h.s8.bf16 %v853
    %v2038 = vunpack.c.h.s8.bf16 %v854
    %v2039 = vunpack.c.h.s8.bf16 %v855
    %v2040 = vunpack.c.l.s8.bf16 %v856
    %v2041 = vunpack.c.l.s8.bf16 %v857
    %v2042 = vunpack.c.l.s8.bf16 %v858
    %v2043 = vunpack.c.l.s8.bf16 %v859
    %v2044 = vunpack.c.l.s8.bf16 %v860
    %v2045 = vunpack.c.l.s8.bf16 %v861
    %v2046 = vunpack.c.l.s8.bf16 %v862
    %v2047 = vunpack.c.l.s8.bf16 %v863
    %v2048 = vunpack.c.h.s8.bf16 %v856
    %v2049 = vunpack.c.h.s8.bf16 %v857
    %v2050 = vunpack.c.h.s8.bf16 %v858
    %v2051 = vunpack.c.h.s8.bf16 %v859
    %v2052 = vunpack.c.h.s8.bf16 %v860
    %v2053 = vunpack.c.h.s8.bf16 %v861
    %v2054 = vunpack.c.h.s8.bf16 %v862
    %v2055 = vunpack.c.h.s8.bf16 %v863
    %v2056 = vunpack.c.l.s8.bf16 %v864
    %v2057 = vunpack.c.l.s8.bf16 %v865
    %v2058 = vunpack.c.l.s8.bf16 %v866
    %v2059 = vunpack.c.l.s8.bf16 %v867
    %v2060 = vunpack.c.l.s8.bf16 %v868
    %v2061 = vunpack.c.l.s8.bf16 %v869
    %v2062 = vunpack.c.l.s8.bf16 %v870
    %v2063 = vunpack.c.l.s8.bf16 %v871
    %v2064 = vunpack.c.h.s8.bf16 %v864
    %v2065 = vunpack.c.h.s8.bf16 %v865
    %v2066 = vunpack.c.h.s8.bf16 %v866
    %v2067 = vunpack.c.h.s8.bf16 %v867
    %v2068 = vunpack.c.h.s8.bf16 %v868
    %v2069 = vunpack.c.h.s8.bf16 %v869
    %v2070 = vunpack.c.h.s8.bf16 %v870
    %v2071 = vunpack.c.h.s8.bf16 %v871
    %v2092 = vunpack.c.l.b16 %v252
    %v2093 = vunpack.c.h.b16 %v252
    %v2094 = vunpack.c.l.b16 %v253
    %v2095 = vunpack.c.h.b16 %v253
    %v2096 = vunpack.c.l.b16 %v254
    %v2097 = vunpack.c.h.b16 %v254
    %v2098 = vunpack.c.l.b16 %v255
    %v2099 = vunpack.c.h.b16 %v255
    %v2100 = vunpack.c.l.b16 %v256
    %v2101 = vunpack.c.h.b16 %v256
    %v2102 = vunpack.c.l.b16 %v257
    %v2103 = vunpack.c.h.b16 %v257
    %v2104 = vunpack.c.l.b16 %v258
    %v2105 = vunpack.c.h.b16 %v258
    %v2106 = vunpack.c.l.b16 %v259
    %v2107 = vunpack.c.h.b16 %v259
    %v2108 = vunpack.c.l.b16 %v260
    %v2109 = vunpack.c.h.b16 %v260
    %v2110 = vunpack.c.l.b16 %v261
    %v2111 = vunpack.c.l.b16 %v262
    %v2112 = vunpack.c.h.b16 %v262
    %v2113 = vunpack.c.l.b16 %v263
    %v2114 = vunpack.c.h.b16 %v263
    %v2115 = vunpack.c.l.b16 %v264
    %v2116 = vunpack.c.h.b16 %v264
    %v2117 = vunpack.c.l.b16 %v265
    %v2118 = vunpack.c.h.b16 %v265
    %v2119 = vunpack.c.l.b16 %v266
    %v2120 = vunpack.c.h.b16 %v266
    %v2121 = vunpack.c.l.b16 %v267
    %v2122 = vunpack.c.h.b16 %v267
    %v2123 = vunpack.c.l.b16 %v268
    %v2124 = vunpack.c.h.b16 %v268
    %v2125 = vunpack.c.l.b16 %v269
    %v2126 = vunpack.c.h.b16 %v269
    %v2127 = vunpack.c.l.b16 %v270
    %v2128 = vunpack.c.h.b16 %v270
    %v2129 = vunpack.c.l.b16 %v271
    %v2130 = vpack.c.b16 %v2111, %v2092
    %v2131 = vpack.c.b16 %v2112, %v2093
    %v2132 = vpack.c.b16 %v2113, %v2094
    %v2133 = vpack.c.b16 %v2114, %v2095
    %v2134 = vpack.c.b16 %v2115, %v2096
    %v2135 = vpack.c.b16 %v2116, %v2097
    %v2136 = vpack.c.b16 %v2117, %v2098
    %v2137 = vpack.c.b16 %v2118, %v2099
    %v2138 = vpack.c.b16 %v2119, %v2100
    %v2139 = vpack.c.b16 %v2120, %v2101
    %v2140 = vpack.c.b16 %v2121, %v2102
    %v2141 = vpack.c.b16 %v2122, %v2103
    %v2142 = vpack.c.b16 %v2123, %v2104
    %v2143 = vpack.c.b16 %v2124, %v2105
    %v2144 = vpack.c.b16 %v2125, %v2106
    %v2145 = vpack.c.b16 %v2126, %v2107
    %v2146 = vpack.c.b16 %v2127, %v2108
    %v2147 = vpack.c.b16 %v2128, %v2109
    %v2148 = vpack.c.b16 %v2129, %v2110
    %vm2167 = vcmask 785408
    %v2169 = vsel %vm2167, %v2148, 0
    %2171 = vmatprep.subr.bf16.mxu0 %v873
    %2172 = vmatpush1.bf16.msra.mxu0 %v872
    %2173 = vmatprep.subr.bf16.mxu0 %v881
    %2174 = vmatpush1.bf16.msra.mxu0 %v880
    %2175 = vmatprep.subr.bf16.mxu0 %v889
    %2176 = vmatpush1.bf16.msra.mxu0 %v888
    %2177 = vmatprep.subr.bf16.mxu0 %v897
    %2178 = vmatpush1.bf16.msra.mxu0 %v896
    %2179 = vmatprep.subr.bf16.mxu0 %v905
    %2180 = vmatpush1.bf16.msra.mxu0 %v904
    %2181 = vmatprep.subr.bf16.mxu0 %v913
    %2182 = vmatpush1.bf16.msra.mxu0 %v912
    %2183 = vmatprep.subr.bf16.mxu0 %v921
    %2184 = vmatpush1.bf16.msra.mxu0 %v920
    %2185 = vmatprep.subr.bf16.mxu0 %v929
    %2186 = vmatpush1.bf16.msra.mxu0 %v928
    %2187 = vmatprep.subr.bf16.mxu0 %v937
    %2188 = vmatpush1.bf16.msra.mxu0 %v936
    %2189 = vmatprep.subr.bf16.mxu0 %v945
    %2190 = vmatpush1.bf16.msra.mxu0 %v944
    %2191 = vmatprep.subr.bf16.mxu0 %v953
    %2192 = vmatpush1.bf16.msra.mxu0 %v952
    %2193 = vmatprep.subr.bf16.mxu0 %v961
    %2194 = vmatpush1.bf16.msra.mxu0 %v960
    %2195 = vmatprep.subr.bf16.mxu0 %v969
    %2196 = vmatpush1.bf16.msra.mxu0 %v968
    %2197 = vmatprep.subr.bf16.mxu0 %v977
    %2198 = vmatpush1.bf16.msra.mxu0 %v976
    %2199 = vmatprep.subr.bf16.mxu0 %v985
    %2200 = vmatpush1.bf16.msra.mxu0 %v984
    %2201 = vmatprep.subr.bf16.mxu0 %v993
    %2202 = vmatpush1.bf16.msra.mxu0 %v992
    %2203 = vmatprep.mubr.bf16.mxu0 %v2131
    %2204 = vmatmul.mubr.bf16.gmra.mrb[0].mxu0 %v2130
    %v2205 = vpop.f32.mrb[0].mxu0
    %v2206 = vadd.f32 0.0, %v2205
    %v2207 = vpop.f32.mrb[0].mxu0
    %v2208 = vadd.f32 0.0, %v2207
    %v2209 = vpop.f32.mrb[0].mxu0
    %v2210 = vadd.f32 0.0, %v2209
    %v2211 = vpop.f32.mrb[0].mxu0
    %v2212 = vadd.f32 0.0, %v2211
    %2213 = vdwg.mxu0
    %2214 = vmatprep.subr.bf16.mxu0 %v1001
    %2215 = vmatpush1.bf16.msra.mxu0 %v1000
    %2216 = vmatprep.subr.bf16.mxu0 %v1009
    %2217 = vmatpush1.bf16.msra.mxu0 %v1008
    %2218 = vmatprep.subr.bf16.mxu0 %v1017
    %2219 = vmatpush1.bf16.msra.mxu0 %v1016
    %2220 = vmatprep.subr.bf16.mxu0 %v1025
    %2221 = vmatpush1.bf16.msra.mxu0 %v1024
    %2222 = vmatprep.subr.bf16.mxu0 %v1033
    %2223 = vmatpush1.bf16.msra.mxu0 %v1032
    %2224 = vmatprep.subr.bf16.mxu0 %v1041
    %2225 = vmatpush1.bf16.msra.mxu0 %v1040
    %2226 = vmatprep.subr.bf16.mxu0 %v1049
    %2227 = vmatpush1.bf16.msra.mxu0 %v1048
    %2228 = vmatprep.subr.bf16.mxu0 %v1057
    %2229 = vmatpush1.bf16.msra.mxu0 %v1056
    %2230 = vmatprep.subr.bf16.mxu0 %v1065
    %2231 = vmatpush1.bf16.msra.mxu0 %v1064
    %2232 = vmatprep.subr.bf16.mxu0 %v1073
    %2233 = vmatpush1.bf16.msra.mxu0 %v1072
    %2234 = vmatprep.subr.bf16.mxu0 %v1081
    %2235 = vmatpush1.bf16.msra.mxu0 %v1080
    %2236 = vmatprep.subr.bf16.mxu0 %v1089
    %2237 = vmatpush1.bf16.msra.mxu0 %v1088
    %2238 = vmatprep.subr.bf16.mxu0 %v1097
    %2239 = vmatpush1.bf16.msra.mxu0 %v1096
    %2240 = vmatprep.subr.bf16.mxu0 %v1105
    %2241 = vmatpush1.bf16.msra.mxu0 %v1104
    %2242 = vmatprep.subr.bf16.mxu0 %v1113
    %2243 = vmatpush1.bf16.msra.mxu0 %v1112
    %2244 = vmatprep.subr.bf16.mxu0 %v1121
    %2245 = vmatpush1.bf16.msra.mxu0 %v1120
    %2246 = vmatprep.mubr.bf16.mxu0 %v2133
    %2247 = vmatmul.mubr.bf16.gmra.mrb[0].mxu0 %v2132
    %v2248 = vpop.f32.mrb[0].mxu0
    %v2249 = vadd.f32 %v2206, %v2248
    %v2250 = vpop.f32.mrb[0].mxu0
    %v2251 = vadd.f32 %v2208, %v2250
    %v2252 = vpop.f32.mrb[0].mxu0
    %v2253 = vadd.f32 %v2210, %v2252
    %v2254 = vpop.f32.mrb[0].mxu0
    %v2255 = vadd.f32 %v2212, %v2254
    %2256 = vdwg.mxu0
    %2257 = vmatprep.subr.bf16.mxu0 %v1129
    %2258 = vmatpush1.bf16.msra.mxu0 %v1128
    %2259 = vmatprep.subr.bf16.mxu0 %v1137
    %2260 = vmatpush1.bf16.msra.mxu0 %v1136
    %2261 = vmatprep.subr.bf16.mxu0 %v1145
    %2262 = vmatpush1.bf16.msra.mxu0 %v1144
    %2263 = vmatprep.subr.bf16.mxu0 %v1153
    %2264 = vmatpush1.bf16.msra.mxu0 %v1152
    %2265 = vmatprep.subr.bf16.mxu0 %v1161
    %2266 = vmatpush1.bf16.msra.mxu0 %v1160
    %2267 = vmatprep.subr.bf16.mxu0 %v1169
    %2268 = vmatpush1.bf16.msra.mxu0 %v1168
    %2269 = vmatprep.subr.bf16.mxu0 %v1177
    %2270 = vmatpush1.bf16.msra.mxu0 %v1176
    %2271 = vmatprep.subr.bf16.mxu0 %v1185
    %2272 = vmatpush1.bf16.msra.mxu0 %v1184
    %2273 = vmatprep.subr.bf16.mxu0 %v1193
    %2274 = vmatpush1.bf16.msra.mxu0 %v1192
    %2275 = vmatprep.subr.bf16.mxu0 %v1201
    %2276 = vmatpush1.bf16.msra.mxu0 %v1200
    %2277 = vmatprep.subr.bf16.mxu0 %v1209
    %2278 = vmatpush1.bf16.msra.mxu0 %v1208
    %2279 = vmatprep.subr.bf16.mxu0 %v1217
    %2280 = vmatpush1.bf16.msra.mxu0 %v1216
    %2281 = vmatprep.subr.bf16.mxu0 %v1225
    %2282 = vmatpush1.bf16.msra.mxu0 %v1224
    %2283 = vmatprep.subr.bf16.mxu0 %v1233
    %2284 = vmatpush1.bf16.msra.mxu0 %v1232
    %2285 = vmatprep.subr.bf16.mxu0 %v1241
    %2286 = vmatpush1.bf16.msra.mxu0 %v1240
    %2287 = vmatprep.subr.bf16.mxu0 %v1249
    %2288 = vmatpush1.bf16.msra.mxu0 %v1248
    %2289 = vmatprep.mubr.bf16.mxu0 %v2135
    %2290 = vmatmul.mubr.bf16.gmra.mrb[0].mxu0 %v2134
    %v2291 = vpop.f32.mrb[0].mxu0
    %v2292 = vadd.f32 %v2249, %v2291
    %v2293 = vpop.f32.mrb[0].mxu0
    %v2294 = vadd.f32 %v2251, %v2293
    %v2295 = vpop.f32.mrb[0].mxu0
    %v2296 = vadd.f32 %v2253, %v2295
    %v2297 = vpop.f32.mrb[0].mxu0
    %v2298 = vadd.f32 %v2255, %v2297
    %2299 = vdwg.mxu0
    %2300 = vmatprep.subr.bf16.mxu0 %v1257
    %2301 = vmatpush1.bf16.msra.mxu0 %v1256
    %2302 = vmatprep.subr.bf16.mxu0 %v1265
    %2303 = vmatpush1.bf16.msra.mxu0 %v1264
    %2304 = vmatprep.subr.bf16.mxu0 %v1273
    %2305 = vmatpush1.bf16.msra.mxu0 %v1272
    %2306 = vmatprep.subr.bf16.mxu0 %v1281
    %2307 = vmatpush1.bf16.msra.mxu0 %v1280
    %2308 = vmatprep.subr.bf16.mxu0 %v1289
    %2309 = vmatpush1.bf16.msra.mxu0 %v1288
    %2310 = vmatprep.subr.bf16.mxu0 %v1297
    %2311 = vmatpush1.bf16.msra.mxu0 %v1296
    %2312 = vmatprep.subr.bf16.mxu0 %v1305
    %2313 = vmatpush1.bf16.msra.mxu0 %v1304
    %2314 = vmatprep.subr.bf16.mxu0 %v1313
    %2315 = vmatpush1.bf16.msra.mxu0 %v1312
    %2316 = vmatprep.subr.bf16.mxu0 %v1321
    %2317 = vmatpush1.bf16.msra.mxu0 %v1320
    %2318 = vmatprep.subr.bf16.mxu0 %v1329
    %2319 = vmatpush1.bf16.msra.mxu0 %v1328
    %2320 = vmatprep.subr.bf16.mxu0 %v1337
    %2321 = vmatpush1.bf16.msra.mxu0 %v1336
    %2322 = vmatprep.subr.bf16.mxu0 %v1345
    %2323 = vmatpush1.bf16.msra.mxu0 %v1344
    %2324 = vmatprep.subr.bf16.mxu0 %v1353
    %2325 = vmatpush1.bf16.msra.mxu0 %v1352
    %2326 = vmatprep.subr.bf16.mxu0 %v1361
    %2327 = vmatpush1.bf16.msra.mxu0 %v1360
    %2328 = vmatprep.subr.bf16.mxu0 %v1369
    %2329 = vmatpush1.bf16.msra.mxu0 %v1368
    %2330 = vmatprep.subr.bf16.mxu0 %v1377
    %2331 = vmatpush1.bf16.msra.mxu0 %v1376
    %2332 = vmatprep.mubr.bf16.mxu0 %v2137
    %2333 = vmatmul.mubr.bf16.gmra.mrb[0].mxu0 %v2136
    %v2334 = vpop.f32.mrb[0].mxu0
    %v2335 = vadd.f32 %v2292, %v2334
    %v2336 = vpop.f32.mrb[0].mxu0
    %v2337 = vadd.f32 %v2294, %v2336
    %v2338 = vpop.f32.mrb[0].mxu0
    %v2339 = vadd.f32 %v2296, %v2338
    %v2340 = vpop.f32.mrb[0].mxu0
    %v2341 = vadd.f32 %v2298, %v2340
    %2342 = vdwg.mxu0
    %2343 = vmatprep.subr.bf16.mxu0 %v1385
    %2344 = vmatpush1.bf16.msra.mxu0 %v1384
    %2345 = vmatprep.subr.bf16.mxu0 %v1393
    %2346 = vmatpush1.bf16.msra.mxu0 %v1392
    %2347 = vmatprep.subr.bf16.mxu0 %v1401
    %2348 = vmatpush1.bf16.msra.mxu0 %v1400
    %2349 = vmatprep.subr.bf16.mxu0 %v1409
    %2350 = vmatpush1.bf16.msra.mxu0 %v1408
    %2351 = vmatprep.subr.bf16.mxu0 %v1417
    %2352 = vmatpush1.bf16.msra.mxu0 %v1416
    %2353 = vmatprep.subr.bf16.mxu0 %v1425
    %2354 = vmatpush1.bf16.msra.mxu0 %v1424
    %2355 = vmatprep.subr.bf16.mxu0 %v1433
    %2356 = vmatpush1.bf16.msra.mxu0 %v1432
    %2357 = vmatprep.subr.bf16.mxu0 %v1441
    %2358 = vmatpush1.bf16.msra.mxu0 %v1440
    %2359 = vmatprep.subr.bf16.mxu0 %v1449
    %2360 = vmatpush1.bf16.msra.mxu0 %v1448
    %2361 = vmatprep.subr.bf16.mxu0 %v1457
    %2362 = vmatpush1.bf16.msra.mxu0 %v1456
    %2363 = vmatprep.subr.bf16.mxu0 %v1465
    %2364 = vmatpush1.bf16.msra.mxu0 %v1464
    %2365 = vmatprep.subr.bf16.mxu0 %v1473
    %2366 = vmatpush1.bf16.msra.mxu0 %v1472
    %2367 = vmatprep.subr.bf16.mxu0 %v1481
    %2368 = vmatpush1.bf16.msra.mxu0 %v1480
    %2369 = vmatprep.subr.bf16.mxu0 %v1489
    %2370 = vmatpush1.bf16.msra.mxu0 %v1488
    %2371 = vmatprep.subr.bf16.mxu0 %v1497
    %2372 = vmatpush1.bf16.msra.mxu0 %v1496
    %2373 = vmatprep.subr.bf16.mxu0 %v1505
    %2374 = vmatpush1.bf16.msra.mxu0 %v1504
    %2375 = vmatprep.mubr.bf16.mxu0 %v2139
    %2376 = vmatmul.mubr.bf16.gmra.mrb[0].mxu0 %v2138
    %v2377 = vpop.f32.mrb[0].mxu0
    %v2378 = vadd.f32 %v2335, %v2377
    %v2379 = vpop.f32.mrb[0].mxu0
    %v2380 = vadd.f32 %v2337, %v2379
    %v2381 = vpop.f32.mrb[0].mxu0
    %v2382 = vadd.f32 %v2339, %v2381
    %v2383 = vpop.f32.mrb[0].mxu0
    %v2384 = vadd.f32 %v2341, %v2383
    %2385 = vdwg.mxu0
    %2386 = vmatprep.subr.bf16.mxu0 %v1513
    %2387 = vmatpush1.bf16.msra.mxu0 %v1512
    %2388 = vmatprep.subr.bf16.mxu0 %v1521
    %2389 = vmatpush1.bf16.msra.mxu0 %v1520
    %2390 = vmatprep.subr.bf16.mxu0 %v1529
    %2391 = vmatpush1.bf16.msra.mxu0 %v1528
    %2392 = vmatprep.subr.bf16.mxu0 %v1537
    %2393 = vmatpush1.bf16.msra.mxu0 %v1536
    %2394 = vmatprep.subr.bf16.mxu0 %v1545
    %2395 = vmatpush1.bf16.msra.mxu0 %v1544
    %2396 = vmatprep.subr.bf16.mxu0 %v1553
    %2397 = vmatpush1.bf16.msra.mxu0 %v1552
    %2398 = vmatprep.subr.bf16.mxu0 %v1561
    %2399 = vmatpush1.bf16.msra.mxu0 %v1560
    %2400 = vmatprep.subr.bf16.mxu0 %v1569
    %2401 = vmatpush1.bf16.msra.mxu0 %v1568
    %2402 = vmatprep.subr.bf16.mxu0 %v1577
    %2403 = vmatpush1.bf16.msra.mxu0 %v1576
    %2404 = vmatprep.subr.bf16.mxu0 %v1585
    %2405 = vmatpush1.bf16.msra.mxu0 %v1584
    %2406 = vmatprep.subr.bf16.mxu0 %v1593
    %2407 = vmatpush1.bf16.msra.mxu0 %v1592
    %2408 = vmatprep.subr.bf16.mxu0 %v1601
    %2409 = vmatpush1.bf16.msra.mxu0 %v1600
    %2410 = vmatprep.subr.bf16.mxu0 %v1609
    %2411 = vmatpush1.bf16.msra.mxu0 %v1608
    %2412 = vmatprep.subr.bf16.mxu0 %v1617
    %2413 = vmatpush1.bf16.msra.mxu0 %v1616
    %2414 = vmatprep.subr.bf16.mxu0 %v1625
    %2415 = vmatpush1.bf16.msra.mxu0 %v1624
    %2416 = vmatprep.subr.bf16.mxu0 %v1633
    %2417 = vmatpush1.bf16.msra.mxu0 %v1632
    %2418 = vmatprep.mubr.bf16.mxu0 %v2141
    %2419 = vmatmul.mubr.bf16.gmra.mrb[0].mxu0 %v2140
    %v2420 = vpop.f32.mrb[0].mxu0
    %v2421 = vadd.f32 %v2378, %v2420
    %v2422 = vpop.f32.mrb[0].mxu0
    %v2423 = vadd.f32 %v2380, %v2422
    %v2424 = vpop.f32.mrb[0].mxu0
    %v2425 = vadd.f32 %v2382, %v2424
    %v2426 = vpop.f32.mrb[0].mxu0
    %v2427 = vadd.f32 %v2384, %v2426
    %2428 = vdwg.mxu0
    %2429 = vmatprep.subr.bf16.mxu0 %v1641
    %2430 = vmatpush1.bf16.msra.mxu0 %v1640
    %2431 = vmatprep.subr.bf16.mxu0 %v1649
    %2432 = vmatpush1.bf16.msra.mxu0 %v1648
    %2433 = vmatprep.subr.bf16.mxu0 %v1657
    %2434 = vmatpush1.bf16.msra.mxu0 %v1656
    %2435 = vmatprep.subr.bf16.mxu0 %v1665
    %2436 = vmatpush1.bf16.msra.mxu0 %v1664
    %2437 = vmatprep.subr.bf16.mxu0 %v1673
    %2438 = vmatpush1.bf16.msra.mxu0 %v1672
    %2439 = vmatprep.subr.bf16.mxu0 %v1681
    %2440 = vmatpush1.bf16.msra.mxu0 %v1680
    %2441 = vmatprep.subr.bf16.mxu0 %v1689
    %2442 = vmatpush1.bf16.msra.mxu0 %v1688
    %2443 = vmatprep.subr.bf16.mxu0 %v1697
    %2444 = vmatpush1.bf16.msra.mxu0 %v1696
    %2445 = vmatprep.subr.bf16.mxu0 %v1705
    %2446 = vmatpush1.bf16.msra.mxu0 %v1704
    %2447 = vmatprep.subr.bf16.mxu0 %v1713
    %2448 = vmatpush1.bf16.msra.mxu0 %v1712
    %2449 = vmatprep.subr.bf16.mxu0 %v1721
    %2450 = vmatpush1.bf16.msra.mxu0 %v1720
    %2451 = vmatprep.subr.bf16.mxu0 %v1729
    %2452 = vmatpush1.bf16.msra.mxu0 %v1728
    %2453 = vmatprep.subr.bf16.mxu0 %v1737
    %2454 = vmatpush1.bf16.msra.mxu0 %v1736
    %2455 = vmatprep.subr.bf16.mxu0 %v1745
    %2456 = vmatpush1.bf16.msra.mxu0 %v1744
    %2457 = vmatprep.subr.bf16.mxu0 %v1753
    %2458 = vmatpush1.bf16.msra.mxu0 %v1752
    %2459 = vmatprep.subr.bf16.mxu0 %v1761
    %2460 = vmatpush1.bf16.msra.mxu0 %v1760
    %2461 = vmatprep.mubr.bf16.mxu0 %v2143
    %2462 = vmatmul.mubr.bf16.gmra.mrb[0].mxu0 %v2142
    %v2463 = vpop.f32.mrb[0].mxu0
    %v2464 = vadd.f32 %v2421, %v2463
    %v2465 = vpop.f32.mrb[0].mxu0
    %v2466 = vadd.f32 %v2423, %v2465
    %v2467 = vpop.f32.mrb[0].mxu0
    %v2468 = vadd.f32 %v2425, %v2467
    %v2469 = vpop.f32.mrb[0].mxu0
    %v2470 = vadd.f32 %v2427, %v2469
    %2471 = vdwg.mxu0
    %2472 = vmatprep.subr.bf16.mxu0 %v1769
    %2473 = vmatpush1.bf16.msra.mxu0 %v1768
    %2474 = vmatprep.subr.bf16.mxu0 %v1777
    %2475 = vmatpush1.bf16.msra.mxu0 %v1776
    %2476 = vmatprep.subr.bf16.mxu0 %v1785
    %2477 = vmatpush1.bf16.msra.mxu0 %v1784
    %2478 = vmatprep.subr.bf16.mxu0 %v1793
    %2479 = vmatpush1.bf16.msra.mxu0 %v1792
    %2480 = vmatprep.subr.bf16.mxu0 %v1801
    %2481 = vmatpush1.bf16.msra.mxu0 %v1800
    %2482 = vmatprep.subr.bf16.mxu0 %v1809
    %2483 = vmatpush1.bf16.msra.mxu0 %v1808
    %2484 = vmatprep.subr.bf16.mxu0 %v1817
    %2485 = vmatpush1.bf16.msra.mxu0 %v1816
    %2486 = vmatprep.subr.bf16.mxu0 %v1825
    %2487 = vmatpush1.bf16.msra.mxu0 %v1824
    %2488 = vmatprep.subr.bf16.mxu0 %v1833
    %2489 = vmatpush1.bf16.msra.mxu0 %v1832
    %2490 = vmatprep.subr.bf16.mxu0 %v1841
    %2491 = vmatpush1.bf16.msra.mxu0 %v1840
    %2492 = vmatprep.subr.bf16.mxu0 %v1849
    %2493 = vmatpush1.bf16.msra.mxu0 %v1848
    %2494 = vmatprep.subr.bf16.mxu0 %v1857
    %2495 = vmatpush1.bf16.msra.mxu0 %v1856
    %2496 = vmatprep.subr.bf16.mxu0 %v1865
    %2497 = vmatpush1.bf16.msra.mxu0 %v1864
    %2498 = vmatprep.subr.bf16.mxu0 %v1873
    %2499 = vmatpush1.bf16.msra.mxu0 %v1872
    %2500 = vmatprep.subr.bf16.mxu0 %v1881
    %2501 = vmatpush1.bf16.msra.mxu0 %v1880
    %2502 = vmatprep.subr.bf16.mxu0 %v1889
    %2503 = vmatpush1.bf16.msra.mxu0 %v1888
    %2504 = vmatprep.mubr.bf16.mxu0 %v2145
    %2505 = vmatmul.mubr.bf16.gmra.mrb[0].mxu0 %v2144
    %v2506 = vpop.f32.mrb[0].mxu0
    %v2507 = vadd.f32 %v2464, %v2506
    %v2508 = vpop.f32.mrb[0].mxu0
    %v2509 = vadd.f32 %v2466, %v2508
    %v2510 = vpop.f32.mrb[0].mxu0
    %v2511 = vadd.f32 %v2468, %v2510
    %v2512 = vpop.f32.mrb[0].mxu0
    %v2513 = vadd.f32 %v2470, %v2512
    %2514 = vdwg.mxu0
    %2515 = vmatprep.subr.bf16.mxu0 %v1897
    %2516 = vmatpush1.bf16.msra.mxu0 %v1896
    %2517 = vmatprep.subr.bf16.mxu0 %v1905
    %2518 = vmatpush1.bf16.msra.mxu0 %v1904
    %2519 = vmatprep.subr.bf16.mxu0 %v1913
    %2520 = vmatpush1.bf16.msra.mxu0 %v1912
    %2521 = vmatprep.subr.bf16.mxu0 %v1921
    %2522 = vmatpush1.bf16.msra.mxu0 %v1920
    %2523 = vmatprep.subr.bf16.mxu0 %v1929
    %2524 = vmatpush1.bf16.msra.mxu0 %v1928
    %2525 = vmatprep.subr.bf16.mxu0 %v1937
    %2526 = vmatpush1.bf16.msra.mxu0 %v1936
    %2527 = vmatprep.subr.bf16.mxu0 %v1945
    %2528 = vmatpush1.bf16.msra.mxu0 %v1944
    %2529 = vmatprep.subr.bf16.mxu0 %v1953
    %2530 = vmatpush1.bf16.msra.mxu0 %v1952
    %2531 = vmatprep.subr.bf16.mxu0 %v1961
    %2532 = vmatpush1.bf16.msra.mxu0 %v1960
    %2533 = vmatprep.subr.bf16.mxu0 %v1969
    %2534 = vmatpush1.bf16.msra.mxu0 %v1968
    %2535 = vmatprep.subr.bf16.mxu0 %v1977
    %2536 = vmatpush1.bf16.msra.mxu0 %v1976
    %2537 = vmatprep.subr.bf16.mxu0 %v1985
    %2538 = vmatpush1.bf16.msra.mxu0 %v1984
    %2539 = vmatprep.subr.bf16.mxu0 %v1993
    %2540 = vmatpush1.bf16.msra.mxu0 %v1992
    %2541 = vmatprep.subr.bf16.mxu0 %v2001
    %2542 = vmatpush1.bf16.msra.mxu0 %v2000
    %2543 = vmatprep.subr.bf16.mxu0 %v2009
    %2544 = vmatpush1.bf16.msra.mxu0 %v2008
    %2545 = vmatprep.subr.bf16.mxu0 %v2017
    %2546 = vmatpush1.bf16.msra.mxu0 %v2016
    %2547 = vmatprep.mubr.bf16.mxu0 %v2147
    %2548 = vmatmul.mubr.bf16.gmra.mrb[0].mxu0 %v2146
    %v2549 = vpop.f32.mrb[0].mxu0
    %v2550 = vadd.f32 %v2507, %v2549
    %v2551 = vpop.f32.mrb[0].mxu0
    %v2552 = vadd.f32 %v2509, %v2551
    %v2553 = vpop.f32.mrb[0].mxu0
    %v2554 = vadd.f32 %v2511, %v2553
    %v2555 = vpop.f32.mrb[0].mxu0
    %v2556 = vadd.f32 %v2513, %v2555
    %2557 = vdwg.mxu0
    %2558 = vmatprep.subr.bf16.mxu0 %v2025
    %2559 = vmatpush1.bf16.msra.mxu0 %v2024
    %2560 = vmatprep.subr.bf16.mxu0 %v2033
    %2561 = vmatpush1.bf16.msra.mxu0 %v2032
    %2562 = vmatprep.subr.bf16.mxu0 %v2041
    %2563 = vmatpush1.bf16.msra.mxu0 %v2040
    %2564 = vmatprep.subr.bf16.mxu0 %v2049
    %2565 = vmatpush1.bf16.msra.mxu0 %v2048
    %2566 = vmatprep.subr.bf16.mxu0 %v2057
    %2567 = vmatpush1.bf16.msra.mxu0 %v2056
    %2568 = vmatprep.subr.bf16.mxu0 %v2065
    %2569 = vmatpush1.bf16.msra.mxu0 %v2064
    %2570 = vmatprep.subr.bf16.mxu0 0
    %2571 = vmatpush1.bf16.msra.mxu0 0
    %2572 = vmatprep.subr.bf16.mxu0 0
    %2573 = vmatpush1.bf16.msra.mxu0 0
    %2574 = vmatprep.subr.bf16.mxu0 0
    %2575 = vmatpush1.bf16.msra.mxu0 0
    %2576 = vmatprep.subr.bf16.mxu0 0
    %2577 = vmatpush1.bf16.msra.mxu0 0
    %2578 = vmatprep.subr.bf16.mxu0 0
    %2579 = vmatpush1.bf16.msra.mxu0 0
    %2580 = vmatprep.subr.bf16.mxu0 0
    %2581 = vmatpush1.bf16.msra.mxu0 0
    %2582 = vmatprep.subr.bf16.mxu0 0
    %2583 = vmatpush1.bf16.msra.mxu0 0
    %2584 = vmatprep.subr.bf16.mxu0 0
    %2585 = vmatpush1.bf16.msra.mxu0 0
    %2586 = vmatprep.subr.bf16.mxu0 0
    %2587 = vmatpush1.bf16.msra.mxu0 0
    %2588 = vmatprep.subr.bf16.mxu0 0
    %2589 = vmatpush1.bf16.msra.mxu0 0
    %2590 = vmatprep.mubr.bf16.mxu0 0
    %2591 = vmatmul.mubr.bf16.gmra.mrb[0].mxu0 %v2169
    %v2592 = vpop.f32.mrb[0].mxu0
    %v2593 = vadd.f32 %v2550, %v2592
    %v2594 = vpop.f32.mrb[0].mxu0
    %v2595 = vadd.f32 %v2552, %v2594
    %v2596 = vpop.f32.mrb[0].mxu0
    %v2597 = vadd.f32 %v2554, %v2596
    %v2598 = vpop.f32.mrb[0].mxu0
    %v2599 = vadd.f32 %v2556, %v2598
    %2600 = vdwg.mxu0
    %2601 = vmatprep.subr.bf16.mxu0 %v875
    %2602 = vmatpush1.bf16.msra.mxu0 %v874
    %2603 = vmatprep.subr.bf16.mxu0 %v883
    %2604 = vmatpush1.bf16.msra.mxu0 %v882
    %2605 = vmatprep.subr.bf16.mxu0 %v891
    %2606 = vmatpush1.bf16.msra.mxu0 %v890
    %2607 = vmatprep.subr.bf16.mxu0 %v899
    %2608 = vmatpush1.bf16.msra.mxu0 %v898
    %2609 = vmatprep.subr.bf16.mxu0 %v907
    %2610 = vmatpush1.bf16.msra.mxu0 %v906
    %2611 = vmatprep.subr.bf16.mxu0 %v915
    %2612 = vmatpush1.bf16.msra.mxu0 %v914
    %2613 = vmatprep.subr.bf16.mxu0 %v923
    %2614 = vmatpush1.bf16.msra.mxu0 %v922
    %2615 = vmatprep.subr.bf16.mxu0 %v931
    %2616 = vmatpush1.bf16.msra.mxu0 %v930
    %2617 = vmatprep.subr.bf16.mxu0 %v939
    %2618 = vmatpush1.bf16.msra.mxu0 %v938
    %2619 = vmatprep.subr.bf16.mxu0 %v947
    %2620 = vmatpush1.bf16.msra.mxu0 %v946
    %2621 = vmatprep.subr.bf16.mxu0 %v955
    %2622 = vmatpush1.bf16.msra.mxu0 %v954
    %2623 = vmatprep.subr.bf16.mxu0 %v963
    %2624 = vmatpush1.bf16.msra.mxu0 %v962
    %2625 = vmatprep.subr.bf16.mxu0 %v971
    %2626 = vmatpush1.bf16.msra.mxu0 %v970
    %2627 = vmatprep.subr.bf16.mxu0 %v979
    %2628 = vmatpush1.bf16.msra.mxu0 %v978
    %2629 = vmatprep.subr.bf16.mxu0 %v987
    %2630 = vmatpush1.bf16.msra.mxu0 %v986
    %2631 = vmatprep.subr.bf16.mxu0 %v995
    %2632 = vmatpush1.bf16.msra.mxu0 %v994
    %2633 = vmatprep.mubr.bf16.mxu0 %v2131
    %2634 = vmatmul.mubr.bf16.gmra.mrb[0].mxu0 %v2130
    %v2635 = vpop.f32.mrb[0].mxu0
    %v2636 = vadd.f32 0.0, %v2635
    %v2637 = vpop.f32.mrb[0].mxu0
    %v2638 = vadd.f32 0.0, %v2637
    %v2639 = vpop.f32.mrb[0].mxu0
    %v2640 = vadd.f32 0.0, %v2639
    %v2641 = vpop.f32.mrb[0].mxu0
    %v2642 = vadd.f32 0.0, %v2641
    %2643 = vdwg.mxu0
    %2644 = vmatprep.subr.bf16.mxu0 %v1003
    %2645 = vmatpush1.bf16.msra.mxu0 %v1002
    %2646 = vmatprep.subr.bf16.mxu0 %v1011
    %2647 = vmatpush1.bf16.msra.mxu0 %v1010
    %2648 = vmatprep.subr.bf16.mxu0 %v1019
    %2649 = vmatpush1.bf16.msra.mxu0 %v1018
    %2650 = vmatprep.subr.bf16.mxu0 %v1027
    %2651 = vmatpush1.bf16.msra.mxu0 %v1026
    %2652 = vmatprep.subr.bf16.mxu0 %v1035
    %2653 = vmatpush1.bf16.msra.mxu0 %v1034
    %2654 = vmatprep.subr.bf16.mxu0 %v1043
    %2655 = vmatpush1.bf16.msra.mxu0 %v1042
    %2656 = vmatprep.subr.bf16.mxu0 %v1051
    %2657 = vmatpush1.bf16.msra.mxu0 %v1050
    %2658 = vmatprep.subr.bf16.mxu0 %v1059
    %2659 = vmatpush1.bf16.msra.mxu0 %v1058
    %2660 = vmatprep.subr.bf16.mxu0 %v1067
    %2661 = vmatpush1.bf16.msra.mxu0 %v1066
    %2662 = vmatprep.subr.bf16.mxu0 %v1075
    %2663 = vmatpush1.bf16.msra.mxu0 %v1074
    %2664 = vmatprep.subr.bf16.mxu0 %v1083
    %2665 = vmatpush1.bf16.msra.mxu0 %v1082
    %2666 = vmatprep.subr.bf16.mxu0 %v1091
    %2667 = vmatpush1.bf16.msra.mxu0 %v1090
    %2668 = vmatprep.subr.bf16.mxu0 %v1099
    %2669 = vmatpush1.bf16.msra.mxu0 %v1098
    %2670 = vmatprep.subr.bf16.mxu0 %v1107
    %2671 = vmatpush1.bf16.msra.mxu0 %v1106
    %2672 = vmatprep.subr.bf16.mxu0 %v1115
    %2673 = vmatpush1.bf16.msra.mxu0 %v1114
    %2674 = vmatprep.subr.bf16.mxu0 %v1123
    %2675 = vmatpush1.bf16.msra.mxu0 %v1122
    %2676 = vmatprep.mubr.bf16.mxu0 %v2133
    %2677 = vmatmul.mubr.bf16.gmra.mrb[0].mxu0 %v2132
    %v2678 = vpop.f32.mrb[0].mxu0
    %v2679 = vadd.f32 %v2636, %v2678
    %v2680 = vpop.f32.mrb[0].mxu0
    %v2681 = vadd.f32 %v2638, %v2680
    %v2682 = vpop.f32.mrb[0].mxu0
    %v2683 = vadd.f32 %v2640, %v2682
    %v2684 = vpop.f32.mrb[0].mxu0
    %v2685 = vadd.f32 %v2642, %v2684
    %2686 = vdwg.mxu0
    %2687 = vmatprep.subr.bf16.mxu0 %v1131
    %2688 = vmatpush1.bf16.msra.mxu0 %v1130
    %2689 = vmatprep.subr.bf16.mxu0 %v1139
    %2690 = vmatpush1.bf16.msra.mxu0 %v1138
    %2691 = vmatprep.subr.bf16.mxu0 %v1147
    %2692 = vmatpush1.bf16.msra.mxu0 %v1146
    %2693 = vmatprep.subr.bf16.mxu0 %v1155
    %2694 = vmatpush1.bf16.msra.mxu0 %v1154
    %2695 = vmatprep.subr.bf16.mxu0 %v1163
    %2696 = vmatpush1.bf16.msra.mxu0 %v1162
    %2697 = vmatprep.subr.bf16.mxu0 %v1171
    %2698 = vmatpush1.bf16.msra.mxu0 %v1170
    %2699 = vmatprep.subr.bf16.mxu0 %v1179
    %2700 = vmatpush1.bf16.msra.mxu0 %v1178
    %2701 = vmatprep.subr.bf16.mxu0 %v1187
    %2702 = vmatpush1.bf16.msra.mxu0 %v1186
    %2703 = vmatprep.subr.bf16.mxu0 %v1195
    %2704 = vmatpush1.bf16.msra.mxu0 %v1194
    %2705 = vmatprep.subr.bf16.mxu0 %v1203
    %2706 = vmatpush1.bf16.msra.mxu0 %v1202
    %2707 = vmatprep.subr.bf16.mxu0 %v1211
    %2708 = vmatpush1.bf16.msra.mxu0 %v1210
    %2709 = vmatprep.subr.bf16.mxu0 %v1219
    %2710 = vmatpush1.bf16.msra.mxu0 %v1218
    %2711 = vmatprep.subr.bf16.mxu0 %v1227
    %2712 = vmatpush1.bf16.msra.mxu0 %v1226
    %2713 = vmatprep.subr.bf16.mxu0 %v1235
    %2714 = vmatpush1.bf16.msra.mxu0 %v1234
    %2715 = vmatprep.subr.bf16.mxu0 %v1243
    %2716 = vmatpush1.bf16.msra.mxu0 %v1242
    %2717 = vmatprep.subr.bf16.mxu0 %v1251
    %2718 = vmatpush1.bf16.msra.mxu0 %v1250
    %2719 = vmatprep.mubr.bf16.mxu0 %v2135
    %2720 = vmatmul.mubr.bf16.gmra.mrb[0].mxu0 %v2134
    %v2721 = vpop.f32.mrb[0].mxu0
    %v2722 = vadd.f32 %v2679, %v2721
    %v2723 = vpop.f32.mrb[0].mxu0
    %v2724 = vadd.f32 %v2681, %v2723
    %v2725 = vpop.f32.mrb[0].mxu0
    %v2726 = vadd.f32 %v2683, %v2725
    %v2727 = vpop.f32.mrb[0].mxu0
    %v2728 = vadd.f32 %v2685, %v2727
    %2729 = vdwg.mxu0
    %2730 = vmatprep.subr.bf16.mxu0 %v1259
    %2731 = vmatpush1.bf16.msra.mxu0 %v1258
    %2732 = vmatprep.subr.bf16.mxu0 %v1267
    %2733 = vmatpush1.bf16.msra.mxu0 %v1266
    %2734 = vmatprep.subr.bf16.mxu0 %v1275
    %2735 = vmatpush1.bf16.msra.mxu0 %v1274
    %2736 = vmatprep.subr.bf16.mxu0 %v1283
    %2737 = vmatpush1.bf16.msra.mxu0 %v1282
    %2738 = vmatprep.subr.bf16.mxu0 %v1291
    %2739 = vmatpush1.bf16.msra.mxu0 %v1290
    %2740 = vmatprep.subr.bf16.mxu0 %v1299
    %2741 = vmatpush1.bf16.msra.mxu0 %v1298
    %2742 = vmatprep.subr.bf16.mxu0 %v1307
    %2743 = vmatpush1.bf16.msra.mxu0 %v1306
    %2744 = vmatprep.subr.bf16.mxu0 %v1315
    %2745 = vmatpush1.bf16.msra.mxu0 %v1314
    %2746 = vmatprep.subr.bf16.mxu0 %v1323
    %2747 = vmatpush1.bf16.msra.mxu0 %v1322
    %2748 = vmatprep.subr.bf16.mxu0 %v1331
    %2749 = vmatpush1.bf16.msra.mxu0 %v1330
    %2750 = vmatprep.subr.bf16.mxu0 %v1339
    %2751 = vmatpush1.bf16.msra.mxu0 %v1338
    %2752 = vmatprep.subr.bf16.mxu0 %v1347
    %2753 = vmatpush1.bf16.msra.mxu0 %v1346
    %2754 = vmatprep.subr.bf16.mxu0 %v1355
    %2755 = vmatpush1.bf16.msra.mxu0 %v1354
    %2756 = vmatprep.subr.bf16.mxu0 %v1363
    %2757 = vmatpush1.bf16.msra.mxu0 %v1362
    %2758 = vmatprep.subr.bf16.mxu0 %v1371
    %2759 = vmatpush1.bf16.msra.mxu0 %v1370
    %2760 = vmatprep.subr.bf16.mxu0 %v1379
    %2761 = vmatpush1.bf16.msra.mxu0 %v1378
    %2762 = vmatprep.mubr.bf16.mxu0 %v2137
    %2763 = vmatmul.mubr.bf16.gmra.mrb[0].mxu0 %v2136
    %v2764 = vpop.f32.mrb[0].mxu0
    %v2765 = vadd.f32 %v2722, %v2764
    %v2766 = vpop.f32.mrb[0].mxu0
    %v2767 = vadd.f32 %v2724, %v2766
    %v2768 = vpop.f32.mrb[0].mxu0
    %v2769 = vadd.f32 %v2726, %v2768
    %v2770 = vpop.f32.mrb[0].mxu0
    %v2771 = vadd.f32 %v2728, %v2770
    %2772 = vdwg.mxu0
    %2773 = vmatprep.subr.bf16.mxu0 %v1387
    %2774 = vmatpush1.bf16.msra.mxu0 %v1386
    %2775 = vmatprep.subr.bf16.mxu0 %v1395
    %2776 = vmatpush1.bf16.msra.mxu0 %v1394
    %2777 = vmatprep.subr.bf16.mxu0 %v1403
    %2778 = vmatpush1.bf16.msra.mxu0 %v1402
    %2779 = vmatprep.subr.bf16.mxu0 %v1411
    %2780 = vmatpush1.bf16.msra.mxu0 %v1410
    %2781 = vmatprep.subr.bf16.mxu0 %v1419
    %2782 = vmatpush1.bf16.msra.mxu0 %v1418
    %2783 = vmatprep.subr.bf16.mxu0 %v1427
    %2784 = vmatpush1.bf16.msra.mxu0 %v1426
    %2785 = vmatprep.subr.bf16.mxu0 %v1435
    %2786 = vmatpush1.bf16.msra.mxu0 %v1434
    %2787 = vmatprep.subr.bf16.mxu0 %v1443
    %2788 = vmatpush1.bf16.msra.mxu0 %v1442
    %2789 = vmatprep.subr.bf16.mxu0 %v1451
    %2790 = vmatpush1.bf16.msra.mxu0 %v1450
    %2791 = vmatprep.subr.bf16.mxu0 %v1459
    %2792 = vmatpush1.bf16.msra.mxu0 %v1458
    %2793 = vmatprep.subr.bf16.mxu0 %v1467
    %2794 = vmatpush1.bf16.msra.mxu0 %v1466
    %2795 = vmatprep.subr.bf16.mxu0 %v1475
    %2796 = vmatpush1.bf16.msra.mxu0 %v1474
    %2797 = vmatprep.subr.bf16.mxu0 %v1483
    %2798 = vmatpush1.bf16.msra.mxu0 %v1482
    %2799 = vmatprep.subr.bf16.mxu0 %v1491
    %2800 = vmatpush1.bf16.msra.mxu0 %v1490
    %2801 = vmatprep.subr.bf16.mxu0 %v1499
    %2802 = vmatpush1.bf16.msra.mxu0 %v1498
    %2803 = vmatprep.subr.bf16.mxu0 %v1507
    %2804 = vmatpush1.bf16.msra.mxu0 %v1506
    %2805 = vmatprep.mubr.bf16.mxu0 %v2139
    %2806 = vmatmul.mubr.bf16.gmra.mrb[0].mxu0 %v2138
    %v2807 = vpop.f32.mrb[0].mxu0
    %v2808 = vadd.f32 %v2765, %v2807
    %v2809 = vpop.f32.mrb[0].mxu0
    %v2810 = vadd.f32 %v2767, %v2809
    %v2811 = vpop.f32.mrb[0].mxu0
    %v2812 = vadd.f32 %v2769, %v2811
    %v2813 = vpop.f32.mrb[0].mxu0
    %v2814 = vadd.f32 %v2771, %v2813
    %2815 = vdwg.mxu0
    %2816 = vmatprep.subr.bf16.mxu0 %v1515
    %2817 = vmatpush1.bf16.msra.mxu0 %v1514
    %2818 = vmatprep.subr.bf16.mxu0 %v1523
    %2819 = vmatpush1.bf16.msra.mxu0 %v1522
    %2820 = vmatprep.subr.bf16.mxu0 %v1531
    %2821 = vmatpush1.bf16.msra.mxu0 %v1530
    %2822 = vmatprep.subr.bf16.mxu0 %v1539
    %2823 = vmatpush1.bf16.msra.mxu0 %v1538
    %2824 = vmatprep.subr.bf16.mxu0 %v1547
    %2825 = vmatpush1.bf16.msra.mxu0 %v1546
    %2826 = vmatprep.subr.bf16.mxu0 %v1555
    %2827 = vmatpush1.bf16.msra.mxu0 %v1554
    %2828 = vmatprep.subr.bf16.mxu0 %v1563
    %2829 = vmatpush1.bf16.msra.mxu0 %v1562
    %2830 = vmatprep.subr.bf16.mxu0 %v1571
    %2831 = vmatpush1.bf16.msra.mxu0 %v1570
    %2832 = vmatprep.subr.bf16.mxu0 %v1579
    %2833 = vmatpush1.bf16.msra.mxu0 %v1578
    %2834 = vmatprep.subr.bf16.mxu0 %v1587
    %2835 = vmatpush1.bf16.msra.mxu0 %v1586
    %2836 = vmatprep.subr.bf16.mxu0 %v1595
    %2837 = vmatpush1.bf16.msra.mxu0 %v1594
    %2838 = vmatprep.subr.bf16.mxu0 %v1603
    %2839 = vmatpush1.bf16.msra.mxu0 %v1602
    %2840 = vmatprep.subr.bf16.mxu0 %v1611
    %2841 = vmatpush1.bf16.msra.mxu0 %v1610
    %2842 = vmatprep.subr.bf16.mxu0 %v1619
    %2843 = vmatpush1.bf16.msra.mxu0 %v1618
    %2844 = vmatprep.subr.bf16.mxu0 %v1627
    %2845 = vmatpush1.bf16.msra.mxu0 %v1626
    %2846 = vmatprep.subr.bf16.mxu0 %v1635
    %2847 = vmatpush1.bf16.msra.mxu0 %v1634
    %2848 = vmatprep.mubr.bf16.mxu0 %v2141
    %2849 = vmatmul.mubr.bf16.gmra.mrb[0].mxu0 %v2140
    %v2850 = vpop.f32.mrb[0].mxu0
    %v2851 = vadd.f32 %v2808, %v2850
    %v2852 = vpop.f32.mrb[0].mxu0
    %v2853 = vadd.f32 %v2810, %v2852
    %v2854 = vpop.f32.mrb[0].mxu0
    %v2855 = vadd.f32 %v2812, %v2854
    %v2856 = vpop.f32.mrb[0].mxu0
    %v2857 = vadd.f32 %v2814, %v2856
    %2858 = vdwg.mxu0
    %2859 = vmatprep.subr.bf16.mxu0 %v1643
    %2860 = vmatpush1.bf16.msra.mxu0 %v1642
    %2861 = vmatprep.subr.bf16.mxu0 %v1651
    %2862 = vmatpush1.bf16.msra.mxu0 %v1650
    %2863 = vmatprep.subr.bf16.mxu0 %v1659
    %2864 = vmatpush1.bf16.msra.mxu0 %v1658
    %2865 = vmatprep.subr.bf16.mxu0 %v1667
    %2866 = vmatpush1.bf16.msra.mxu0 %v1666
    %2867 = vmatprep.subr.bf16.mxu0 %v1675
    %2868 = vmatpush1.bf16.msra.mxu0 %v1674
    %2869 = vmatprep.subr.bf16.mxu0 %v1683
    %2870 = vmatpush1.bf16.msra.mxu0 %v1682
    %2871 = vmatprep.subr.bf16.mxu0 %v1691
    %2872 = vmatpush1.bf16.msra.mxu0 %v1690
    %2873 = vmatprep.subr.bf16.mxu0 %v1699
    %2874 = vmatpush1.bf16.msra.mxu0 %v1698
    %2875 = vmatprep.subr.bf16.mxu0 %v1707
    %2876 = vmatpush1.bf16.msra.mxu0 %v1706
    %2877 = vmatprep.subr.bf16.mxu0 %v1715
    %2878 = vmatpush1.bf16.msra.mxu0 %v1714
    %2879 = vmatprep.subr.bf16.mxu0 %v1723
    %2880 = vmatpush1.bf16.msra.mxu0 %v1722
    %2881 = vmatprep.subr.bf16.mxu0 %v1731
    %2882 = vmatpush1.bf16.msra.mxu0 %v1730
    %2883 = vmatprep.subr.bf16.mxu0 %v1739
    %2884 = vmatpush1.bf16.msra.mxu0 %v1738
    %2885 = vmatprep.subr.bf16.mxu0 %v1747
    %2886 = vmatpush1.bf16.msra.mxu0 %v1746
    %2887 = vmatprep.subr.bf16.mxu0 %v1755
    %2888 = vmatpush1.bf16.msra.mxu0 %v1754
    %2889 = vmatprep.subr.bf16.mxu0 %v1763
    %2890 = vmatpush1.bf16.msra.mxu0 %v1762
    %2891 = vmatprep.mubr.bf16.mxu0 %v2143
    %2892 = vmatmul.mubr.bf16.gmra.mrb[0].mxu0 %v2142
    %v2893 = vpop.f32.mrb[0].mxu0
    %v2894 = vadd.f32 %v2851, %v2893
    %v2895 = vpop.f32.mrb[0].mxu0
    %v2896 = vadd.f32 %v2853, %v2895
    %v2897 = vpop.f32.mrb[0].mxu0
    %v2898 = vadd.f32 %v2855, %v2897
    %v2899 = vpop.f32.mrb[0].mxu0
    %v2900 = vadd.f32 %v2857, %v2899
    %2901 = vdwg.mxu0
    %2902 = vmatprep.subr.bf16.mxu0 %v1771
    %2903 = vmatpush1.bf16.msra.mxu0 %v1770
    %2904 = vmatprep.subr.bf16.mxu0 %v1779
    %2905 = vmatpush1.bf16.msra.mxu0 %v1778
    %2906 = vmatprep.subr.bf16.mxu0 %v1787
    %2907 = vmatpush1.bf16.msra.mxu0 %v1786
    %2908 = vmatprep.subr.bf16.mxu0 %v1795
    %2909 = vmatpush1.bf16.msra.mxu0 %v1794
    %2910 = vmatprep.subr.bf16.mxu0 %v1803
    %2911 = vmatpush1.bf16.msra.mxu0 %v1802
    %2912 = vmatprep.subr.bf16.mxu0 %v1811
    %2913 = vmatpush1.bf16.msra.mxu0 %v1810
    %2914 = vmatprep.subr.bf16.mxu0 %v1819
    %2915 = vmatpush1.bf16.msra.mxu0 %v1818
    %2916 = vmatprep.subr.bf16.mxu0 %v1827
    %2917 = vmatpush1.bf16.msra.mxu0 %v1826
    %2918 = vmatprep.subr.bf16.mxu0 %v1835
    %2919 = vmatpush1.bf16.msra.mxu0 %v1834
    %2920 = vmatprep.subr.bf16.mxu0 %v1843
    %2921 = vmatpush1.bf16.msra.mxu0 %v1842
    %2922 = vmatprep.subr.bf16.mxu0 %v1851
    %2923 = vmatpush1.bf16.msra.mxu0 %v1850
    %2924 = vmatprep.subr.bf16.mxu0 %v1859
    %2925 = vmatpush1.bf16.msra.mxu0 %v1858
    %2926 = vmatprep.subr.bf16.mxu0 %v1867
    %2927 = vmatpush1.bf16.msra.mxu0 %v1866
    %2928 = vmatprep.subr.bf16.mxu0 %v1875
    %2929 = vmatpush1.bf16.msra.mxu0 %v1874
    %2930 = vmatprep.subr.bf16.mxu0 %v1883
    %2931 = vmatpush1.bf16.msra.mxu0 %v1882
    %2932 = vmatprep.subr.bf16.mxu0 %v1891
    %2933 = vmatpush1.bf16.msra.mxu0 %v1890
    %2934 = vmatprep.mubr.bf16.mxu0 %v2145
    %2935 = vmatmul.mubr.bf16.gmra.mrb[0].mxu0 %v2144
    %v2936 = vpop.f32.mrb[0].mxu0
    %v2937 = vadd.f32 %v2894, %v2936
    %v2938 = vpop.f32.mrb[0].mxu0
    %v2939 = vadd.f32 %v2896, %v2938
    %v2940 = vpop.f32.mrb[0].mxu0
    %v2941 = vadd.f32 %v2898, %v2940
    %v2942 = vpop.f32.mrb[0].mxu0
    %v2943 = vadd.f32 %v2900, %v2942
    %2944 = vdwg.mxu0
    %2945 = vmatprep.subr.bf16.mxu0 %v1899
    %2946 = vmatpush1.bf16.msra.mxu0 %v1898
    %2947 = vmatprep.subr.bf16.mxu0 %v1907
    %2948 = vmatpush1.bf16.msra.mxu0 %v1906
    %2949 = vmatprep.subr.bf16.mxu0 %v1915
    %2950 = vmatpush1.bf16.msra.mxu0 %v1914
    %2951 = vmatprep.subr.bf16.mxu0 %v1923
    %2952 = vmatpush1.bf16.msra.mxu0 %v1922
    %2953 = vmatprep.subr.bf16.mxu0 %v1931
    %2954 = vmatpush1.bf16.msra.mxu0 %v1930
    %2955 = vmatprep.subr.bf16.mxu0 %v1939
    %2956 = vmatpush1.bf16.msra.mxu0 %v1938
    %2957 = vmatprep.subr.bf16.mxu0 %v1947
    %2958 = vmatpush1.bf16.msra.mxu0 %v1946
    %2959 = vmatprep.subr.bf16.mxu0 %v1955
    %2960 = vmatpush1.bf16.msra.mxu0 %v1954
    %2961 = vmatprep.subr.bf16.mxu0 %v1963
    %2962 = vmatpush1.bf16.msra.mxu0 %v1962
    %2963 = vmatprep.subr.bf16.mxu0 %v1971
    %2964 = vmatpush1.bf16.msra.mxu0 %v1970
    %2965 = vmatprep.subr.bf16.mxu0 %v1979
    %2966 = vmatpush1.bf16.msra.mxu0 %v1978
    %2967 = vmatprep.subr.bf16.mxu0 %v1987
    %2968 = vmatpush1.bf16.msra.mxu0 %v1986
    %2969 = vmatprep.subr.bf16.mxu0 %v1995
    %2970 = vmatpush1.bf16.msra.mxu0 %v1994
    %2971 = vmatprep.subr.bf16.mxu0 %v2003
    %2972 = vmatpush1.bf16.msra.mxu0 %v2002
    %2973 = vmatprep.subr.bf16.mxu0 %v2011
    %2974 = vmatpush1.bf16.msra.mxu0 %v2010
    %2975 = vmatprep.subr.bf16.mxu0 %v2019
    %2976 = vmatpush1.bf16.msra.mxu0 %v2018
    %2977 = vmatprep.mubr.bf16.mxu0 %v2147
    %2978 = vmatmul.mubr.bf16.gmra.mrb[0].mxu0 %v2146
    %v2979 = vpop.f32.mrb[0].mxu0
    %v2980 = vadd.f32 %v2937, %v2979
    %v2981 = vpop.f32.mrb[0].mxu0
    %v2982 = vadd.f32 %v2939, %v2981
    %v2983 = vpop.f32.mrb[0].mxu0
    %v2984 = vadd.f32 %v2941, %v2983
    %v2985 = vpop.f32.mrb[0].mxu0
    %v2986 = vadd.f32 %v2943, %v2985
    %2987 = vdwg.mxu0
    %2988 = vmatprep.subr.bf16.mxu0 %v2027
    %2989 = vmatpush1.bf16.msra.mxu0 %v2026
    %2990 = vmatprep.subr.bf16.mxu0 %v2035
    %2991 = vmatpush1.bf16.msra.mxu0 %v2034
    %2992 = vmatprep.subr.bf16.mxu0 %v2043
    %2993 = vmatpush1.bf16.msra.mxu0 %v2042
    %2994 = vmatprep.subr.bf16.mxu0 %v2051
    %2995 = vmatpush1.bf16.msra.mxu0 %v2050
    %2996 = vmatprep.subr.bf16.mxu0 %v2059
    %2997 = vmatpush1.bf16.msra.mxu0 %v2058
    %2998 = vmatprep.subr.bf16.mxu0 %v2067
    %2999 = vmatpush1.bf16.msra.mxu0 %v2066
    %3000 = vmatprep.subr.bf16.mxu0 0
    %3001 = vmatpush1.bf16.msra.mxu0 0
    %3002 = vmatprep.subr.bf16.mxu0 0
    %3003 = vmatpush1.bf16.msra.mxu0 0
    %3004 = vmatprep.subr.bf16.mxu0 0
    %3005 = vmatpush1.bf16.msra.mxu0 0
    %3006 = vmatprep.subr.bf16.mxu0 0
    %3007 = vmatpush1.bf16.msra.mxu0 0
    %3008 = vmatprep.subr.bf16.mxu0 0
    %3009 = vmatpush1.bf16.msra.mxu0 0
    %3010 = vmatprep.subr.bf16.mxu0 0
    %3011 = vmatpush1.bf16.msra.mxu0 0
    %3012 = vmatprep.subr.bf16.mxu0 0
    %3013 = vmatpush1.bf16.msra.mxu0 0
    %3014 = vmatprep.subr.bf16.mxu0 0
    %3015 = vmatpush1.bf16.msra.mxu0 0
    %3016 = vmatprep.subr.bf16.mxu0 0
    %3017 = vmatpush1.bf16.msra.mxu0 0
    %3018 = vmatprep.subr.bf16.mxu0 0
    %3019 = vmatpush1.bf16.msra.mxu0 0
    %3020 = vmatprep.mubr.bf16.mxu0 0
    %3021 = vmatmul.mubr.bf16.gmra.mrb[0].mxu0 %v2169
    %v3022 = vpop.f32.mrb[0].mxu0
    %v3023 = vadd.f32 %v2980, %v3022
    %v3024 = vpop.f32.mrb[0].mxu0
    %v3025 = vadd.f32 %v2982, %v3024
    %v3026 = vpop.f32.mrb[0].mxu0
    %v3027 = vadd.f32 %v2984, %v3026
    %v3028 = vpop.f32.mrb[0].mxu0
    %v3029 = vadd.f32 %v2986, %v3028
    %3030 = vdwg.mxu0
    %3031 = vmatprep.subr.bf16.mxu0 %v877
    %3032 = vmatpush1.bf16.msra.mxu0 %v876
    %3033 = vmatprep.subr.bf16.mxu0 %v885
    %3034 = vmatpush1.bf16.msra.mxu0 %v884
    %3035 = vmatprep.subr.bf16.mxu0 %v893
    %3036 = vmatpush1.bf16.msra.mxu0 %v892
    %3037 = vmatprep.subr.bf16.mxu0 %v901
    %3038 = vmatpush1.bf16.msra.mxu0 %v900
    %3039 = vmatprep.subr.bf16.mxu0 %v909
    %3040 = vmatpush1.bf16.msra.mxu0 %v908
    %3041 = vmatprep.subr.bf16.mxu0 %v917
    %3042 = vmatpush1.bf16.msra.mxu0 %v916
    %3043 = vmatprep.subr.bf16.mxu0 %v925
    %3044 = vmatpush1.bf16.msra.mxu0 %v924
    %3045 = vmatprep.subr.bf16.mxu0 %v933
    %3046 = vmatpush1.bf16.msra.mxu0 %v932
    %3047 = vmatprep.subr.bf16.mxu0 %v941
    %3048 = vmatpush1.bf16.msra.mxu0 %v940
    %3049 = vmatprep.subr.bf16.mxu0 %v949
    %3050 = vmatpush1.bf16.msra.mxu0 %v948
    %3051 = vmatprep.subr.bf16.mxu0 %v957
    %3052 = vmatpush1.bf16.msra.mxu0 %v956
    %3053 = vmatprep.subr.bf16.mxu0 %v965
    %3054 = vmatpush1.bf16.msra.mxu0 %v964
    %3055 = vmatprep.subr.bf16.mxu0 %v973
    %3056 = vmatpush1.bf16.msra.mxu0 %v972
    %3057 = vmatprep.subr.bf16.mxu0 %v981
    %3058 = vmatpush1.bf16.msra.mxu0 %v980
    %3059 = vmatprep.subr.bf16.mxu0 %v989
    %3060 = vmatpush1.bf16.msra.mxu0 %v988
    %3061 = vmatprep.subr.bf16.mxu0 %v997
    %3062 = vmatpush1.bf16.msra.mxu0 %v996
    %3063 = vmatprep.mubr.bf16.mxu0 %v2131
    %3064 = vmatmul.mubr.bf16.gmra.mrb[0].mxu0 %v2130
    %v3065 = vpop.f32.mrb[0].mxu0
    %v3066 = vadd.f32 0.0, %v3065
    %v3067 = vpop.f32.mrb[0].mxu0
    %v3068 = vadd.f32 0.0, %v3067
    %v3069 = vpop.f32.mrb[0].mxu0
    %v3070 = vadd.f32 0.0, %v3069
    %v3071 = vpop.f32.mrb[0].mxu0
    %v3072 = vadd.f32 0.0, %v3071
    %3073 = vdwg.mxu0
    %3074 = vmatprep.subr.bf16.mxu0 %v1005
    %3075 = vmatpush1.bf16.msra.mxu0 %v1004
    %3076 = vmatprep.subr.bf16.mxu0 %v1013
    %3077 = vmatpush1.bf16.msra.mxu0 %v1012
    %3078 = vmatprep.subr.bf16.mxu0 %v1021
    %3079 = vmatpush1.bf16.msra.mxu0 %v1020
    %3080 = vmatprep.subr.bf16.mxu0 %v1029
    %3081 = vmatpush1.bf16.msra.mxu0 %v1028
    %3082 = vmatprep.subr.bf16.mxu0 %v1037
    %3083 = vmatpush1.bf16.msra.mxu0 %v1036
    %3084 = vmatprep.subr.bf16.mxu0 %v1045
    %3085 = vmatpush1.bf16.msra.mxu0 %v1044
    %3086 = vmatprep.subr.bf16.mxu0 %v1053
    %3087 = vmatpush1.bf16.msra.mxu0 %v1052
    %3088 = vmatprep.subr.bf16.mxu0 %v1061
    %3089 = vmatpush1.bf16.msra.mxu0 %v1060
    %3090 = vmatprep.subr.bf16.mxu0 %v1069
    %3091 = vmatpush1.bf16.msra.mxu0 %v1068
    %3092 = vmatprep.subr.bf16.mxu0 %v1077
    %3093 = vmatpush1.bf16.msra.mxu0 %v1076
    %3094 = vmatprep.subr.bf16.mxu0 %v1085
    %3095 = vmatpush1.bf16.msra.mxu0 %v1084
    %3096 = vmatprep.subr.bf16.mxu0 %v1093
    %3097 = vmatpush1.bf16.msra.mxu0 %v1092
    %3098 = vmatprep.subr.bf16.mxu0 %v1101
    %3099 = vmatpush1.bf16.msra.mxu0 %v1100
    %3100 = vmatprep.subr.bf16.mxu0 %v1109
    %3101 = vmatpush1.bf16.msra.mxu0 %v1108
    %3102 = vmatprep.subr.bf16.mxu0 %v1117
    %3103 = vmatpush1.bf16.msra.mxu0 %v1116
    %3104 = vmatprep.subr.bf16.mxu0 %v1125
    %3105 = vmatpush1.bf16.msra.mxu0 %v1124
    %3106 = vmatprep.mubr.bf16.mxu0 %v2133
    %3107 = vmatmul.mubr.bf16.gmra.mrb[0].mxu0 %v2132
    %v3108 = vpop.f32.mrb[0].mxu0
    %v3109 = vadd.f32 %v3066, %v3108
    %v3110 = vpop.f32.mrb[0].mxu0
    %v3111 = vadd.f32 %v3068, %v3110
    %v3112 = vpop.f32.mrb[0].mxu0
    %v3113 = vadd.f32 %v3070, %v3112
    %v3114 = vpop.f32.mrb[0].mxu0
    %v3115 = vadd.f32 %v3072, %v3114
    %3116 = vdwg.mxu0
    %3117 = vmatprep.subr.bf16.mxu0 %v1133
    %3118 = vmatpush1.bf16.msra.mxu0 %v1132
    %3119 = vmatprep.subr.bf16.mxu0 %v1141
    %3120 = vmatpush1.bf16.msra.mxu0 %v1140
    %3121 = vmatprep.subr.bf16.mxu0 %v1149
    %3122 = vmatpush1.bf16.msra.mxu0 %v1148
    %3123 = vmatprep.subr.bf16.mxu0 %v1157
    %3124 = vmatpush1.bf16.msra.mxu0 %v1156
    %3125 = vmatprep.subr.bf16.mxu0 %v1165
    %3126 = vmatpush1.bf16.msra.mxu0 %v1164
    %3127 = vmatprep.subr.bf16.mxu0 %v1173
    %3128 = vmatpush1.bf16.msra.mxu0 %v1172
    %3129 = vmatprep.subr.bf16.mxu0 %v1181
    %3130 = vmatpush1.bf16.msra.mxu0 %v1180
    %3131 = vmatprep.subr.bf16.mxu0 %v1189
    %3132 = vmatpush1.bf16.msra.mxu0 %v1188
    %3133 = vmatprep.subr.bf16.mxu0 %v1197
    %3134 = vmatpush1.bf16.msra.mxu0 %v1196
    %3135 = vmatprep.subr.bf16.mxu0 %v1205
    %3136 = vmatpush1.bf16.msra.mxu0 %v1204
    %3137 = vmatprep.subr.bf16.mxu0 %v1213
    %3138 = vmatpush1.bf16.msra.mxu0 %v1212
    %3139 = vmatprep.subr.bf16.mxu0 %v1221
    %3140 = vmatpush1.bf16.msra.mxu0 %v1220
    %3141 = vmatprep.subr.bf16.mxu0 %v1229
    %3142 = vmatpush1.bf16.msra.mxu0 %v1228
    %3143 = vmatprep.subr.bf16.mxu0 %v1237
    %3144 = vmatpush1.bf16.msra.mxu0 %v1236
    %3145 = vmatprep.subr.bf16.mxu0 %v1245
    %3146 = vmatpush1.bf16.msra.mxu0 %v1244
    %3147 = vmatprep.subr.bf16.mxu0 %v1253
    %3148 = vmatpush1.bf16.msra.mxu0 %v1252
    %3149 = vmatprep.mubr.bf16.mxu0 %v2135
    %3150 = vmatmul.mubr.bf16.gmra.mrb[0].mxu0 %v2134
    %v3151 = vpop.f32.mrb[0].mxu0
    %v3152 = vadd.f32 %v3109, %v3151
    %v3153 = vpop.f32.mrb[0].mxu0
    %v3154 = vadd.f32 %v3111, %v3153
    %v3155 = vpop.f32.mrb[0].mxu0
    %v3156 = vadd.f32 %v3113, %v3155
    %v3157 = vpop.f32.mrb[0].mxu0
    %v3158 = vadd.f32 %v3115, %v3157
    %3159 = vdwg.mxu0
    %3160 = vmatprep.subr.bf16.mxu0 %v1261
    %3161 = vmatpush1.bf16.msra.mxu0 %v1260
    %3162 = vmatprep.subr.bf16.mxu0 %v1269
    %3163 = vmatpush1.bf16.msra.mxu0 %v1268
    %3164 = vmatprep.subr.bf16.mxu0 %v1277
    %3165 = vmatpush1.bf16.msra.mxu0 %v1276
    %3166 = vmatprep.subr.bf16.mxu0 %v1285
    %3167 = vmatpush1.bf16.msra.mxu0 %v1284
    %3168 = vmatprep.subr.bf16.mxu0 %v1293
    %3169 = vmatpush1.bf16.msra.mxu0 %v1292
    %3170 = vmatprep.subr.bf16.mxu0 %v1301
    %3171 = vmatpush1.bf16.msra.mxu0 %v1300
    %3172 = vmatprep.subr.bf16.mxu0 %v1309
    %3173 = vmatpush1.bf16.msra.mxu0 %v1308
    %3174 = vmatprep.subr.bf16.mxu0 %v1317
    %3175 = vmatpush1.bf16.msra.mxu0 %v1316
    %3176 = vmatprep.subr.bf16.mxu0 %v1325
    %3177 = vmatpush1.bf16.msra.mxu0 %v1324
    %3178 = vmatprep.subr.bf16.mxu0 %v1333
    %3179 = vmatpush1.bf16.msra.mxu0 %v1332
    %3180 = vmatprep.subr.bf16.mxu0 %v1341
    %3181 = vmatpush1.bf16.msra.mxu0 %v1340
    %3182 = vmatprep.subr.bf16.mxu0 %v1349
    %3183 = vmatpush1.bf16.msra.mxu0 %v1348
    %3184 = vmatprep.subr.bf16.mxu0 %v1357
    %3185 = vmatpush1.bf16.msra.mxu0 %v1356
    %3186 = vmatprep.subr.bf16.mxu0 %v1365
    %3187 = vmatpush1.bf16.msra.mxu0 %v1364
    %3188 = vmatprep.subr.bf16.mxu0 %v1373
    %3189 = vmatpush1.bf16.msra.mxu0 %v1372
    %3190 = vmatprep.subr.bf16.mxu0 %v1381
    %3191 = vmatpush1.bf16.msra.mxu0 %v1380
    %3192 = vmatprep.mubr.bf16.mxu0 %v2137
    %3193 = vmatmul.mubr.bf16.gmra.mrb[0].mxu0 %v2136
    %v3194 = vpop.f32.mrb[0].mxu0
    %v3195 = vadd.f32 %v3152, %v3194
    %v3196 = vpop.f32.mrb[0].mxu0
    %v3197 = vadd.f32 %v3154, %v3196
    %v3198 = vpop.f32.mrb[0].mxu0
    %v3199 = vadd.f32 %v3156, %v3198
    %v3200 = vpop.f32.mrb[0].mxu0
    %v3201 = vadd.f32 %v3158, %v3200
    %3202 = vdwg.mxu0
    %3203 = vmatprep.subr.bf16.mxu0 %v1389
    %3204 = vmatpush1.bf16.msra.mxu0 %v1388
    %3205 = vmatprep.subr.bf16.mxu0 %v1397
    %3206 = vmatpush1.bf16.msra.mxu0 %v1396
    %3207 = vmatprep.subr.bf16.mxu0 %v1405
    %3208 = vmatpush1.bf16.msra.mxu0 %v1404
    %3209 = vmatprep.subr.bf16.mxu0 %v1413
    %3210 = vmatpush1.bf16.msra.mxu0 %v1412
    %3211 = vmatprep.subr.bf16.mxu0 %v1421
    %3212 = vmatpush1.bf16.msra.mxu0 %v1420
    %3213 = vmatprep.subr.bf16.mxu0 %v1429
    %3214 = vmatpush1.bf16.msra.mxu0 %v1428
    %3215 = vmatprep.subr.bf16.mxu0 %v1437
    %3216 = vmatpush1.bf16.msra.mxu0 %v1436
    %3217 = vmatprep.subr.bf16.mxu0 %v1445
    %3218 = vmatpush1.bf16.msra.mxu0 %v1444
    %3219 = vmatprep.subr.bf16.mxu0 %v1453
    %3220 = vmatpush1.bf16.msra.mxu0 %v1452
    %3221 = vmatprep.subr.bf16.mxu0 %v1461
    %3222 = vmatpush1.bf16.msra.mxu0 %v1460
    %3223 = vmatprep.subr.bf16.mxu0 %v1469
    %3224 = vmatpush1.bf16.msra.mxu0 %v1468
    %3225 = vmatprep.subr.bf16.mxu0 %v1477
    %3226 = vmatpush1.bf16.msra.mxu0 %v1476
    %3227 = vmatprep.subr.bf16.mxu0 %v1485
    %3228 = vmatpush1.bf16.msra.mxu0 %v1484
    %3229 = vmatprep.subr.bf16.mxu0 %v1493
    %3230 = vmatpush1.bf16.msra.mxu0 %v1492
    %3231 = vmatprep.subr.bf16.mxu0 %v1501
    %3232 = vmatpush1.bf16.msra.mxu0 %v1500
    %3233 = vmatprep.subr.bf16.mxu0 %v1509
    %3234 = vmatpush1.bf16.msra.mxu0 %v1508
    %3235 = vmatprep.mubr.bf16.mxu0 %v2139
    %3236 = vmatmul.mubr.bf16.gmra.mrb[0].mxu0 %v2138
    %v3237 = vpop.f32.mrb[0].mxu0
    %v3238 = vadd.f32 %v3195, %v3237
    %v3239 = vpop.f32.mrb[0].mxu0
    %v3240 = vadd.f32 %v3197, %v3239
    %v3241 = vpop.f32.mrb[0].mxu0
    %v3242 = vadd.f32 %v3199, %v3241
    %v3243 = vpop.f32.mrb[0].mxu0
    %v3244 = vadd.f32 %v3201, %v3243
    %3245 = vdwg.mxu0
    %3246 = vmatprep.subr.bf16.mxu0 %v1517
    %3247 = vmatpush1.bf16.msra.mxu0 %v1516
    %3248 = vmatprep.subr.bf16.mxu0 %v1525
    %3249 = vmatpush1.bf16.msra.mxu0 %v1524
    %3250 = vmatprep.subr.bf16.mxu0 %v1533
    %3251 = vmatpush1.bf16.msra.mxu0 %v1532
    %3252 = vmatprep.subr.bf16.mxu0 %v1541
    %3253 = vmatpush1.bf16.msra.mxu0 %v1540
    %3254 = vmatprep.subr.bf16.mxu0 %v1549
    %3255 = vmatpush1.bf16.msra.mxu0 %v1548
    %3256 = vmatprep.subr.bf16.mxu0 %v1557
    %3257 = vmatpush1.bf16.msra.mxu0 %v1556
    %3258 = vmatprep.subr.bf16.mxu0 %v1565
    %3259 = vmatpush1.bf16.msra.mxu0 %v1564
    %3260 = vmatprep.subr.bf16.mxu0 %v1573
    %3261 = vmatpush1.bf16.msra.mxu0 %v1572
    %3262 = vmatprep.subr.bf16.mxu0 %v1581
    %3263 = vmatpush1.bf16.msra.mxu0 %v1580
    %3264 = vmatprep.subr.bf16.mxu0 %v1589
    %3265 = vmatpush1.bf16.msra.mxu0 %v1588
    %3266 = vmatprep.subr.bf16.mxu0 %v1597
    %3267 = vmatpush1.bf16.msra.mxu0 %v1596
    %3268 = vmatprep.subr.bf16.mxu0 %v1605
    %3269 = vmatpush1.bf16.msra.mxu0 %v1604
    %3270 = vmatprep.subr.bf16.mxu0 %v1613
    %3271 = vmatpush1.bf16.msra.mxu0 %v1612
    %3272 = vmatprep.subr.bf16.mxu0 %v1621
    %3273 = vmatpush1.bf16.msra.mxu0 %v1620
    %3274 = vmatprep.subr.bf16.mxu0 %v1629
    %3275 = vmatpush1.bf16.msra.mxu0 %v1628
    %3276 = vmatprep.subr.bf16.mxu0 %v1637
    %3277 = vmatpush1.bf16.msra.mxu0 %v1636
    %3278 = vmatprep.mubr.bf16.mxu0 %v2141
    %3279 = vmatmul.mubr.bf16.gmra.mrb[0].mxu0 %v2140
    %v3280 = vpop.f32.mrb[0].mxu0
    %v3281 = vadd.f32 %v3238, %v3280
    %v3282 = vpop.f32.mrb[0].mxu0
    %v3283 = vadd.f32 %v3240, %v3282
    %v3284 = vpop.f32.mrb[0].mxu0
    %v3285 = vadd.f32 %v3242, %v3284
    %v3286 = vpop.f32.mrb[0].mxu0
    %v3287 = vadd.f32 %v3244, %v3286
    %3288 = vdwg.mxu0
    %3289 = vmatprep.subr.bf16.mxu0 %v1645
    %3290 = vmatpush1.bf16.msra.mxu0 %v1644
    %3291 = vmatprep.subr.bf16.mxu0 %v1653
    %3292 = vmatpush1.bf16.msra.mxu0 %v1652
    %3293 = vmatprep.subr.bf16.mxu0 %v1661
    %3294 = vmatpush1.bf16.msra.mxu0 %v1660
    %3295 = vmatprep.subr.bf16.mxu0 %v1669
    %3296 = vmatpush1.bf16.msra.mxu0 %v1668
    %3297 = vmatprep.subr.bf16.mxu0 %v1677
    %3298 = vmatpush1.bf16.msra.mxu0 %v1676
    %3299 = vmatprep.subr.bf16.mxu0 %v1685
    %3300 = vmatpush1.bf16.msra.mxu0 %v1684
    %3301 = vmatprep.subr.bf16.mxu0 %v1693
    %3302 = vmatpush1.bf16.msra.mxu0 %v1692
    %3303 = vmatprep.subr.bf16.mxu0 %v1701
    %3304 = vmatpush1.bf16.msra.mxu0 %v1700
    %3305 = vmatprep.subr.bf16.mxu0 %v1709
    %3306 = vmatpush1.bf16.msra.mxu0 %v1708
    %3307 = vmatprep.subr.bf16.mxu0 %v1717
    %3308 = vmatpush1.bf16.msra.mxu0 %v1716
    %3309 = vmatprep.subr.bf16.mxu0 %v1725
    %3310 = vmatpush1.bf16.msra.mxu0 %v1724
    %3311 = vmatprep.subr.bf16.mxu0 %v1733
    %3312 = vmatpush1.bf16.msra.mxu0 %v1732
    %3313 = vmatprep.subr.bf16.mxu0 %v1741
    %3314 = vmatpush1.bf16.msra.mxu0 %v1740
    %3315 = vmatprep.subr.bf16.mxu0 %v1749
    %3316 = vmatpush1.bf16.msra.mxu0 %v1748
    %3317 = vmatprep.subr.bf16.mxu0 %v1757
    %3318 = vmatpush1.bf16.msra.mxu0 %v1756
    %3319 = vmatprep.subr.bf16.mxu0 %v1765
    %3320 = vmatpush1.bf16.msra.mxu0 %v1764
    %3321 = vmatprep.mubr.bf16.mxu0 %v2143
    %3322 = vmatmul.mubr.bf16.gmra.mrb[0].mxu0 %v2142
    %v3323 = vpop.f32.mrb[0].mxu0
    %v3324 = vadd.f32 %v3281, %v3323
    %v3325 = vpop.f32.mrb[0].mxu0
    %v3326 = vadd.f32 %v3283, %v3325
    %v3327 = vpop.f32.mrb[0].mxu0
    %v3328 = vadd.f32 %v3285, %v3327
    %v3329 = vpop.f32.mrb[0].mxu0
    %v3330 = vadd.f32 %v3287, %v3329
    %3331 = vdwg.mxu0
    %3332 = vmatprep.subr.bf16.mxu0 %v1773
    %3333 = vmatpush1.bf16.msra.mxu0 %v1772
    %3334 = vmatprep.subr.bf16.mxu0 %v1781
    %3335 = vmatpush1.bf16.msra.mxu0 %v1780
    %3336 = vmatprep.subr.bf16.mxu0 %v1789
    %3337 = vmatpush1.bf16.msra.mxu0 %v1788
    %3338 = vmatprep.subr.bf16.mxu0 %v1797
    %3339 = vmatpush1.bf16.msra.mxu0 %v1796
    %3340 = vmatprep.subr.bf16.mxu0 %v1805
    %3341 = vmatpush1.bf16.msra.mxu0 %v1804
    %3342 = vmatprep.subr.bf16.mxu0 %v1813
    %3343 = vmatpush1.bf16.msra.mxu0 %v1812
    %3344 = vmatprep.subr.bf16.mxu0 %v1821
    %3345 = vmatpush1.bf16.msra.mxu0 %v1820
    %3346 = vmatprep.subr.bf16.mxu0 %v1829
    %3347 = vmatpush1.bf16.msra.mxu0 %v1828
    %3348 = vmatprep.subr.bf16.mxu0 %v1837
    %3349 = vmatpush1.bf16.msra.mxu0 %v1836
    %3350 = vmatprep.subr.bf16.mxu0 %v1845
    %3351 = vmatpush1.bf16.msra.mxu0 %v1844
    %3352 = vmatprep.subr.bf16.mxu0 %v1853
    %3353 = vmatpush1.bf16.msra.mxu0 %v1852
    %3354 = vmatprep.subr.bf16.mxu0 %v1861
    %3355 = vmatpush1.bf16.msra.mxu0 %v1860
    %3356 = vmatprep.subr.bf16.mxu0 %v1869
    %3357 = vmatpush1.bf16.msra.mxu0 %v1868
    %3358 = vmatprep.subr.bf16.mxu0 %v1877
    %3359 = vmatpush1.bf16.msra.mxu0 %v1876
    %3360 = vmatprep.subr.bf16.mxu0 %v1885
    %3361 = vmatpush1.bf16.msra.mxu0 %v1884
    %3362 = vmatprep.subr.bf16.mxu0 %v1893
    %3363 = vmatpush1.bf16.msra.mxu0 %v1892
    %3364 = vmatprep.mubr.bf16.mxu0 %v2145
    %3365 = vmatmul.mubr.bf16.gmra.mrb[0].mxu0 %v2144
    %v3366 = vpop.f32.mrb[0].mxu0
    %v3367 = vadd.f32 %v3324, %v3366
    %v3368 = vpop.f32.mrb[0].mxu0
    %v3369 = vadd.f32 %v3326, %v3368
    %v3370 = vpop.f32.mrb[0].mxu0
    %v3371 = vadd.f32 %v3328, %v3370
    %v3372 = vpop.f32.mrb[0].mxu0
    %v3373 = vadd.f32 %v3330, %v3372
    %3374 = vdwg.mxu0
    %3375 = vmatprep.subr.bf16.mxu0 %v1901
    %3376 = vmatpush1.bf16.msra.mxu0 %v1900
    %3377 = vmatprep.subr.bf16.mxu0 %v1909
    %3378 = vmatpush1.bf16.msra.mxu0 %v1908
    %3379 = vmatprep.subr.bf16.mxu0 %v1917
    %3380 = vmatpush1.bf16.msra.mxu0 %v1916
    %3381 = vmatprep.subr.bf16.mxu0 %v1925
    %3382 = vmatpush1.bf16.msra.mxu0 %v1924
    %3383 = vmatprep.subr.bf16.mxu0 %v1933
    %3384 = vmatpush1.bf16.msra.mxu0 %v1932
    %3385 = vmatprep.subr.bf16.mxu0 %v1941
    %3386 = vmatpush1.bf16.msra.mxu0 %v1940
    %3387 = vmatprep.subr.bf16.mxu0 %v1949
    %3388 = vmatpush1.bf16.msra.mxu0 %v1948
    %3389 = vmatprep.subr.bf16.mxu0 %v1957
    %3390 = vmatpush1.bf16.msra.mxu0 %v1956
    %3391 = vmatprep.subr.bf16.mxu0 %v1965
    %3392 = vmatpush1.bf16.msra.mxu0 %v1964
    %3393 = vmatprep.subr.bf16.mxu0 %v1973
    %3394 = vmatpush1.bf16.msra.mxu0 %v1972
    %3395 = vmatprep.subr.bf16.mxu0 %v1981
    %3396 = vmatpush1.bf16.msra.mxu0 %v1980
    %3397 = vmatprep.subr.bf16.mxu0 %v1989
    %3398 = vmatpush1.bf16.msra.mxu0 %v1988
    %3399 = vmatprep.subr.bf16.mxu0 %v1997
    %3400 = vmatpush1.bf16.msra.mxu0 %v1996
    %3401 = vmatprep.subr.bf16.mxu0 %v2005
    %3402 = vmatpush1.bf16.msra.mxu0 %v2004
    %3403 = vmatprep.subr.bf16.mxu0 %v2013
    %3404 = vmatpush1.bf16.msra.mxu0 %v2012
    %3405 = vmatprep.subr.bf16.mxu0 %v2021
    %3406 = vmatpush1.bf16.msra.mxu0 %v2020
    %3407 = vmatprep.mubr.bf16.mxu0 %v2147
    %3408 = vmatmul.mubr.bf16.gmra.mrb[0].mxu0 %v2146
    %v3409 = vpop.f32.mrb[0].mxu0
    %v3410 = vadd.f32 %v3367, %v3409
    %v3411 = vpop.f32.mrb[0].mxu0
    %v3412 = vadd.f32 %v3369, %v3411
    %v3413 = vpop.f32.mrb[0].mxu0
    %v3414 = vadd.f32 %v3371, %v3413
    %v3415 = vpop.f32.mrb[0].mxu0
    %v3416 = vadd.f32 %v3373, %v3415
    %3417 = vdwg.mxu0
    %3418 = vmatprep.subr.bf16.mxu0 %v2029
    %3419 = vmatpush1.bf16.msra.mxu0 %v2028
    %3420 = vmatprep.subr.bf16.mxu0 %v2037
    %3421 = vmatpush1.bf16.msra.mxu0 %v2036
    %3422 = vmatprep.subr.bf16.mxu0 %v2045
    %3423 = vmatpush1.bf16.msra.mxu0 %v2044
    %3424 = vmatprep.subr.bf16.mxu0 %v2053
    %3425 = vmatpush1.bf16.msra.mxu0 %v2052
    %3426 = vmatprep.subr.bf16.mxu0 %v2061
    %3427 = vmatpush1.bf16.msra.mxu0 %v2060
    %3428 = vmatprep.subr.bf16.mxu0 %v2069
    %3429 = vmatpush1.bf16.msra.mxu0 %v2068
    %3430 = vmatprep.subr.bf16.mxu0 0
    %3431 = vmatpush1.bf16.msra.mxu0 0
    %3432 = vmatprep.subr.bf16.mxu0 0
    %3433 = vmatpush1.bf16.msra.mxu0 0
    %3434 = vmatprep.subr.bf16.mxu0 0
    %3435 = vmatpush1.bf16.msra.mxu0 0
    %3436 = vmatprep.subr.bf16.mxu0 0
    %3437 = vmatpush1.bf16.msra.mxu0 0
    %3438 = vmatprep.subr.bf16.mxu0 0
    %3439 = vmatpush1.bf16.msra.mxu0 0
    %3440 = vmatprep.subr.bf16.mxu0 0
    %3441 = vmatpush1.bf16.msra.mxu0 0
    %3442 = vmatprep.subr.bf16.mxu0 0
    %3443 = vmatpush1.bf16.msra.mxu0 0
    %3444 = vmatprep.subr.bf16.mxu0 0
    %3445 = vmatpush1.bf16.msra.mxu0 0
    %3446 = vmatprep.subr.bf16.mxu0 0
    %3447 = vmatpush1.bf16.msra.mxu0 0
    %3448 = vmatprep.subr.bf16.mxu0 0
    %3449 = vmatpush1.bf16.msra.mxu0 0
    %3450 = vmatprep.mubr.bf16.mxu0 0
    %3451 = vmatmul.mubr.bf16.gmra.mrb[0].mxu0 %v2169
    %v3452 = vpop.f32.mrb[0].mxu0
    %v3453 = vadd.f32 %v3410, %v3452
    %v3454 = vpop.f32.mrb[0].mxu0
    %v3455 = vadd.f32 %v3412, %v3454
    %v3456 = vpop.f32.mrb[0].mxu0
    %v3457 = vadd.f32 %v3414, %v3456
    %v3458 = vpop.f32.mrb[0].mxu0
    %v3459 = vadd.f32 %v3416, %v3458
    %3460 = vdwg.mxu0
    %3461 = vmatprep.subr.bf16.mxu0 %v879
    %3462 = vmatpush1.bf16.msra.mxu0 %v878
    %3463 = vmatprep.subr.bf16.mxu0 %v887
    %3464 = vmatpush1.bf16.msra.mxu0 %v886
    %3465 = vmatprep.subr.bf16.mxu0 %v895
    %3466 = vmatpush1.bf16.msra.mxu0 %v894
    %3467 = vmatprep.subr.bf16.mxu0 %v903
    %3468 = vmatpush1.bf16.msra.mxu0 %v902
    %3469 = vmatprep.subr.bf16.mxu0 %v911
    %3470 = vmatpush1.bf16.msra.mxu0 %v910
    %3471 = vmatprep.subr.bf16.mxu0 %v919
    %3472 = vmatpush1.bf16.msra.mxu0 %v918
    %3473 = vmatprep.subr.bf16.mxu0 %v927
    %3474 = vmatpush1.bf16.msra.mxu0 %v926
    %3475 = vmatprep.subr.bf16.mxu0 %v935
    %3476 = vmatpush1.bf16.msra.mxu0 %v934
    %3477 = vmatprep.subr.bf16.mxu0 %v943
    %3478 = vmatpush1.bf16.msra.mxu0 %v942
    %3479 = vmatprep.subr.bf16.mxu0 %v951
    %3480 = vmatpush1.bf16.msra.mxu0 %v950
    %3481 = vmatprep.subr.bf16.mxu0 %v959
    %3482 = vmatpush1.bf16.msra.mxu0 %v958
    %3483 = vmatprep.subr.bf16.mxu0 %v967
    %3484 = vmatpush1.bf16.msra.mxu0 %v966
    %3485 = vmatprep.subr.bf16.mxu0 %v975
    %3486 = vmatpush1.bf16.msra.mxu0 %v974
    %3487 = vmatprep.subr.bf16.mxu0 %v983
    %3488 = vmatpush1.bf16.msra.mxu0 %v982
    %3489 = vmatprep.subr.bf16.mxu0 %v991
    %3490 = vmatpush1.bf16.msra.mxu0 %v990
    %3491 = vmatprep.subr.bf16.mxu0 %v999
    %3492 = vmatpush1.bf16.msra.mxu0 %v998
    %3493 = vmatprep.mubr.bf16.mxu0 %v2131
    %3494 = vmatmul.mubr.bf16.gmra.mrb[0].mxu0 %v2130
    %v3495 = vpop.f32.mrb[0].mxu0
    %v3496 = vadd.f32 0.0, %v3495
    %v3497 = vpop.f32.mrb[0].mxu0
    %v3498 = vadd.f32 0.0, %v3497
    %v3499 = vpop.f32.mrb[0].mxu0
    %v3500 = vadd.f32 0.0, %v3499
    %v3501 = vpop.f32.mrb[0].mxu0
    %v3502 = vadd.f32 0.0, %v3501
    %3503 = vdwg.mxu0
    %3504 = vmatprep.subr.bf16.mxu0 %v1007
    %3505 = vmatpush1.bf16.msra.mxu0 %v1006
    %3506 = vmatprep.subr.bf16.mxu0 %v1015
    %3507 = vmatpush1.bf16.msra.mxu0 %v1014
    %3508 = vmatprep.subr.bf16.mxu0 %v1023
    %3509 = vmatpush1.bf16.msra.mxu0 %v1022
    %3510 = vmatprep.subr.bf16.mxu0 %v1031
    %3511 = vmatpush1.bf16.msra.mxu0 %v1030
    %3512 = vmatprep.subr.bf16.mxu0 %v1039
    %3513 = vmatpush1.bf16.msra.mxu0 %v1038
    %3514 = vmatprep.subr.bf16.mxu0 %v1047
    %3515 = vmatpush1.bf16.msra.mxu0 %v1046
    %3516 = vmatprep.subr.bf16.mxu0 %v1055
    %3517 = vmatpush1.bf16.msra.mxu0 %v1054
    %3518 = vmatprep.subr.bf16.mxu0 %v1063
    %3519 = vmatpush1.bf16.msra.mxu0 %v1062
    %3520 = vmatprep.subr.bf16.mxu0 %v1071
    %3521 = vmatpush1.bf16.msra.mxu0 %v1070
    %3522 = vmatprep.subr.bf16.mxu0 %v1079
    %3523 = vmatpush1.bf16.msra.mxu0 %v1078
    %3524 = vmatprep.subr.bf16.mxu0 %v1087
    %3525 = vmatpush1.bf16.msra.mxu0 %v1086
    %3526 = vmatprep.subr.bf16.mxu0 %v1095
    %3527 = vmatpush1.bf16.msra.mxu0 %v1094
    %3528 = vmatprep.subr.bf16.mxu0 %v1103
    %3529 = vmatpush1.bf16.msra.mxu0 %v1102
    %3530 = vmatprep.subr.bf16.mxu0 %v1111
    %3531 = vmatpush1.bf16.msra.mxu0 %v1110
    %3532 = vmatprep.subr.bf16.mxu0 %v1119
    %3533 = vmatpush1.bf16.msra.mxu0 %v1118
    %3534 = vmatprep.subr.bf16.mxu0 %v1127
    %3535 = vmatpush1.bf16.msra.mxu0 %v1126
    %3536 = vmatprep.mubr.bf16.mxu0 %v2133
    %3537 = vmatmul.mubr.bf16.gmra.mrb[0].mxu0 %v2132
    %v3538 = vpop.f32.mrb[0].mxu0
    %v3539 = vadd.f32 %v3496, %v3538
    %v3540 = vpop.f32.mrb[0].mxu0
    %v3541 = vadd.f32 %v3498, %v3540
    %v3542 = vpop.f32.mrb[0].mxu0
    %v3543 = vadd.f32 %v3500, %v3542
    %v3544 = vpop.f32.mrb[0].mxu0
    %v3545 = vadd.f32 %v3502, %v3544
    %3546 = vdwg.mxu0
    %3547 = vmatprep.subr.bf16.mxu0 %v1135
    %3548 = vmatpush1.bf16.msra.mxu0 %v1134
    %3549 = vmatprep.subr.bf16.mxu0 %v1143
    %3550 = vmatpush1.bf16.msra.mxu0 %v1142
    %3551 = vmatprep.subr.bf16.mxu0 %v1151
    %3552 = vmatpush1.bf16.msra.mxu0 %v1150
    %3553 = vmatprep.subr.bf16.mxu0 %v1159
    %3554 = vmatpush1.bf16.msra.mxu0 %v1158
    %3555 = vmatprep.subr.bf16.mxu0 %v1167
    %3556 = vmatpush1.bf16.msra.mxu0 %v1166
    %3557 = vmatprep.subr.bf16.mxu0 %v1175
    %3558 = vmatpush1.bf16.msra.mxu0 %v1174
    %3559 = vmatprep.subr.bf16.mxu0 %v1183
    %3560 = vmatpush1.bf16.msra.mxu0 %v1182
    %3561 = vmatprep.subr.bf16.mxu0 %v1191
    %3562 = vmatpush1.bf16.msra.mxu0 %v1190
    %3563 = vmatprep.subr.bf16.mxu0 %v1199
    %3564 = vmatpush1.bf16.msra.mxu0 %v1198
    %3565 = vmatprep.subr.bf16.mxu0 %v1207
    %3566 = vmatpush1.bf16.msra.mxu0 %v1206
    %3567 = vmatprep.subr.bf16.mxu0 %v1215
    %3568 = vmatpush1.bf16.msra.mxu0 %v1214
    %3569 = vmatprep.subr.bf16.mxu0 %v1223
    %3570 = vmatpush1.bf16.msra.mxu0 %v1222
    %3571 = vmatprep.subr.bf16.mxu0 %v1231
    %3572 = vmatpush1.bf16.msra.mxu0 %v1230
    %3573 = vmatprep.subr.bf16.mxu0 %v1239
    %3574 = vmatpush1.bf16.msra.mxu0 %v1238
    %3575 = vmatprep.subr.bf16.mxu0 %v1247
    %3576 = vmatpush1.bf16.msra.mxu0 %v1246
    %3577 = vmatprep.subr.bf16.mxu0 %v1255
    %3578 = vmatpush1.bf16.msra.mxu0 %v1254
    %3579 = vmatprep.mubr.bf16.mxu0 %v2135
    %3580 = vmatmul.mubr.bf16.gmra.mrb[0].mxu0 %v2134
    %v3581 = vpop.f32.mrb[0].mxu0
    %v3582 = vadd.f32 %v3539, %v3581
    %v3583 = vpop.f32.mrb[0].mxu0
    %v3584 = vadd.f32 %v3541, %v3583
    %v3585 = vpop.f32.mrb[0].mxu0
    %v3586 = vadd.f32 %v3543, %v3585
    %v3587 = vpop.f32.mrb[0].mxu0
    %v3588 = vadd.f32 %v3545, %v3587
    %3589 = vdwg.mxu0
    %3590 = vmatprep.subr.bf16.mxu0 %v1263
    %3591 = vmatpush1.bf16.msra.mxu0 %v1262
    %3592 = vmatprep.subr.bf16.mxu0 %v1271
    %3593 = vmatpush1.bf16.msra.mxu0 %v1270
    %3594 = vmatprep.subr.bf16.mxu0 %v1279
    %3595 = vmatpush1.bf16.msra.mxu0 %v1278
    %3596 = vmatprep.subr.bf16.mxu0 %v1287
    %3597 = vmatpush1.bf16.msra.mxu0 %v1286
    %3598 = vmatprep.subr.bf16.mxu0 %v1295
    %3599 = vmatpush1.bf16.msra.mxu0 %v1294
    %3600 = vmatprep.subr.bf16.mxu0 %v1303
    %3601 = vmatpush1.bf16.msra.mxu0 %v1302
    %3602 = vmatprep.subr.bf16.mxu0 %v1311
    %3603 = vmatpush1.bf16.msra.mxu0 %v1310
    %3604 = vmatprep.subr.bf16.mxu0 %v1319
    %3605 = vmatpush1.bf16.msra.mxu0 %v1318
    %3606 = vmatprep.subr.bf16.mxu0 %v1327
    %3607 = vmatpush1.bf16.msra.mxu0 %v1326
    %3608 = vmatprep.subr.bf16.mxu0 %v1335
    %3609 = vmatpush1.bf16.msra.mxu0 %v1334
    %3610 = vmatprep.subr.bf16.mxu0 %v1343
    %3611 = vmatpush1.bf16.msra.mxu0 %v1342
    %3612 = vmatprep.subr.bf16.mxu0 %v1351
    %3613 = vmatpush1.bf16.msra.mxu0 %v1350
    %3614 = vmatprep.subr.bf16.mxu0 %v1359
    %3615 = vmatpush1.bf16.msra.mxu0 %v1358
    %3616 = vmatprep.subr.bf16.mxu0 %v1367
    %3617 = vmatpush1.bf16.msra.mxu0 %v1366
    %3618 = vmatprep.subr.bf16.mxu0 %v1375
    %3619 = vmatpush1.bf16.msra.mxu0 %v1374
    %3620 = vmatprep.subr.bf16.mxu0 %v1383
    %3621 = vmatpush1.bf16.msra.mxu0 %v1382
    %3622 = vmatprep.mubr.bf16.mxu0 %v2137
    %3623 = vmatmul.mubr.bf16.gmra.mrb[0].mxu0 %v2136
    %v3624 = vpop.f32.mrb[0].mxu0
    %v3625 = vadd.f32 %v3582, %v3624
    %v3626 = vpop.f32.mrb[0].mxu0
    %v3627 = vadd.f32 %v3584, %v3626
    %v3628 = vpop.f32.mrb[0].mxu0
    %v3629 = vadd.f32 %v3586, %v3628
    %v3630 = vpop.f32.mrb[0].mxu0
    %v3631 = vadd.f32 %v3588, %v3630
    %3632 = vdwg.mxu0
    %3633 = vmatprep.subr.bf16.mxu0 %v1391
    %3634 = vmatpush1.bf16.msra.mxu0 %v1390
    %3635 = vmatprep.subr.bf16.mxu0 %v1399
    %3636 = vmatpush1.bf16.msra.mxu0 %v1398
    %3637 = vmatprep.subr.bf16.mxu0 %v1407
    %3638 = vmatpush1.bf16.msra.mxu0 %v1406
    %3639 = vmatprep.subr.bf16.mxu0 %v1415
    %3640 = vmatpush1.bf16.msra.mxu0 %v1414
    %3641 = vmatprep.subr.bf16.mxu0 %v1423
    %3642 = vmatpush1.bf16.msra.mxu0 %v1422
    %3643 = vmatprep.subr.bf16.mxu0 %v1431
    %3644 = vmatpush1.bf16.msra.mxu0 %v1430
    %3645 = vmatprep.subr.bf16.mxu0 %v1439
    %3646 = vmatpush1.bf16.msra.mxu0 %v1438
    %3647 = vmatprep.subr.bf16.mxu0 %v1447
    %3648 = vmatpush1.bf16.msra.mxu0 %v1446
    %3649 = vmatprep.subr.bf16.mxu0 %v1455
    %3650 = vmatpush1.bf16.msra.mxu0 %v1454
    %3651 = vmatprep.subr.bf16.mxu0 %v1463
    %3652 = vmatpush1.bf16.msra.mxu0 %v1462
    %3653 = vmatprep.subr.bf16.mxu0 %v1471
    %3654 = vmatpush1.bf16.msra.mxu0 %v1470
    %3655 = vmatprep.subr.bf16.mxu0 %v1479
    %3656 = vmatpush1.bf16.msra.mxu0 %v1478
    %3657 = vmatprep.subr.bf16.mxu0 %v1487
    %3658 = vmatpush1.bf16.msra.mxu0 %v1486
    %3659 = vmatprep.subr.bf16.mxu0 %v1495
    %3660 = vmatpush1.bf16.msra.mxu0 %v1494
    %3661 = vmatprep.subr.bf16.mxu0 %v1503
    %3662 = vmatpush1.bf16.msra.mxu0 %v1502
    %3663 = vmatprep.subr.bf16.mxu0 %v1511
    %3664 = vmatpush1.bf16.msra.mxu0 %v1510
    %3665 = vmatprep.mubr.bf16.mxu0 %v2139
    %3666 = vmatmul.mubr.bf16.gmra.mrb[0].mxu0 %v2138
    %v3667 = vpop.f32.mrb[0].mxu0
    %v3668 = vadd.f32 %v3625, %v3667
    %v3669 = vpop.f32.mrb[0].mxu0
    %v3670 = vadd.f32 %v3627, %v3669
    %v3671 = vpop.f32.mrb[0].mxu0
    %v3672 = vadd.f32 %v3629, %v3671
    %v3673 = vpop.f32.mrb[0].mxu0
    %v3674 = vadd.f32 %v3631, %v3673
    %3675 = vdwg.mxu0
    %3676 = vmatprep.subr.bf16.mxu0 %v1519
    %3677 = vmatpush1.bf16.msra.mxu0 %v1518
    %3678 = vmatprep.subr.bf16.mxu0 %v1527
    %3679 = vmatpush1.bf16.msra.mxu0 %v1526
    %3680 = vmatprep.subr.bf16.mxu0 %v1535
    %3681 = vmatpush1.bf16.msra.mxu0 %v1534
    %3682 = vmatprep.subr.bf16.mxu0 %v1543
    %3683 = vmatpush1.bf16.msra.mxu0 %v1542
    %3684 = vmatprep.subr.bf16.mxu0 %v1551
    %3685 = vmatpush1.bf16.msra.mxu0 %v1550
    %3686 = vmatprep.subr.bf16.mxu0 %v1559
    %3687 = vmatpush1.bf16.msra.mxu0 %v1558
    %3688 = vmatprep.subr.bf16.mxu0 %v1567
    %3689 = vmatpush1.bf16.msra.mxu0 %v1566
    %3690 = vmatprep.subr.bf16.mxu0 %v1575
    %3691 = vmatpush1.bf16.msra.mxu0 %v1574
    %3692 = vmatprep.subr.bf16.mxu0 %v1583
    %3693 = vmatpush1.bf16.msra.mxu0 %v1582
    %3694 = vmatprep.subr.bf16.mxu0 %v1591
    %3695 = vmatpush1.bf16.msra.mxu0 %v1590
    %3696 = vmatprep.subr.bf16.mxu0 %v1599
    %3697 = vmatpush1.bf16.msra.mxu0 %v1598
    %3698 = vmatprep.subr.bf16.mxu0 %v1607
    %3699 = vmatpush1.bf16.msra.mxu0 %v1606
    %3700 = vmatprep.subr.bf16.mxu0 %v1615
    %3701 = vmatpush1.bf16.msra.mxu0 %v1614
    %3702 = vmatprep.subr.bf16.mxu0 %v1623
    %3703 = vmatpush1.bf16.msra.mxu0 %v1622
    %3704 = vmatprep.subr.bf16.mxu0 %v1631
    %3705 = vmatpush1.bf16.msra.mxu0 %v1630
    %3706 = vmatprep.subr.bf16.mxu0 %v1639
    %3707 = vmatpush1.bf16.msra.mxu0 %v1638
    %3708 = vmatprep.mubr.bf16.mxu0 %v2141
    %3709 = vmatmul.mubr.bf16.gmra.mrb[0].mxu0 %v2140
    %v3710 = vpop.f32.mrb[0].mxu0
    %v3711 = vadd.f32 %v3668, %v3710
    %v3712 = vpop.f32.mrb[0].mxu0
    %v3713 = vadd.f32 %v3670, %v3712
    %v3714 = vpop.f32.mrb[0].mxu0
    %v3715 = vadd.f32 %v3672, %v3714
    %v3716 = vpop.f32.mrb[0].mxu0
    %v3717 = vadd.f32 %v3674, %v3716
    %3718 = vdwg.mxu0
    %3719 = vmatprep.subr.bf16.mxu0 %v1647
    %3720 = vmatpush1.bf16.msra.mxu0 %v1646
    %3721 = vmatprep.subr.bf16.mxu0 %v1655
    %3722 = vmatpush1.bf16.msra.mxu0 %v1654
    %3723 = vmatprep.subr.bf16.mxu0 %v1663
    %3724 = vmatpush1.bf16.msra.mxu0 %v1662
    %3725 = vmatprep.subr.bf16.mxu0 %v1671
    %3726 = vmatpush1.bf16.msra.mxu0 %v1670
    %3727 = vmatprep.subr.bf16.mxu0 %v1679
    %3728 = vmatpush1.bf16.msra.mxu0 %v1678
    %3729 = vmatprep.subr.bf16.mxu0 %v1687
    %3730 = vmatpush1.bf16.msra.mxu0 %v1686
    %3731 = vmatprep.subr.bf16.mxu0 %v1695
    %3732 = vmatpush1.bf16.msra.mxu0 %v1694
    %3733 = vmatprep.subr.bf16.mxu0 %v1703
    %3734 = vmatpush1.bf16.msra.mxu0 %v1702
    %3735 = vmatprep.subr.bf16.mxu0 %v1711
    %3736 = vmatpush1.bf16.msra.mxu0 %v1710
    %3737 = vmatprep.subr.bf16.mxu0 %v1719
    %3738 = vmatpush1.bf16.msra.mxu0 %v1718
    %3739 = vmatprep.subr.bf16.mxu0 %v1727
    %3740 = vmatpush1.bf16.msra.mxu0 %v1726
    %3741 = vmatprep.subr.bf16.mxu0 %v1735
    %3742 = vmatpush1.bf16.msra.mxu0 %v1734
    %3743 = vmatprep.subr.bf16.mxu0 %v1743
    %3744 = vmatpush1.bf16.msra.mxu0 %v1742
    %3745 = vmatprep.subr.bf16.mxu0 %v1751
    %3746 = vmatpush1.bf16.msra.mxu0 %v1750
    %3747 = vmatprep.subr.bf16.mxu0 %v1759
    %3748 = vmatpush1.bf16.msra.mxu0 %v1758
    %3749 = vmatprep.subr.bf16.mxu0 %v1767
    %3750 = vmatpush1.bf16.msra.mxu0 %v1766
    %3751 = vmatprep.mubr.bf16.mxu0 %v2143
    %3752 = vmatmul.mubr.bf16.gmra.mrb[0].mxu0 %v2142
    %v3753 = vpop.f32.mrb[0].mxu0
    %v3754 = vadd.f32 %v3711, %v3753
    %v3755 = vpop.f32.mrb[0].mxu0
    %v3756 = vadd.f32 %v3713, %v3755
    %v3757 = vpop.f32.mrb[0].mxu0
    %v3758 = vadd.f32 %v3715, %v3757
    %v3759 = vpop.f32.mrb[0].mxu0
    %v3760 = vadd.f32 %v3717, %v3759
    %3761 = vdwg.mxu0
    %3762 = vmatprep.subr.bf16.mxu0 %v1775
    %3763 = vmatpush1.bf16.msra.mxu0 %v1774
    %3764 = vmatprep.subr.bf16.mxu0 %v1783
    %3765 = vmatpush1.bf16.msra.mxu0 %v1782
    %3766 = vmatprep.subr.bf16.mxu0 %v1791
    %3767 = vmatpush1.bf16.msra.mxu0 %v1790
    %3768 = vmatprep.subr.bf16.mxu0 %v1799
    %3769 = vmatpush1.bf16.msra.mxu0 %v1798
    %3770 = vmatprep.subr.bf16.mxu0 %v1807
    %3771 = vmatpush1.bf16.msra.mxu0 %v1806
    %3772 = vmatprep.subr.bf16.mxu0 %v1815
    %3773 = vmatpush1.bf16.msra.mxu0 %v1814
    %3774 = vmatprep.subr.bf16.mxu0 %v1823
    %3775 = vmatpush1.bf16.msra.mxu0 %v1822
    %3776 = vmatprep.subr.bf16.mxu0 %v1831
    %3777 = vmatpush1.bf16.msra.mxu0 %v1830
    %3778 = vmatprep.subr.bf16.mxu0 %v1839
    %3779 = vmatpush1.bf16.msra.mxu0 %v1838
    %3780 = vmatprep.subr.bf16.mxu0 %v1847
    %3781 = vmatpush1.bf16.msra.mxu0 %v1846
    %3782 = vmatprep.subr.bf16.mxu0 %v1855
    %3783 = vmatpush1.bf16.msra.mxu0 %v1854
    %3784 = vmatprep.subr.bf16.mxu0 %v1863
    %3785 = vmatpush1.bf16.msra.mxu0 %v1862
    %3786 = vmatprep.subr.bf16.mxu0 %v1871
    %3787 = vmatpush1.bf16.msra.mxu0 %v1870
    %3788 = vmatprep.subr.bf16.mxu0 %v1879
    %3789 = vmatpush1.bf16.msra.mxu0 %v1878
    %3790 = vmatprep.subr.bf16.mxu0 %v1887
    %3791 = vmatpush1.bf16.msra.mxu0 %v1886
    %3792 = vmatprep.subr.bf16.mxu0 %v1895
    %3793 = vmatpush1.bf16.msra.mxu0 %v1894
    %3794 = vmatprep.mubr.bf16.mxu0 %v2145
    %3795 = vmatmul.mubr.bf16.gmra.mrb[0].mxu0 %v2144
    %v3796 = vpop.f32.mrb[0].mxu0
    %v3797 = vadd.f32 %v3754, %v3796
    %v3798 = vpop.f32.mrb[0].mxu0
    %v3799 = vadd.f32 %v3756, %v3798
    %v3800 = vpop.f32.mrb[0].mxu0
    %v3801 = vadd.f32 %v3758, %v3800
    %v3802 = vpop.f32.mrb[0].mxu0
    %v3803 = vadd.f32 %v3760, %v3802
    %3804 = vdwg.mxu0
    %3805 = vmatprep.subr.bf16.mxu0 %v1903
    %3806 = vmatpush1.bf16.msra.mxu0 %v1902
    %3807 = vmatprep.subr.bf16.mxu0 %v1911
    %3808 = vmatpush1.bf16.msra.mxu0 %v1910
    %3809 = vmatprep.subr.bf16.mxu0 %v1919
    %3810 = vmatpush1.bf16.msra.mxu0 %v1918
    %3811 = vmatprep.subr.bf16.mxu0 %v1927
    %3812 = vmatpush1.bf16.msra.mxu0 %v1926
    %3813 = vmatprep.subr.bf16.mxu0 %v1935
    %3814 = vmatpush1.bf16.msra.mxu0 %v1934
    %3815 = vmatprep.subr.bf16.mxu0 %v1943
    %3816 = vmatpush1.bf16.msra.mxu0 %v1942
    %3817 = vmatprep.subr.bf16.mxu0 %v1951
    %3818 = vmatpush1.bf16.msra.mxu0 %v1950
    %3819 = vmatprep.subr.bf16.mxu0 %v1959
    %3820 = vmatpush1.bf16.msra.mxu0 %v1958
    %3821 = vmatprep.subr.bf16.mxu0 %v1967
    %3822 = vmatpush1.bf16.msra.mxu0 %v1966
    %3823 = vmatprep.subr.bf16.mxu0 %v1975
    %3824 = vmatpush1.bf16.msra.mxu0 %v1974
    %3825 = vmatprep.subr.bf16.mxu0 %v1983
    %3826 = vmatpush1.bf16.msra.mxu0 %v1982
    %3827 = vmatprep.subr.bf16.mxu0 %v1991
    %3828 = vmatpush1.bf16.msra.mxu0 %v1990
    %3829 = vmatprep.subr.bf16.mxu0 %v1999
    %3830 = vmatpush1.bf16.msra.mxu0 %v1998
    %3831 = vmatprep.subr.bf16.mxu0 %v2007
    %3832 = vmatpush1.bf16.msra.mxu0 %v2006
    %3833 = vmatprep.subr.bf16.mxu0 %v2015
    %3834 = vmatpush1.bf16.msra.mxu0 %v2014
    %3835 = vmatprep.subr.bf16.mxu0 %v2023
    %3836 = vmatpush1.bf16.msra.mxu0 %v2022
    %3837 = vmatprep.mubr.bf16.mxu0 %v2147
    %3838 = vmatmul.mubr.bf16.gmra.mrb[0].mxu0 %v2146
    %v3839 = vpop.f32.mrb[0].mxu0
    %v3840 = vadd.f32 %v3797, %v3839
    %v3841 = vpop.f32.mrb[0].mxu0
    %v3842 = vadd.f32 %v3799, %v3841
    %v3843 = vpop.f32.mrb[0].mxu0
    %v3844 = vadd.f32 %v3801, %v3843
    %v3845 = vpop.f32.mrb[0].mxu0
    %v3846 = vadd.f32 %v3803, %v3845
    %3847 = vdwg.mxu0
    %3848 = vmatprep.subr.bf16.mxu0 %v2031
    %3849 = vmatpush1.bf16.msra.mxu0 %v2030
    %3850 = vmatprep.subr.bf16.mxu0 %v2039
    %3851 = vmatpush1.bf16.msra.mxu0 %v2038
    %3852 = vmatprep.subr.bf16.mxu0 %v2047
    %3853 = vmatpush1.bf16.msra.mxu0 %v2046
    %3854 = vmatprep.subr.bf16.mxu0 %v2055
    %3855 = vmatpush1.bf16.msra.mxu0 %v2054
    %3856 = vmatprep.subr.bf16.mxu0 %v2063
    %3857 = vmatpush1.bf16.msra.mxu0 %v2062
    %3858 = vmatprep.subr.bf16.mxu0 %v2071
    %3859 = vmatpush1.bf16.msra.mxu0 %v2070
    %3860 = vmatprep.subr.bf16.mxu0 0
    %3861 = vmatpush1.bf16.msra.mxu0 0
    %3862 = vmatprep.subr.bf16.mxu0 0
    %3863 = vmatpush1.bf16.msra.mxu0 0
    %3864 = vmatprep.subr.bf16.mxu0 0
    %3865 = vmatpush1.bf16.msra.mxu0 0
    %3866 = vmatprep.subr.bf16.mxu0 0
    %3867 = vmatpush1.bf16.msra.mxu0 0
    %3868 = vmatprep.subr.bf16.mxu0 0
    %3869 = vmatpush1.bf16.msra.mxu0 0
    %3870 = vmatprep.subr.bf16.mxu0 0
    %3871 = vmatpush1.bf16.msra.mxu0 0
    %3872 = vmatprep.subr.bf16.mxu0 0
    %3873 = vmatpush1.bf16.msra.mxu0 0
    %3874 = vmatprep.subr.bf16.mxu0 0
    %3875 = vmatpush1.bf16.msra.mxu0 0
    %3876 = vmatprep.subr.bf16.mxu0 0
    %3877 = vmatpush1.bf16.msra.mxu0 0
    %3878 = vmatprep.subr.bf16.mxu0 0
    %3879 = vmatpush1.bf16.msra.mxu0 0
    %3880 = vmatprep.mubr.bf16.mxu0 0
    %3881 = vmatmul.mubr.bf16.gmra.mrb[0].mxu0 %v2169
    %v3882 = vpop.f32.mrb[0].mxu0
    %v3883 = vadd.f32 %v3840, %v3882
    %v3884 = vpop.f32.mrb[0].mxu0
    %v3885 = vadd.f32 %v3842, %v3884
    %v3886 = vpop.f32.mrb[0].mxu0
    %v3887 = vadd.f32 %v3844, %v3886
    %v3888 = vpop.f32.mrb[0].mxu0
    %v3889 = vadd.f32 %v3846, %v3888
    %3890 = vdwg.mxu0
    %v3891 = vld [vmem:[#allocation7] sm:$0xff]
    %v3893 = vlaneseq
    %v3894 = vshrl.u32 %v3893, 7
    %v3895 = vsub.s32 0, %v3894
    %v3896 = vrot.slane %v3891, %v3895
    %v3897 = vlaneseq
    %v3898 = vshrl.u32 %v3897, 7
    %v3899 = vsub.s32 1, %v3898
    %v3900 = vrot.slane %v3891, %v3899
    %v3901 = vlaneseq
    %v3902 = vshrl.u32 %v3901, 7
    %v3903 = vsub.s32 2, %v3902
    %v3904 = vrot.slane %v3891, %v3903
    %v3905 = vlaneseq
    %v3906 = vshrl.u32 %v3905, 7
    %v3907 = vsub.s32 3, %v3906
    %v3908 = vrot.slane %v3891, %v3907
    %v3909 = vlaneseq
    %v3910 = vshrl.u32 %v3909, 7
    %v3911 = vsub.s32 4, %v3910
    %v3912 = vrot.slane %v3891, %v3911
    %v3913 = vlaneseq
    %v3914 = vshrl.u32 %v3913, 7
    %v3915 = vsub.s32 5, %v3914
    %v3916 = vrot.slane %v3891, %v3915
    %v3917 = vlaneseq
    %v3918 = vshrl.u32 %v3917, 7
    %v3919 = vsub.s32 6, %v3918
    %v3920 = vrot.slane %v3891, %v3919
    %v3921 = vlaneseq
    %v3922 = vshrl.u32 %v3921, 7
    %v3923 = vsub.s32 7, %v3922
    %v3924 = vrot.slane %v3891, %v3923
    %v3933 = vmul.f32 %v2593, %v3896
    %v3934 = vmul.f32 %v2595, %v3900
    %v3935 = vmul.f32 %v3023, %v3904
    %v3936 = vmul.f32 %v3025, %v3908
    %v3937 = vmul.f32 %v3453, %v3912
    %v3938 = vmul.f32 %v3455, %v3916
    %v3939 = vmul.f32 %v3883, %v3920
    %v3940 = vmul.f32 %v3885, %v3924
    %v3941 = vmul.f32 %v2597, %v3896
    %v3942 = vmul.f32 %v2599, %v3900
    %v3943 = vmul.f32 %v3027, %v3904
    %v3944 = vmul.f32 %v3029, %v3908
    %v3945 = vmul.f32 %v3457, %v3912
    %v3946 = vmul.f32 %v3459, %v3916
    %v3947 = vmul.f32 %v3887, %v3920
    %v3948 = vmul.f32 %v3889, %v3924
    %v3949 = vld [vmem:[#allocation8] sm:$0xff]
    %v3951 = vlaneseq
    %v3952 = vshrl.u32 %v3951, 7
    %v3953 = vsub.s32 0, %v3952
    %v3954 = vrot.slane %v3949, %v3953
    %v3955 = vlaneseq
    %v3956 = vshrl.u32 %v3955, 7
    %v3957 = vsub.s32 1, %v3956
    %v3958 = vrot.slane %v3949, %v3957
    %v3959 = vlaneseq
    %v3960 = vshrl.u32 %v3959, 7
    %v3961 = vsub.s32 2, %v3960
    %v3962 = vrot.slane %v3949, %v3961
    %v3963 = vlaneseq
    %v3964 = vshrl.u32 %v3963, 7
    %v3965 = vsub.s32 3, %v3964
    %v3966 = vrot.slane %v3949, %v3965
    %v3967 = vlaneseq
    %v3968 = vshrl.u32 %v3967, 7
    %v3969 = vsub.s32 4, %v3968
    %v3970 = vrot.slane %v3949, %v3969
    %v3971 = vlaneseq
    %v3972 = vshrl.u32 %v3971, 7
    %v3973 = vsub.s32 5, %v3972
    %v3974 = vrot.slane %v3949, %v3973
    %v3975 = vlaneseq
    %v3976 = vshrl.u32 %v3975, 7
    %v3977 = vsub.s32 6, %v3976
    %v3978 = vrot.slane %v3949, %v3977
    %v3979 = vlaneseq
    %v3980 = vshrl.u32 %v3979, 7
    %v3981 = vsub.s32 7, %v3980
    %v3982 = vrot.slane %v3949, %v3981
    %v3991 = vadd.f32 %v3933, %v3954
    %v3992 = vadd.f32 %v3934, %v3958
    %v3993 = vadd.f32 %v3935, %v3962
    %v3994 = vadd.f32 %v3936, %v3966
    %v3995 = vadd.f32 %v3937, %v3970
    %v3996 = vadd.f32 %v3938, %v3974
    %v3997 = vadd.f32 %v3939, %v3978
    %v3998 = vadd.f32 %v3940, %v3982
    %v3999 = vadd.f32 %v3941, %v3954
    %v4000 = vadd.f32 %v3942, %v3958
    %v4001 = vadd.f32 %v3943, %v3962
    %v4002 = vadd.f32 %v3944, %v3966
    %v4003 = vadd.f32 %v3945, %v3970
    %v4004 = vadd.f32 %v3946, %v3974
    %v4005 = vadd.f32 %v3947, %v3978
    %v4006 = vadd.f32 %v3948, %v3982
    %v4007 = vmax.f32 %v3991, 0.0
    %v4008 = vmax.f32 %v3992, 0.0
    %v4009 = vmax.f32 %v3993, 0.0
    %v4010 = vmax.f32 %v3994, 0.0
    %v4011 = vmax.f32 %v3995, 0.0
    %v4012 = vmax.f32 %v3996, 0.0
    %v4013 = vmax.f32 %v3997, 0.0
    %v4014 = vmax.f32 %v3998, 0.0
    %v4015 = vmax.f32 %v3999, 0.0
    %v4016 = vmax.f32 %v4000, 0.0
    %v4017 = vmax.f32 %v4001, 0.0
    %v4018 = vmax.f32 %v4002, 0.0
    %v4019 = vmax.f32 %v4003, 0.0
    %v4020 = vmax.f32 %v4004, 0.0
    %v4021 = vmax.f32 %v4005, 0.0
    %v4022 = vmax.f32 %v4006, 0.0
    %v4023 = vpack.c.bf16 %v4015, %v4007
    %v4024 = vpack.c.bf16 %v4016, %v4008
    %v4025 = vpack.c.bf16 %v4017, %v4009
    %v4026 = vpack.c.bf16 %v4018, %v4010
    %v4027 = vpack.c.bf16 %v4019, %v4011
    %v4028 = vpack.c.bf16 %v4020, %v4012
    %v4029 = vpack.c.bf16 %v4021, %v4013
    %v4030 = vpack.c.bf16 %v4022, %v4014
    %v4031 = vld [vmem:[#allocation10] sm:$0xff]
    %v4032 = vld [vmem:[#allocation10 + $0x8] sm:$0xff]
    %v4033 = vld [vmem:[#allocation10 + $0x10] sm:$0xff]
    %v4034 = vld [vmem:[#allocation10 + $0x18] sm:$0xff]
    %v4035 = vld [vmem:[#allocation10 + $0x20] sm:$0xff]
    %v4036 = vld [vmem:[#allocation10 + $0x28] sm:$0xff]
    %v4037 = vld [vmem:[#allocation10 + $0x30] sm:$0xff]
    %v4038 = vld [vmem:[#allocation10 + $0x38] sm:$0xff]
    %v4039 = vld [vmem:[#allocation10 + $0x40] sm:$0xff]
    %v4040 = vld [vmem:[#allocation10 + $0x48] sm:$0xff]
    %v4041 = vld [vmem:[#allocation10 + $0x50] sm:$0xff]
    %v4042 = vld [vmem:[#allocation10 + $0x58] sm:$0xff]
    %v4043 = vld [vmem:[#allocation10 + $0x60] sm:$0xff]
    %v4044 = vld [vmem:[#allocation10 + $0x68] sm:$0xff]
    %v4045 = vld [vmem:[#allocation10 + $0x70] sm:$0xff]
    %v4046 = vld [vmem:[#allocation10 + $0x78] sm:$0xff]
    %v4047 = vld [vmem:[#allocation10 + $0x80] sm:$0xff]
    %v4048 = vld [vmem:[#allocation10 + $0x88] sm:$0xff]
    %v4049 = vld [vmem:[#allocation10 + $0x90] sm:$0xff]
    %v4050 = vld [vmem:[#allocation10 + $0x98] sm:$0xff]
    %v4051 = vld [vmem:[#allocation10 + $0xa0] sm:$0xff]
    %v4052 = vld [vmem:[#allocation10 + $0xa8] sm:$0xff]
    %v4053 = vld [vmem:[#allocation10 + $0xb0] sm:$0xff]
    %v4054 = vld [vmem:[#allocation10 + $0xb8] sm:$0xff]
    %v4055 = vld [vmem:[#allocation10 + $0xc0] sm:$0xff]
    %v4056 = vld [vmem:[#allocation10 + $0xc8] sm:$0xff]
    %v4057 = vld [vmem:[#allocation10 + $0xd0] sm:$0xff]
    %v4058 = vld [vmem:[#allocation10 + $0xd8] sm:$0xff]
    %v4059 = vld [vmem:[#allocation10 + $0xe0] sm:$0xff]
    %v4060 = vld [vmem:[#allocation10 + $0xe8] sm:$0xff]
    %v4061 = vld [vmem:[#allocation10 + $0xf0] sm:$0xff]
    %v4062 = vld [vmem:[#allocation10 + $0xf8] sm:$0xff]
    %v4063 = vld [vmem:[#allocation10 + $0x100] sm:$0xff]
    %v4064 = vld [vmem:[#allocation10 + $0x108] sm:$0xff]
    %v4065 = vld [vmem:[#allocation10 + $0x110] sm:$0xff]
    %v4066 = vld [vmem:[#allocation10 + $0x118] sm:$0xff]
    %v4067 = vld [vmem:[#allocation10 + $0x120] sm:$0xff]
    %v4068 = vld [vmem:[#allocation10 + $0x128] sm:$0xff]
    %v4069 = vld [vmem:[#allocation10 + $0x130] sm:$0xff]
    %v4070 = vld [vmem:[#allocation10 + $0x138] sm:$0xff]
    %v4071 = vld [vmem:[#allocation10 + $0x140] sm:$0xff]
    %v4072 = vld [vmem:[#allocation10 + $0x148] sm:$0xff]
    %v4073 = vld [vmem:[#allocation10 + $0x150] sm:$0xff]
    %v4074 = vld [vmem:[#allocation10 + $0x158] sm:$0xff]
    %v4075 = vld [vmem:[#allocation10 + $0x160] sm:$0xff]
    %v4076 = vld [vmem:[#allocation10 + $0x168] sm:$0xff]
    %v4077 = vld [vmem:[#allocation10 + $0x170] sm:$0xff]
    %v4078 = vld [vmem:[#allocation10 + $0x178] sm:$0xff]
    %v4079 = vld [vmem:[#allocation10 + $0x180] sm:$0xff]
    %v4080 = vld [vmem:[#allocation10 + $0x188] sm:$0xff]
    %v4081 = vld [vmem:[#allocation10 + $0x190] sm:$0xff]
    %v4082 = vld [vmem:[#allocation10 + $0x198] sm:$0xff]
    %v4083 = vld [vmem:[#allocation10 + $0x1a0] sm:$0xff]
    %v4084 = vld [vmem:[#allocation10 + $0x1a8] sm:$0xff]
    %v4085 = vld [vmem:[#allocation10 + $0x1b0] sm:$0xff]
    %v4086 = vld [vmem:[#allocation10 + $0x1b8] sm:$0xff]
    %v4087 = vld [vmem:[#allocation10 + $0x1c0] sm:$0xff]
    %v4088 = vld [vmem:[#allocation10 + $0x1c8] sm:$0xff]
    %v4089 = vld [vmem:[#allocation10 + $0x1d0] sm:$0xff]
    %v4090 = vld [vmem:[#allocation10 + $0x1d8] sm:$0xff]
    %v4091 = vld [vmem:[#allocation10 + $0x1e0] sm:$0xff]
    %v4092 = vld [vmem:[#allocation10 + $0x1e8] sm:$0xff]
    %v4093 = vld [vmem:[#allocation10 + $0x1f0] sm:$0xff]
    %v4094 = vld [vmem:[#allocation10 + $0x1f8] sm:$0xff]
    %v4095 = vld [vmem:[#allocation10 + $0x200] sm:$0xff]
    %v4096 = vld [vmem:[#allocation10 + $0x208] sm:$0xff]
    %v4097 = vld [vmem:[#allocation10 + $0x210] sm:$0xff]
    %v4098 = vld [vmem:[#allocation10 + $0x218] sm:$0xff]
    %v4099 = vld [vmem:[#allocation10 + $0x220] sm:$0xff]
    %v4100 = vld [vmem:[#allocation10 + $0x228] sm:$0xff]
    %v4101 = vld [vmem:[#allocation10 + $0x230] sm:$0xff]
    %v4102 = vld [vmem:[#allocation10 + $0x238] sm:$0xff]
    %v4103 = vld [vmem:[#allocation10 + $0x240] sm:$0xff]
    %v4104 = vld [vmem:[#allocation10 + $0x248] sm:$0xff]
    %v4105 = vld [vmem:[#allocation10 + $0x250] sm:$0xff]
    %v4106 = vld [vmem:[#allocation10 + $0x258] sm:$0xff]
    %v4107 = vld [vmem:[#allocation10 + $0x260] sm:$0xff]
    %v4108 = vld [vmem:[#allocation10 + $0x268] sm:$0xff]
    %v4109 = vld [vmem:[#allocation10 + $0x270] sm:$0xff]
    %v4110 = vld [vmem:[#allocation10 + $0x278] sm:$0xff]
    %v4111 = vld [vmem:[#allocation10 + $0x280] sm:$0xff]
    %v4112 = vld [vmem:[#allocation10 + $0x288] sm:$0xff]
    %v4113 = vld [vmem:[#allocation10 + $0x290] sm:$0xff]
    %v4114 = vld [vmem:[#allocation10 + $0x298] sm:$0xff]
    %v4115 = vld [vmem:[#allocation10 + $0x2a0] sm:$0xff]
    %v4116 = vld [vmem:[#allocation10 + $0x2a8] sm:$0xff]
    %v4117 = vld [vmem:[#allocation10 + $0x2b0] sm:$0xff]
    %v4118 = vld [vmem:[#allocation10 + $0x2b8] sm:$0xff]
    %v4119 = vld [vmem:[#allocation10 + $0x2c0] sm:$0xff]
    %v4120 = vld [vmem:[#allocation10 + $0x2c8] sm:$0xff]
    %v4121 = vld [vmem:[#allocation10 + $0x2d0] sm:$0xff]
    %v4122 = vld [vmem:[#allocation10 + $0x2d8] sm:$0xff]
    %v4123 = vld [vmem:[#allocation10 + $0x2e0] sm:$0xff]
    %v4124 = vld [vmem:[#allocation10 + $0x2e8] sm:$0xff]
    %v4125 = vld [vmem:[#allocation10 + $0x2f0] sm:$0xff]
    %v4126 = vld [vmem:[#allocation10 + $0x2f8] sm:$0xff]
    %v4127 = vld [vmem:[#allocation10 + $0x300] sm:$0xff]
    %v4128 = vld [vmem:[#allocation10 + $0x308] sm:$0xff]
    %v4129 = vld [vmem:[#allocation10 + $0x310] sm:$0xff]
    %v4130 = vld [vmem:[#allocation10 + $0x318] sm:$0xff]
    %v4131 = vld [vmem:[#allocation10 + $0x320] sm:$0xff]
    %v4132 = vld [vmem:[#allocation10 + $0x328] sm:$0xff]
    %v4133 = vld [vmem:[#allocation10 + $0x330] sm:$0xff]
    %v4134 = vld [vmem:[#allocation10 + $0x338] sm:$0xff]
    %v4135 = vld [vmem:[#allocation10 + $0x340] sm:$0xff]
    %v4136 = vld [vmem:[#allocation10 + $0x348] sm:$0xff]
    %v4137 = vld [vmem:[#allocation10 + $0x350] sm:$0xff]
    %v4138 = vld [vmem:[#allocation10 + $0x358] sm:$0xff]
    %v4139 = vld [vmem:[#allocation10 + $0x360] sm:$0xff]
    %v4140 = vld [vmem:[#allocation10 + $0x368] sm:$0xff]
    %v4141 = vld [vmem:[#allocation10 + $0x370] sm:$0xff]
    %v4142 = vld [vmem:[#allocation10 + $0x378] sm:$0xff]
    %v4143 = vld [vmem:[#allocation10 + $0x380] sm:$0xff]
    %v4144 = vld [vmem:[#allocation10 + $0x388] sm:$0xff]
    %v4145 = vld [vmem:[#allocation10 + $0x390] sm:$0xff]
    %v4146 = vld [vmem:[#allocation10 + $0x398] sm:$0xff]
    %v4147 = vld [vmem:[#allocation10 + $0x3a0] sm:$0xff]
    %v4148 = vld [vmem:[#allocation10 + $0x3a8] sm:$0xff]
    %v4149 = vld [vmem:[#allocation10 + $0x3b0] sm:$0xff]
    %v4150 = vld [vmem:[#allocation10 + $0x3b8] sm:$0xff]
    %v4151 = vld [vmem:[#allocation10 + $0x3c0] sm:$0xff]
    %v4152 = vld [vmem:[#allocation10 + $0x3c8] sm:$0xff]
    %v4153 = vld [vmem:[#allocation10 + $0x3d0] sm:$0xff]
    %v4154 = vld [vmem:[#allocation10 + $0x3d8] sm:$0xff]
    %v4155 = vld [vmem:[#allocation10 + $0x3e0] sm:$0xff]
    %v4156 = vld [vmem:[#allocation10 + $0x3e8] sm:$0xff]
    %v4157 = vld [vmem:[#allocation10 + $0x3f0] sm:$0xff]
    %v4158 = vld [vmem:[#allocation10 + $0x3f8] sm:$0xff]
    %v4159 = vld [vmem:[#allocation10 + $0x400] sm:$0xff]
    %v4160 = vld [vmem:[#allocation10 + $0x408] sm:$0xff]
    %v4161 = vld [vmem:[#allocation10 + $0x410] sm:$0xff]
    %v4162 = vld [vmem:[#allocation10 + $0x418] sm:$0xff]
    %v4163 = vld [vmem:[#allocation10 + $0x420] sm:$0xff]
    %v4164 = vld [vmem:[#allocation10 + $0x428] sm:$0xff]
    %v4165 = vld [vmem:[#allocation10 + $0x430] sm:$0xff]
    %v4166 = vld [vmem:[#allocation10 + $0x438] sm:$0xff]
    %v4167 = vld [vmem:[#allocation10 + $0x440] sm:$0xff]
    %v4168 = vld [vmem:[#allocation10 + $0x448] sm:$0xff]
    %v4169 = vld [vmem:[#allocation10 + $0x450] sm:$0xff]
    %v4170 = vld [vmem:[#allocation10 + $0x458] sm:$0xff]
    %v4171 = vld [vmem:[#allocation10 + $0x460] sm:$0xff]
    %v4172 = vld [vmem:[#allocation10 + $0x468] sm:$0xff]
    %v4173 = vld [vmem:[#allocation10 + $0x470] sm:$0xff]
    %v4174 = vld [vmem:[#allocation10 + $0x478] sm:$0xff]
    %v4175 = vld [vmem:[#allocation10 + $0x480] sm:$0xff]
    %v4176 = vld [vmem:[#allocation10 + $0x488] sm:$0xff]
    %v4177 = vld [vmem:[#allocation10 + $0x490] sm:$0xff]
    %v4178 = vld [vmem:[#allocation10 + $0x498] sm:$0xff]
    %v4179 = vld [vmem:[#allocation10 + $0x4a0] sm:$0xff]
    %v4180 = vld [vmem:[#allocation10 + $0x4a8] sm:$0xff]
    %v4181 = vld [vmem:[#allocation10 + $0x4b0] sm:$0xff]
    %v4182 = vld [vmem:[#allocation10 + $0x4b8] sm:$0xff]
    %v4183 = vld [vmem:[#allocation10 + $0x4c0] sm:$0xff]
    %v4184 = vld [vmem:[#allocation10 + $0x4c8] sm:$0xff]
    %v4185 = vld [vmem:[#allocation10 + $0x4d0] sm:$0xff]
    %v4186 = vld [vmem:[#allocation10 + $0x4d8] sm:$0xff]
    %v4187 = vld [vmem:[#allocation10 + $0x4e0] sm:$0xff]
    %v4188 = vld [vmem:[#allocation10 + $0x4e8] sm:$0xff]
    %v4189 = vld [vmem:[#allocation10 + $0x4f0] sm:$0xff]
    %v4190 = vld [vmem:[#allocation10 + $0x4f8] sm:$0xff]
    %v4191 = vld [vmem:[#allocation10 + $0x500] sm:$0xff]
    %v4192 = vld [vmem:[#allocation10 + $0x508] sm:$0xff]
    %v4193 = vld [vmem:[#allocation10 + $0x510] sm:$0xff]
    %v4194 = vld [vmem:[#allocation10 + $0x518] sm:$0xff]
    %v4195 = vld [vmem:[#allocation10 + $0x520] sm:$0xff]
    %v4196 = vld [vmem:[#allocation10 + $0x528] sm:$0xff]
    %v4197 = vld [vmem:[#allocation10 + $0x530] sm:$0xff]
    %v4198 = vld [vmem:[#allocation10 + $0x538] sm:$0xff]
    %v4199 = vld [vmem:[#allocation10 + $0x540] sm:$0xff]
    %v4200 = vld [vmem:[#allocation10 + $0x548] sm:$0xff]
    %v4201 = vld [vmem:[#allocation10 + $0x550] sm:$0xff]
    %v4202 = vld [vmem:[#allocation10 + $0x558] sm:$0xff]
    %v4203 = vld [vmem:[#allocation10 + $0x560] sm:$0xff]
    %v4204 = vld [vmem:[#allocation10 + $0x568] sm:$0xff]
    %v4205 = vld [vmem:[#allocation10 + $0x570] sm:$0xff]
    %v4206 = vld [vmem:[#allocation10 + $0x578] sm:$0xff]
    %v4207 = vld [vmem:[#allocation10 + $0x580] sm:$0xff]
    %v4208 = vld [vmem:[#allocation10 + $0x588] sm:$0xff]
    %v4209 = vld [vmem:[#allocation10 + $0x590] sm:$0xff]
    %v4210 = vld [vmem:[#allocation10 + $0x598] sm:$0xff]
    %v4211 = vld [vmem:[#allocation10 + $0x5a0] sm:$0xff]
    %v4212 = vld [vmem:[#allocation10 + $0x5a8] sm:$0xff]
    %v4213 = vld [vmem:[#allocation10 + $0x5b0] sm:$0xff]
    %v4214 = vld [vmem:[#allocation10 + $0x5b8] sm:$0xff]
    %v4215 = vld [vmem:[#allocation10 + $0x5c0] sm:$0xff]
    %v4216 = vld [vmem:[#allocation10 + $0x5c8] sm:$0xff]
    %v4217 = vld [vmem:[#allocation10 + $0x5d0] sm:$0xff]
    %v4218 = vld [vmem:[#allocation10 + $0x5d8] sm:$0xff]
    %v4219 = vld [vmem:[#allocation10 + $0x5e0] sm:$0xff]
    %v4220 = vld [vmem:[#allocation10 + $0x5e8] sm:$0xff]
    %v4221 = vld [vmem:[#allocation10 + $0x5f0] sm:$0xff]
    %v4222 = vld [vmem:[#allocation10 + $0x5f8] sm:$0xff]
    %v4223 = vunpack.c.l.s8.bf16 %v4031
    %v4224 = vunpack.c.l.s8.bf16 %v4032
    %v4225 = vunpack.c.l.s8.bf16 %v4033
    %v4226 = vunpack.c.l.s8.bf16 %v4034
    %v4227 = vunpack.c.l.s8.bf16 %v4035
    %v4228 = vunpack.c.l.s8.bf16 %v4036
    %v4229 = vunpack.c.h.s8.bf16 %v4031
    %v4230 = vunpack.c.h.s8.bf16 %v4032
    %v4231 = vunpack.c.h.s8.bf16 %v4033
    %v4232 = vunpack.c.h.s8.bf16 %v4034
    %v4233 = vunpack.c.h.s8.bf16 %v4035
    %v4234 = vunpack.c.h.s8.bf16 %v4036
    %v4235 = vunpack.c.l.s8.bf16 %v4037
    %v4236 = vunpack.c.l.s8.bf16 %v4038
    %v4237 = vunpack.c.l.s8.bf16 %v4039
    %v4238 = vunpack.c.l.s8.bf16 %v4040
    %v4239 = vunpack.c.l.s8.bf16 %v4041
    %v4240 = vunpack.c.l.s8.bf16 %v4042
    %v4241 = vunpack.c.h.s8.bf16 %v4037
    %v4242 = vunpack.c.h.s8.bf16 %v4038
    %v4243 = vunpack.c.h.s8.bf16 %v4039
    %v4244 = vunpack.c.h.s8.bf16 %v4040
    %v4245 = vunpack.c.h.s8.bf16 %v4041
    %v4246 = vunpack.c.h.s8.bf16 %v4042
    %v4247 = vunpack.c.l.s8.bf16 %v4043
    %v4248 = vunpack.c.l.s8.bf16 %v4044
    %v4249 = vunpack.c.l.s8.bf16 %v4045
    %v4250 = vunpack.c.l.s8.bf16 %v4046
    %v4251 = vunpack.c.l.s8.bf16 %v4047
    %v4252 = vunpack.c.l.s8.bf16 %v4048
    %v4253 = vunpack.c.h.s8.bf16 %v4043
    %v4254 = vunpack.c.h.s8.bf16 %v4044
    %v4255 = vunpack.c.h.s8.bf16 %v4045
    %v4256 = vunpack.c.h.s8.bf16 %v4046
    %v4257 = vunpack.c.h.s8.bf16 %v4047
    %v4258 = vunpack.c.h.s8.bf16 %v4048
    %v4259 = vunpack.c.l.s8.bf16 %v4049
    %v4260 = vunpack.c.l.s8.bf16 %v4050
    %v4261 = vunpack.c.l.s8.bf16 %v4051
    %v4262 = vunpack.c.l.s8.bf16 %v4052
    %v4263 = vunpack.c.l.s8.bf16 %v4053
    %v4264 = vunpack.c.l.s8.bf16 %v4054
    %v4265 = vunpack.c.h.s8.bf16 %v4049
    %v4266 = vunpack.c.h.s8.bf16 %v4050
    %v4267 = vunpack.c.h.s8.bf16 %v4051
    %v4268 = vunpack.c.h.s8.bf16 %v4052
    %v4269 = vunpack.c.h.s8.bf16 %v4053
    %v4270 = vunpack.c.h.s8.bf16 %v4054
    %v4271 = vunpack.c.l.s8.bf16 %v4055
    %v4272 = vunpack.c.l.s8.bf16 %v4056
    %v4273 = vunpack.c.l.s8.bf16 %v4057
    %v4274 = vunpack.c.l.s8.bf16 %v4058
    %v4275 = vunpack.c.l.s8.bf16 %v4059
    %v4276 = vunpack.c.l.s8.bf16 %v4060
    %v4277 = vunpack.c.h.s8.bf16 %v4055
    %v4278 = vunpack.c.h.s8.bf16 %v4056
    %v4279 = vunpack.c.h.s8.bf16 %v4057
    %v4280 = vunpack.c.h.s8.bf16 %v4058
    %v4281 = vunpack.c.h.s8.bf16 %v4059
    %v4282 = vunpack.c.h.s8.bf16 %v4060
    %v4283 = vunpack.c.l.s8.bf16 %v4061
    %v4284 = vunpack.c.l.s8.bf16 %v4062
    %v4285 = vunpack.c.l.s8.bf16 %v4063
    %v4286 = vunpack.c.l.s8.bf16 %v4064
    %v4287 = vunpack.c.l.s8.bf16 %v4065
    %v4288 = vunpack.c.l.s8.bf16 %v4066
    %v4289 = vunpack.c.h.s8.bf16 %v4061
    %v4290 = vunpack.c.h.s8.bf16 %v4062
    %v4291 = vunpack.c.h.s8.bf16 %v4063
    %v4292 = vunpack.c.h.s8.bf16 %v4064
    %v4293 = vunpack.c.h.s8.bf16 %v4065
    %v4294 = vunpack.c.h.s8.bf16 %v4066
    %v4295 = vunpack.c.l.s8.bf16 %v4067
    %v4296 = vunpack.c.l.s8.bf16 %v4068
    %v4297 = vunpack.c.l.s8.bf16 %v4069
    %v4298 = vunpack.c.l.s8.bf16 %v4070
    %v4299 = vunpack.c.l.s8.bf16 %v4071
    %v4300 = vunpack.c.l.s8.bf16 %v4072
    %v4301 = vunpack.c.h.s8.bf16 %v4067
    %v4302 = vunpack.c.h.s8.bf16 %v4068
    %v4303 = vunpack.c.h.s8.bf16 %v4069
    %v4304 = vunpack.c.h.s8.bf16 %v4070
    %v4305 = vunpack.c.h.s8.bf16 %v4071
    %v4306 = vunpack.c.h.s8.bf16 %v4072
    %v4307 = vunpack.c.l.s8.bf16 %v4073
    %v4308 = vunpack.c.l.s8.bf16 %v4074
    %v4309 = vunpack.c.l.s8.bf16 %v4075
    %v4310 = vunpack.c.l.s8.bf16 %v4076
    %v4311 = vunpack.c.l.s8.bf16 %v4077
    %v4312 = vunpack.c.l.s8.bf16 %v4078
    %v4313 = vunpack.c.h.s8.bf16 %v4073
    %v4314 = vunpack.c.h.s8.bf16 %v4074
    %v4315 = vunpack.c.h.s8.bf16 %v4075
    %v4316 = vunpack.c.h.s8.bf16 %v4076
    %v4317 = vunpack.c.h.s8.bf16 %v4077
    %v4318 = vunpack.c.h.s8.bf16 %v4078
    %v4319 = vunpack.c.l.s8.bf16 %v4079
    %v4320 = vunpack.c.l.s8.bf16 %v4080
    %v4321 = vunpack.c.l.s8.bf16 %v4081
    %v4322 = vunpack.c.l.s8.bf16 %v4082
    %v4323 = vunpack.c.l.s8.bf16 %v4083
    %v4324 = vunpack.c.l.s8.bf16 %v4084
    %v4325 = vunpack.c.h.s8.bf16 %v4079
    %v4326 = vunpack.c.h.s8.bf16 %v4080
    %v4327 = vunpack.c.h.s8.bf16 %v4081
    %v4328 = vunpack.c.h.s8.bf16 %v4082
    %v4329 = vunpack.c.h.s8.bf16 %v4083
    %v4330 = vunpack.c.h.s8.bf16 %v4084
    %v4331 = vunpack.c.l.s8.bf16 %v4085
    %v4332 = vunpack.c.l.s8.bf16 %v4086
    %v4333 = vunpack.c.l.s8.bf16 %v4087
    %v4334 = vunpack.c.l.s8.bf16 %v4088
    %v4335 = vunpack.c.l.s8.bf16 %v4089
    %v4336 = vunpack.c.l.s8.bf16 %v4090
    %v4337 = vunpack.c.h.s8.bf16 %v4085
    %v4338 = vunpack.c.h.s8.bf16 %v4086
    %v4339 = vunpack.c.h.s8.bf16 %v4087
    %v4340 = vunpack.c.h.s8.bf16 %v4088
    %v4341 = vunpack.c.h.s8.bf16 %v4089
    %v4342 = vunpack.c.h.s8.bf16 %v4090
    %v4343 = vunpack.c.l.s8.bf16 %v4091
    %v4344 = vunpack.c.l.s8.bf16 %v4092
    %v4345 = vunpack.c.l.s8.bf16 %v4093
    %v4346 = vunpack.c.l.s8.bf16 %v4094
    %v4347 = vunpack.c.l.s8.bf16 %v4095
    %v4348 = vunpack.c.l.s8.bf16 %v4096
    %v4349 = vunpack.c.h.s8.bf16 %v4091
    %v4350 = vunpack.c.h.s8.bf16 %v4092
    %v4351 = vunpack.c.h.s8.bf16 %v4093
    %v4352 = vunpack.c.h.s8.bf16 %v4094
    %v4353 = vunpack.c.h.s8.bf16 %v4095
    %v4354 = vunpack.c.h.s8.bf16 %v4096
    %v4355 = vunpack.c.l.s8.bf16 %v4097
    %v4356 = vunpack.c.l.s8.bf16 %v4098
    %v4357 = vunpack.c.l.s8.bf16 %v4099
    %v4358 = vunpack.c.l.s8.bf16 %v4100
    %v4359 = vunpack.c.l.s8.bf16 %v4101
    %v4360 = vunpack.c.l.s8.bf16 %v4102
    %v4361 = vunpack.c.h.s8.bf16 %v4097
    %v4362 = vunpack.c.h.s8.bf16 %v4098
    %v4363 = vunpack.c.h.s8.bf16 %v4099
    %v4364 = vunpack.c.h.s8.bf16 %v4100
    %v4365 = vunpack.c.h.s8.bf16 %v4101
    %v4366 = vunpack.c.h.s8.bf16 %v4102
    %v4367 = vunpack.c.l.s8.bf16 %v4103
    %v4368 = vunpack.c.l.s8.bf16 %v4104
    %v4369 = vunpack.c.l.s8.bf16 %v4105
    %v4370 = vunpack.c.l.s8.bf16 %v4106
    %v4371 = vunpack.c.l.s8.bf16 %v4107
    %v4372 = vunpack.c.l.s8.bf16 %v4108
    %v4373 = vunpack.c.h.s8.bf16 %v4103
    %v4374 = vunpack.c.h.s8.bf16 %v4104
    %v4375 = vunpack.c.h.s8.bf16 %v4105
    %v4376 = vunpack.c.h.s8.bf16 %v4106
    %v4377 = vunpack.c.h.s8.bf16 %v4107
    %v4378 = vunpack.c.h.s8.bf16 %v4108
    %v4379 = vunpack.c.l.s8.bf16 %v4109
    %v4380 = vunpack.c.l.s8.bf16 %v4110
    %v4381 = vunpack.c.l.s8.bf16 %v4111
    %v4382 = vunpack.c.l.s8.bf16 %v4112
    %v4383 = vunpack.c.l.s8.bf16 %v4113
    %v4384 = vunpack.c.l.s8.bf16 %v4114
    %v4385 = vunpack.c.h.s8.bf16 %v4109
    %v4386 = vunpack.c.h.s8.bf16 %v4110
    %v4387 = vunpack.c.h.s8.bf16 %v4111
    %v4388 = vunpack.c.h.s8.bf16 %v4112
    %v4389 = vunpack.c.h.s8.bf16 %v4113
    %v4390 = vunpack.c.h.s8.bf16 %v4114
    %v4391 = vunpack.c.l.s8.bf16 %v4115
    %v4392 = vunpack.c.l.s8.bf16 %v4116
    %v4393 = vunpack.c.l.s8.bf16 %v4117
    %v4394 = vunpack.c.l.s8.bf16 %v4118
    %v4395 = vunpack.c.l.s8.bf16 %v4119
    %v4396 = vunpack.c.l.s8.bf16 %v4120
    %v4397 = vunpack.c.h.s8.bf16 %v4115
    %v4398 = vunpack.c.h.s8.bf16 %v4116
    %v4399 = vunpack.c.h.s8.bf16 %v4117
    %v4400 = vunpack.c.h.s8.bf16 %v4118
    %v4401 = vunpack.c.h.s8.bf16 %v4119
    %v4402 = vunpack.c.h.s8.bf16 %v4120
    %v4403 = vunpack.c.l.s8.bf16 %v4121
    %v4404 = vunpack.c.l.s8.bf16 %v4122
    %v4405 = vunpack.c.l.s8.bf16 %v4123
    %v4406 = vunpack.c.l.s8.bf16 %v4124
    %v4407 = vunpack.c.l.s8.bf16 %v4125
    %v4408 = vunpack.c.l.s8.bf16 %v4126
    %v4409 = vunpack.c.h.s8.bf16 %v4121
    %v4410 = vunpack.c.h.s8.bf16 %v4122
    %v4411 = vunpack.c.h.s8.bf16 %v4123
    %v4412 = vunpack.c.h.s8.bf16 %v4124
    %v4413 = vunpack.c.h.s8.bf16 %v4125
    %v4414 = vunpack.c.h.s8.bf16 %v4126
    %v4415 = vunpack.c.l.s8.bf16 %v4127
    %v4416 = vunpack.c.l.s8.bf16 %v4128
    %v4417 = vunpack.c.l.s8.bf16 %v4129
    %v4418 = vunpack.c.l.s8.bf16 %v4130
    %v4419 = vunpack.c.l.s8.bf16 %v4131
    %v4420 = vunpack.c.l.s8.bf16 %v4132
    %v4421 = vunpack.c.h.s8.bf16 %v4127
    %v4422 = vunpack.c.h.s8.bf16 %v4128
    %v4423 = vunpack.c.h.s8.bf16 %v4129
    %v4424 = vunpack.c.h.s8.bf16 %v4130
    %v4425 = vunpack.c.h.s8.bf16 %v4131
    %v4426 = vunpack.c.h.s8.bf16 %v4132
    %v4427 = vunpack.c.l.s8.bf16 %v4133
    %v4428 = vunpack.c.l.s8.bf16 %v4134
    %v4429 = vunpack.c.l.s8.bf16 %v4135
    %v4430 = vunpack.c.l.s8.bf16 %v4136
    %v4431 = vunpack.c.l.s8.bf16 %v4137
    %v4432 = vunpack.c.l.s8.bf16 %v4138
    %v4433 = vunpack.c.h.s8.bf16 %v4133
    %v4434 = vunpack.c.h.s8.bf16 %v4134
    %v4435 = vunpack.c.h.s8.bf16 %v4135
    %v4436 = vunpack.c.h.s8.bf16 %v4136
    %v4437 = vunpack.c.h.s8.bf16 %v4137
    %v4438 = vunpack.c.h.s8.bf16 %v4138
    %v4439 = vunpack.c.l.s8.bf16 %v4139
    %v4440 = vunpack.c.l.s8.bf16 %v4140
    %v4441 = vunpack.c.l.s8.bf16 %v4141
    %v4442 = vunpack.c.l.s8.bf16 %v4142
    %v4443 = vunpack.c.l.s8.bf16 %v4143
    %v4444 = vunpack.c.l.s8.bf16 %v4144
    %v4445 = vunpack.c.h.s8.bf16 %v4139
    %v4446 = vunpack.c.h.s8.bf16 %v4140
    %v4447 = vunpack.c.h.s8.bf16 %v4141
    %v4448 = vunpack.c.h.s8.bf16 %v4142
    %v4449 = vunpack.c.h.s8.bf16 %v4143
    %v4450 = vunpack.c.h.s8.bf16 %v4144
    %v4451 = vunpack.c.l.s8.bf16 %v4145
    %v4452 = vunpack.c.l.s8.bf16 %v4146
    %v4453 = vunpack.c.l.s8.bf16 %v4147
    %v4454 = vunpack.c.l.s8.bf16 %v4148
    %v4455 = vunpack.c.l.s8.bf16 %v4149
    %v4456 = vunpack.c.l.s8.bf16 %v4150
    %v4457 = vunpack.c.h.s8.bf16 %v4145
    %v4458 = vunpack.c.h.s8.bf16 %v4146
    %v4459 = vunpack.c.h.s8.bf16 %v4147
    %v4460 = vunpack.c.h.s8.bf16 %v4148
    %v4461 = vunpack.c.h.s8.bf16 %v4149
    %v4462 = vunpack.c.h.s8.bf16 %v4150
    %v4463 = vunpack.c.l.s8.bf16 %v4151
    %v4464 = vunpack.c.l.s8.bf16 %v4152
    %v4465 = vunpack.c.l.s8.bf16 %v4153
    %v4466 = vunpack.c.l.s8.bf16 %v4154
    %v4467 = vunpack.c.l.s8.bf16 %v4155
    %v4468 = vunpack.c.l.s8.bf16 %v4156
    %v4469 = vunpack.c.h.s8.bf16 %v4151
    %v4470 = vunpack.c.h.s8.bf16 %v4152
    %v4471 = vunpack.c.h.s8.bf16 %v4153
    %v4472 = vunpack.c.h.s8.bf16 %v4154
    %v4473 = vunpack.c.h.s8.bf16 %v4155
    %v4474 = vunpack.c.h.s8.bf16 %v4156
    %v4475 = vunpack.c.l.s8.bf16 %v4157
    %v4476 = vunpack.c.l.s8.bf16 %v4158
    %v4477 = vunpack.c.l.s8.bf16 %v4159
    %v4478 = vunpack.c.l.s8.bf16 %v4160
    %v4479 = vunpack.c.l.s8.bf16 %v4161
    %v4480 = vunpack.c.l.s8.bf16 %v4162
    %v4481 = vunpack.c.h.s8.bf16 %v4157
    %v4482 = vunpack.c.h.s8.bf16 %v4158
    %v4483 = vunpack.c.h.s8.bf16 %v4159
    %v4484 = vunpack.c.h.s8.bf16 %v4160
    %v4485 = vunpack.c.h.s8.bf16 %v4161
    %v4486 = vunpack.c.h.s8.bf16 %v4162
    %v4487 = vunpack.c.l.s8.bf16 %v4163
    %v4488 = vunpack.c.l.s8.bf16 %v4164
    %v4489 = vunpack.c.l.s8.bf16 %v4165
    %v4490 = vunpack.c.l.s8.bf16 %v4166
    %v4491 = vunpack.c.l.s8.bf16 %v4167
    %v4492 = vunpack.c.l.s8.bf16 %v4168
    %v4493 = vunpack.c.h.s8.bf16 %v4163
    %v4494 = vunpack.c.h.s8.bf16 %v4164
    %v4495 = vunpack.c.h.s8.bf16 %v4165
    %v4496 = vunpack.c.h.s8.bf16 %v4166
    %v4497 = vunpack.c.h.s8.bf16 %v4167
    %v4498 = vunpack.c.h.s8.bf16 %v4168
    %v4499 = vunpack.c.l.s8.bf16 %v4169
    %v4500 = vunpack.c.l.s8.bf16 %v4170
    %v4501 = vunpack.c.l.s8.bf16 %v4171
    %v4502 = vunpack.c.l.s8.bf16 %v4172
    %v4503 = vunpack.c.l.s8.bf16 %v4173
    %v4504 = vunpack.c.l.s8.bf16 %v4174
    %v4505 = vunpack.c.h.s8.bf16 %v4169
    %v4506 = vunpack.c.h.s8.bf16 %v4170
    %v4507 = vunpack.c.h.s8.bf16 %v4171
    %v4508 = vunpack.c.h.s8.bf16 %v4172
    %v4509 = vunpack.c.h.s8.bf16 %v4173
    %v4510 = vunpack.c.h.s8.bf16 %v4174
    %v4511 = vunpack.c.l.s8.bf16 %v4175
    %v4512 = vunpack.c.l.s8.bf16 %v4176
    %v4513 = vunpack.c.l.s8.bf16 %v4177
    %v4514 = vunpack.c.l.s8.bf16 %v4178
    %v4515 = vunpack.c.l.s8.bf16 %v4179
    %v4516 = vunpack.c.l.s8.bf16 %v4180
    %v4517 = vunpack.c.h.s8.bf16 %v4175
    %v4518 = vunpack.c.h.s8.bf16 %v4176
    %v4519 = vunpack.c.h.s8.bf16 %v4177
    %v4520 = vunpack.c.h.s8.bf16 %v4178
    %v4521 = vunpack.c.h.s8.bf16 %v4179
    %v4522 = vunpack.c.h.s8.bf16 %v4180
    %v4523 = vunpack.c.l.s8.bf16 %v4181
    %v4524 = vunpack.c.l.s8.bf16 %v4182
    %v4525 = vunpack.c.l.s8.bf16 %v4183
    %v4526 = vunpack.c.l.s8.bf16 %v4184
    %v4527 = vunpack.c.l.s8.bf16 %v4185
    %v4528 = vunpack.c.l.s8.bf16 %v4186
    %v4529 = vunpack.c.h.s8.bf16 %v4181
    %v4530 = vunpack.c.h.s8.bf16 %v4182
    %v4531 = vunpack.c.h.s8.bf16 %v4183
    %v4532 = vunpack.c.h.s8.bf16 %v4184
    %v4533 = vunpack.c.h.s8.bf16 %v4185
    %v4534 = vunpack.c.h.s8.bf16 %v4186
    %v4535 = vunpack.c.l.s8.bf16 %v4187
    %v4536 = vunpack.c.l.s8.bf16 %v4188
    %v4537 = vunpack.c.l.s8.bf16 %v4189
    %v4538 = vunpack.c.l.s8.bf16 %v4190
    %v4539 = vunpack.c.l.s8.bf16 %v4191
    %v4540 = vunpack.c.l.s8.bf16 %v4192
    %v4541 = vunpack.c.h.s8.bf16 %v4187
    %v4542 = vunpack.c.h.s8.bf16 %v4188
    %v4543 = vunpack.c.h.s8.bf16 %v4189
    %v4544 = vunpack.c.h.s8.bf16 %v4190
    %v4545 = vunpack.c.h.s8.bf16 %v4191
    %v4546 = vunpack.c.h.s8.bf16 %v4192
    %v4547 = vunpack.c.l.s8.bf16 %v4193
    %v4548 = vunpack.c.l.s8.bf16 %v4194
    %v4549 = vunpack.c.l.s8.bf16 %v4195
    %v4550 = vunpack.c.l.s8.bf16 %v4196
    %v4551 = vunpack.c.l.s8.bf16 %v4197
    %v4552 = vunpack.c.l.s8.bf16 %v4198
    %v4553 = vunpack.c.h.s8.bf16 %v4193
    %v4554 = vunpack.c.h.s8.bf16 %v4194
    %v4555 = vunpack.c.h.s8.bf16 %v4195
    %v4556 = vunpack.c.h.s8.bf16 %v4196
    %v4557 = vunpack.c.h.s8.bf16 %v4197
    %v4558 = vunpack.c.h.s8.bf16 %v4198
    %v4559 = vunpack.c.l.s8.bf16 %v4199
    %v4560 = vunpack.c.l.s8.bf16 %v4200
    %v4561 = vunpack.c.l.s8.bf16 %v4201
    %v4562 = vunpack.c.l.s8.bf16 %v4202
    %v4563 = vunpack.c.l.s8.bf16 %v4203
    %v4564 = vunpack.c.l.s8.bf16 %v4204
    %v4565 = vunpack.c.h.s8.bf16 %v4199
    %v4566 = vunpack.c.h.s8.bf16 %v4200
    %v4567 = vunpack.c.h.s8.bf16 %v4201
    %v4568 = vunpack.c.h.s8.bf16 %v4202
    %v4569 = vunpack.c.h.s8.bf16 %v4203
    %v4570 = vunpack.c.h.s8.bf16 %v4204
    %v4571 = vunpack.c.l.s8.bf16 %v4205
    %v4572 = vunpack.c.l.s8.bf16 %v4206
    %v4573 = vunpack.c.l.s8.bf16 %v4207
    %v4574 = vunpack.c.l.s8.bf16 %v4208
    %v4575 = vunpack.c.l.s8.bf16 %v4209
    %v4576 = vunpack.c.l.s8.bf16 %v4210
    %v4577 = vunpack.c.h.s8.bf16 %v4205
    %v4578 = vunpack.c.h.s8.bf16 %v4206
    %v4579 = vunpack.c.h.s8.bf16 %v4207
    %v4580 = vunpack.c.h.s8.bf16 %v4208
    %v4581 = vunpack.c.h.s8.bf16 %v4209
    %v4582 = vunpack.c.h.s8.bf16 %v4210
    %v4583 = vunpack.c.l.s8.bf16 %v4211
    %v4584 = vunpack.c.l.s8.bf16 %v4212
    %v4585 = vunpack.c.l.s8.bf16 %v4213
    %v4586 = vunpack.c.l.s8.bf16 %v4214
    %v4587 = vunpack.c.l.s8.bf16 %v4215
    %v4588 = vunpack.c.l.s8.bf16 %v4216
    %v4589 = vunpack.c.h.s8.bf16 %v4211
    %v4590 = vunpack.c.h.s8.bf16 %v4212
    %v4591 = vunpack.c.h.s8.bf16 %v4213
    %v4592 = vunpack.c.h.s8.bf16 %v4214
    %v4593 = vunpack.c.h.s8.bf16 %v4215
    %v4594 = vunpack.c.h.s8.bf16 %v4216
    %v4595 = vunpack.c.l.s8.bf16 %v4217
    %v4596 = vunpack.c.l.s8.bf16 %v4218
    %v4597 = vunpack.c.l.s8.bf16 %v4219
    %v4598 = vunpack.c.l.s8.bf16 %v4220
    %v4599 = vunpack.c.l.s8.bf16 %v4221
    %v4600 = vunpack.c.l.s8.bf16 %v4222
    %v4601 = vunpack.c.h.s8.bf16 %v4217
    %v4602 = vunpack.c.h.s8.bf16 %v4218
    %v4603 = vunpack.c.h.s8.bf16 %v4219
    %v4604 = vunpack.c.h.s8.bf16 %v4220
    %v4605 = vunpack.c.h.s8.bf16 %v4221
    %v4606 = vunpack.c.h.s8.bf16 %v4222
    %4607 = vmatprep.subr.bf16.mxu0 %v4224
    %4608 = vmatpush1.bf16.msra.mxu0 %v4223
    %4609 = vmatprep.subr.bf16.mxu0 %v4230
    %4610 = vmatpush1.bf16.msra.mxu0 %v4229
    %4611 = vmatprep.subr.bf16.mxu0 %v4236
    %4612 = vmatpush1.bf16.msra.mxu0 %v4235
    %4613 = vmatprep.subr.bf16.mxu0 %v4242
    %4614 = vmatpush1.bf16.msra.mxu0 %v4241
    %4615 = vmatprep.subr.bf16.mxu0 %v4248
    %4616 = vmatpush1.bf16.msra.mxu0 %v4247
    %4617 = vmatprep.subr.bf16.mxu0 %v4254
    %4618 = vmatpush1.bf16.msra.mxu0 %v4253
    %4619 = vmatprep.subr.bf16.mxu0 %v4260
    %4620 = vmatpush1.bf16.msra.mxu0 %v4259
    %4621 = vmatprep.subr.bf16.mxu0 %v4266
    %4622 = vmatpush1.bf16.msra.mxu0 %v4265
    %4623 = vmatprep.subr.bf16.mxu0 %v4272
    %4624 = vmatpush1.bf16.msra.mxu0 %v4271
    %4625 = vmatprep.subr.bf16.mxu0 %v4278
    %4626 = vmatpush1.bf16.msra.mxu0 %v4277
    %4627 = vmatprep.subr.bf16.mxu0 %v4284
    %4628 = vmatpush1.bf16.msra.mxu0 %v4283
    %4629 = vmatprep.subr.bf16.mxu0 %v4290
    %4630 = vmatpush1.bf16.msra.mxu0 %v4289
    %4631 = vmatprep.subr.bf16.mxu0 %v4296
    %4632 = vmatpush1.bf16.msra.mxu0 %v4295
    %4633 = vmatprep.subr.bf16.mxu0 %v4302
    %4634 = vmatpush1.bf16.msra.mxu0 %v4301
    %4635 = vmatprep.subr.bf16.mxu0 %v4308
    %4636 = vmatpush1.bf16.msra.mxu0 %v4307
    %4637 = vmatprep.subr.bf16.mxu0 %v4314
    %4638 = vmatpush1.bf16.msra.mxu0 %v4313
    %4639 = vmatprep.mubr.bf16.mxu0 %v4024
    %4640 = vmatmul.mubr.bf16.gmra.mrb[0].mxu0 %v4023
    %v4641 = vpop.f32.mrb[0].mxu0
    %v4642 = vadd.f32 0.0, %v4641
    %v4643 = vpop.f32.mrb[0].mxu0
    %v4644 = vadd.f32 0.0, %v4643
    %v4645 = vpop.f32.mrb[0].mxu0
    %v4646 = vadd.f32 0.0, %v4645
    %v4647 = vpop.f32.mrb[0].mxu0
    %v4648 = vadd.f32 0.0, %v4647
    %4649 = vdwg.mxu0
    %4650 = vmatprep.subr.bf16.mxu0 %v4320
    %4651 = vmatpush1.bf16.msra.mxu0 %v4319
    %4652 = vmatprep.subr.bf16.mxu0 %v4326
    %4653 = vmatpush1.bf16.msra.mxu0 %v4325
    %4654 = vmatprep.subr.bf16.mxu0 %v4332
    %4655 = vmatpush1.bf16.msra.mxu0 %v4331
    %4656 = vmatprep.subr.bf16.mxu0 %v4338
    %4657 = vmatpush1.bf16.msra.mxu0 %v4337
    %4658 = vmatprep.subr.bf16.mxu0 %v4344
    %4659 = vmatpush1.bf16.msra.mxu0 %v4343
    %4660 = vmatprep.subr.bf16.mxu0 %v4350
    %4661 = vmatpush1.bf16.msra.mxu0 %v4349
    %4662 = vmatprep.subr.bf16.mxu0 %v4356
    %4663 = vmatpush1.bf16.msra.mxu0 %v4355
    %4664 = vmatprep.subr.bf16.mxu0 %v4362
    %4665 = vmatpush1.bf16.msra.mxu0 %v4361
    %4666 = vmatprep.subr.bf16.mxu0 %v4368
    %4667 = vmatpush1.bf16.msra.mxu0 %v4367
    %4668 = vmatprep.subr.bf16.mxu0 %v4374
    %4669 = vmatpush1.bf16.msra.mxu0 %v4373
    %4670 = vmatprep.subr.bf16.mxu0 %v4380
    %4671 = vmatpush1.bf16.msra.mxu0 %v4379
    %4672 = vmatprep.subr.bf16.mxu0 %v4386
    %4673 = vmatpush1.bf16.msra.mxu0 %v4385
    %4674 = vmatprep.subr.bf16.mxu0 %v4392
    %4675 = vmatpush1.bf16.msra.mxu0 %v4391
    %4676 = vmatprep.subr.bf16.mxu0 %v4398
    %4677 = vmatpush1.bf16.msra.mxu0 %v4397
    %4678 = vmatprep.subr.bf16.mxu0 %v4404
    %4679 = vmatpush1.bf16.msra.mxu0 %v4403
    %4680 = vmatprep.subr.bf16.mxu0 %v4410
    %4681 = vmatpush1.bf16.msra.mxu0 %v4409
    %4682 = vmatprep.mubr.bf16.mxu0 %v4026
    %4683 = vmatmul.mubr.bf16.gmra.mrb[0].mxu0 %v4025
    %v4684 = vpop.f32.mrb[0].mxu0
    %v4685 = vadd.f32 %v4642, %v4684
    %v4686 = vpop.f32.mrb[0].mxu0
    %v4687 = vadd.f32 %v4644, %v4686
    %v4688 = vpop.f32.mrb[0].mxu0
    %v4689 = vadd.f32 %v4646, %v4688
    %v4690 = vpop.f32.mrb[0].mxu0
    %v4691 = vadd.f32 %v4648, %v4690
    %4692 = vdwg.mxu0
    %4693 = vmatprep.subr.bf16.mxu0 %v4416
    %4694 = vmatpush1.bf16.msra.mxu0 %v4415
    %4695 = vmatprep.subr.bf16.mxu0 %v4422
    %4696 = vmatpush1.bf16.msra.mxu0 %v4421
    %4697 = vmatprep.subr.bf16.mxu0 %v4428
    %4698 = vmatpush1.bf16.msra.mxu0 %v4427
    %4699 = vmatprep.subr.bf16.mxu0 %v4434
    %4700 = vmatpush1.bf16.msra.mxu0 %v4433
    %4701 = vmatprep.subr.bf16.mxu0 %v4440
    %4702 = vmatpush1.bf16.msra.mxu0 %v4439
    %4703 = vmatprep.subr.bf16.mxu0 %v4446
    %4704 = vmatpush1.bf16.msra.mxu0 %v4445
    %4705 = vmatprep.subr.bf16.mxu0 %v4452
    %4706 = vmatpush1.bf16.msra.mxu0 %v4451
    %4707 = vmatprep.subr.bf16.mxu0 %v4458
    %4708 = vmatpush1.bf16.msra.mxu0 %v4457
    %4709 = vmatprep.subr.bf16.mxu0 %v4464
    %4710 = vmatpush1.bf16.msra.mxu0 %v4463
    %4711 = vmatprep.subr.bf16.mxu0 %v4470
    %4712 = vmatpush1.bf16.msra.mxu0 %v4469
    %4713 = vmatprep.subr.bf16.mxu0 %v4476
    %4714 = vmatpush1.bf16.msra.mxu0 %v4475
    %4715 = vmatprep.subr.bf16.mxu0 %v4482
    %4716 = vmatpush1.bf16.msra.mxu0 %v4481
    %4717 = vmatprep.subr.bf16.mxu0 %v4488
    %4718 = vmatpush1.bf16.msra.mxu0 %v4487
    %4719 = vmatprep.subr.bf16.mxu0 %v4494
    %4720 = vmatpush1.bf16.msra.mxu0 %v4493
    %4721 = vmatprep.subr.bf16.mxu0 %v4500
    %4722 = vmatpush1.bf16.msra.mxu0 %v4499
    %4723 = vmatprep.subr.bf16.mxu0 %v4506
    %4724 = vmatpush1.bf16.msra.mxu0 %v4505
    %4725 = vmatprep.mubr.bf16.mxu0 %v4028
    %4726 = vmatmul.mubr.bf16.gmra.mrb[0].mxu0 %v4027
    %v4727 = vpop.f32.mrb[0].mxu0
    %v4728 = vadd.f32 %v4685, %v4727
    %v4729 = vpop.f32.mrb[0].mxu0
    %v4730 = vadd.f32 %v4687, %v4729
    %v4731 = vpop.f32.mrb[0].mxu0
    %v4732 = vadd.f32 %v4689, %v4731
    %v4733 = vpop.f32.mrb[0].mxu0
    %v4734 = vadd.f32 %v4691, %v4733
    %4735 = vdwg.mxu0
    %4736 = vmatprep.subr.bf16.mxu0 %v4512
    %4737 = vmatpush1.bf16.msra.mxu0 %v4511
    %4738 = vmatprep.subr.bf16.mxu0 %v4518
    %4739 = vmatpush1.bf16.msra.mxu0 %v4517
    %4740 = vmatprep.subr.bf16.mxu0 %v4524
    %4741 = vmatpush1.bf16.msra.mxu0 %v4523
    %4742 = vmatprep.subr.bf16.mxu0 %v4530
    %4743 = vmatpush1.bf16.msra.mxu0 %v4529
    %4744 = vmatprep.subr.bf16.mxu0 %v4536
    %4745 = vmatpush1.bf16.msra.mxu0 %v4535
    %4746 = vmatprep.subr.bf16.mxu0 %v4542
    %4747 = vmatpush1.bf16.msra.mxu0 %v4541
    %4748 = vmatprep.subr.bf16.mxu0 %v4548
    %4749 = vmatpush1.bf16.msra.mxu0 %v4547
    %4750 = vmatprep.subr.bf16.mxu0 %v4554
    %4751 = vmatpush1.bf16.msra.mxu0 %v4553
    %4752 = vmatprep.subr.bf16.mxu0 %v4560
    %4753 = vmatpush1.bf16.msra.mxu0 %v4559
    %4754 = vmatprep.subr.bf16.mxu0 %v4566
    %4755 = vmatpush1.bf16.msra.mxu0 %v4565
    %4756 = vmatprep.subr.bf16.mxu0 %v4572
    %4757 = vmatpush1.bf16.msra.mxu0 %v4571
    %4758 = vmatprep.subr.bf16.mxu0 %v4578
    %4759 = vmatpush1.bf16.msra.mxu0 %v4577
    %4760 = vmatprep.subr.bf16.mxu0 %v4584
    %4761 = vmatpush1.bf16.msra.mxu0 %v4583
    %4762 = vmatprep.subr.bf16.mxu0 %v4590
    %4763 = vmatpush1.bf16.msra.mxu0 %v4589
    %4764 = vmatprep.subr.bf16.mxu0 %v4596
    %4765 = vmatpush1.bf16.msra.mxu0 %v4595
    %4766 = vmatprep.subr.bf16.mxu0 %v4602
    %4767 = vmatpush1.bf16.msra.mxu0 %v4601
    %4768 = vmatprep.mubr.bf16.mxu0 %v4030
    %4769 = vmatmul.mubr.bf16.gmra.mrb[0].mxu0 %v4029
    %v4770 = vpop.f32.mrb[0].mxu0
    %v4771 = vadd.f32 %v4728, %v4770
    %v4772 = vpop.f32.mrb[0].mxu0
    %v4773 = vadd.f32 %v4730, %v4772
    %v4774 = vpop.f32.mrb[0].mxu0
    %v4775 = vadd.f32 %v4732, %v4774
    %v4776 = vpop.f32.mrb[0].mxu0
    %v4777 = vadd.f32 %v4734, %v4776
    %4778 = vdwg.mxu0
    %4779 = vmatprep.subr.bf16.mxu0 %v4226
    %4780 = vmatpush1.bf16.msra.mxu0 %v4225
    %4781 = vmatprep.subr.bf16.mxu0 %v4232
    %4782 = vmatpush1.bf16.msra.mxu0 %v4231
    %4783 = vmatprep.subr.bf16.mxu0 %v4238
    %4784 = vmatpush1.bf16.msra.mxu0 %v4237
    %4785 = vmatprep.subr.bf16.mxu0 %v4244
    %4786 = vmatpush1.bf16.msra.mxu0 %v4243
    %4787 = vmatprep.subr.bf16.mxu0 %v4250
    %4788 = vmatpush1.bf16.msra.mxu0 %v4249
    %4789 = vmatprep.subr.bf16.mxu0 %v4256
    %4790 = vmatpush1.bf16.msra.mxu0 %v4255
    %4791 = vmatprep.subr.bf16.mxu0 %v4262
    %4792 = vmatpush1.bf16.msra.mxu0 %v4261
    %4793 = vmatprep.subr.bf16.mxu0 %v4268
    %4794 = vmatpush1.bf16.msra.mxu0 %v4267
    %4795 = vmatprep.subr.bf16.mxu0 %v4274
    %4796 = vmatpush1.bf16.msra.mxu0 %v4273
    %4797 = vmatprep.subr.bf16.mxu0 %v4280
    %4798 = vmatpush1.bf16.msra.mxu0 %v4279
    %4799 = vmatprep.subr.bf16.mxu0 %v4286
    %4800 = vmatpush1.bf16.msra.mxu0 %v4285
    %4801 = vmatprep.subr.bf16.mxu0 %v4292
    %4802 = vmatpush1.bf16.msra.mxu0 %v4291
    %4803 = vmatprep.subr.bf16.mxu0 %v4298
    %4804 = vmatpush1.bf16.msra.mxu0 %v4297
    %4805 = vmatprep.subr.bf16.mxu0 %v4304
    %4806 = vmatpush1.bf16.msra.mxu0 %v4303
    %4807 = vmatprep.subr.bf16.mxu0 %v4310
    %4808 = vmatpush1.bf16.msra.mxu0 %v4309
    %4809 = vmatprep.subr.bf16.mxu0 %v4316
    %4810 = vmatpush1.bf16.msra.mxu0 %v4315
    %4811 = vmatprep.mubr.bf16.mxu0 %v4024
    %4812 = vmatmul.mubr.bf16.gmra.mrb[0].mxu0 %v4023
    %v4813 = vpop.f32.mrb[0].mxu0
    %v4814 = vadd.f32 0.0, %v4813
    %v4815 = vpop.f32.mrb[0].mxu0
    %v4816 = vadd.f32 0.0, %v4815
    %v4817 = vpop.f32.mrb[0].mxu0
    %v4818 = vadd.f32 0.0, %v4817
    %v4819 = vpop.f32.mrb[0].mxu0
    %v4820 = vadd.f32 0.0, %v4819
    %4821 = vdwg.mxu0
    %4822 = vmatprep.subr.bf16.mxu0 %v4322
    %4823 = vmatpush1.bf16.msra.mxu0 %v4321
    %4824 = vmatprep.subr.bf16.mxu0 %v4328
    %4825 = vmatpush1.bf16.msra.mxu0 %v4327
    %4826 = vmatprep.subr.bf16.mxu0 %v4334
    %4827 = vmatpush1.bf16.msra.mxu0 %v4333
    %4828 = vmatprep.subr.bf16.mxu0 %v4340
    %4829 = vmatpush1.bf16.msra.mxu0 %v4339
    %4830 = vmatprep.subr.bf16.mxu0 %v4346
    %4831 = vmatpush1.bf16.msra.mxu0 %v4345
    %4832 = vmatprep.subr.bf16.mxu0 %v4352
    %4833 = vmatpush1.bf16.msra.mxu0 %v4351
    %4834 = vmatprep.subr.bf16.mxu0 %v4358
    %4835 = vmatpush1.bf16.msra.mxu0 %v4357
    %4836 = vmatprep.subr.bf16.mxu0 %v4364
    %4837 = vmatpush1.bf16.msra.mxu0 %v4363
    %4838 = vmatprep.subr.bf16.mxu0 %v4370
    %4839 = vmatpush1.bf16.msra.mxu0 %v4369
    %4840 = vmatprep.subr.bf16.mxu0 %v4376
    %4841 = vmatpush1.bf16.msra.mxu0 %v4375
    %4842 = vmatprep.subr.bf16.mxu0 %v4382
    %4843 = vmatpush1.bf16.msra.mxu0 %v4381
    %4844 = vmatprep.subr.bf16.mxu0 %v4388
    %4845 = vmatpush1.bf16.msra.mxu0 %v4387
    %4846 = vmatprep.subr.bf16.mxu0 %v4394
    %4847 = vmatpush1.bf16.msra.mxu0 %v4393
    %4848 = vmatprep.subr.bf16.mxu0 %v4400
    %4849 = vmatpush1.bf16.msra.mxu0 %v4399
    %4850 = vmatprep.subr.bf16.mxu0 %v4406
    %4851 = vmatpush1.bf16.msra.mxu0 %v4405
    %4852 = vmatprep.subr.bf16.mxu0 %v4412
    %4853 = vmatpush1.bf16.msra.mxu0 %v4411
    %4854 = vmatprep.mubr.bf16.mxu0 %v4026
    %4855 = vmatmul.mubr.bf16.gmra.mrb[0].mxu0 %v4025
    %v4856 = vpop.f32.mrb[0].mxu0
    %v4857 = vadd.f32 %v4814, %v4856
    %v4858 = vpop.f32.mrb[0].mxu0
    %v4859 = vadd.f32 %v4816, %v4858
    %v4860 = vpop.f32.mrb[0].mxu0
    %v4861 = vadd.f32 %v4818, %v4860
    %v4862 = vpop.f32.mrb[0].mxu0
    %v4863 = vadd.f32 %v4820, %v4862
    %4864 = vdwg.mxu0
    %4865 = vmatprep.subr.bf16.mxu0 %v4418
    %4866 = vmatpush1.bf16.msra.mxu0 %v4417
    %4867 = vmatprep.subr.bf16.mxu0 %v4424
    %4868 = vmatpush1.bf16.msra.mxu0 %v4423
    %4869 = vmatprep.subr.bf16.mxu0 %v4430
    %4870 = vmatpush1.bf16.msra.mxu0 %v4429
    %4871 = vmatprep.subr.bf16.mxu0 %v4436
    %4872 = vmatpush1.bf16.msra.mxu0 %v4435
    %4873 = vmatprep.subr.bf16.mxu0 %v4442
    %4874 = vmatpush1.bf16.msra.mxu0 %v4441
    %4875 = vmatprep.subr.bf16.mxu0 %v4448
    %4876 = vmatpush1.bf16.msra.mxu0 %v4447
    %4877 = vmatprep.subr.bf16.mxu0 %v4454
    %4878 = vmatpush1.bf16.msra.mxu0 %v4453
    %4879 = vmatprep.subr.bf16.mxu0 %v4460
    %4880 = vmatpush1.bf16.msra.mxu0 %v4459
    %4881 = vmatprep.subr.bf16.mxu0 %v4466
    %4882 = vmatpush1.bf16.msra.mxu0 %v4465
    %4883 = vmatprep.subr.bf16.mxu0 %v4472
    %4884 = vmatpush1.bf16.msra.mxu0 %v4471
    %4885 = vmatprep.subr.bf16.mxu0 %v4478
    %4886 = vmatpush1.bf16.msra.mxu0 %v4477
    %4887 = vmatprep.subr.bf16.mxu0 %v4484
    %4888 = vmatpush1.bf16.msra.mxu0 %v4483
    %4889 = vmatprep.subr.bf16.mxu0 %v4490
    %4890 = vmatpush1.bf16.msra.mxu0 %v4489
    %4891 = vmatprep.subr.bf16.mxu0 %v4496
    %4892 = vmatpush1.bf16.msra.mxu0 %v4495
    %4893 = vmatprep.subr.bf16.mxu0 %v4502
    %4894 = vmatpush1.bf16.msra.mxu0 %v4501
    %4895 = vmatprep.subr.bf16.mxu0 %v4508
    %4896 = vmatpush1.bf16.msra.mxu0 %v4507
    %4897 = vmatprep.mubr.bf16.mxu0 %v4028
    %4898 = vmatmul.mubr.bf16.gmra.mrb[0].mxu0 %v4027
    %v4899 = vpop.f32.mrb[0].mxu0
    %v4900 = vadd.f32 %v4857, %v4899
    %v4901 = vpop.f32.mrb[0].mxu0
    %v4902 = vadd.f32 %v4859, %v4901
    %v4903 = vpop.f32.mrb[0].mxu0
    %v4904 = vadd.f32 %v4861, %v4903
    %v4905 = vpop.f32.mrb[0].mxu0
    %v4906 = vadd.f32 %v4863, %v4905
    %4907 = vdwg.mxu0
    %4908 = vmatprep.subr.bf16.mxu0 %v4514
    %4909 = vmatpush1.bf16.msra.mxu0 %v4513
    %4910 = vmatprep.subr.bf16.mxu0 %v4520
    %4911 = vmatpush1.bf16.msra.mxu0 %v4519
    %4912 = vmatprep.subr.bf16.mxu0 %v4526
    %4913 = vmatpush1.bf16.msra.mxu0 %v4525
    %4914 = vmatprep.subr.bf16.mxu0 %v4532
    %4915 = vmatpush1.bf16.msra.mxu0 %v4531
    %4916 = vmatprep.subr.bf16.mxu0 %v4538
    %4917 = vmatpush1.bf16.msra.mxu0 %v4537
    %4918 = vmatprep.subr.bf16.mxu0 %v4544
    %4919 = vmatpush1.bf16.msra.mxu0 %v4543
    %4920 = vmatprep.subr.bf16.mxu0 %v4550
    %4921 = vmatpush1.bf16.msra.mxu0 %v4549
    %4922 = vmatprep.subr.bf16.mxu0 %v4556
    %4923 = vmatpush1.bf16.msra.mxu0 %v4555
    %4924 = vmatprep.subr.bf16.mxu0 %v4562
    %4925 = vmatpush1.bf16.msra.mxu0 %v4561
    %4926 = vmatprep.subr.bf16.mxu0 %v4568
    %4927 = vmatpush1.bf16.msra.mxu0 %v4567
    %4928 = vmatprep.subr.bf16.mxu0 %v4574
    %4929 = vmatpush1.bf16.msra.mxu0 %v4573
    %4930 = vmatprep.subr.bf16.mxu0 %v4580
    %4931 = vmatpush1.bf16.msra.mxu0 %v4579
    %4932 = vmatprep.subr.bf16.mxu0 %v4586
    %4933 = vmatpush1.bf16.msra.mxu0 %v4585
    %4934 = vmatprep.subr.bf16.mxu0 %v4592
    %4935 = vmatpush1.bf16.msra.mxu0 %v4591
    %4936 = vmatprep.subr.bf16.mxu0 %v4598
    %4937 = vmatpush1.bf16.msra.mxu0 %v4597
    %4938 = vmatprep.subr.bf16.mxu0 %v4604
    %4939 = vmatpush1.bf16.msra.mxu0 %v4603
    %4940 = vmatprep.mubr.bf16.mxu0 %v4030
    %4941 = vmatmul.mubr.bf16.gmra.mrb[0].mxu0 %v4029
    %v4942 = vpop.f32.mrb[0].mxu0
    %v4943 = vadd.f32 %v4900, %v4942
    %v4944 = vpop.f32.mrb[0].mxu0
    %v4945 = vadd.f32 %v4902, %v4944
    %v4946 = vpop.f32.mrb[0].mxu0
    %v4947 = vadd.f32 %v4904, %v4946
    %v4948 = vpop.f32.mrb[0].mxu0
    %v4949 = vadd.f32 %v4906, %v4948
    %4950 = vdwg.mxu0
    %4951 = vmatprep.subr.bf16.mxu0 %v4228
    %4952 = vmatpush1.bf16.msra.mxu0 %v4227
    %4953 = vmatprep.subr.bf16.mxu0 %v4234
    %4954 = vmatpush1.bf16.msra.mxu0 %v4233
    %4955 = vmatprep.subr.bf16.mxu0 %v4240
    %4956 = vmatpush1.bf16.msra.mxu0 %v4239
    %4957 = vmatprep.subr.bf16.mxu0 %v4246
    %4958 = vmatpush1.bf16.msra.mxu0 %v4245
    %4959 = vmatprep.subr.bf16.mxu0 %v4252
    %4960 = vmatpush1.bf16.msra.mxu0 %v4251
    %4961 = vmatprep.subr.bf16.mxu0 %v4258
    %4962 = vmatpush1.bf16.msra.mxu0 %v4257
    %4963 = vmatprep.subr.bf16.mxu0 %v4264
    %4964 = vmatpush1.bf16.msra.mxu0 %v4263
    %4965 = vmatprep.subr.bf16.mxu0 %v4270
    %4966 = vmatpush1.bf16.msra.mxu0 %v4269
    %4967 = vmatprep.subr.bf16.mxu0 %v4276
    %4968 = vmatpush1.bf16.msra.mxu0 %v4275
    %4969 = vmatprep.subr.bf16.mxu0 %v4282
    %4970 = vmatpush1.bf16.msra.mxu0 %v4281
    %4971 = vmatprep.subr.bf16.mxu0 %v4288
    %4972 = vmatpush1.bf16.msra.mxu0 %v4287
    %4973 = vmatprep.subr.bf16.mxu0 %v4294
    %4974 = vmatpush1.bf16.msra.mxu0 %v4293
    %4975 = vmatprep.subr.bf16.mxu0 %v4300
    %4976 = vmatpush1.bf16.msra.mxu0 %v4299
    %4977 = vmatprep.subr.bf16.mxu0 %v4306
    %4978 = vmatpush1.bf16.msra.mxu0 %v4305
    %4979 = vmatprep.subr.bf16.mxu0 %v4312
    %4980 = vmatpush1.bf16.msra.mxu0 %v4311
    %4981 = vmatprep.subr.bf16.mxu0 %v4318
    %4982 = vmatpush1.bf16.msra.mxu0 %v4317
    %4983 = vmatprep.mubr.bf16.mxu0 %v4024
    %4984 = vmatmul.mubr.bf16.gmra.mrb[0].mxu0 %v4023
    %v4985 = vpop.f32.mrb[0].mxu0
    %v4986 = vadd.f32 0.0, %v4985
    %v4987 = vpop.f32.mrb[0].mxu0
    %v4988 = vadd.f32 0.0, %v4987
    %v4989 = vpop.f32.mrb[0].mxu0
    %v4990 = vadd.f32 0.0, %v4989
    %v4991 = vpop.f32.mrb[0].mxu0
    %v4992 = vadd.f32 0.0, %v4991
    %4993 = vdwg.mxu0
    %4994 = vmatprep.subr.bf16.mxu0 %v4324
    %4995 = vmatpush1.bf16.msra.mxu0 %v4323
    %4996 = vmatprep.subr.bf16.mxu0 %v4330
    %4997 = vmatpush1.bf16.msra.mxu0 %v4329
    %4998 = vmatprep.subr.bf16.mxu0 %v4336
    %4999 = vmatpush1.bf16.msra.mxu0 %v4335
    %5000 = vmatprep.subr.bf16.mxu0 %v4342
    %5001 = vmatpush1.bf16.msra.mxu0 %v4341
    %5002 = vmatprep.subr.bf16.mxu0 %v4348
    %5003 = vmatpush1.bf16.msra.mxu0 %v4347
    %5004 = vmatprep.subr.bf16.mxu0 %v4354
    %5005 = vmatpush1.bf16.msra.mxu0 %v4353
    %5006 = vmatprep.subr.bf16.mxu0 %v4360
    %5007 = vmatpush1.bf16.msra.mxu0 %v4359
    %5008 = vmatprep.subr.bf16.mxu0 %v4366
    %5009 = vmatpush1.bf16.msra.mxu0 %v4365
    %5010 = vmatprep.subr.bf16.mxu0 %v4372
    %5011 = vmatpush1.bf16.msra.mxu0 %v4371
    %5012 = vmatprep.subr.bf16.mxu0 %v4378
    %5013 = vmatpush1.bf16.msra.mxu0 %v4377
    %5014 = vmatprep.subr.bf16.mxu0 %v4384
    %5015 = vmatpush1.bf16.msra.mxu0 %v4383
    %5016 = vmatprep.subr.bf16.mxu0 %v4390
    %5017 = vmatpush1.bf16.msra.mxu0 %v4389
    %5018 = vmatprep.subr.bf16.mxu0 %v4396
    %5019 = vmatpush1.bf16.msra.mxu0 %v4395
    %5020 = vmatprep.subr.bf16.mxu0 %v4402
    %5021 = vmatpush1.bf16.msra.mxu0 %v4401
    %5022 = vmatprep.subr.bf16.mxu0 %v4408
    %5023 = vmatpush1.bf16.msra.mxu0 %v4407
    %5024 = vmatprep.subr.bf16.mxu0 %v4414
    %5025 = vmatpush1.bf16.msra.mxu0 %v4413
    %5026 = vmatprep.mubr.bf16.mxu0 %v4026
    %5027 = vmatmul.mubr.bf16.gmra.mrb[0].mxu0 %v4025
    %v5028 = vpop.f32.mrb[0].mxu0
    %v5029 = vadd.f32 %v4986, %v5028
    %v5030 = vpop.f32.mrb[0].mxu0
    %v5031 = vadd.f32 %v4988, %v5030
    %v5032 = vpop.f32.mrb[0].mxu0
    %v5033 = vadd.f32 %v4990, %v5032
    %v5034 = vpop.f32.mrb[0].mxu0
    %v5035 = vadd.f32 %v4992, %v5034
    %5036 = vdwg.mxu0
    %5037 = vmatprep.subr.bf16.mxu0 %v4420
    %5038 = vmatpush1.bf16.msra.mxu0 %v4419
    %5039 = vmatprep.subr.bf16.mxu0 %v4426
    %5040 = vmatpush1.bf16.msra.mxu0 %v4425
    %5041 = vmatprep.subr.bf16.mxu0 %v4432
    %5042 = vmatpush1.bf16.msra.mxu0 %v4431
    %5043 = vmatprep.subr.bf16.mxu0 %v4438
    %5044 = vmatpush1.bf16.msra.mxu0 %v4437
    %5045 = vmatprep.subr.bf16.mxu0 %v4444
    %5046 = vmatpush1.bf16.msra.mxu0 %v4443
    %5047 = vmatprep.subr.bf16.mxu0 %v4450
    %5048 = vmatpush1.bf16.msra.mxu0 %v4449
    %5049 = vmatprep.subr.bf16.mxu0 %v4456
    %5050 = vmatpush1.bf16.msra.mxu0 %v4455
    %5051 = vmatprep.subr.bf16.mxu0 %v4462
    %5052 = vmatpush1.bf16.msra.mxu0 %v4461
    %5053 = vmatprep.subr.bf16.mxu0 %v4468
    %5054 = vmatpush1.bf16.msra.mxu0 %v4467
    %5055 = vmatprep.subr.bf16.mxu0 %v4474
    %5056 = vmatpush1.bf16.msra.mxu0 %v4473
    %5057 = vmatprep.subr.bf16.mxu0 %v4480
    %5058 = vmatpush1.bf16.msra.mxu0 %v4479
    %5059 = vmatprep.subr.bf16.mxu0 %v4486
    %5060 = vmatpush1.bf16.msra.mxu0 %v4485
    %5061 = vmatprep.subr.bf16.mxu0 %v4492
    %5062 = vmatpush1.bf16.msra.mxu0 %v4491
    %5063 = vmatprep.subr.bf16.mxu0 %v4498
    %5064 = vmatpush1.bf16.msra.mxu0 %v4497
    %5065 = vmatprep.subr.bf16.mxu0 %v4504
    %5066 = vmatpush1.bf16.msra.mxu0 %v4503
    %5067 = vmatprep.subr.bf16.mxu0 %v4510
    %5068 = vmatpush1.bf16.msra.mxu0 %v4509
    %5069 = vmatprep.mubr.bf16.mxu0 %v4028
    %5070 = vmatmul.mubr.bf16.gmra.mrb[0].mxu0 %v4027
    %v5071 = vpop.f32.mrb[0].mxu0
    %v5072 = vadd.f32 %v5029, %v5071
    %v5073 = vpop.f32.mrb[0].mxu0
    %v5074 = vadd.f32 %v5031, %v5073
    %v5075 = vpop.f32.mrb[0].mxu0
    %v5076 = vadd.f32 %v5033, %v5075
    %v5077 = vpop.f32.mrb[0].mxu0
    %v5078 = vadd.f32 %v5035, %v5077
    %5079 = vdwg.mxu0
    %5080 = vmatprep.subr.bf16.mxu0 %v4516
    %5081 = vmatpush1.bf16.msra.mxu0 %v4515
    %5082 = vmatprep.subr.bf16.mxu0 %v4522
    %5083 = vmatpush1.bf16.msra.mxu0 %v4521
    %5084 = vmatprep.subr.bf16.mxu0 %v4528
    %5085 = vmatpush1.bf16.msra.mxu0 %v4527
    %5086 = vmatprep.subr.bf16.mxu0 %v4534
    %5087 = vmatpush1.bf16.msra.mxu0 %v4533
    %5088 = vmatprep.subr.bf16.mxu0 %v4540
    %5089 = vmatpush1.bf16.msra.mxu0 %v4539
    %5090 = vmatprep.subr.bf16.mxu0 %v4546
    %5091 = vmatpush1.bf16.msra.mxu0 %v4545
    %5092 = vmatprep.subr.bf16.mxu0 %v4552
    %5093 = vmatpush1.bf16.msra.mxu0 %v4551
    %5094 = vmatprep.subr.bf16.mxu0 %v4558
    %5095 = vmatpush1.bf16.msra.mxu0 %v4557
    %5096 = vmatprep.subr.bf16.mxu0 %v4564
    %5097 = vmatpush1.bf16.msra.mxu0 %v4563
    %5098 = vmatprep.subr.bf16.mxu0 %v4570
    %5099 = vmatpush1.bf16.msra.mxu0 %v4569
    %5100 = vmatprep.subr.bf16.mxu0 %v4576
    %5101 = vmatpush1.bf16.msra.mxu0 %v4575
    %5102 = vmatprep.subr.bf16.mxu0 %v4582
    %5103 = vmatpush1.bf16.msra.mxu0 %v4581
    %5104 = vmatprep.subr.bf16.mxu0 %v4588
    %5105 = vmatpush1.bf16.msra.mxu0 %v4587
    %5106 = vmatprep.subr.bf16.mxu0 %v4594
    %5107 = vmatpush1.bf16.msra.mxu0 %v4593
    %5108 = vmatprep.subr.bf16.mxu0 %v4600
    %5109 = vmatpush1.bf16.msra.mxu0 %v4599
    %5110 = vmatprep.subr.bf16.mxu0 %v4606
    %5111 = vmatpush1.bf16.msra.mxu0 %v4605
    %5112 = vmatprep.mubr.bf16.mxu0 %v4030
    %5113 = vmatmul.mubr.bf16.gmra.mrb[0].mxu0 %v4029
    %v5114 = vpop.f32.mrb[0].mxu0
    %v5115 = vadd.f32 %v5072, %v5114
    %v5116 = vpop.f32.mrb[0].mxu0
    %v5117 = vadd.f32 %v5074, %v5116
    %v5118 = vpop.f32.mrb[0].mxu0
    %v5119 = vadd.f32 %v5076, %v5118
    %v5120 = vpop.f32.mrb[0].mxu0
    %v5121 = vadd.f32 %v5078, %v5120
    %5122 = vdwg.mxu0
    %v5123 = vld [vmem:[#allocation11] sm:$0x3f]
    %v5125 = vlaneseq
    %v5126 = vshrl.u32 %v5125, 7
    %v5127 = vsub.s32 0, %v5126
    %v5128 = vrot.slane %v5123, %v5127
    %v5129 = vlaneseq
    %v5130 = vshrl.u32 %v5129, 7
    %v5131 = vsub.s32 1, %v5130
    %v5132 = vrot.slane %v5123, %v5131
    %v5133 = vlaneseq
    %v5134 = vshrl.u32 %v5133, 7
    %v5135 = vsub.s32 2, %v5134
    %v5136 = vrot.slane %v5123, %v5135
    %v5137 = vlaneseq
    %v5138 = vshrl.u32 %v5137, 7
    %v5139 = vsub.s32 3, %v5138
    %v5140 = vrot.slane %v5123, %v5139
    %v5141 = vlaneseq
    %v5142 = vshrl.u32 %v5141, 7
    %v5143 = vsub.s32 4, %v5142
    %v5144 = vrot.slane %v5123, %v5143
    %v5145 = vlaneseq
    %v5146 = vshrl.u32 %v5145, 7
    %v5147 = vsub.s32 5, %v5146
    %v5148 = vrot.slane %v5123, %v5147
    %v5155 = vmul.f32 %v4771, %v5128
    %v5156 = vmul.f32 %v4773, %v5132
    %v5157 = vmul.f32 %v4943, %v5136
    %v5158 = vmul.f32 %v4945, %v5140
    %v5159 = vmul.f32 %v5115, %v5144
    %v5160 = vmul.f32 %v5117, %v5148
    %v5161 = vmul.f32 %v4775, %v5128
    %v5162 = vmul.f32 %v4777, %v5132
    %v5163 = vmul.f32 %v4947, %v5136
    %v5164 = vmul.f32 %v4949, %v5140
    %v5165 = vmul.f32 %v5119, %v5144
    %v5166 = vmul.f32 %v5121, %v5148
    %v5167 = vld [vmem:[#allocation13] sm:$0x3f]
    %v5169 = vlaneseq
    %v5170 = vshrl.u32 %v5169, 7
    %v5171 = vsub.s32 0, %v5170
    %v5172 = vrot.slane %v5167, %v5171
    %v5173 = vlaneseq
    %v5174 = vshrl.u32 %v5173, 7
    %v5175 = vsub.s32 1, %v5174
    %v5176 = vrot.slane %v5167, %v5175
    %v5177 = vlaneseq
    %v5178 = vshrl.u32 %v5177, 7
    %v5179 = vsub.s32 2, %v5178
    %v5180 = vrot.slane %v5167, %v5179
    %v5181 = vlaneseq
    %v5182 = vshrl.u32 %v5181, 7
    %v5183 = vsub.s32 3, %v5182
    %v5184 = vrot.slane %v5167, %v5183
    %v5185 = vlaneseq
    %v5186 = vshrl.u32 %v5185, 7
    %v5187 = vsub.s32 4, %v5186
    %v5188 = vrot.slane %v5167, %v5187
    %v5189 = vlaneseq
    %v5190 = vshrl.u32 %v5189, 7
    %v5191 = vsub.s32 5, %v5190
    %v5192 = vrot.slane %v5167, %v5191
    %v5199 = vadd.f32 %v5155, %v5172
    %v5200 = vadd.f32 %v5156, %v5176
    %v5201 = vadd.f32 %v5157, %v5180
    %v5202 = vadd.f32 %v5158, %v5184
    %v5203 = vadd.f32 %v5159, %v5188
    %v5204 = vadd.f32 %v5160, %v5192
    %v5205 = vadd.f32 %v5161, %v5172
    %v5206 = vadd.f32 %v5162, %v5176
    %v5207 = vadd.f32 %v5163, %v5180
    %v5208 = vadd.f32 %v5164, %v5184
    %v5209 = vadd.f32 %v5165, %v5188
    %v5210 = vadd.f32 %v5166, %v5192
    %v5211 = vmax.f32 %v5199, 0.0
    %v5212 = vmax.f32 %v5200, 0.0
    %v5213 = vmax.f32 %v5201, 0.0
    %v5214 = vmax.f32 %v5202, 0.0
    %v5215 = vmax.f32 %v5203, 0.0
    %v5216 = vmax.f32 %v5204, 0.0
    %v5217 = vmax.f32 %v5205, 0.0
    %v5218 = vmax.f32 %v5206, 0.0
    %v5219 = vmax.f32 %v5207, 0.0
    %v5220 = vmax.f32 %v5208, 0.0
    %v5221 = vmax.f32 %v5209, 0.0
    %v5222 = vmax.f32 %v5210, 0.0
    %v5223 = vpack.c.bf16 %v5217, %v5211
    %v5224 = vpack.c.bf16 %v5218, %v5212
    %v5225 = vpack.c.bf16 %v5219, %v5213
    %v5226 = vpack.c.bf16 %v5220, %v5214
    %v5227 = vpack.c.bf16 %v5221, %v5215
    %v5228 = vpack.c.bf16 %v5222, %v5216
    %v5229 = vld [vmem:[#allocation14] sm:$0xff]
    %v5230 = vld [vmem:[#allocation14 + $0x8] sm:$0xff]
    %v5231 = vld [vmem:[#allocation14 + $0x10] sm:$0xff]
    %v5232 = vld [vmem:[#allocation14 + $0x18] sm:$0xff]
    %v5233 = vld [vmem:[#allocation14 + $0x20] sm:$0xff]
    %v5234 = vld [vmem:[#allocation14 + $0x28] sm:$0xff]
    %v5235 = vld [vmem:[#allocation14 + $0x30] sm:$0xff]
    %v5236 = vld [vmem:[#allocation14 + $0x38] sm:$0xff]
    %v5237 = vld [vmem:[#allocation14 + $0x40] sm:$0xff]
    %v5238 = vld [vmem:[#allocation14 + $0x48] sm:$0xff]
    %v5239 = vld [vmem:[#allocation14 + $0x50] sm:$0xff]
    %v5240 = vld [vmem:[#allocation14 + $0x58] sm:$0xff]
    %v5241 = vld [vmem:[#allocation14 + $0x60] sm:$0xff]
    %v5242 = vld [vmem:[#allocation14 + $0x68] sm:$0xff]
    %v5243 = vld [vmem:[#allocation14 + $0x70] sm:$0xff]
    %v5244 = vld [vmem:[#allocation14 + $0x78] sm:$0xff]
    %v5245 = vld [vmem:[#allocation14 + $0x80] sm:$0xff]
    %v5246 = vld [vmem:[#allocation14 + $0x88] sm:$0xff]
    %v5247 = vld [vmem:[#allocation14 + $0x90] sm:$0xff]
    %v5248 = vld [vmem:[#allocation14 + $0x98] sm:$0xff]
    %v5249 = vld [vmem:[#allocation14 + $0xa0] sm:$0xff]
    %v5250 = vld [vmem:[#allocation14 + $0xa8] sm:$0xff]
    %v5251 = vld [vmem:[#allocation14 + $0xb0] sm:$0xff]
    %v5252 = vld [vmem:[#allocation14 + $0xb8] sm:$0xff]
    %v5253 = vld [vmem:[#allocation14 + $0xc0] sm:$0xff]
    %v5254 = vld [vmem:[#allocation14 + $0xc8] sm:$0xff]
    %v5255 = vld [vmem:[#allocation14 + $0xd0] sm:$0xff]
    %v5256 = vld [vmem:[#allocation14 + $0xd8] sm:$0xff]
    %v5257 = vld [vmem:[#allocation14 + $0xe0] sm:$0xff]
    %v5258 = vld [vmem:[#allocation14 + $0xe8] sm:$0xff]
    %v5259 = vld [vmem:[#allocation14 + $0xf0] sm:$0xff]
    %v5260 = vld [vmem:[#allocation14 + $0xf8] sm:$0xff]
    %v5261 = vld [vmem:[#allocation14 + $0x100] sm:$0xff]
    %v5262 = vld [vmem:[#allocation14 + $0x108] sm:$0xff]
    %v5263 = vld [vmem:[#allocation14 + $0x110] sm:$0xff]
    %v5264 = vld [vmem:[#allocation14 + $0x118] sm:$0xff]
    %v5265 = vld [vmem:[#allocation14 + $0x120] sm:$0xff]
    %v5266 = vld [vmem:[#allocation14 + $0x128] sm:$0xff]
    %v5267 = vld [vmem:[#allocation14 + $0x130] sm:$0xff]
    %v5268 = vld [vmem:[#allocation14 + $0x138] sm:$0xff]
    %v5269 = vld [vmem:[#allocation14 + $0x140] sm:$0xff]
    %v5270 = vld [vmem:[#allocation14 + $0x148] sm:$0xff]
    %v5271 = vld [vmem:[#allocation14 + $0x150] sm:$0xff]
    %v5272 = vld [vmem:[#allocation14 + $0x158] sm:$0xff]
    %v5273 = vld [vmem:[#allocation14 + $0x160] sm:$0xff]
    %v5274 = vld [vmem:[#allocation14 + $0x168] sm:$0xff]
    %v5275 = vld [vmem:[#allocation14 + $0x170] sm:$0xff]
    %v5276 = vld [vmem:[#allocation14 + $0x178] sm:$0xff]
    %v5277 = vld [vmem:[#allocation14 + $0x180] sm:$0xff]
    %v5278 = vld [vmem:[#allocation14 + $0x188] sm:$0xff]
    %v5279 = vld [vmem:[#allocation14 + $0x190] sm:$0xff]
    %v5280 = vld [vmem:[#allocation14 + $0x198] sm:$0xff]
    %v5281 = vld [vmem:[#allocation14 + $0x1a0] sm:$0xff]
    %v5282 = vld [vmem:[#allocation14 + $0x1a8] sm:$0xff]
    %v5283 = vld [vmem:[#allocation14 + $0x1b0] sm:$0xff]
    %v5284 = vld [vmem:[#allocation14 + $0x1b8] sm:$0xff]
    %v5285 = vld [vmem:[#allocation14 + $0x1c0] sm:$0xff]
    %v5286 = vld [vmem:[#allocation14 + $0x1c8] sm:$0xff]
    %v5287 = vld [vmem:[#allocation14 + $0x1d0] sm:$0xff]
    %v5288 = vld [vmem:[#allocation14 + $0x1d8] sm:$0xff]
    %v5289 = vld [vmem:[#allocation14 + $0x1e0] sm:$0xff]
    %v5290 = vld [vmem:[#allocation14 + $0x1e8] sm:$0xff]
    %v5291 = vld [vmem:[#allocation14 + $0x1f0] sm:$0xff]
    %v5292 = vld [vmem:[#allocation14 + $0x1f8] sm:$0xff]
    %v5293 = vld [vmem:[#allocation14 + $0x200] sm:$0xff]
    %v5294 = vld [vmem:[#allocation14 + $0x208] sm:$0xff]
    %v5295 = vld [vmem:[#allocation14 + $0x210] sm:$0xff]
    %v5296 = vld [vmem:[#allocation14 + $0x218] sm:$0xff]
    %v5297 = vld [vmem:[#allocation14 + $0x220] sm:$0xff]
    %v5298 = vld [vmem:[#allocation14 + $0x228] sm:$0xff]
    %v5299 = vld [vmem:[#allocation14 + $0x230] sm:$0xff]
    %v5300 = vld [vmem:[#allocation14 + $0x238] sm:$0xff]
    %v5301 = vunpack.c.l.s8.bf16 %v5229
    %v5302 = vunpack.c.l.s8.bf16 %v5230
    %v5303 = vunpack.c.l.s8.bf16 %v5231
    %v5304 = vunpack.c.h.s8.bf16 %v5229
    %v5305 = vunpack.c.h.s8.bf16 %v5230
    %v5306 = vunpack.c.h.s8.bf16 %v5231
    %v5307 = vunpack.c.l.s8.bf16 %v5232
    %v5308 = vunpack.c.l.s8.bf16 %v5233
    %v5309 = vunpack.c.l.s8.bf16 %v5234
    %v5310 = vunpack.c.h.s8.bf16 %v5232
    %v5311 = vunpack.c.h.s8.bf16 %v5233
    %v5312 = vunpack.c.h.s8.bf16 %v5234
    %v5313 = vunpack.c.l.s8.bf16 %v5235
    %v5314 = vunpack.c.l.s8.bf16 %v5236
    %v5315 = vunpack.c.l.s8.bf16 %v5237
    %v5316 = vunpack.c.h.s8.bf16 %v5235
    %v5317 = vunpack.c.h.s8.bf16 %v5236
    %v5318 = vunpack.c.h.s8.bf16 %v5237
    %v5319 = vunpack.c.l.s8.bf16 %v5238
    %v5320 = vunpack.c.l.s8.bf16 %v5239
    %v5321 = vunpack.c.l.s8.bf16 %v5240
    %v5322 = vunpack.c.h.s8.bf16 %v5238
    %v5323 = vunpack.c.h.s8.bf16 %v5239
    %v5324 = vunpack.c.h.s8.bf16 %v5240
    %v5325 = vunpack.c.l.s8.bf16 %v5241
    %v5326 = vunpack.c.l.s8.bf16 %v5242
    %v5327 = vunpack.c.l.s8.bf16 %v5243
    %v5328 = vunpack.c.h.s8.bf16 %v5241
    %v5329 = vunpack.c.h.s8.bf16 %v5242
    %v5330 = vunpack.c.h.s8.bf16 %v5243
    %v5331 = vunpack.c.l.s8.bf16 %v5244
    %v5332 = vunpack.c.l.s8.bf16 %v5245
    %v5333 = vunpack.c.l.s8.bf16 %v5246
    %v5334 = vunpack.c.h.s8.bf16 %v5244
    %v5335 = vunpack.c.h.s8.bf16 %v5245
    %v5336 = vunpack.c.h.s8.bf16 %v5246
    %v5337 = vunpack.c.l.s8.bf16 %v5247
    %v5338 = vunpack.c.l.s8.bf16 %v5248
    %v5339 = vunpack.c.l.s8.bf16 %v5249
    %v5340 = vunpack.c.h.s8.bf16 %v5247
    %v5341 = vunpack.c.h.s8.bf16 %v5248
    %v5342 = vunpack.c.h.s8.bf16 %v5249
    %v5343 = vunpack.c.l.s8.bf16 %v5250
    %v5344 = vunpack.c.l.s8.bf16 %v5251
    %v5345 = vunpack.c.l.s8.bf16 %v5252
    %v5346 = vunpack.c.h.s8.bf16 %v5250
    %v5347 = vunpack.c.h.s8.bf16 %v5251
    %v5348 = vunpack.c.h.s8.bf16 %v5252
    %v5349 = vunpack.c.l.s8.bf16 %v5253
    %v5350 = vunpack.c.l.s8.bf16 %v5254
    %v5351 = vunpack.c.l.s8.bf16 %v5255
    %v5352 = vunpack.c.h.s8.bf16 %v5253
    %v5353 = vunpack.c.h.s8.bf16 %v5254
    %v5354 = vunpack.c.h.s8.bf16 %v5255
    %v5355 = vunpack.c.l.s8.bf16 %v5256
    %v5356 = vunpack.c.l.s8.bf16 %v5257
    %v5357 = vunpack.c.l.s8.bf16 %v5258
    %v5358 = vunpack.c.h.s8.bf16 %v5256
    %v5359 = vunpack.c.h.s8.bf16 %v5257
    %v5360 = vunpack.c.h.s8.bf16 %v5258
    %v5361 = vunpack.c.l.s8.bf16 %v5259
    %v5362 = vunpack.c.l.s8.bf16 %v5260
    %v5363 = vunpack.c.l.s8.bf16 %v5261
    %v5364 = vunpack.c.h.s8.bf16 %v5259
    %v5365 = vunpack.c.h.s8.bf16 %v5260
    %v5366 = vunpack.c.h.s8.bf16 %v5261
    %v5367 = vunpack.c.l.s8.bf16 %v5262
    %v5368 = vunpack.c.l.s8.bf16 %v5263
    %v5369 = vunpack.c.l.s8.bf16 %v5264
    %v5370 = vunpack.c.h.s8.bf16 %v5262
    %v5371 = vunpack.c.h.s8.bf16 %v5263
    %v5372 = vunpack.c.h.s8.bf16 %v5264
    %v5373 = vunpack.c.l.s8.bf16 %v5265
    %v5374 = vunpack.c.l.s8.bf16 %v5266
    %v5375 = vunpack.c.l.s8.bf16 %v5267
    %v5376 = vunpack.c.h.s8.bf16 %v5265
    %v5377 = vunpack.c.h.s8.bf16 %v5266
    %v5378 = vunpack.c.h.s8.bf16 %v5267
    %v5379 = vunpack.c.l.s8.bf16 %v5268
    %v5380 = vunpack.c.l.s8.bf16 %v5269
    %v5381 = vunpack.c.l.s8.bf16 %v5270
    %v5382 = vunpack.c.h.s8.bf16 %v5268
    %v5383 = vunpack.c.h.s8.bf16 %v5269
    %v5384 = vunpack.c.h.s8.bf16 %v5270
    %v5385 = vunpack.c.l.s8.bf16 %v5271
    %v5386 = vunpack.c.l.s8.bf16 %v5272
    %v5387 = vunpack.c.l.s8.bf16 %v5273
    %v5388 = vunpack.c.h.s8.bf16 %v5271
    %v5389 = vunpack.c.h.s8.bf16 %v5272
    %v5390 = vunpack.c.h.s8.bf16 %v5273
    %v5391 = vunpack.c.l.s8.bf16 %v5274
    %v5392 = vunpack.c.l.s8.bf16 %v5275
    %v5393 = vunpack.c.l.s8.bf16 %v5276
    %v5394 = vunpack.c.h.s8.bf16 %v5274
    %v5395 = vunpack.c.h.s8.bf16 %v5275
    %v5396 = vunpack.c.h.s8.bf16 %v5276
    %v5397 = vunpack.c.l.s8.bf16 %v5277
    %v5398 = vunpack.c.l.s8.bf16 %v5278
    %v5399 = vunpack.c.l.s8.bf16 %v5279
    %v5400 = vunpack.c.h.s8.bf16 %v5277
    %v5401 = vunpack.c.h.s8.bf16 %v5278
    %v5402 = vunpack.c.h.s8.bf16 %v5279
    %v5403 = vunpack.c.l.s8.bf16 %v5280
    %v5404 = vunpack.c.l.s8.bf16 %v5281
    %v5405 = vunpack.c.l.s8.bf16 %v5282
    %v5406 = vunpack.c.h.s8.bf16 %v5280
    %v5407 = vunpack.c.h.s8.bf16 %v5281
    %v5408 = vunpack.c.h.s8.bf16 %v5282
    %v5409 = vunpack.c.l.s8.bf16 %v5283
    %v5410 = vunpack.c.l.s8.bf16 %v5284
    %v5411 = vunpack.c.l.s8.bf16 %v5285
    %v5412 = vunpack.c.h.s8.bf16 %v5283
    %v5413 = vunpack.c.h.s8.bf16 %v5284
    %v5414 = vunpack.c.h.s8.bf16 %v5285
    %v5415 = vunpack.c.l.s8.bf16 %v5286
    %v5416 = vunpack.c.l.s8.bf16 %v5287
    %v5417 = vunpack.c.l.s8.bf16 %v5288
    %v5418 = vunpack.c.h.s8.bf16 %v5286
    %v5419 = vunpack.c.h.s8.bf16 %v5287
    %v5420 = vunpack.c.h.s8.bf16 %v5288
    %v5421 = vunpack.c.l.s8.bf16 %v5289
    %v5422 = vunpack.c.l.s8.bf16 %v5290
    %v5423 = vunpack.c.l.s8.bf16 %v5291
    %v5424 = vunpack.c.h.s8.bf16 %v5289
    %v5425 = vunpack.c.h.s8.bf16 %v5290
    %v5426 = vunpack.c.h.s8.bf16 %v5291
    %v5427 = vunpack.c.l.s8.bf16 %v5292
    %v5428 = vunpack.c.l.s8.bf16 %v5293
    %v5429 = vunpack.c.l.s8.bf16 %v5294
    %v5430 = vunpack.c.h.s8.bf16 %v5292
    %v5431 = vunpack.c.h.s8.bf16 %v5293
    %v5432 = vunpack.c.h.s8.bf16 %v5294
    %v5433 = vunpack.c.l.s8.bf16 %v5295
    %v5434 = vunpack.c.l.s8.bf16 %v5296
    %v5435 = vunpack.c.l.s8.bf16 %v5297
    %v5436 = vunpack.c.h.s8.bf16 %v5295
    %v5437 = vunpack.c.h.s8.bf16 %v5296
    %v5438 = vunpack.c.h.s8.bf16 %v5297
    %v5439 = vunpack.c.l.s8.bf16 %v5298
    %v5440 = vunpack.c.l.s8.bf16 %v5299
    %v5441 = vunpack.c.l.s8.bf16 %v5300
    %v5442 = vunpack.c.h.s8.bf16 %v5298
    %v5443 = vunpack.c.h.s8.bf16 %v5299
    %v5444 = vunpack.c.h.s8.bf16 %v5300
    %5445 = vmatprep.subr.bf16.mxu0 %v5302
    %5446 = vmatpush1.bf16.msra.mxu0 %v5301
    %5447 = vmatprep.subr.bf16.mxu0 %v5305
    %5448 = vmatpush1.bf16.msra.mxu0 %v5304
    %5449 = vmatprep.subr.bf16.mxu0 %v5308
    %5450 = vmatpush1.bf16.msra.mxu0 %v5307
    %5451 = vmatprep.subr.bf16.mxu0 %v5311
    %5452 = vmatpush1.bf16.msra.mxu0 %v5310
    %5453 = vmatprep.subr.bf16.mxu0 %v5314
    %5454 = vmatpush1.bf16.msra.mxu0 %v5313
    %5455 = vmatprep.subr.bf16.mxu0 %v5317
    %5456 = vmatpush1.bf16.msra.mxu0 %v5316
    %5457 = vmatprep.subr.bf16.mxu0 %v5320
    %5458 = vmatpush1.bf16.msra.mxu0 %v5319
    %5459 = vmatprep.subr.bf16.mxu0 %v5323
    %5460 = vmatpush1.bf16.msra.mxu0 %v5322
    %5461 = vmatprep.subr.bf16.mxu0 %v5326
    %5462 = vmatpush1.bf16.msra.mxu0 %v5325
    %5463 = vmatprep.subr.bf16.mxu0 %v5329
    %5464 = vmatpush1.bf16.msra.mxu0 %v5328
    %5465 = vmatprep.subr.bf16.mxu0 %v5332
    %5466 = vmatpush1.bf16.msra.mxu0 %v5331
    %5467 = vmatprep.subr.bf16.mxu0 %v5335
    %5468 = vmatpush1.bf16.msra.mxu0 %v5334
    %5469 = vmatprep.subr.bf16.mxu0 %v5338
    %5470 = vmatpush1.bf16.msra.mxu0 %v5337
    %5471 = vmatprep.subr.bf16.mxu0 %v5341
    %5472 = vmatpush1.bf16.msra.mxu0 %v5340
    %5473 = vmatprep.subr.bf16.mxu0 %v5344
    %5474 = vmatpush1.bf16.msra.mxu0 %v5343
    %5475 = vmatprep.subr.bf16.mxu0 %v5347
    %5476 = vmatpush1.bf16.msra.mxu0 %v5346
    %5477 = vmatprep.mubr.bf16.mxu0 %v5224
    %5478 = vmatmul.mubr.bf16.gmra.mrb[0].mxu0 %v5223
    %v5479 = vpop.f32.mrb[0].mxu0
    %v5480 = vadd.f32 0.0, %v5479
    %v5481 = vpop.f32.mrb[0].mxu0
    %v5482 = vadd.f32 0.0, %v5481
    %v5483 = vpop.f32.mrb[0].mxu0
    %v5484 = vadd.f32 0.0, %v5483
    %v5485 = vpop.f32.mrb[0].mxu0
    %v5486 = vadd.f32 0.0, %v5485
    %5487 = vdwg.mxu0
    %5488 = vmatprep.subr.bf16.mxu0 %v5350
    %5489 = vmatpush1.bf16.msra.mxu0 %v5349
    %5490 = vmatprep.subr.bf16.mxu0 %v5353
    %5491 = vmatpush1.bf16.msra.mxu0 %v5352
    %5492 = vmatprep.subr.bf16.mxu0 %v5356
    %5493 = vmatpush1.bf16.msra.mxu0 %v5355
    %5494 = vmatprep.subr.bf16.mxu0 %v5359
    %5495 = vmatpush1.bf16.msra.mxu0 %v5358
    %5496 = vmatprep.subr.bf16.mxu0 %v5362
    %5497 = vmatpush1.bf16.msra.mxu0 %v5361
    %5498 = vmatprep.subr.bf16.mxu0 %v5365
    %5499 = vmatpush1.bf16.msra.mxu0 %v5364
    %5500 = vmatprep.subr.bf16.mxu0 %v5368
    %5501 = vmatpush1.bf16.msra.mxu0 %v5367
    %5502 = vmatprep.subr.bf16.mxu0 %v5371
    %5503 = vmatpush1.bf16.msra.mxu0 %v5370
    %5504 = vmatprep.subr.bf16.mxu0 %v5374
    %5505 = vmatpush1.bf16.msra.mxu0 %v5373
    %5506 = vmatprep.subr.bf16.mxu0 %v5377
    %5507 = vmatpush1.bf16.msra.mxu0 %v5376
    %5508 = vmatprep.subr.bf16.mxu0 %v5380
    %5509 = vmatpush1.bf16.msra.mxu0 %v5379
    %5510 = vmatprep.subr.bf16.mxu0 %v5383
    %5511 = vmatpush1.bf16.msra.mxu0 %v5382
    %5512 = vmatprep.subr.bf16.mxu0 %v5386
    %5513 = vmatpush1.bf16.msra.mxu0 %v5385
    %5514 = vmatprep.subr.bf16.mxu0 %v5389
    %5515 = vmatpush1.bf16.msra.mxu0 %v5388
    %5516 = vmatprep.subr.bf16.mxu0 %v5392
    %5517 = vmatpush1.bf16.msra.mxu0 %v5391
    %5518 = vmatprep.subr.bf16.mxu0 %v5395
    %5519 = vmatpush1.bf16.msra.mxu0 %v5394
    %5520 = vmatprep.mubr.bf16.mxu0 %v5226
    %5521 = vmatmul.mubr.bf16.gmra.mrb[0].mxu0 %v5225
    %v5522 = vpop.f32.mrb[0].mxu0
    %v5523 = vadd.f32 %v5480, %v5522
    %v5524 = vpop.f32.mrb[0].mxu0
    %v5525 = vadd.f32 %v5482, %v5524
    %v5526 = vpop.f32.mrb[0].mxu0
    %v5527 = vadd.f32 %v5484, %v5526
    %v5528 = vpop.f32.mrb[0].mxu0
    %v5529 = vadd.f32 %v5486, %v5528
    %5530 = vdwg.mxu0
    %5531 = vmatprep.subr.bf16.mxu0 %v5398
    %5532 = vmatpush1.bf16.msra.mxu0 %v5397
    %5533 = vmatprep.subr.bf16.mxu0 %v5401
    %5534 = vmatpush1.bf16.msra.mxu0 %v5400
    %5535 = vmatprep.subr.bf16.mxu0 %v5404
    %5536 = vmatpush1.bf16.msra.mxu0 %v5403
    %5537 = vmatprep.subr.bf16.mxu0 %v5407
    %5538 = vmatpush1.bf16.msra.mxu0 %v5406
    %5539 = vmatprep.subr.bf16.mxu0 %v5410
    %5540 = vmatpush1.bf16.msra.mxu0 %v5409
    %5541 = vmatprep.subr.bf16.mxu0 %v5413
    %5542 = vmatpush1.bf16.msra.mxu0 %v5412
    %5543 = vmatprep.subr.bf16.mxu0 %v5416
    %5544 = vmatpush1.bf16.msra.mxu0 %v5415
    %5545 = vmatprep.subr.bf16.mxu0 %v5419
    %5546 = vmatpush1.bf16.msra.mxu0 %v5418
    %5547 = vmatprep.subr.bf16.mxu0 %v5422
    %5548 = vmatpush1.bf16.msra.mxu0 %v5421
    %5549 = vmatprep.subr.bf16.mxu0 %v5425
    %5550 = vmatpush1.bf16.msra.mxu0 %v5424
    %5551 = vmatprep.subr.bf16.mxu0 %v5428
    %5552 = vmatpush1.bf16.msra.mxu0 %v5427
    %5553 = vmatprep.subr.bf16.mxu0 %v5431
    %5554 = vmatpush1.bf16.msra.mxu0 %v5430
    %5555 = vmatprep.subr.bf16.mxu0 %v5434
    %5556 = vmatpush1.bf16.msra.mxu0 %v5433
    %5557 = vmatprep.subr.bf16.mxu0 %v5437
    %5558 = vmatpush1.bf16.msra.mxu0 %v5436
    %5559 = vmatprep.subr.bf16.mxu0 %v5440
    %5560 = vmatpush1.bf16.msra.mxu0 %v5439
    %5561 = vmatprep.subr.bf16.mxu0 %v5443
    %5562 = vmatpush1.bf16.msra.mxu0 %v5442
    %5563 = vmatprep.mubr.bf16.mxu0 %v5228
    %5564 = vmatmul.mubr.bf16.gmra.mrb[0].mxu0 %v5227
    %v5565 = vpop.f32.mrb[0].mxu0
    %v5566 = vadd.f32 %v5523, %v5565
    %v5567 = vpop.f32.mrb[0].mxu0
    %v5568 = vadd.f32 %v5525, %v5567
    %v5569 = vpop.f32.mrb[0].mxu0
    %v5570 = vadd.f32 %v5527, %v5569
    %v5571 = vpop.f32.mrb[0].mxu0
    %v5572 = vadd.f32 %v5529, %v5571
    %5573 = vdwg.mxu0
    %5574 = vmatprep.subr.bf16.mxu0 0
    %5575 = vmatpush1.bf16.msra.mxu0 %v5303
    %5576 = vmatprep.subr.bf16.mxu0 0
    %5577 = vmatpush1.bf16.msra.mxu0 %v5306
    %5578 = vmatprep.subr.bf16.mxu0 0
    %5579 = vmatpush1.bf16.msra.mxu0 %v5309
    %5580 = vmatprep.subr.bf16.mxu0 0
    %5581 = vmatpush1.bf16.msra.mxu0 %v5312
    %5582 = vmatprep.subr.bf16.mxu0 0
    %5583 = vmatpush1.bf16.msra.mxu0 %v5315
    %5584 = vmatprep.subr.bf16.mxu0 0
    %5585 = vmatpush1.bf16.msra.mxu0 %v5318
    %5586 = vmatprep.subr.bf16.mxu0 0
    %5587 = vmatpush1.bf16.msra.mxu0 %v5321
    %5588 = vmatprep.subr.bf16.mxu0 0
    %5589 = vmatpush1.bf16.msra.mxu0 %v5324
    %5590 = vmatprep.subr.bf16.mxu0 0
    %5591 = vmatpush1.bf16.msra.mxu0 %v5327
    %5592 = vmatprep.subr.bf16.mxu0 0
    %5593 = vmatpush1.bf16.msra.mxu0 %v5330
    %5594 = vmatprep.subr.bf16.mxu0 0
    %5595 = vmatpush1.bf16.msra.mxu0 %v5333
    %5596 = vmatprep.subr.bf16.mxu0 0
    %5597 = vmatpush1.bf16.msra.mxu0 %v5336
    %5598 = vmatprep.subr.bf16.mxu0 0
    %5599 = vmatpush1.bf16.msra.mxu0 %v5339
    %5600 = vmatprep.subr.bf16.mxu0 0
    %5601 = vmatpush1.bf16.msra.mxu0 %v5342
    %5602 = vmatprep.subr.bf16.mxu0 0
    %5603 = vmatpush1.bf16.msra.mxu0 %v5345
    %5604 = vmatprep.subr.bf16.mxu0 0
    %5605 = vmatpush1.bf16.msra.mxu0 %v5348
    %5606 = vmatprep.mubr.bf16.mxu0 %v5224
    %5607 = vmatmul.mubr.bf16.gmra.mrb[0].mxu0 %v5223
    %v5608 = vpop.f32.mrb[0].mxu0
    %v5609 = vadd.f32 0.0, %v5608
    %v5610 = vpop.f32.mrb[0].mxu0
    %v5611 = vpop.f32.mrb[0].mxu0
    %v5612 = vadd.f32 0.0, %v5611
    %v5613 = vpop.f32.mrb[0].mxu0
    %5614 = vdwg.mxu0
    %5615 = vmatprep.subr.bf16.mxu0 0
    %5616 = vmatpush1.bf16.msra.mxu0 %v5351
    %5617 = vmatprep.subr.bf16.mxu0 0
    %5618 = vmatpush1.bf16.msra.mxu0 %v5354
    %5619 = vmatprep.subr.bf16.mxu0 0
    %5620 = vmatpush1.bf16.msra.mxu0 %v5357
    %5621 = vmatprep.subr.bf16.mxu0 0
    %5622 = vmatpush1.bf16.msra.mxu0 %v5360
    %5623 = vmatprep.subr.bf16.mxu0 0
    %5624 = vmatpush1.bf16.msra.mxu0 %v5363
    %5625 = vmatprep.subr.bf16.mxu0 0
    %5626 = vmatpush1.bf16.msra.mxu0 %v5366
    %5627 = vmatprep.subr.bf16.mxu0 0
    %5628 = vmatpush1.bf16.msra.mxu0 %v5369
    %5629 = vmatprep.subr.bf16.mxu0 0
    %5630 = vmatpush1.bf16.msra.mxu0 %v5372
    %5631 = vmatprep.subr.bf16.mxu0 0
    %5632 = vmatpush1.bf16.msra.mxu0 %v5375
    %5633 = vmatprep.subr.bf16.mxu0 0
    %5634 = vmatpush1.bf16.msra.mxu0 %v5378
    %5635 = vmatprep.subr.bf16.mxu0 0
    %5636 = vmatpush1.bf16.msra.mxu0 %v5381
    %5637 = vmatprep.subr.bf16.mxu0 0
    %5638 = vmatpush1.bf16.msra.mxu0 %v5384
    %5639 = vmatprep.subr.bf16.mxu0 0
    %5640 = vmatpush1.bf16.msra.mxu0 %v5387
    %5641 = vmatprep.subr.bf16.mxu0 0
    %5642 = vmatpush1.bf16.msra.mxu0 %v5390
    %5643 = vmatprep.subr.bf16.mxu0 0
    %5644 = vmatpush1.bf16.msra.mxu0 %v5393
    %5645 = vmatprep.subr.bf16.mxu0 0
    %5646 = vmatpush1.bf16.msra.mxu0 %v5396
    %5647 = vmatprep.mubr.bf16.mxu0 %v5226
    %5648 = vmatmul.mubr.bf16.gmra.mrb[0].mxu0 %v5225
    %v5649 = vpop.f32.mrb[0].mxu0
    %v5650 = vadd.f32 %v5609, %v5649
    %v5651 = vpop.f32.mrb[0].mxu0
    %v5652 = vpop.f32.mrb[0].mxu0
    %v5653 = vadd.f32 %v5612, %v5652
    %v5654 = vpop.f32.mrb[0].mxu0
    %5655 = vdwg.mxu0
    %5656 = vmatprep.subr.bf16.mxu0 0
    %5657 = vmatpush1.bf16.msra.mxu0 %v5399
    %5658 = vmatprep.subr.bf16.mxu0 0
    %5659 = vmatpush1.bf16.msra.mxu0 %v5402
    %5660 = vmatprep.subr.bf16.mxu0 0
    %5661 = vmatpush1.bf16.msra.mxu0 %v5405
    %5662 = vmatprep.subr.bf16.mxu0 0
    %5663 = vmatpush1.bf16.msra.mxu0 %v5408
    %5664 = vmatprep.subr.bf16.mxu0 0
    %5665 = vmatpush1.bf16.msra.mxu0 %v5411
    %5666 = vmatprep.subr.bf16.mxu0 0
    %5667 = vmatpush1.bf16.msra.mxu0 %v5414
    %5668 = vmatprep.subr.bf16.mxu0 0
    %5669 = vmatpush1.bf16.msra.mxu0 %v5417
    %5670 = vmatprep.subr.bf16.mxu0 0
    %5671 = vmatpush1.bf16.msra.mxu0 %v5420
    %5672 = vmatprep.subr.bf16.mxu0 0
    %5673 = vmatpush1.bf16.msra.mxu0 %v5423
    %5674 = vmatprep.subr.bf16.mxu0 0
    %5675 = vmatpush1.bf16.msra.mxu0 %v5426
    %5676 = vmatprep.subr.bf16.mxu0 0
    %5677 = vmatpush1.bf16.msra.mxu0 %v5429
    %5678 = vmatprep.subr.bf16.mxu0 0
    %5679 = vmatpush1.bf16.msra.mxu0 %v5432
    %5680 = vmatprep.subr.bf16.mxu0 0
    %5681 = vmatpush1.bf16.msra.mxu0 %v5435
    %5682 = vmatprep.subr.bf16.mxu0 0
    %5683 = vmatpush1.bf16.msra.mxu0 %v5438
    %5684 = vmatprep.subr.bf16.mxu0 0
    %5685 = vmatpush1.bf16.msra.mxu0 %v5441
    %5686 = vmatprep.subr.bf16.mxu0 0
    %5687 = vmatpush1.bf16.msra.mxu0 %v5444
    %5688 = vmatprep.mubr.bf16.mxu0 %v5228
    %5689 = vmatmul.mubr.bf16.gmra.mrb[0].mxu0 %v5227
    %v5690 = vpop.f32.mrb[0].mxu0
    %v5691 = vadd.f32 %v5650, %v5690
    %v5692 = vpop.f32.mrb[0].mxu0
    %v5693 = vpop.f32.mrb[0].mxu0
    %v5694 = vadd.f32 %v5653, %v5693
    %v5695 = vpop.f32.mrb[0].mxu0
    %5696 = vdwg.mxu0
    %v5697 = vld [vmem:[#allocation16] sm:$0x7]
    %v5699 = vlaneseq
    %v5700 = vshrl.u32 %v5699, 7
    %v5701 = vsub.s32 0, %v5700
    %v5702 = vrot.slane %v5697, %v5701
    %v5703 = vlaneseq
    %v5704 = vshrl.u32 %v5703, 7
    %v5705 = vsub.s32 1, %v5704
    %v5706 = vrot.slane %v5697, %v5705
    %v5707 = vlaneseq
    %v5708 = vshrl.u32 %v5707, 7
    %v5709 = vsub.s32 2, %v5708
    %v5710 = vrot.slane %v5697, %v5709
    %v5714 = vmul.f32 %v5566, %v5702
    %v5715 = vmul.f32 %v5568, %v5706
    %v5716 = vmul.f32 %v5691, %v5710
    %v5717 = vmul.f32 %v5570, %v5702
    %v5718 = vmul.f32 %v5572, %v5706
    %v5719 = vmul.f32 %v5694, %v5710
    %v5720 = vld [vmem:[#allocation17] sm:$0x7]
    %v5722 = vlaneseq
    %v5723 = vshrl.u32 %v5722, 7
    %v5724 = vsub.s32 0, %v5723
    %v5725 = vrot.slane %v5720, %v5724
    %v5726 = vlaneseq
    %v5727 = vshrl.u32 %v5726, 7
    %v5728 = vsub.s32 1, %v5727
    %v5729 = vrot.slane %v5720, %v5728
    %v5730 = vlaneseq
    %v5731 = vshrl.u32 %v5730, 7
    %v5732 = vsub.s32 2, %v5731
    %v5733 = vrot.slane %v5720, %v5732
    %v5737 = vadd.f32 %v5714, %v5725
    %v5738 = vadd.f32 %v5715, %v5729
    %v5739 = vadd.f32 %v5716, %v5733
    %v5740 = vadd.f32 %v5717, %v5725
    %v5741 = vadd.f32 %v5718, %v5729
    %v5742 = vadd.f32 %v5719, %v5733
    %v5743 = vmax.f32 %v5737, 0.0
    %v5744 = vmax.f32 %v5738, 0.0
    %v5745 = vmax.f32 %v5739, 0.0
    %v5746 = vmax.f32 %v5740, 0.0
    %v5747 = vmax.f32 %v5741, 0.0
    %v5748 = vmax.f32 %v5742, 0.0
    %v5749 = vpack.c.bf16 %v5746, %v5743
    %v5750 = vpack.c.bf16 %v5747, %v5744
    %v5751 = vpack.c.bf16 %v5748, %v5745
    %v5752 = vld [vmem:[#allocation19] sm:$0xff]
    %v5753 = vld [vmem:[#allocation19 + $0x8] sm:$0xff]
    %v5754 = vld [vmem:[#allocation19 + $0x10] sm:$0xff]
    %v5755 = vld [vmem:[#allocation19 + $0x18] sm:$0xff]
    %v5756 = vld [vmem:[#allocation19 + $0x20] sm:$0xff]
    %v5757 = vld [vmem:[#allocation19 + $0x28] sm:$0xff]
    %v5758 = vld [vmem:[#allocation19 + $0x30] sm:$0xff]
    %v5759 = vld [vmem:[#allocation19 + $0x38] sm:$0xff]
    %v5760 = vld [vmem:[#allocation19 + $0x40] sm:$0xff]
    %v5761 = vld [vmem:[#allocation19 + $0x48] sm:$0xff]
    %v5762 = vld [vmem:[#allocation19 + $0x50] sm:$0xff]
    %v5763 = vld [vmem:[#allocation19 + $0x58] sm:$0xff]
    %v5764 = vld [vmem:[#allocation19 + $0x60] sm:$0xff]
    %v5765 = vld [vmem:[#allocation19 + $0x68] sm:$0xff]
    %v5766 = vld [vmem:[#allocation19 + $0x70] sm:$0xff]
    %v5767 = vld [vmem:[#allocation19 + $0x78] sm:$0xff]
    %v5768 = vld [vmem:[#allocation19 + $0x80] sm:$0xff]
    %v5769 = vld [vmem:[#allocation19 + $0x88] sm:$0xff]
    %v5770 = vld [vmem:[#allocation19 + $0x90] sm:$0xff]
    %v5771 = vld [vmem:[#allocation19 + $0x98] sm:$0xff]
    %v5772 = vld [vmem:[#allocation19 + $0xa0] sm:$0xff]
    %v5773 = vld [vmem:[#allocation19 + $0xa8] sm:$0xff]
    %v5774 = vld [vmem:[#allocation19 + $0xb0] sm:$0xff]
    %v5775 = vld [vmem:[#allocation19 + $0xb8] sm:$0xff]
    %v5776 = vunpack.c.l.s8.bf16 %v5752
    %v5777 = vunpack.c.l.s8.bf16 %v5753
    %v5778 = vunpack.c.h.s8.bf16 %v5752
    %v5779 = vunpack.c.h.s8.bf16 %v5753
    %v5780 = vunpack.c.l.s8.bf16 %v5754
    %v5781 = vunpack.c.l.s8.bf16 %v5755
    %v5782 = vunpack.c.h.s8.bf16 %v5754
    %v5783 = vunpack.c.h.s8.bf16 %v5755
    %v5784 = vunpack.c.l.s8.bf16 %v5756
    %v5785 = vunpack.c.l.s8.bf16 %v5757
    %v5786 = vunpack.c.h.s8.bf16 %v5756
    %v5787 = vunpack.c.h.s8.bf16 %v5757
    %v5788 = vunpack.c.l.s8.bf16 %v5758
    %v5789 = vunpack.c.l.s8.bf16 %v5759
    %v5790 = vunpack.c.h.s8.bf16 %v5758
    %v5791 = vunpack.c.h.s8.bf16 %v5759
    %v5792 = vunpack.c.l.s8.bf16 %v5760
    %v5793 = vunpack.c.l.s8.bf16 %v5761
    %v5794 = vunpack.c.h.s8.bf16 %v5760
    %v5795 = vunpack.c.h.s8.bf16 %v5761
    %v5796 = vunpack.c.l.s8.bf16 %v5762
    %v5797 = vunpack.c.l.s8.bf16 %v5763
    %v5798 = vunpack.c.h.s8.bf16 %v5762
    %v5799 = vunpack.c.h.s8.bf16 %v5763
    %v5800 = vunpack.c.l.s8.bf16 %v5764
    %v5801 = vunpack.c.l.s8.bf16 %v5765
    %v5802 = vunpack.c.h.s8.bf16 %v5764
    %v5803 = vunpack.c.h.s8.bf16 %v5765
    %v5804 = vunpack.c.l.s8.bf16 %v5766
    %v5805 = vunpack.c.l.s8.bf16 %v5767
    %v5806 = vunpack.c.h.s8.bf16 %v5766
    %v5807 = vunpack.c.h.s8.bf16 %v5767
    %v5808 = vunpack.c.l.s8.bf16 %v5768
    %v5809 = vunpack.c.l.s8.bf16 %v5769
    %v5810 = vunpack.c.h.s8.bf16 %v5768
    %v5811 = vunpack.c.h.s8.bf16 %v5769
    %v5812 = vunpack.c.l.s8.bf16 %v5770
    %v5813 = vunpack.c.l.s8.bf16 %v5771
    %v5814 = vunpack.c.h.s8.bf16 %v5770
    %v5815 = vunpack.c.h.s8.bf16 %v5771
    %v5816 = vunpack.c.l.s8.bf16 %v5772
    %v5817 = vunpack.c.l.s8.bf16 %v5773
    %v5818 = vunpack.c.h.s8.bf16 %v5772
    %v5819 = vunpack.c.h.s8.bf16 %v5773
    %v5820 = vunpack.c.l.s8.bf16 %v5774
    %v5821 = vunpack.c.l.s8.bf16 %v5775
    %v5822 = vunpack.c.h.s8.bf16 %v5774
    %v5823 = vunpack.c.h.s8.bf16 %v5775
    %5824 = vmatprep.subr.bf16.mxu0 %v5777
    %5825 = vmatpush1.bf16.msra.mxu0 %v5776
    %5826 = vmatprep.subr.bf16.mxu0 %v5779
    %5827 = vmatpush1.bf16.msra.mxu0 %v5778
    %5828 = vmatprep.subr.bf16.mxu0 %v5781
    %5829 = vmatpush1.bf16.msra.mxu0 %v5780
    %5830 = vmatprep.subr.bf16.mxu0 %v5783
    %5831 = vmatpush1.bf16.msra.mxu0 %v5782
    %5832 = vmatprep.subr.bf16.mxu0 %v5785
    %5833 = vmatpush1.bf16.msra.mxu0 %v5784
    %5834 = vmatprep.subr.bf16.mxu0 %v5787
    %5835 = vmatpush1.bf16.msra.mxu0 %v5786
    %5836 = vmatprep.subr.bf16.mxu0 %v5789
    %5837 = vmatpush1.bf16.msra.mxu0 %v5788
    %5838 = vmatprep.subr.bf16.mxu0 %v5791
    %5839 = vmatpush1.bf16.msra.mxu0 %v5790
    %5840 = vmatprep.subr.bf16.mxu0 %v5793
    %5841 = vmatpush1.bf16.msra.mxu0 %v5792
    %5842 = vmatprep.subr.bf16.mxu0 %v5795
    %5843 = vmatpush1.bf16.msra.mxu0 %v5794
    %5844 = vmatprep.subr.bf16.mxu0 %v5797
    %5845 = vmatpush1.bf16.msra.mxu0 %v5796
    %5846 = vmatprep.subr.bf16.mxu0 %v5799
    %5847 = vmatpush1.bf16.msra.mxu0 %v5798
    %5848 = vmatprep.subr.bf16.mxu0 %v5801
    %5849 = vmatpush1.bf16.msra.mxu0 %v5800
    %5850 = vmatprep.subr.bf16.mxu0 %v5803
    %5851 = vmatpush1.bf16.msra.mxu0 %v5802
    %5852 = vmatprep.subr.bf16.mxu0 %v5805
    %5853 = vmatpush1.bf16.msra.mxu0 %v5804
    %5854 = vmatprep.subr.bf16.mxu0 %v5807
    %5855 = vmatpush1.bf16.msra.mxu0 %v5806
    %5856 = vmatprep.mubr.bf16.mxu0 %v5750
    %5857 = vmatmul.mubr.bf16.gmra.mrb[0].mxu0 %v5749
    %v5858 = vpop.f32.mrb[0].mxu0
    %v5859 = vadd.f32 0.0, %v5858
    %v5860 = vpop.f32.mrb[0].mxu0
    %v5861 = vadd.f32 0.0, %v5860
    %v5862 = vpop.f32.mrb[0].mxu0
    %v5863 = vadd.f32 0.0, %v5862
    %v5864 = vpop.f32.mrb[0].mxu0
    %v5865 = vadd.f32 0.0, %v5864
    %5866 = vdwg.mxu0
    %5867 = vmatprep.subr.bf16.mxu0 %v5809
    %5868 = vmatpush1.bf16.msra.mxu0 %v5808
    %5869 = vmatprep.subr.bf16.mxu0 %v5811
    %5870 = vmatpush1.bf16.msra.mxu0 %v5810
    %5871 = vmatprep.subr.bf16.mxu0 %v5813
    %5872 = vmatpush1.bf16.msra.mxu0 %v5812
    %5873 = vmatprep.subr.bf16.mxu0 %v5815
    %5874 = vmatpush1.bf16.msra.mxu0 %v5814
    %5875 = vmatprep.subr.bf16.mxu0 %v5817
    %5876 = vmatpush1.bf16.msra.mxu0 %v5816
    %5877 = vmatprep.subr.bf16.mxu0 %v5819
    %5878 = vmatpush1.bf16.msra.mxu0 %v5818
    %5879 = vmatprep.subr.bf16.mxu0 %v5821
    %5880 = vmatpush1.bf16.msra.mxu0 %v5820
    %5881 = vmatprep.subr.bf16.mxu0 %v5823
    %5882 = vmatpush1.bf16.msra.mxu0 %v5822
    %5883 = vmatprep.subr.bf16.mxu0 0
    %5884 = vmatpush1.bf16.msra.mxu0 0
    %5885 = vmatprep.subr.bf16.mxu0 0
    %5886 = vmatpush1.bf16.msra.mxu0 0
    %5887 = vmatprep.subr.bf16.mxu0 0
    %5888 = vmatpush1.bf16.msra.mxu0 0
    %5889 = vmatprep.subr.bf16.mxu0 0
    %5890 = vmatpush1.bf16.msra.mxu0 0
    %5891 = vmatprep.subr.bf16.mxu0 0
    %5892 = vmatpush1.bf16.msra.mxu0 0
    %5893 = vmatprep.subr.bf16.mxu0 0
    %5894 = vmatpush1.bf16.msra.mxu0 0
    %5895 = vmatprep.subr.bf16.mxu0 0
    %5896 = vmatpush1.bf16.msra.mxu0 0
    %5897 = vmatprep.subr.bf16.mxu0 0
    %5898 = vmatpush1.bf16.msra.mxu0 0
    %5899 = vmatprep.mubr.bf16.mxu0 0
    %5900 = vmatmul.mubr.bf16.gmra.mrb[0].mxu0 %v5751
    %v5901 = vpop.f32.mrb[0].mxu0
    %v5902 = vadd.f32 %v5859, %v5901
    %v5903 = vpop.f32.mrb[0].mxu0
    %v5904 = vadd.f32 %v5861, %v5903
    %v5905 = vpop.f32.mrb[0].mxu0
    %v5906 = vadd.f32 %v5863, %v5905
    %v5907 = vpop.f32.mrb[0].mxu0
    %v5908 = vadd.f32 %v5865, %v5907
    %5909 = vdwg.mxu0
    %v5910 = vld [vmem:[#allocation20] sm:$0x3]
    %v5912 = vlaneseq
    %v5913 = vshrl.u32 %v5912, 7
    %v5914 = vsub.s32 0, %v5913
    %v5915 = vrot.slane %v5910, %v5914
    %v5916 = vlaneseq
    %v5917 = vshrl.u32 %v5916, 7
    %v5918 = vsub.s32 1, %v5917
    %v5919 = vrot.slane %v5910, %v5918
    %v5922 = vmul.f32 %v5902, %v5915
    %v5923 = vmul.f32 %v5904, %v5919
    %v5924 = vmul.f32 %v5906, %v5915
    %v5925 = vmul.f32 %v5908, %v5919
    %v5926 = vld [vmem:[#allocation22] sm:$0x3]
    %v5928 = vlaneseq
    %v5929 = vshrl.u32 %v5928, 7
    %v5930 = vsub.s32 0, %v5929
    %v5931 = vrot.slane %v5926, %v5930
    %v5932 = vlaneseq
    %v5933 = vshrl.u32 %v5932, 7
    %v5934 = vsub.s32 1, %v5933
    %v5935 = vrot.slane %v5926, %v5934
    %v5938 = vadd.f32 %v5922, %v5931
    %v5939 = vadd.f32 %v5923, %v5935
    %v5940 = vadd.f32 %v5924, %v5931
    %v5941 = vadd.f32 %v5925, %v5935
    %v5942 = vmax.f32 %v5938, 0.0
    %v5943 = vmax.f32 %v5939, 0.0
    %v5944 = vmax.f32 %v5940, 0.0
    %v5945 = vmax.f32 %v5941, 0.0
    %v5946 = vpack.c.bf16 %v5944, %v5942
    %v5947 = vpack.c.bf16 %v5945, %v5943
    %v5948 = vld [vmem:[#allocation23] sm:$0xff]
    %v5949 = vld [vmem:[#allocation23 + $0x8] sm:$0xff]
    %v5950 = vld [vmem:[#allocation23 + $0x10] sm:$0xff]
    %v5951 = vld [vmem:[#allocation23 + $0x18] sm:$0xff]
    %v5952 = vld [vmem:[#allocation23 + $0x20] sm:$0xff]
    %v5953 = vld [vmem:[#allocation23 + $0x28] sm:$0xff]
    %v5954 = vld [vmem:[#allocation23 + $0x30] sm:$0xff]
    %v5955 = vld [vmem:[#allocation23 + $0x38] sm:$0xff]
    %v5956 = vunpack.c.l.s8.bf16 %v5948
    %v5957 = vunpack.c.h.s8.bf16 %v5948
    %v5958 = vunpack.c.l.s8.bf16 %v5949
    %v5959 = vunpack.c.h.s8.bf16 %v5949
    %v5960 = vunpack.c.l.s8.bf16 %v5950
    %v5961 = vunpack.c.h.s8.bf16 %v5950
    %v5962 = vunpack.c.l.s8.bf16 %v5951
    %v5963 = vunpack.c.h.s8.bf16 %v5951
    %v5964 = vunpack.c.l.s8.bf16 %v5952
    %v5965 = vunpack.c.h.s8.bf16 %v5952
    %v5966 = vunpack.c.l.s8.bf16 %v5953
    %v5967 = vunpack.c.h.s8.bf16 %v5953
    %v5968 = vunpack.c.l.s8.bf16 %v5954
    %v5969 = vunpack.c.h.s8.bf16 %v5954
    %v5970 = vunpack.c.l.s8.bf16 %v5955
    %v5971 = vunpack.c.h.s8.bf16 %v5955
    %5972 = vmatprep.subr.bf16.mxu0 0
    %5973 = vmatpush1.bf16.msra.mxu0 %v5956
    %5974 = vmatprep.subr.bf16.mxu0 0
    %5975 = vmatpush1.bf16.msra.mxu0 %v5957
    %5976 = vmatprep.subr.bf16.mxu0 0
    %5977 = vmatpush1.bf16.msra.mxu0 %v5958
    %5978 = vmatprep.subr.bf16.mxu0 0
    %5979 = vmatpush1.bf16.msra.mxu0 %v5959
    %5980 = vmatprep.subr.bf16.mxu0 0
    %5981 = vmatpush1.bf16.msra.mxu0 %v5960
    %5982 = vmatprep.subr.bf16.mxu0 0
    %5983 = vmatpush1.bf16.msra.mxu0 %v5961
    %5984 = vmatprep.subr.bf16.mxu0 0
    %5985 = vmatpush1.bf16.msra.mxu0 %v5962
    %5986 = vmatprep.subr.bf16.mxu0 0
    %5987 = vmatpush1.bf16.msra.mxu0 %v5963
    %5988 = vmatprep.subr.bf16.mxu0 0
    %5989 = vmatpush1.bf16.msra.mxu0 %v5964
    %5990 = vmatprep.subr.bf16.mxu0 0
    %5991 = vmatpush1.bf16.msra.mxu0 %v5965
    %5992 = vmatprep.subr.bf16.mxu0 0
    %5993 = vmatpush1.bf16.msra.mxu0 %v5966
    %5994 = vmatprep.subr.bf16.mxu0 0
    %5995 = vmatpush1.bf16.msra.mxu0 %v5967
    %5996 = vmatprep.subr.bf16.mxu0 0
    %5997 = vmatpush1.bf16.msra.mxu0 %v5968
    %5998 = vmatprep.subr.bf16.mxu0 0
    %5999 = vmatpush1.bf16.msra.mxu0 %v5969
    %6000 = vmatprep.subr.bf16.mxu0 0
    %6001 = vmatpush1.bf16.msra.mxu0 %v5970
    %6002 = vmatprep.subr.bf16.mxu0 0
    %6003 = vmatpush1.bf16.msra.mxu0 %v5971
    %6004 = vmatprep.mubr.bf16.mxu0 %v5947
    %6005 = vmatmul.mubr.bf16.gmra.mrb[0].mxu0 %v5946
    %v6006 = vpop.f32.mrb[0].mxu0
    %v6007 = vadd.f32 0.0, %v6006
    %v6008 = vpop.f32.mrb[0].mxu0
    %v6009 = vpop.f32.mrb[0].mxu0
    %v6010 = vadd.f32 0.0, %v6009
    %v6011 = vpop.f32.mrb[0].mxu0
    %6012 = vdwg.mxu0
    %v6013 = vld [vmem:[#allocation25] sm:$0x1]
    %v6015 = vlaneseq
    %v6016 = vshrl.u32 %v6015, 7
    %v6017 = vsub.s32 0, %v6016
    %v6018 = vrot.slane %v6013, %v6017
    %v6020 = vmul.f32 %v6007, %v6018
    %v6021 = vmul.f32 %v6010, %v6018
    %v6022 = vld [vmem:[#allocation26] sm:$0x1]
    %v6024 = vlaneseq
    %v6025 = vshrl.u32 %v6024, 7
    %v6026 = vsub.s32 0, %v6025
    %v6027 = vrot.slane %v6022, %v6026
    %v6029 = vadd.f32 %v6020, %v6027
    %v6030 = vadd.f32 %v6021, %v6027
    %6031 = vst [vmem:[#allocation28] sm:$0xff] %v6029
    %6032 = vst [vmem:[#allocation28 + $0x8] sm:$0xff] %v6030
    // Predicated region
    $region130: #{tpu_custom_call.1} parent=1 // pred_check
      _
    $region131: #{tpu_custom_call.1} parent=1 // pred_check_branch
      %6034 = sbr.rel (0) target = $region133
    $region132: #{tpu_custom_call.1} parent=1 // pred_region
      %s6036 = ssub.s32 256, 256
      %6037 = vsyncadd [#allocation4], %s6036
      %s6038 = sshll.u32 [#allocation28], 4
      %s6039 = int_to_ptr.vmem [resolvable:$true] %s6038
      %6044 = dma.vmem_to_hbm [thread:$0]  %s6039, 256, %s16, [#allocation4], 128, 128, 8
    $region133: #{tpu_custom_call.1} parent=1 // pred_fallthru
      _
    // Predicated region
    $region134: #{tpu_custom_call.1} parent=1 // pred_check
      _
    $region135: #{tpu_custom_call.1} parent=1 // pred_check_branch
      %6046 = sbr.rel (0) target = $region137
    $region136: #{tpu_custom_call.1} parent=1 // pred_region
      %6047 = dma.done [#allocation4], 256
    $region137: #{tpu_custom_call.1} parent=1 // pred_fallthru
      _
    %6048 = vsyncpa [#allocation3], 1
    %6049 = vsyncpa [#allocation6], 1
    %6050 = vsyncpa [#allocation9], 1
    %6051 = vsyncpa [#allocation12], 1
    %6052 = vsyncpa [#allocation15], 1
    %6053 = vsyncpa [#allocation18], 1
    %6054 = vsyncpa [#allocation21], 1
    %6055 = vsyncpa [#allocation24], 1
    %6056 = vsyncpa [#allocation27], 1
    %6057 = vsyncpa [#allocation4], 1

</llo_original>
